<compile_context>
chip_gen: v6e
topology: v6e:2x2x1
jax: 0.10.0
libtpu: 0.0.40
codegen_flags: <defaults>
</compile_context>

<pallas_src>
import functools

import jax
import jax.numpy as jnp
from jax import lax
from jax.experimental import pallas as pl
from jax.experimental.pallas import tpu as pltpu

_LANE = 128
_SUB = 8


def _round_up(n, m):
    return (n + m - 1) // m * m


# Optional: single-buffering of grid-invariant operands (saves their second
# VMEM buffer).  Feature-detect so older Pallas versions still work.
try:
    pl.BlockSpec((8, 128), lambda *_: (0, 0), pipeline_mode=pl.Buffered(1))
    _HAS_PIPELINE_MODE = True
except Exception:  # pragma: no cover
    _HAS_PIPELINE_MODE = False


def _bottleneck_kernel(cfg, x_ref, w1_ref, b1_ref, w2_ref, b2_ref, w3_ref,
                       b3_ref, o_ref, buf_ref):
    """One (batch image, row tile) step.

    Layouts (all flat row-padded, channels lane-dense):
      x_ref  : (1, 1, R, Cp)   R = (TH+2d)*Wp8 rows of padded input (with halo)
      o_ref  : (1, 1, L, Cp)   L = TH*Wp8 output rows (junk cols sliced off
                               in the wrapper)
      buf_ref: (R_s, Pp)       flat h1 scratch; h1 stored at row offset d8
    """
    d, H, W, TH, Wp8, d8, tail = cfg
    TH2d = TH + 2 * d
    R = TH2d * Wp8
    L = TH * Wp8
    Pp = w1_ref.shape[1]
    cdt = buf_ref.dtype
    t = pl.program_id(1)

    xb = x_ref[0, 0]                                         # (R, Cp), bf16

    # ---- conv1 (1x1, BN folded) over the whole padded tile ------------------
    c1 = jnp.dot(xb, w1_ref[...], preferred_element_type=jnp.float32)
    h1 = jnp.maximum(c1 + b1_ref[...], 0.0)                  # (R, Pp) f32
    # Zero the image-level zero-padding slots (rows/cols outside the image) so
    # conv2's halo taps see exact zeros; real halo rows from neighbouring row
    # tiles are recomputed here and kept.  (Wp8 % 8 == 0 => free 3-D view.)
    h1 = h1.reshape(TH2d, Wp8, Pp)
    row = lax.broadcasted_iota(jnp.int32, (TH2d, Wp8, Pp), 0) + t * TH
    col = lax.broadcasted_iota(jnp.int32, (TH2d, Wp8, Pp), 1)
    keep = (row >= d) & (row < H + d) & (col >= d) & (col < W + d)
    h1 = jnp.where(keep, h1, 0.0).reshape(R, Pp)

    # Single aligned, contiguous, unmasked store into the flat scratch.
    buf_ref[pl.ds(d8, R), :] = h1.astype(cdt)
    # Guard rows on either side only feed junk (discarded) output columns, but
    # zero them so every step's scratch contents are fully defined.
    buf_ref[pl.ds(0, d8), :] = jnp.zeros((d8, Pp), cdt)
    buf_ref[pl.ds(d8 + R, tail), :] = jnp.zeros((tail, Pp), cdt)

    # ---- conv2 (3x3, dilation d, BN folded): 9 flat-offset taps -------------
    # No materialized im2col; each tap is a contiguous slice of the scratch
    # accumulated on the MXU into an f32 accumulator.
    acc = jnp.zeros((L, Pp), jnp.float32)
    for ky in range(3):
        for kx in range(3):
            start = d8 + d * (ky * Wp8 + kx - 1)             # static offset
            acc = acc + jnp.dot(buf_ref[pl.ds(start, L), :],
                                w2_ref[ky * 3 + kx],
                                preferred_element_type=jnp.float32)
    h2 = jnp.maximum(acc + b2_ref[...], 0.0).astype(cdt)     # (L, Pp)

    # ---- conv3 (1x1, BN folded) + residual + relu ----------------------------
    h3 = jnp.dot(h2, w3_ref[...], preferred_element_type=jnp.float32)
    h3 = h3 + b3_ref[...]
    res = xb[d * Wp8:d * Wp8 + L, :].astype(jnp.float32)     # aligned slice
    o_ref[0, 0] = jnp.maximum(h3 + res, 0.0).astype(o_ref.dtype)


def bottleneck_pallas(x_nhwc, w1, w2, w3,
                      scale1, bias1, scale2, bias2, scale3, bias3,
                      *, dilation=1, row_tile=None,
                      compute_dtype=jnp.bfloat16, single_buffer_weights=True):
    """x_nhwc: (N,H,W,Cin); w1:(Cin,P); w2:(3,3,P,P) HWIO; w3:(P,4P=Cin)."""
    N, H, W, Cin = x_nhwc.shape
    P = w1.shape[1]
    Cout = w3.shape[1]
    assert Cout == Cin, "downsample=None requires inplanes == planes * 4"
    d = int(dilation)
    out_dtype = x_nhwc.dtype
    cdt = compute_dtype

    # Row-tile size (spatial grid axis; also what lets v7x split work over
    # both TensorCores at batch 1).
    if row_tile is None:
        row_tile = H
        for cand in (16, 8, 4, 2):
            if H > cand and H % cand == 0:
                row_tile = cand
                break
    TH = int(row_tile)
    assert H % TH == 0, "row_tile must divide H"
    n_t = H // TH

    Pp = _round_up(P, _LANE)            # lane-dense bottleneck width
    Cp = _round_up(Cin, _LANE)          # lane-dense in/out width
    Wp8 = _round_up(W + 2 * d, _SUB)    # padded row width (sublane aligned)
    TH2d = TH + 2 * d
    R = TH2d * Wp8                      # padded rows per input tile
    L = TH * Wp8                        # padded rows per output tile
    d8 = _round_up(d, _SUB)             # aligned scratch offset of h1
    tail = _round_up(d, _SUB)           # aligned guard rows after h1
    R_s = d8 + R + tail                 # scratch rows (multiple of 8)

    # ---- fold BN scales into conv weights; bf16 MXU operands ---------------
    w1q = jnp.pad((w1 * scale1[None, :]).astype(cdt),
                  ((0, Cp - Cin), (0, Pp - P)))                       # (Cp,Pp)
    w2q = jnp.pad((w2 * scale2[None, None, None, :]).astype(cdt),
                  ((0, 0), (0, 0), (0, Pp - P), (0, Pp - P)))
    w2q = w2q.reshape(9, Pp, Pp)                                      # taps
    w3q = jnp.pad((w3 * scale3[None, :]).astype(cdt),
                  ((0, Pp - P), (0, Cp - Cout)))                      # (Pp,Cp)
    b1q = jnp.pad(bias1, (0, Pp - P)).reshape(1, Pp).astype(jnp.float32)
    b2q = jnp.pad(bias2, (0, Pp - P)).reshape(1, Pp).astype(jnp.float32)
    b3q = jnp.pad(bias3, (0, Cp - Cout)).reshape(1, Cp).astype(jnp.float32)

    # ---- present x as overlapping row tiles in flat row-padded layout ------
    x_pad = jnp.pad(x_nhwc.astype(cdt),
                    ((0, 0), (d, d), (d, Wp8 - W - d), (0, Cp - Cin)))
    rows = (jnp.arange(n_t) * TH)[:, None] + jnp.arange(TH2d)[None, :]
    x_tiles = x_pad[:, rows].reshape(N, n_t, R, Cp)          # (N,n_t,R,Cp)

    use_sb = bool(single_buffer_weights) and _HAS_PIPELINE_MODE

    def const_spec(shape, sb):
        imap = lambda n, t, _nd=len(shape): (0,) * _nd
        if sb:
            return pl.BlockSpec(shape, imap, pipeline_mode=pl.Buffered(1))
        return pl.BlockSpec(shape, imap)

    try:
        info = pltpu.get_tpu_info()
        vmem_cap = int(getattr(info, "vmem_capacity_bytes", 64 * 1024 * 1024))
    except Exception:
        vmem_cap = 64 * 1024 * 1024
    vmem_limit = max(32 * 1024 * 1024,
                     min(96 * 1024 * 1024, (vmem_cap * 3) // 4))

    cfg = (d, H, W, TH, Wp8, d8, tail)
    kernel = functools.partial(_bottleneck_kernel, cfg)

    def run(sb):
        f = pl.pallas_call(
            kernel,
            out_shape=jax.ShapeDtypeStruct((N, n_t, L, Cp), out_dtype),
            grid_spec=pltpu.PrefetchScalarGridSpec(
                num_scalar_prefetch=0,
                grid=(N, n_t),
                in_specs=[
                    pl.BlockSpec((1, 1, R, Cp), lambda n, t: (n, t, 0, 0)),
                    const_spec(w1q.shape, sb), const_spec(b1q.shape, sb),
                    const_spec(w2q.shape, sb), const_spec(b2q.shape, sb),
                    const_spec(w3q.shape, sb), const_spec(b3q.shape, sb),
                ],
                out_specs=pl.BlockSpec((1, 1, L, Cp), lambda n, t: (n, t, 0, 0)),
                scratch_shapes=[pltpu.VMEM((R_s, Pp), cdt)],
            ),
            compiler_params=pltpu.CompilerParams(
                dimension_semantics=("parallel", "parallel"),
                vmem_limit_bytes=vmem_limit),
        )
        out = f(x_tiles, w1q, b1q, w2q, b2q, w3q, b3q)
        return jax.block_until_ready(out)

    try:
        out_t = run(use_sb)
    except Exception:
        if not use_sb:
            raise
        out_t = run(False)  # fall back to default double-buffered weights

    # (N, n_t, L, Cp) -> (N, H, Wp8, Cp) -> drop halo/junk columns & channels.
    out = out_t.reshape(N, n_t, TH, Wp8, Cp).reshape(N, H, Wp8, Cp)
    return out[:, :, d:d + W, :Cout]


def _fold_bn(gamma, beta, mean, var, eps=1e-5):
    scale = gamma / jnp.sqrt(var + eps)
    bias = beta - mean * scale
    return scale, bias


def _ref_forward(x, w1, w2, w3, s1, b1, s2, b2, s3, b3, dilation=1):
    """Pure-f32 JAX reference (module semantics, unfolded BN)."""
    dn = ("NHWC", "HWIO", "NHWC")
    h = lax.conv_general_dilated(x, w1[None, None], (1, 1), "VALID",
                                 dimension_numbers=dn)
    h = jnp.maximum(h * s1 + b1, 0.0)
    h = lax.conv_general_dilated(h, w2, (1, 1),
                                 [(dilation, dilation)] * 2,
                                 rhs_dilation=(dilation, dilation),
                                 dimension_numbers=dn)
    h = jnp.maximum(h * s2 + b2, 0.0)
    h = lax.conv_general_dilated(h, w3[None, None], (1, 1), "VALID",
                                 dimension_numbers=dn)
    h = h * s3 + b3
    return jnp.maximum(h + x, 0.0)


def _ref_forward_matched(x, w1, w2, w3, s1, b1, s2, b2, s3, b3,
                         dilation=1, cdt=jnp.bfloat16):
    """Reference with the kernel's mixed precision (bf16 operands, f32 acc)."""
    dn = ("NHWC", "HWIO", "NHWC")
    xq = x.astype(cdt)
    w1q = (w1 * s1[None, :]).astype(cdt)
    w2q = (w2 * s2[None, None, None, :]).astype(cdt)
    w3q = (w3 * s3[None, :]).astype(cdt)
    h = lax.conv_general_dilated(xq, w1q[None, None], (1, 1), "VALID",
                                 dimension_numbers=dn,
                                 preferred_element_type=jnp.float32)
    h = jnp.maximum(h + b1, 0.0).astype(cdt)
    h = lax.conv_general_dilated(h, w2q, (1, 1), [(dilation, dilation)] * 2,
                                 rhs_dilation=(dilation, dilation),
                                 dimension_numbers=dn,
                                 preferred_element_type=jnp.float32)
    h = jnp.maximum(h + b2, 0.0).astype(cdt)
    h = lax.conv_general_dilated(h, w3q[None, None], (1, 1), "VALID",
                                 dimension_numbers=dn,
                                 preferred_element_type=jnp.float32)
    h = h + b3
    return jnp.maximum(h + xq.astype(jnp.float32), 0.0)


if __name__ == "__main__":
    # Bottleneck(inplanes=16, planes=4): inplanes == planes*expansion so
    # downsample=None / stride=1 is valid.
    N, H, W = 2, 16, 16
    inplanes, planes = 16, 4

    key = jax.random.PRNGKey(0)
    ks = jax.random.split(key, 8)
    x_nchw = jax.random.normal(ks[0], (N, inplanes, H, W), jnp.float32)
    w1 = jax.random.normal(ks[1], (inplanes, planes), jnp.float32) * 0.1
    w2 = jax.random.normal(ks[2], (3, 3, planes, planes), jnp.float32) * 0.1
    w3 = jax.random.normal(ks[3], (planes, planes * 4), jnp.float32) * 0.1

    def make_bn(k, c):
        k1, k2, k3, k4 = jax.random.split(k, 4)
        gamma = 1.0 + 0.1 * jax.random.normal(k1, (c,), jnp.float32)
        beta = 0.1 * jax.random.normal(k2, (c,), jnp.float32)
        mean = 0.1 * jax.random.normal(k3, (c,), jnp.float32)
        var = 0.5 + jax.random.uniform(k4, (c,), jnp.float32)
        return _fold_bn(gamma, beta, mean, var)

    s1, b1 = make_bn(ks[4], planes)
    s2, b2 = make_bn(ks[5], planes)
    s3, b3 = make_bn(ks[6], planes * 4)

    # Kernel runs in NHWC; transpose the PyTorch-style NCHW at the boundary.
    x_nhwc = jnp.transpose(x_nchw, (0, 2, 3, 1))

    ok = True
    # (dilation=1, row-tiled) and (dilation=2, whole-image tile) configs.
    for dil, rt in ((1, 8), (2, 16)):
        out = bottleneck_pallas(x_nhwc, w1, w2, w3, s1, b1, s2, b2, s3, b3,
                                dilation=dil, row_tile=rt)
        out = jax.block_until_ready(out)
        assert out.shape == (N, H, W, inplanes)
        ref_f32 = _ref_forward(x_nhwc, w1, w2, w3, s1, b1, s2, b2, s3, b3,
                               dilation=dil)
        ref_bf = _ref_forward_matched(x_nhwc, w1, w2, w3, s1, b1, s2, b2,
                                      s3, b3, dilation=dil)
        ok &= bool(jnp.allclose(out, ref_bf, rtol=2e-3, atol=2e-3))
        ok &= bool(jnp.allclose(out, ref_f32, rtol=5e-2, atol=5e-2))
    assert ok, "mismatch vs reference"

    out_nchw = jnp.transpose(out, (0, 3, 1, 2))  # back to PyTorch layout
    assert out_nchw.shape == (N, inplanes, H, W)
    print("KERNEL_OK")
</pallas_src>

<mosaic_0001>
module attributes {stable_mosaic.version = 11 : i64} {
  func.func @_bottleneck_kernel(%arg0: i32, %arg1: i32, %arg2: memref<1x1x240x128xbf16, #tpu.memory_space<vmem>>, %arg3: memref<128x128xbf16, #tpu.memory_space<vmem>>, %arg4: memref<1x128xf32, #tpu.memory_space<vmem>>, %arg5: memref<9x128x128xbf16, #tpu.memory_space<vmem>>, %arg6: memref<1x128xf32, #tpu.memory_space<vmem>>, %arg7: memref<128x128xbf16, #tpu.memory_space<vmem>>, %arg8: memref<1x128xf32, #tpu.memory_space<vmem>>, %arg9: memref<1x1x192x128xf32, #tpu.memory_space<vmem>>, %arg10: memref<256x128xbf16, #tpu.memory_space<vmem>>) attributes {dimension_semantics = [#tpu.dimension_semantics<parallel>, #tpu.dimension_semantics<parallel>], iteration_bounds = array<i64: 2, 2>, scalar_prefetch = 0 : i64, scratch_operands = 1 : i64, tpu.core_type = #tpu.core_type<tc>, window_params = [{transform_indices = @transform_0, window_bounds = array<i64: 1, 1, 240, 128>}, {pipeline_mode = #tpu.pipeline_mode<synchronous>, transform_indices = @transform_1, window_bounds = array<i64: 128, 128>}, {pipeline_mode = #tpu.pipeline_mode<synchronous>, transform_indices = @transform_2, window_bounds = array<i64: 1, 128>}, {pipeline_mode = #tpu.pipeline_mode<synchronous>, transform_indices = @transform_3, window_bounds = array<i64: 9, 128, 128>}, {pipeline_mode = #tpu.pipeline_mode<synchronous>, transform_indices = @transform_4, window_bounds = array<i64: 1, 128>}, {pipeline_mode = #tpu.pipeline_mode<synchronous>, transform_indices = @transform_5, window_bounds = array<i64: 128, 128>}, {pipeline_mode = #tpu.pipeline_mode<synchronous>, transform_indices = @transform_6, window_bounds = array<i64: 1, 128>}, {transform_indices = @transform_7, window_bounds = array<i64: 1, 1, 192, 128>}]} {
    %c0 = arith.constant 0 : index
    %c0_0 = arith.constant 0 : index
    %c0_1 = arith.constant 0 : index
    %c0_2 = arith.constant 0 : index
    %0 = vector.load %arg2[%c0, %c0_0, %c0_1, %c0_2] : memref<1x1x240x128xbf16, #tpu.memory_space<vmem>>, vector<1x1x240x128xbf16>
    %1 = vector.shape_cast %0 : vector<1x1x240x128xbf16> to vector<240x128xbf16>
    %c0_3 = arith.constant 0 : index
    %c0_4 = arith.constant 0 : index
    %2 = vector.load %arg3[%c0_3, %c0_4] : memref<128x128xbf16, #tpu.memory_space<vmem>>, vector<128x128xbf16>
    %cst = arith.constant dense<0.000000e+00> : vector<240x128xf32>
    %3 = tpu.matmul %1, %2, %cst {dimension_numbers = #tpu.dot_dimension_numbers<[1], [0], [0], [1], [0, 0, 1, 1], [], []>} : vector<240x128xbf16>, vector<128x128xbf16>, vector<240x128xf32> -> vector<240x128xf32>
    %c0_5 = arith.constant 0 : index
    %c0_6 = arith.constant 0 : index
    %4 = vector.load %arg4[%c0_5, %c0_6] : memref<1x128xf32, #tpu.memory_space<vmem>>, vector<1x128xf32>
    %5 = vector.broadcast %4 : vector<1x128xf32> to vector<240x128xf32>
    %6 = arith.addf %3, %5 : vector<240x128xf32>
    %cst_7 = arith.constant 0.000000e+00 : f32
    %7 = vector.broadcast %cst_7 : f32 to vector<240x128xf32>
    %8 = arith.maximumf %6, %7 : vector<240x128xf32>
    %9 = vector.shape_cast %8 : vector<240x128xf32> to vector<10x24x128xf32>
    %10 = tpu.iota {dimensions = array<i32: 0>} : vector<10x24x128xi32>
    %c8_i32 = arith.constant 8 : i32
    %11 = arith.muli %arg1, %c8_i32 : i32
    %12 = vector.broadcast %11 : i32 to vector<10x24x128xi32>
    %13 = arith.addi %10, %12 : vector<10x24x128xi32>
    %14 = tpu.iota {dimensions = array<i32: 1>} : vector<10x24x128xi32>
    %c1_i32 = arith.constant 1 : i32
    %15 = vector.broadcast %c1_i32 : i32 to vector<10x24x128xi32>
    %16 = arith.cmpi sge, %13, %15 : vector<10x24x128xi32>
    %c17_i32 = arith.constant 17 : i32
    %17 = vector.broadcast %c17_i32 : i32 to vector<10x24x128xi32>
    %18 = arith.cmpi slt, %13, %17 : vector<10x24x128xi32>
    %19 = arith.andi %16, %18 : vector<10x24x128xi1>
    %c1_i32_8 = arith.constant 1 : i32
    %20 = vector.broadcast %c1_i32_8 : i32 to vector<10x24x128xi32>
    %21 = arith.cmpi sge, %14, %20 : vector<10x24x128xi32>
    %22 = arith.andi %19, %21 : vector<10x24x128xi1>
    %c17_i32_9 = arith.constant 17 : i32
    %23 = vector.broadcast %c17_i32_9 : i32 to vector<10x24x128xi32>
    %24 = arith.cmpi slt, %14, %23 : vector<10x24x128xi32>
    %25 = arith.andi %22, %24 : vector<10x24x128xi1>
    %cst_10 = arith.constant 0.000000e+00 : f32
    %26 = vector.broadcast %cst_10 : f32 to vector<10x24x128xf32>
    %27 = arith.select %25, %9, %26 : vector<10x24x128xi1>, vector<10x24x128xf32>
    %28 = vector.shape_cast %27 : vector<10x24x128xf32> to vector<240x128xf32>
    %29 = arith.truncf %28 : vector<240x128xf32> to vector<240x128xbf16>
    %c8 = arith.constant 8 : index
    %c0_11 = arith.constant 0 : index
    %30 = vector.load %arg10[%c8, %c0_11] : memref<256x128xbf16, #tpu.memory_space<vmem>>, vector<240x128xbf16>
    tpu.vector_store %arg10[%c8, %c0_11], %29 {strides = array<i32>} : memref<256x128xbf16, #tpu.memory_space<vmem>>, vector<240x128xbf16>,
    %cst_12 = arith.constant 0.000000e+00 : bf16
    %31 = vector.broadcast %cst_12 : bf16 to vector<8x128xbf16>
    %c0_13 = arith.constant 0 : index
    %c0_14 = arith.constant 0 : index
    %32 = vector.load %arg10[%c0_13, %c0_14] : memref<256x128xbf16, #tpu.memory_space<vmem>>, vector<8x128xbf16>
    tpu.vector_store %arg10[%c0_13, %c0_14], %31 {strides = array<i32>} : memref<256x128xbf16, #tpu.memory_space<vmem>>, vector<8x128xbf16>,
    %cst_15 = arith.constant 0.000000e+00 : bf16
    %33 = vector.broadcast %cst_15 : bf16 to vector<8x128xbf16>
    %c248 = arith.constant 248 : index
    %c0_16 = arith.constant 0 : index
    %34 = vector.load %arg10[%c248, %c0_16] : memref<256x128xbf16, #tpu.memory_space<vmem>>, vector<8x128xbf16>
    tpu.vector_store %arg10[%c248, %c0_16], %33 {strides = array<i32>} : memref<256x128xbf16, #tpu.memory_space<vmem>>, vector<8x128xbf16>,
    %cst_17 = arith.constant 0.000000e+00 : f32
    %35 = vector.broadcast %cst_17 : f32 to vector<192x128xf32>
    %c7 = arith.constant 7 : index
    %c0_18 = arith.constant 0 : index
    %36 = vector.load %arg10[%c7, %c0_18] : memref<256x128xbf16, #tpu.memory_space<vmem>>, vector<192x128xbf16>
    %c0_19 = arith.constant 0 : index
    %c0_20 = arith.constant 0 : index
    %c0_21 = arith.constant 0 : index
    %37 = vector.load %arg5[%c0_19, %c0_20, %c0_21] : memref<9x128x128xbf16, #tpu.memory_space<vmem>>, vector<1x128x128xbf16>
    %38 = vector.shape_cast %37 : vector<1x128x128xbf16> to vector<128x128xbf16>
    %cst_22 = arith.constant dense<0.000000e+00> : vector<192x128xf32>
    %39 = tpu.matmul %36, %38, %cst_22 {dimension_numbers = #tpu.dot_dimension_numbers<[1], [0], [0], [1], [0, 0, 1, 1], [], []>} : vector<192x128xbf16>, vector<128x128xbf16>, vector<192x128xf32> -> vector<192x128xf32>
    %40 = arith.addf %35, %39 : vector<192x128xf32>
    %c8_23 = arith.constant 8 : index
    %c0_24 = arith.constant 0 : index
    %41 = vector.load %arg10[%c8_23, %c0_24] : memref<256x128xbf16, #tpu.memory_space<vmem>>, vector<192x128xbf16>
    %c1 = arith.constant 1 : index
    %c0_25 = arith.constant 0 : index
    %c0_26 = arith.constant 0 : index
    %42 = vector.load %arg5[%c1, %c0_25, %c0_26] : memref<9x128x128xbf16, #tpu.memory_space<vmem>>, vector<1x128x128xbf16>
    %43 = vector.shape_cast %42 : vector<1x128x128xbf16> to vector<128x128xbf16>
    %cst_27 = arith.constant dense<0.000000e+00> : vector<192x128xf32>
    %44 = tpu.matmul %41, %43, %cst_27 {dimension_numbers = #tpu.dot_dimension_numbers<[1], [0], [0], [1], [0, 0, 1, 1], [], []>} : vector<192x128xbf16>, vector<128x128xbf16>, vector<192x128xf32> -> vector<192x128xf32>
    %45 = arith.addf %40, %44 : vector<192x128xf32>
    %c9 = arith.constant 9 : index
    %c0_28 = arith.constant 0 : index
    %46 = vector.load %arg10[%c9, %c0_28] : memref<256x128xbf16, #tpu.memory_space<vmem>>, vector<192x128xbf16>
    %c2 = arith.constant 2 : index
    %c0_29 = arith.constant 0 : index
    %c0_30 = arith.constant 0 : index
    %47 = vector.load %arg5[%c2, %c0_29, %c0_30] : memref<9x128x128xbf16, #tpu.memory_space<vmem>>, vector<1x128x128xbf16>
    %48 = vector.shape_cast %47 : vector<1x128x128xbf16> to vector<128x128xbf16>
    %cst_31 = arith.constant dense<0.000000e+00> : vector<192x128xf32>
    %49 = tpu.matmul %46, %48, %cst_31 {dimension_numbers = #tpu.dot_dimension_numbers<[1], [0], [0], [1], [0, 0, 1, 1], [], []>} : vector<192x128xbf16>, vector<128x128xbf16>, vector<192x128xf32> -> vector<192x128xf32>
    %50 = arith.addf %45, %49 : vector<192x128xf32>
    %c31 = arith.constant 31 : index
    %c0_32 = arith.constant 0 : index
    %51 = vector.load %arg10[%c31, %c0_32] : memref<256x128xbf16, #tpu.memory_space<vmem>>, vector<192x128xbf16>
    %c3 = arith.constant 3 : index
    %c0_33 = arith.constant 0 : index
    %c0_34 = arith.constant 0 : index
    %52 = vector.load %arg5[%c3, %c0_33, %c0_34] : memref<9x128x128xbf16, #tpu.memory_space<vmem>>, vector<1x128x128xbf16>
    %53 = vector.shape_cast %52 : vector<1x128x128xbf16> to vector<128x128xbf16>
    %cst_35 = arith.constant dense<0.000000e+00> : vector<192x128xf32>
    %54 = tpu.matmul %51, %53, %cst_35 {dimension_numbers = #tpu.dot_dimension_numbers<[1], [0], [0], [1], [0, 0, 1, 1], [], []>} : vector<192x128xbf16>, vector<128x128xbf16>, vector<192x128xf32> -> vector<192x128xf32>
    %55 = arith.addf %50, %54 : vector<192x128xf32>
    %c32 = arith.constant 32 : index
    %c0_36 = arith.constant 0 : index
    %56 = vector.load %arg10[%c32, %c0_36] : memref<256x128xbf16, #tpu.memory_space<vmem>>, vector<192x128xbf16>
    %c4 = arith.constant 4 : index
    %c0_37 = arith.constant 0 : index
    %c0_38 = arith.constant 0 : index
    %57 = vector.load %arg5[%c4, %c0_37, %c0_38] : memref<9x128x128xbf16, #tpu.memory_space<vmem>>, vector<1x128x128xbf16>
    %58 = vector.shape_cast %57 : vector<1x128x128xbf16> to vector<128x128xbf16>
    %cst_39 = arith.constant dense<0.000000e+00> : vector<192x128xf32>
    %59 = tpu.matmul %56, %58, %cst_39 {dimension_numbers = #tpu.dot_dimension_numbers<[1], [0], [0], [1], [0, 0, 1, 1], [], []>} : vector<192x128xbf16>, vector<128x128xbf16>, vector<192x128xf32> -> vector<192x128xf32>
    %60 = arith.addf %55, %59 : vector<192x128xf32>
    %c33 = arith.constant 33 : index
    %c0_40 = arith.constant 0 : index
    %61 = vector.load %arg10[%c33, %c0_40] : memref<256x128xbf16, #tpu.memory_space<vmem>>, vector<192x128xbf16>
    %c5 = arith.constant 5 : index
    %c0_41 = arith.constant 0 : index
    %c0_42 = arith.constant 0 : index
    %62 = vector.load %arg5[%c5, %c0_41, %c0_42] : memref<9x128x128xbf16, #tpu.memory_space<vmem>>, vector<1x128x128xbf16>
    %63 = vector.shape_cast %62 : vector<1x128x128xbf16> to vector<128x128xbf16>
    %cst_43 = arith.constant dense<0.000000e+00> : vector<192x128xf32>
    %64 = tpu.matmul %61, %63, %cst_43 {dimension_numbers = #tpu.dot_dimension_numbers<[1], [0], [0], [1], [0, 0, 1, 1], [], []>} : vector<192x128xbf16>, vector<128x128xbf16>, vector<192x128xf32> -> vector<192x128xf32>
    %65 = arith.addf %60, %64 : vector<192x128xf32>
    %c55 = arith.constant 55 : index
    %c0_44 = arith.constant 0 : index
    %66 = vector.load %arg10[%c55, %c0_44] : memref<256x128xbf16, #tpu.memory_space<vmem>>, vector<192x128xbf16>
    %c6 = arith.constant 6 : index
    %c0_45 = arith.constant 0 : index
    %c0_46 = arith.constant 0 : index
    %67 = vector.load %arg5[%c6, %c0_45, %c0_46] : memref<9x128x128xbf16, #tpu.memory_space<vmem>>, vector<1x128x128xbf16>
    %68 = vector.shape_cast %67 : vector<1x128x128xbf16> to vector<128x128xbf16>
    %cst_47 = arith.constant dense<0.000000e+00> : vector<192x128xf32>
    %69 = tpu.matmul %66, %68, %cst_47 {dimension_numbers = #tpu.dot_dimension_numbers<[1], [0], [0], [1], [0, 0, 1, 1], [], []>} : vector<192x128xbf16>, vector<128x128xbf16>, vector<192x128xf32> -> vector<192x128xf32>
    %70 = arith.addf %65, %69 : vector<192x128xf32>
    %c56 = arith.constant 56 : index
    %c0_48 = arith.constant 0 : index
    %71 = vector.load %arg10[%c56, %c0_48] : memref<256x128xbf16, #tpu.memory_space<vmem>>, vector<192x128xbf16>
    %c7_49 = arith.constant 7 : index
    %c0_50 = arith.constant 0 : index
    %c0_51 = arith.constant 0 : index
    %72 = vector.load %arg5[%c7_49, %c0_50, %c0_51] : memref<9x128x128xbf16, #tpu.memory_space<vmem>>, vector<1x128x128xbf16>
    %73 = vector.shape_cast %72 : vector<1x128x128xbf16> to vector<128x128xbf16>
    %cst_52 = arith.constant dense<0.000000e+00> : vector<192x128xf32>
    %74 = tpu.matmul %71, %73, %cst_52 {dimension_numbers = #tpu.dot_dimension_numbers<[1], [0], [0], [1], [0, 0, 1, 1], [], []>} : vector<192x128xbf16>, vector<128x128xbf16>, vector<192x128xf32> -> vector<192x128xf32>
    %75 = arith.addf %70, %74 : vector<192x128xf32>
    %c57 = arith.constant 57 : index
    %c0_53 = arith.constant 0 : index
    %76 = vector.load %arg10[%c57, %c0_53] : memref<256x128xbf16, #tpu.memory_space<vmem>>, vector<192x128xbf16>
    %c8_54 = arith.constant 8 : index
    %c0_55 = arith.constant 0 : index
    %c0_56 = arith.constant 0 : index
    %77 = vector.load %arg5[%c8_54, %c0_55, %c0_56] : memref<9x128x128xbf16, #tpu.memory_space<vmem>>, vector<1x128x128xbf16>
    %78 = vector.shape_cast %77 : vector<1x128x128xbf16> to vector<128x128xbf16>
    %cst_57 = arith.constant dense<0.000000e+00> : vector<192x128xf32>
    %79 = tpu.matmul %76, %78, %cst_57 {dimension_numbers = #tpu.dot_dimension_numbers<[1], [0], [0], [1], [0, 0, 1, 1], [], []>} : vector<192x128xbf16>, vector<128x128xbf16>, vector<192x128xf32> -> vector<192x128xf32>
    %80 = arith.addf %75, %79 : vector<192x128xf32>
    %c0_58 = arith.constant 0 : index
    %c0_59 = arith.constant 0 : index
    %81 = vector.load %arg6[%c0_58, %c0_59] : memref<1x128xf32, #tpu.memory_space<vmem>>, vector<1x128xf32>
    %82 = vector.broadcast %81 : vector<1x128xf32> to vector<192x128xf32>
    %83 = arith.addf %80, %82 : vector<192x128xf32>
    %cst_60 = arith.constant 0.000000e+00 : f32
    %84 = vector.broadcast %cst_60 : f32 to vector<192x128xf32>
    %85 = arith.maximumf %83, %84 : vector<192x128xf32>
    %86 = arith.truncf %85 : vector<192x128xf32> to vector<192x128xbf16>
    %c0_61 = arith.constant 0 : index
    %c0_62 = arith.constant 0 : index
    %87 = vector.load %arg7[%c0_61, %c0_62] : memref<128x128xbf16, #tpu.memory_space<vmem>>, vector<128x128xbf16>
    %cst_63 = arith.constant dense<0.000000e+00> : vector<192x128xf32>
    %88 = tpu.matmul %86, %87, %cst_63 {dimension_numbers = #tpu.dot_dimension_numbers<[1], [0], [0], [1], [0, 0, 1, 1], [], []>} : vector<192x128xbf16>, vector<128x128xbf16>, vector<192x128xf32> -> vector<192x128xf32>
    %c0_64 = arith.constant 0 : index
    %c0_65 = arith.constant 0 : index
    %89 = vector.load %arg8[%c0_64, %c0_65] : memref<1x128xf32, #tpu.memory_space<vmem>>, vector<1x128xf32>
    %90 = vector.broadcast %89 : vector<1x128xf32> to vector<192x128xf32>
    %91 = arith.addf %88, %90 : vector<192x128xf32>
    %92 = vector.extract_strided_slice %1 {offsets = [24, 0], sizes = [192, 128], strides = [1, 1]} : vector<240x128xbf16> to vector<192x128xbf16>
    %93 = arith.extf %92 : vector<192x128xbf16> to vector<192x128xf32>
    %94 = arith.addf %91, %93 : vector<192x128xf32>
    %cst_66 = arith.constant 0.000000e+00 : f32
    %95 = vector.broadcast %cst_66 : f32 to vector<192x128xf32>
    %96 = arith.maximumf %94, %95 : vector<192x128xf32>
    %c0_67 = arith.constant 0 : index
    %c0_68 = arith.constant 0 : index
    %c0_69 = arith.constant 0 : index
    %c0_70 = arith.constant 0 : index
    %97 = vector.load %arg9[%c0_67, %c0_68, %c0_69, %c0_70] : memref<1x1x192x128xf32, #tpu.memory_space<vmem>>, vector<1x1x192x128xf32>
    %98 = vector.shape_cast %97 : vector<1x1x192x128xf32> to vector<192x128xf32>
    %99 = vector.shape_cast %96 : vector<192x128xf32> to vector<1x1x192x128xf32>
    tpu.vector_store %arg9[%c0_67, %c0_68, %c0_69, %c0_70], %99 {strides = array<i32>} : memref<1x1x192x128xf32, #tpu.memory_space<vmem>>, vector<1x1x192x128xf32>,
    return
  }
  func.func @transform_0(%arg0: i32, %arg1: i32) -> (i32, i32, i32, i32) {
    %c0_i32 = arith.constant 0 : i32
    %c0_i32_0 = arith.constant 0 : i32
    %c0_i32_1 = arith.constant 0 : i32
    return %arg0, %arg1, %c0_i32, %c0_i32_0 : i32, i32, i32, i32
  }
  func.func @transform_1(%arg0: i32, %arg1: i32) -> (i32, i32) {
    %c0_i32 = arith.constant 0 : i32
    %c0_i32_0 = arith.constant 0 : i32
    %c0_i32_1 = arith.constant 0 : i32
    return %c0_i32, %c0_i32_0 : i32, i32
  }
  func.func @transform_2(%arg0: i32, %arg1: i32) -> (i32, i32) {
    %c0_i32 = arith.constant 0 : i32
    %c0_i32_0 = arith.constant 0 : i32
    %c0_i32_1 = arith.constant 0 : i32
    return %c0_i32, %c0_i32_0 : i32, i32
  }
  func.func @transform_3(%arg0: i32, %arg1: i32) -> (i32, i32, i32) {
    %c0_i32 = arith.constant 0 : i32
    %c0_i32_0 = arith.constant 0 : i32
    %c0_i32_1 = arith.constant 0 : i32
    %c0_i32_2 = arith.constant 0 : i32
    return %c0_i32, %c0_i32_0, %c0_i32_1 : i32, i32, i32
  }
  func.func @transform_4(%arg0: i32, %arg1: i32) -> (i32, i32) {
    %c0_i32 = arith.constant 0 : i32
    %c0_i32_0 = arith.constant 0 : i32
    %c0_i32_1 = arith.constant 0 : i32
    return %c0_i32, %c0_i32_0 : i32, i32
  }
  func.func @transform_5(%arg0: i32, %arg1: i32) -> (i32, i32) {
    %c0_i32 = arith.constant 0 : i32
    %c0_i32_0 = arith.constant 0 : i32
    %c0_i32_1 = arith.constant 0 : i32
    return %c0_i32, %c0_i32_0 : i32, i32
  }
  func.func @transform_6(%arg0: i32, %arg1: i32) -> (i32, i32) {
    %c0_i32 = arith.constant 0 : i32
    %c0_i32_0 = arith.constant 0 : i32
    %c0_i32_1 = arith.constant 0 : i32
    return %c0_i32, %c0_i32_0 : i32, i32
  }
  func.func @transform_7(%arg0: i32, %arg1: i32) -> (i32, i32, i32, i32) {
    %c0_i32 = arith.constant 0 : i32
    %c0_i32_0 = arith.constant 0 : i32
    %c0_i32_1 = arith.constant 0 : i32
    return %arg0, %arg1, %c0_i32, %c0_i32_0 : i32, i32, i32, i32
  }
}

module attributes {stable_mosaic.version = 11 : i64} {
  func.func @_bottleneck_kernel(%arg0: i32, %arg1: i32, %arg2: memref<1x1x240x128xbf16, #tpu.memory_space<vmem>>, %arg3: memref<128x128xbf16, #tpu.memory_space<vmem>>, %arg4: memref<1x128xf32, #tpu.memory_space<vmem>>, %arg5: memref<9x128x128xbf16, #tpu.memory_space<vmem>>, %arg6: memref<1x128xf32, #tpu.memory_space<vmem>>, %arg7: memref<128x128xbf16, #tpu.memory_space<vmem>>, %arg8: memref<1x128xf32, #tpu.memory_space<vmem>>, %arg9: memref<1x1x192x128xf32, #tpu.memory_space<vmem>>, %arg10: memref<256x128xbf16, #tpu.memory_space<vmem>>) attributes {dimension_semantics = [#tpu.dimension_semantics<parallel>, #tpu.dimension_semantics<parallel>], iteration_bounds = array<i64: 2, 2>, scalar_prefetch = 0 : i64, scratch_operands = 1 : i64, tpu.core_type = #tpu.core_type<tc>, window_params = [{transform_indices = @transform_0, window_bounds = array<i64: 1, 1, 240, 128>}, {pipeline_mode = #tpu.pipeline_mode<synchronous>, transform_indices = @transform_1, window_bounds = array<i64: 128, 128>}, {pipeline_mode = #tpu.pipeline_mode<synchronous>, transform_indices = @transform_2, window_bounds = array<i64: 1, 128>}, {pipeline_mode = #tpu.pipeline_mode<synchronous>, transform_indices = @transform_3, window_bounds = array<i64: 9, 128, 128>}, {pipeline_mode = #tpu.pipeline_mode<synchronous>, transform_indices = @transform_4, window_bounds = array<i64: 1, 128>}, {pipeline_mode = #tpu.pipeline_mode<synchronous>, transform_indices = @transform_5, window_bounds = array<i64: 128, 128>}, {pipeline_mode = #tpu.pipeline_mode<synchronous>, transform_indices = @transform_6, window_bounds = array<i64: 1, 128>}, {transform_indices = @transform_7, window_bounds = array<i64: 1, 1, 192, 128>}]} {
    %c0 = arith.constant 0 : index
    %c0_0 = arith.constant 0 : index
    %c0_1 = arith.constant 0 : index
    %c0_2 = arith.constant 0 : index
    %0 = vector.load %arg2[%c0, %c0_0, %c0_1, %c0_2] : memref<1x1x240x128xbf16, #tpu.memory_space<vmem>>, vector<1x1x240x128xbf16>
    %1 = vector.shape_cast %0 : vector<1x1x240x128xbf16> to vector<240x128xbf16>
    %c0_3 = arith.constant 0 : index
    %c0_4 = arith.constant 0 : index
    %2 = vector.load %arg3[%c0_3, %c0_4] : memref<128x128xbf16, #tpu.memory_space<vmem>>, vector<128x128xbf16>
    %cst = arith.constant dense<0.000000e+00> : vector<240x128xf32>
    %3 = tpu.matmul %1, %2, %cst {dimension_numbers = #tpu.dot_dimension_numbers<[1], [0], [0], [1], [0, 0, 1, 1], [], []>} : vector<240x128xbf16>, vector<128x128xbf16>, vector<240x128xf32> -> vector<240x128xf32>
    %c0_5 = arith.constant 0 : index
    %c0_6 = arith.constant 0 : index
    %4 = vector.load %arg4[%c0_5, %c0_6] : memref<1x128xf32, #tpu.memory_space<vmem>>, vector<1x128xf32>
    %5 = vector.broadcast %4 : vector<1x128xf32> to vector<240x128xf32>
    %6 = arith.addf %3, %5 : vector<240x128xf32>
    %cst_7 = arith.constant 0.000000e+00 : f32
    %7 = vector.broadcast %cst_7 : f32 to vector<240x128xf32>
    %8 = arith.maximumf %6, %7 : vector<240x128xf32>
    %9 = vector.shape_cast %8 : vector<240x128xf32> to vector<10x24x128xf32>
    %10 = tpu.iota {dimensions = array<i32: 0>} : vector<10x24x128xi32>
    %c8_i32 = arith.constant 8 : i32
    %11 = arith.muli %arg1, %c8_i32 : i32
    %12 = vector.broadcast %11 : i32 to vector<10x24x128xi32>
    %13 = arith.addi %10, %12 : vector<10x24x128xi32>
    %14 = tpu.iota {dimensions = array<i32: 1>} : vector<10x24x128xi32>
    %c1_i32 = arith.constant 1 : i32
    %15 = vector.broadcast %c1_i32 : i32 to vector<10x24x128xi32>
    %16 = arith.cmpi sge, %13, %15 : vector<10x24x128xi32>
    %c17_i32 = arith.constant 17 : i32
    %17 = vector.broadcast %c17_i32 : i32 to vector<10x24x128xi32>
    %18 = arith.cmpi slt, %13, %17 : vector<10x24x128xi32>
    %19 = arith.andi %16, %18 : vector<10x24x128xi1>
    %c1_i32_8 = arith.constant 1 : i32
    %20 = vector.broadcast %c1_i32_8 : i32 to vector<10x24x128xi32>
    %21 = arith.cmpi sge, %14, %20 : vector<10x24x128xi32>
    %22 = arith.andi %19, %21 : vector<10x24x128xi1>
    %c17_i32_9 = arith.constant 17 : i32
    %23 = vector.broadcast %c17_i32_9 : i32 to vector<10x24x128xi32>
    %24 = arith.cmpi slt, %14, %23 : vector<10x24x128xi32>
    %25 = arith.andi %22, %24 : vector<10x24x128xi1>
    %cst_10 = arith.constant 0.000000e+00 : f32
    %26 = vector.broadcast %cst_10 : f32 to vector<10x24x128xf32>
    %27 = arith.select %25, %9, %26 : vector<10x24x128xi1>, vector<10x24x128xf32>
    %28 = vector.shape_cast %27 : vector<10x24x128xf32> to vector<240x128xf32>
    %29 = arith.truncf %28 : vector<240x128xf32> to vector<240x128xbf16>
    %c8 = arith.constant 8 : index
    %c0_11 = arith.constant 0 : index
    %30 = vector.load %arg10[%c8, %c0_11] : memref<256x128xbf16, #tpu.memory_space<vmem>>, vector<240x128xbf16>
    tpu.vector_store %arg10[%c8, %c0_11], %29 {strides = array<i32>} : memref<256x128xbf16, #tpu.memory_space<vmem>>, vector<240x128xbf16>,
    %cst_12 = arith.constant 0.000000e+00 : bf16
    %31 = vector.broadcast %cst_12 : bf16 to vector<8x128xbf16>
    %c0_13 = arith.constant 0 : index
    %c0_14 = arith.constant 0 : index
    %32 = vector.load %arg10[%c0_13, %c0_14] : memref<256x128xbf16, #tpu.memory_space<vmem>>, vector<8x128xbf16>
    tpu.vector_store %arg10[%c0_13, %c0_14], %31 {strides = array<i32>} : memref<256x128xbf16, #tpu.memory_space<vmem>>, vector<8x128xbf16>,
    %cst_15 = arith.constant 0.000000e+00 : bf16
    %33 = vector.broadcast %cst_15 : bf16 to vector<8x128xbf16>
    %c248 = arith.constant 248 : index
    %c0_16 = arith.constant 0 : index
    %34 = vector.load %arg10[%c248, %c0_16] : memref<256x128xbf16, #tpu.memory_space<vmem>>, vector<8x128xbf16>
    tpu.vector_store %arg10[%c248, %c0_16], %33 {strides = array<i32>} : memref<256x128xbf16, #tpu.memory_space<vmem>>, vector<8x128xbf16>,
    %cst_17 = arith.constant 0.000000e+00 : f32
    %35 = vector.broadcast %cst_17 : f32 to vector<192x128xf32>
    %c7 = arith.constant 7 : index
    %c0_18 = arith.constant 0 : index
    %36 = vector.load %arg10[%c7, %c0_18] : memref<256x128xbf16, #tpu.memory_space<vmem>>, vector<192x128xbf16>
    %c0_19 = arith.constant 0 : index
    %c0_20 = arith.constant 0 : index
    %c0_21 = arith.constant 0 : index
    %37 = vector.load %arg5[%c0_19, %c0_20, %c0_21] : memref<9x128x128xbf16, #tpu.memory_space<vmem>>, vector<1x128x128xbf16>
    %38 = vector.shape_cast %37 : vector<1x128x128xbf16> to vector<128x128xbf16>
    %cst_22 = arith.constant dense<0.000000e+00> : vector<192x128xf32>
    %39 = tpu.matmul %36, %38, %cst_22 {dimension_numbers = #tpu.dot_dimension_numbers<[1], [0], [0], [1], [0, 0, 1, 1], [], []>} : vector<192x128xbf16>, vector<128x128xbf16>, vector<192x128xf32> -> vector<192x128xf32>
    %40 = arith.addf %35, %39 : vector<192x128xf32>
    %c8_23 = arith.constant 8 : index
    %c0_24 = arith.constant 0 : index
    %41 = vector.load %arg10[%c8_23, %c0_24] : memref<256x128xbf16, #tpu.memory_space<vmem>>, vector<192x128xbf16>
    %c1 = arith.constant 1 : index
    %c0_25 = arith.constant 0 : index
    %c0_26 = arith.constant 0 : index
    %42 = vector.load %arg5[%c1, %c0_25, %c0_26] : memref<9x128x128xbf16, #tpu.memory_space<vmem>>, vector<1x128x128xbf16>
    %43 = vector.shape_cast %42 : vector<1x128x128xbf16> to vector<128x128xbf16>
    %cst_27 = arith.constant dense<0.000000e+00> : vector<192x128xf32>
    %44 = tpu.matmul %41, %43, %cst_27 {dimension_numbers = #tpu.dot_dimension_numbers<[1], [0], [0], [1], [0, 0, 1, 1], [], []>} : vector<192x128xbf16>, vector<128x128xbf16>, vector<192x128xf32> -> vector<192x128xf32>
    %45 = arith.addf %40, %44 : vector<192x128xf32>
    %c9 = arith.constant 9 : index
    %c0_28 = arith.constant 0 : index
    %46 = vector.load %arg10[%c9, %c0_28] : memref<256x128xbf16, #tpu.memory_space<vmem>>, vector<192x128xbf16>
    %c2 = arith.constant 2 : index
    %c0_29 = arith.constant 0 : index
    %c0_30 = arith.constant 0 : index
    %47 = vector.load %arg5[%c2, %c0_29, %c0_30] : memref<9x128x128xbf16, #tpu.memory_space<vmem>>, vector<1x128x128xbf16>
    %48 = vector.shape_cast %47 : vector<1x128x128xbf16> to vector<128x128xbf16>
    %cst_31 = arith.constant dense<0.000000e+00> : vector<192x128xf32>
    %49 = tpu.matmul %46, %48, %cst_31 {dimension_numbers = #tpu.dot_dimension_numbers<[1], [0], [0], [1], [0, 0, 1, 1], [], []>} : vector<192x128xbf16>, vector<128x128xbf16>, vector<192x128xf32> -> vector<192x128xf32>
    %50 = arith.addf %45, %49 : vector<192x128xf32>
    %c31 = arith.constant 31 : index
    %c0_32 = arith.constant 0 : index
    %51 = vector.load %arg10[%c31, %c0_32] : memref<256x128xbf16, #tpu.memory_space<vmem>>, vector<192x128xbf16>
    %c3 = arith.constant 3 : index
    %c0_33 = arith.constant 0 : index
    %c0_34 = arith.constant 0 : index
    %52 = vector.load %arg5[%c3, %c0_33, %c0_34] : memref<9x128x128xbf16, #tpu.memory_space<vmem>>, vector<1x128x128xbf16>
    %53 = vector.shape_cast %52 : vector<1x128x128xbf16> to vector<128x128xbf16>
    %cst_35 = arith.constant dense<0.000000e+00> : vector<192x128xf32>
    %54 = tpu.matmul %51, %53, %cst_35 {dimension_numbers = #tpu.dot_dimension_numbers<[1], [0], [0], [1], [0, 0, 1, 1], [], []>} : vector<192x128xbf16>, vector<128x128xbf16>, vector<192x128xf32> -> vector<192x128xf32>
    %55 = arith.addf %50, %54 : vector<192x128xf32>
    %c32 = arith.constant 32 : index
    %c0_36 = arith.constant 0 : index
    %56 = vector.load %arg10[%c32, %c0_36] : memref<256x128xbf16, #tpu.memory_space<vmem>>, vector<192x128xbf16>
    %c4 = arith.constant 4 : index
    %c0_37 = arith.constant 0 : index
    %c0_38 = arith.constant 0 : index
    %57 = vector.load %arg5[%c4, %c0_37, %c0_38] : memref<9x128x128xbf16, #tpu.memory_space<vmem>>, vector<1x128x128xbf16>
    %58 = vector.shape_cast %57 : vector<1x128x128xbf16> to vector<128x128xbf16>
    %cst_39 = arith.constant dense<0.000000e+00> : vector<192x128xf32>
    %59 = tpu.matmul %56, %58, %cst_39 {dimension_numbers = #tpu.dot_dimension_numbers<[1], [0], [0], [1], [0, 0, 1, 1], [], []>} : vector<192x128xbf16>, vector<128x128xbf16>, vector<192x128xf32> -> vector<192x128xf32>
    %60 = arith.addf %55, %59 : vector<192x128xf32>
    %c33 = arith.constant 33 : index
    %c0_40 = arith.constant 0 : index
    %61 = vector.load %arg10[%c33, %c0_40] : memref<256x128xbf16, #tpu.memory_space<vmem>>, vector<192x128xbf16>
    %c5 = arith.constant 5 : index
    %c0_41 = arith.constant 0 : index
    %c0_42 = arith.constant 0 : index
    %62 = vector.load %arg5[%c5, %c0_41, %c0_42] : memref<9x128x128xbf16, #tpu.memory_space<vmem>>, vector<1x128x128xbf16>
    %63 = vector.shape_cast %62 : vector<1x128x128xbf16> to vector<128x128xbf16>
    %cst_43 = arith.constant dense<0.000000e+00> : vector<192x128xf32>
    %64 = tpu.matmul %61, %63, %cst_43 {dimension_numbers = #tpu.dot_dimension_numbers<[1], [0], [0], [1], [0, 0, 1, 1], [], []>} : vector<192x128xbf16>, vector<128x128xbf16>, vector<192x128xf32> -> vector<192x128xf32>
    %65 = arith.addf %60, %64 : vector<192x128xf32>
    %c55 = arith.constant 55 : index
    %c0_44 = arith.constant 0 : index
    %66 = vector.load %arg10[%c55, %c0_44] : memref<256x128xbf16, #tpu.memory_space<vmem>>, vector<192x128xbf16>
    %c6 = arith.constant 6 : index
    %c0_45 = arith.constant 0 : index
    %c0_46 = arith.constant 0 : index
    %67 = vector.load %arg5[%c6, %c0_45, %c0_46] : memref<9x128x128xbf16, #tpu.memory_space<vmem>>, vector<1x128x128xbf16>
    %68 = vector.shape_cast %67 : vector<1x128x128xbf16> to vector<128x128xbf16>
    %cst_47 = arith.constant dense<0.000000e+00> : vector<192x128xf32>
    %69 = tpu.matmul %66, %68, %cst_47 {dimension_numbers = #tpu.dot_dimension_numbers<[1], [0], [0], [1], [0, 0, 1, 1], [], []>} : vector<192x128xbf16>, vector<128x128xbf16>, vector<192x128xf32> -> vector<192x128xf32>
    %70 = arith.addf %65, %69 : vector<192x128xf32>
    %c56 = arith.constant 56 : index
    %c0_48 = arith.constant 0 : index
    %71 = vector.load %arg10[%c56, %c0_48] : memref<256x128xbf16, #tpu.memory_space<vmem>>, vector<192x128xbf16>
    %c7_49 = arith.constant 7 : index
    %c0_50 = arith.constant 0 : index
    %c0_51 = arith.constant 0 : index
    %72 = vector.load %arg5[%c7_49, %c0_50, %c0_51] : memref<9x128x128xbf16, #tpu.memory_space<vmem>>, vector<1x128x128xbf16>
    %73 = vector.shape_cast %72 : vector<1x128x128xbf16> to vector<128x128xbf16>
    %cst_52 = arith.constant dense<0.000000e+00> : vector<192x128xf32>
    %74 = tpu.matmul %71, %73, %cst_52 {dimension_numbers = #tpu.dot_dimension_numbers<[1], [0], [0], [1], [0, 0, 1, 1], [], []>} : vector<192x128xbf16>, vector<128x128xbf16>, vector<192x128xf32> -> vector<192x128xf32>
    %75 = arith.addf %70, %74 : vector<192x128xf32>
    %c57 = arith.constant 57 : index
    %c0_53 = arith.constant 0 : index
    %76 = vector.load %arg10[%c57, %c0_53] : memref<256x128xbf16, #tpu.memory_space<vmem>>, vector<192x128xbf16>
    %c8_54 = arith.constant 8 : index
    %c0_55 = arith.constant 0 : index
    %c0_56 = arith.constant 0 : index
    %77 = vector.load %arg5[%c8_54, %c0_55, %c0_56] : memref<9x128x128xbf16, #tpu.memory_space<vmem>>, vector<1x128x128xbf16>
    %78 = vector.shape_cast %77 : vector<1x128x128xbf16> to vector<128x128xbf16>
    %cst_57 = arith.constant dense<0.000000e+00> : vector<192x128xf32>
    %79 = tpu.matmul %76, %78, %cst_57 {dimension_numbers = #tpu.dot_dimension_numbers<[1], [0], [0], [1], [0, 0, 1, 1], [], []>} : vector<192x128xbf16>, vector<128x128xbf16>, vector<192x128xf32> -> vector<192x128xf32>
    %80 = arith.addf %75, %79 : vector<192x128xf32>
    %c0_58 = arith.constant 0 : index
    %c0_59 = arith.constant 0 : index
    %81 = vector.load %arg6[%c0_58, %c0_59] : memref<1x128xf32, #tpu.memory_space<vmem>>, vector<1x128xf32>
    %82 = vector.broadcast %81 : vector<1x128xf32> to vector<192x128xf32>
    %83 = arith.addf %80, %82 : vector<192x128xf32>
    %cst_60 = arith.constant 0.000000e+00 : f32
    %84 = vector.broadcast %cst_60 : f32 to vector<192x128xf32>
    %85 = arith.maximumf %83, %84 : vector<192x128xf32>
    %86 = arith.truncf %85 : vector<192x128xf32> to vector<192x128xbf16>
    %c0_61 = arith.constant 0 : index
    %c0_62 = arith.constant 0 : index
    %87 = vector.load %arg7[%c0_61, %c0_62] : memref<128x128xbf16, #tpu.memory_space<vmem>>, vector<128x128xbf16>
    %cst_63 = arith.constant dense<0.000000e+00> : vector<192x128xf32>
    %88 = tpu.matmul %86, %87, %cst_63 {dimension_numbers = #tpu.dot_dimension_numbers<[1], [0], [0], [1], [0, 0, 1, 1], [], []>} : vector<192x128xbf16>, vector<128x128xbf16>, vector<192x128xf32> -> vector<192x128xf32>
    %c0_64 = arith.constant 0 : index
    %c0_65 = arith.constant 0 : index
    %89 = vector.load %arg8[%c0_64, %c0_65] : memref<1x128xf32, #tpu.memory_space<vmem>>, vector<1x128xf32>
    %90 = vector.broadcast %89 : vector<1x128xf32> to vector<192x128xf32>
    %91 = arith.addf %88, %90 : vector<192x128xf32>
    %92 = vector.extract_strided_slice %1 {offsets = [24, 0], sizes = [192, 128], strides = [1, 1]} : vector<240x128xbf16> to vector<192x128xbf16>
    %93 = arith.extf %92 : vector<192x128xbf16> to vector<192x128xf32>
    %94 = arith.addf %91, %93 : vector<192x128xf32>
    %cst_66 = arith.constant 0.000000e+00 : f32
    %95 = vector.broadcast %cst_66 : f32 to vector<192x128xf32>
    %96 = arith.maximumf %94, %95 : vector<192x128xf32>
    %c0_67 = arith.constant 0 : index
    %c0_68 = arith.constant 0 : index
    %c0_69 = arith.constant 0 : index
    %c0_70 = arith.constant 0 : index
    %97 = vector.load %arg9[%c0_67, %c0_68, %c0_69, %c0_70] : memref<1x1x192x128xf32, #tpu.memory_space<vmem>>, vector<1x1x192x128xf32>
    %98 = vector.shape_cast %97 : vector<1x1x192x128xf32> to vector<192x128xf32>
    %99 = vector.shape_cast %96 : vector<192x128xf32> to vector<1x1x192x128xf32>
    tpu.vector_store %arg9[%c0_67, %c0_68, %c0_69, %c0_70], %99 {strides = array<i32>} : memref<1x1x192x128xf32, #tpu.memory_space<vmem>>, vector<1x1x192x128xf32>,
    return
  }
  func.func @transform_0(%arg0: i32, %arg1: i32) -> (i32, i32, i32, i32) {
    %c0_i32 = arith.constant 0 : i32
    %c0_i32_0 = arith.constant 0 : i32
    %c0_i32_1 = arith.constant 0 : i32
    return %arg0, %arg1, %c0_i32, %c0_i32_0 : i32, i32, i32, i32
  }
  func.func @transform_1(%arg0: i32, %arg1: i32) -> (i32, i32) {
    %c0_i32 = arith.constant 0 : i32
    %c0_i32_0 = arith.constant 0 : i32
    %c0_i32_1 = arith.constant 0 : i32
    return %c0_i32, %c0_i32_0 : i32, i32
  }
  func.func @transform_2(%arg0: i32, %arg1: i32) -> (i32, i32) {
    %c0_i32 = arith.constant 0 : i32
    %c0_i32_0 = arith.constant 0 : i32
    %c0_i32_1 = arith.constant 0 : i32
    return %c0_i32, %c0_i32_0 : i32, i32
  }
  func.func @transform_3(%arg0: i32, %arg1: i32) -> (i32, i32, i32) {
    %c0_i32 = arith.constant 0 : i32
    %c0_i32_0 = arith.constant 0 : i32
    %c0_i32_1 = arith.constant 0 : i32
    %c0_i32_2 = arith.constant 0 : i32
    return %c0_i32, %c0_i32_0, %c0_i32_1 : i32, i32, i32
  }
  func.func @transform_4(%arg0: i32, %arg1: i32) -> (i32, i32) {
    %c0_i32 = arith.constant 0 : i32
    %c0_i32_0 = arith.constant 0 : i32
    %c0_i32_1 = arith.constant 0 : i32
    return %c0_i32, %c0_i32_0 : i32, i32
  }
  func.func @transform_5(%arg0: i32, %arg1: i32) -> (i32, i32) {
    %c0_i32 = arith.constant 0 : i32
    %c0_i32_0 = arith.constant 0 : i32
    %c0_i32_1 = arith.constant 0 : i32
    return %c0_i32, %c0_i32_0 : i32, i32
  }
  func.func @transform_6(%arg0: i32, %arg1: i32) -> (i32, i32) {
    %c0_i32 = arith.constant 0 : i32
    %c0_i32_0 = arith.constant 0 : i32
    %c0_i32_1 = arith.constant 0 : i32
    return %c0_i32, %c0_i32_0 : i32, i32
  }
  func.func @transform_7(%arg0: i32, %arg1: i32) -> (i32, i32, i32, i32) {
    %c0_i32 = arith.constant 0 : i32
    %c0_i32_0 = arith.constant 0 : i32
    %c0_i32_1 = arith.constant 0 : i32
    return %arg0, %arg1, %c0_i32, %c0_i32_0 : i32, i32, i32, i32
  }
}

</mosaic_0001>

<llo_original>
// kernel: tpu_custom_call.1
$region0: #{tpu_custom_call.1}
  #allocation0 [shape = 'u32[]', space=smem, size = 0x4, offset = 0x4, fixed_abs, tag = 'smem constant byte address 0x4 - core index']
  #allocation1 [shape = 'u32[144,128]{1,0:T(1,128)}', space=vmem, size = 0x12000, scoped, tag = 'internal scratch']
  #allocation2 [shape = 'bf16[256,128]{1,0:T(8,128)(2,1)}', space=vmem, size = 0x10000, scoped, tag = 'scratch operand']
  %s0 = inlined_call_operand.hbm [shape: bf16[2,2,240,128], index: 0, kind: input, shape index: {}]
  %s1 = inlined_call_operand.hbm [shape: bf16[128,128], index: 1, kind: input, shape index: {}]
  %s2 = inlined_call_operand.vmem [shape: f32[1,128], index: 2, kind: input, shape index: {}]
  %s3 = inlined_call_operand.hbm [shape: bf16[9,128,128], index: 3, kind: input, shape index: {}]
  %s4 = inlined_call_operand.vmem [shape: f32[1,128], index: 4, kind: input, shape index: {}]
  %s5 = inlined_call_operand.hbm [shape: bf16[128,128], index: 5, kind: input, shape index: {}]
  %s6 = inlined_call_operand.vmem [shape: f32[1,128], index: 6, kind: input, shape index: {}]
  %s7 = inlined_call_operand.hbm [shape: f32[2,2,192,128], index: 7, kind: output, shape index: {}]
  %s8 = sld [smem:[#allocation0]]
  $region77: #{tpu_custom_call.1} parent=0
    _
  %s10 = ssub.s32 1, %s8
  %s11 = scalar_select 0, %s10, %s8
  $region1: #{tpu_custom_call.1} parent=0
    #allocation3 [shape = 'u8[122880]{0}', space=vmem, size = 0x1e000, scoped, tag = 'input window, operand 0']
    #allocation4 [shape = 's32[2]{0}', space=sflag, size = 0x8, scoped, tag = 'scoped memory for tpu_custom_call.1']
    #allocation5 [shape = 's32[2]{0}', space=sflag, size = 0x8, scoped, tag = 'scoped memory for tpu_custom_call.1']
    #allocation6 [shape = 'u8[32768]{0}', space=vmem, size = 0x8000, scoped, tag = 'input window, operand 1, single buffered']
    #allocation7 [shape = 's32[1]{0}', space=sflag, size = 0x4, scoped, tag = 'scoped memory for tpu_custom_call.1']
    #allocation8 [shape = 'u8[294912]{0}', space=vmem, size = 0x48000, scoped, tag = 'input window, operand 3, single buffered']
    #allocation9 [shape = 'u8[32768]{0}', space=vmem, size = 0x8000, scoped, tag = 'input window, operand 5, single buffered']
    #allocation10 [shape = 's32[1]{0}', space=sflag, size = 0x4, scoped, tag = 'scoped memory for tpu_custom_call.1']
    #allocation11 [shape = 'u8[196608]{0}', space=vmem, size = 0x30000, scoped, tag = 'output window, operand 0']
    %12 = vsyncpa [#allocation4], 0
    %s13 = scalar_lea.sflag [#allocation4], 1
    %14 = vsyncpa %s13, 0
    %15 = vsyncpa [#allocation7], 0
    %16 = vsyncpa [#allocation10], 0
    %17 = vsyncpa [#allocation5], 0
    %s18 = scalar_lea.sflag [#allocation5], 1
    %19 = vsyncpa %s18, 0
    loop: start=0, step=1, limit=6
    $region2: #{tpu_custom_call.1} parent=1 // loop_pre_header
      _
    $region3: #{tpu_custom_call.1} parent=1 // loop_header
      %s21 = sphi 0, %s25
      %p22 = scmp.ge.s32.totalorder %s21, 6
      %s28 = sphi 0, %s40
      %s29 = sphi 0, %s36
      %s30 = sphi 0, %s28
      %s31 = sphi 0, %s29
      %s32 = sphi 0, %s30
      %s33 = sphi 0, %s31
      %s45 = sphi 0, %s47
      %s48 = sphi 0, %s45
      %s49 = sphi 0, %s48
      %s65 = sphi 0, %s49
      %s69 = sphi 0, %s69
      %s71 = sphi 0, %s69
      %s72 = sphi 0, %s71
      %s86 = sphi 0, %s72
      %s90 = sphi 0, %s90
      %s92 = sphi 0, %s90
      %s93 = sphi 0, %s92
      %s107 = sphi 0, %s93
      %s111 = sphi 0, %s111
      %s113 = sphi 0, %s111
      %s114 = sphi 0, %s113
      %s128 = sphi 0, %s114
      %s132 = sphi 0, %s132
      %s134 = sphi 0, %s132
      %s135 = sphi 0, %s134
      %s149 = sphi 0, %s135
      %s153 = sphi 0, %s153
      %s155 = sphi 0, %s153
      %s156 = sphi 0, %s155
      %s170 = sphi 0, %s156
      %s174 = sphi 0, %s174
      %s176 = sphi 0, %s174
      %s177 = sphi 0, %s176
      %s191 = sphi 0, %s177
      %s199 = sphi 0, %s201
      %s202 = sphi 0, %s199
      %s203 = sphi 0, %s202
      %s219 = sphi 0, %s203
    $region4: #{tpu_custom_call.1} parent=1 // loop_header_branch
      %24 = sbr.rel (%p22) target = $region8
    $region5: #{tpu_custom_call.1} parent=1 // loop_body
      %s26 = ssub.s32 %s21, 1
      %s27 = ssub.s32 %s21, 2
      %s34 = sadd.s32 1, %s29
      %p35 = scmp.ge.s32.totalorder %s34, 2
      %s36 = scalar_select %p35, 0, %s34
      %s37 = sadd.s32 1, %s28
      %s38 = scalar_select %p35, %s37, %s28
      %p39 = scmp.ge.s32.totalorder %s38, 2
      %s40 = scalar_select %p39, 0, %s38
      %s41 = ssub.s32 %s28, %s40
      %s42 = ssub.s32 %s29, %s36
      %s43 = sor.u32 %s41, %s42
      %p44 = scmp.eq.s32.totalorder %s43, 0
      %s46 = sadd.s32 %s45, 1
      %s47 = scalar_select %p44, %s45, %s46
      %p50 = pneg %p44
      %p51 = scmp.eq.s32.totalorder %s21, 3
      %p52 = por %p50, %p51
      %p53 = scmp.ne.s32.totalorder %s45, %s48
      %p54 = scmp.eq.s32.totalorder %s21, 0
      %p55 = por %p53, %p54
      %p56 = scmp.ne.s32.totalorder %s45, %s48
      %p57 = scmp.eq.s32.totalorder %s26, 3
      %p58 = por %p56, %p57
      %p59 = scmp.ne.s32.totalorder %s48, %s49
      %p60 = scmp.eq.s32.totalorder %s26, 0
      %p61 = por %p59, %p60
      %p62 = scmp.ne.s32.totalorder %s48, %s49
      %p63 = scmp.eq.s32.totalorder %s27, 3
      %p64 = por %p62, %p63
      %p66 = scmp.ne.s32.totalorder %s49, %s65
      %p67 = scmp.eq.s32.totalorder %s27, 0
      %p68 = por %p66, %p67
      %s70 = sadd.s32 %s69, 1
      %p73 = scmp.eq.s32.totalorder %s21, 3
      %p74 = scmp.ne.s32.totalorder %s69, %s71
      %p75 = scmp.eq.s32.totalorder %s21, 0
      %p76 = por %p74, %p75
      %p77 = scmp.ne.s32.totalorder %s69, %s71
      %p78 = scmp.eq.s32.totalorder %s26, 3
      %p79 = por %p77, %p78
      %p80 = scmp.ne.s32.totalorder %s71, %s72
      %p81 = scmp.eq.s32.totalorder %s26, 0
      %p82 = por %p80, %p81
      %p83 = scmp.ne.s32.totalorder %s71, %s72
      %p84 = scmp.eq.s32.totalorder %s27, 3
      %p85 = por %p83, %p84
      %p87 = scmp.ne.s32.totalorder %s72, %s86
      %p88 = scmp.eq.s32.totalorder %s27, 0
      %p89 = por %p87, %p88
      %s91 = sadd.s32 %s90, 1
      %p94 = scmp.eq.s32.totalorder %s21, 3
      %p95 = scmp.ne.s32.totalorder %s90, %s92
      %p96 = scmp.eq.s32.totalorder %s21, 0
      %p97 = por %p95, %p96
      %p98 = scmp.ne.s32.totalorder %s90, %s92
      %p99 = scmp.eq.s32.totalorder %s26, 3
      %p100 = por %p98, %p99
      %p101 = scmp.ne.s32.totalorder %s92, %s93
      %p102 = scmp.eq.s32.totalorder %s26, 0
      %p103 = por %p101, %p102
      %p104 = scmp.ne.s32.totalorder %s92, %s93
      %p105 = scmp.eq.s32.totalorder %s27, 3
      %p106 = por %p104, %p105
      %p108 = scmp.ne.s32.totalorder %s93, %s107
      %p109 = scmp.eq.s32.totalorder %s27, 0
      %p110 = por %p108, %p109
      %s112 = sadd.s32 %s111, 1
      %p115 = scmp.eq.s32.totalorder %s21, 3
      %p116 = scmp.ne.s32.totalorder %s111, %s113
      %p117 = scmp.eq.s32.totalorder %s21, 0
      %p118 = por %p116, %p117
      %p119 = scmp.ne.s32.totalorder %s111, %s113
      %p120 = scmp.eq.s32.totalorder %s26, 3
      %p121 = por %p119, %p120
      %p122 = scmp.ne.s32.totalorder %s113, %s114
      %p123 = scmp.eq.s32.totalorder %s26, 0
      %p124 = por %p122, %p123
      %p125 = scmp.ne.s32.totalorder %s113, %s114
      %p126 = scmp.eq.s32.totalorder %s27, 3
      %p127 = por %p125, %p126
      %p129 = scmp.ne.s32.totalorder %s114, %s128
      %p130 = scmp.eq.s32.totalorder %s27, 0
      %p131 = por %p129, %p130
      %s133 = sadd.s32 %s132, 1
      %p136 = scmp.eq.s32.totalorder %s21, 3
      %p137 = scmp.ne.s32.totalorder %s132, %s134
      %p138 = scmp.eq.s32.totalorder %s21, 0
      %p139 = por %p137, %p138
      %p140 = scmp.ne.s32.totalorder %s132, %s134
      %p141 = scmp.eq.s32.totalorder %s26, 3
      %p142 = por %p140, %p141
      %p143 = scmp.ne.s32.totalorder %s134, %s135
      %p144 = scmp.eq.s32.totalorder %s26, 0
      %p145 = por %p143, %p144
      %p146 = scmp.ne.s32.totalorder %s134, %s135
      %p147 = scmp.eq.s32.totalorder %s27, 3
      %p148 = por %p146, %p147
      %p150 = scmp.ne.s32.totalorder %s135, %s149
      %p151 = scmp.eq.s32.totalorder %s27, 0
      %p152 = por %p150, %p151
      %s154 = sadd.s32 %s153, 1
      %p157 = scmp.eq.s32.totalorder %s21, 3
      %p158 = scmp.ne.s32.totalorder %s153, %s155
      %p159 = scmp.eq.s32.totalorder %s21, 0
      %p160 = por %p158, %p159
      %p161 = scmp.ne.s32.totalorder %s153, %s155
      %p162 = scmp.eq.s32.totalorder %s26, 3
      %p163 = por %p161, %p162
      %p164 = scmp.ne.s32.totalorder %s155, %s156
      %p165 = scmp.eq.s32.totalorder %s26, 0
      %p166 = por %p164, %p165
      %p167 = scmp.ne.s32.totalorder %s155, %s156
      %p168 = scmp.eq.s32.totalorder %s27, 3
      %p169 = por %p167, %p168
      %p171 = scmp.ne.s32.totalorder %s156, %s170
      %p172 = scmp.eq.s32.totalorder %s27, 0
      %p173 = por %p171, %p172
      %s175 = sadd.s32 %s174, 1
      %p178 = scmp.eq.s32.totalorder %s21, 3
      %p179 = scmp.ne.s32.totalorder %s174, %s176
      %p180 = scmp.eq.s32.totalorder %s21, 0
      %p181 = por %p179, %p180
      %p182 = scmp.ne.s32.totalorder %s174, %s176
      %p183 = scmp.eq.s32.totalorder %s26, 3
      %p184 = por %p182, %p183
      %p185 = scmp.ne.s32.totalorder %s176, %s177
      %p186 = scmp.eq.s32.totalorder %s26, 0
      %p187 = por %p185, %p186
      %p188 = scmp.ne.s32.totalorder %s176, %s177
      %p189 = scmp.eq.s32.totalorder %s27, 3
      %p190 = por %p188, %p189
      %p192 = scmp.ne.s32.totalorder %s177, %s191
      %p193 = scmp.eq.s32.totalorder %s27, 0
      %p194 = por %p192, %p193
      %s195 = ssub.s32 %s28, %s40
      %s196 = ssub.s32 %s29, %s36
      %s197 = sor.u32 %s195, %s196
      %p198 = scmp.eq.s32.totalorder %s197, 0
      %s200 = sadd.s32 %s199, 1
      %s201 = scalar_select %p198, %s199, %s200
      %p204 = pneg %p198
      %p205 = scmp.eq.s32.totalorder %s21, 3
      %p206 = por %p204, %p205
      %p207 = scmp.ne.s32.totalorder %s199, %s202
      %p208 = scmp.eq.s32.totalorder %s21, 0
      %p209 = por %p207, %p208
      %p210 = scmp.ne.s32.totalorder %s199, %s202
      %p211 = scmp.eq.s32.totalorder %s26, 3
      %p212 = por %p210, %p211
      %p213 = scmp.ne.s32.totalorder %s202, %s203
      %p214 = scmp.eq.s32.totalorder %s26, 0
      %p215 = por %p213, %p214
      %p216 = scmp.ne.s32.totalorder %s202, %s203
      %p217 = scmp.eq.s32.totalorder %s27, 3
      %p218 = por %p216, %p217
      %p220 = scmp.ne.s32.totalorder %s203, %s219
      %p221 = scmp.eq.s32.totalorder %s27, 0
      %p222 = por %p220, %p221
      %p223 = scmp.le.s32.totalorder 1, %s21
      %p224 = scmp.lt.s32.totalorder %s21, 5
      %p225 = pnand %p223, %p224
      %p226 = pneg %p225
      // Predicated region
      $region9: #{tpu_custom_call.1} parent=5 // pred_check
        _
      $region10: #{tpu_custom_call.1} parent=5 // pred_check_branch
        %228 = sbr.rel (%p225) target = $region12
      $region11: #{tpu_custom_call.1} parent=5 // pred_region
        %s229 = ssub.s32 %s21, 1
        // Predicated region
        $region13: #{tpu_custom_call.1} parent=11 // pred_check
          %p230 = pneg %p82
        $region14: #{tpu_custom_call.1} parent=11 // pred_check_branch
          %232 = sbr.rel (%p230) target = $region16
        $region15: #{tpu_custom_call.1} parent=11 // pred_region
          %s234 = ssub.s32 1024, 1024
          %235 = vsyncadd [#allocation7], %s234
          %s236 = sshll.u32 [#allocation6], 4
          %s237 = int_to_ptr.vmem [resolvable:$true] %s236
          %242 = dma.hbm_to_vmem [thread:$0]  %s1, 1024, %s237, [#allocation7], 64, 64, 4
        $region16: #{tpu_custom_call.1} parent=11 // pred_fallthru
          _
        // Predicated region
        $region17: #{tpu_custom_call.1} parent=11 // pred_check
          %p243 = pneg %p103
        $region18: #{tpu_custom_call.1} parent=11 // pred_check_branch
          %245 = sbr.rel (%p243) target = $region20
        $region19: #{tpu_custom_call.1} parent=11 // pred_region
          _
        $region20: #{tpu_custom_call.1} parent=11 // pred_fallthru
          _
        // Predicated region
        $region21: #{tpu_custom_call.1} parent=11 // pred_check
          %p246 = pneg %p124
        $region22: #{tpu_custom_call.1} parent=11 // pred_check_branch
          %248 = sbr.rel (%p246) target = $region24
        $region23: #{tpu_custom_call.1} parent=11 // pred_region
          %s250 = ssub.s32 9216, 9216
          %251 = vsyncadd [#allocation7], %s250
          %s252 = sshll.u32 [#allocation8], 4
          %s253 = int_to_ptr.vmem [resolvable:$true] %s252
          %258 = dma.hbm_to_vmem [thread:$0]  %s3, 9216, %s253, [#allocation7], 64, 64, 4
        $region24: #{tpu_custom_call.1} parent=11 // pred_fallthru
          _
        // Predicated region
        $region25: #{tpu_custom_call.1} parent=11 // pred_check
          %p259 = pneg %p145
        $region26: #{tpu_custom_call.1} parent=11 // pred_check_branch
          %261 = sbr.rel (%p259) target = $region28
        $region27: #{tpu_custom_call.1} parent=11 // pred_region
          _
        $region28: #{tpu_custom_call.1} parent=11 // pred_fallthru
          _
        // Predicated region
        $region29: #{tpu_custom_call.1} parent=11 // pred_check
          %p262 = pneg %p166
        $region30: #{tpu_custom_call.1} parent=11 // pred_check_branch
          %264 = sbr.rel (%p262) target = $region32
        $region31: #{tpu_custom_call.1} parent=11 // pred_region
          %s266 = ssub.s32 1024, 1024
          %267 = vsyncadd [#allocation10], %s266
          %s268 = sshll.u32 [#allocation9], 4
          %s269 = int_to_ptr.vmem [resolvable:$true] %s268
          %274 = dma.hbm_to_vmem [thread:$0]  %s5, 1024, %s269, [#allocation10], 64, 64, 4
        $region32: #{tpu_custom_call.1} parent=11 // pred_fallthru
          _
        // Predicated region
        $region33: #{tpu_custom_call.1} parent=11 // pred_check
          %p275 = pneg %p187
        $region34: #{tpu_custom_call.1} parent=11 // pred_check_branch
          %277 = sbr.rel (%p275) target = $region36
        $region35: #{tpu_custom_call.1} parent=11 // pred_region
          _
        $region36: #{tpu_custom_call.1} parent=11 // pred_fallthru
          _
      $region12: #{tpu_custom_call.1} parent=5 // pred_fallthru
        _
      %p278 = scmp.lt.s32.totalorder %s21, 4
      // Predicated region
      $region37: #{tpu_custom_call.1} parent=5 // pred_check
        %p279 = pneg %p278
      $region38: #{tpu_custom_call.1} parent=5 // pred_check_branch
        %281 = sbr.rel (%p279) target = $region40
      $region39: #{tpu_custom_call.1} parent=5 // pred_region
        // Predicated region
        $region41: #{tpu_custom_call.1} parent=39 // pred_check
          %p282 = pneg %p55
        $region42: #{tpu_custom_call.1} parent=39 // pred_check_branch
          %284 = sbr.rel (%p282) target = $region44
        $region43: #{tpu_custom_call.1} parent=39 // pred_region
          %s285 = sand.u32 %s45, 1
          %s286 = scalar_lea.sflag [#allocation4], %s285
          %s287 = sand.u32 %s45, 1
          %s288 = smul.addr %s287, 120
          %s289 = scalar_lea.vmem [#allocation3], %s288
          %s291 = ssub.s32 1920, 1920
          %292 = vsyncadd %s286, %s291
          %s293 = smul.addr %s29, 30
          %s294 = smul.addr %s28, 60
          %s295 = sadd.s32 %s293, %s294
          %s296 = smul.addr %s295, 64
          %s297 = scalar_lea.hbm %s0, %s296
          %s298 = sshll.u32 %s289, 4
          %s299 = int_to_ptr.vmem [resolvable:$true] %s298
          %304 = dma.hbm_to_vmem [thread:$0]  %s297, 1920, %s299, %s286, 64, 64, 4
        $region44: #{tpu_custom_call.1} parent=39 // pred_fallthru
          _
      $region40: #{tpu_custom_call.1} parent=5 // pred_fallthru
        _
      %p305 = scmp.le.s32.totalorder 1, %s21
      %p306 = scmp.lt.s32.totalorder %s21, 5
      %p307 = pnand %p305, %p306
      %p308 = pneg %p307
      // Predicated region
      $region45: #{tpu_custom_call.1} parent=5 // pred_check
        _
      $region46: #{tpu_custom_call.1} parent=5 // pred_check_branch
        %310 = sbr.rel (%p307) target = $region48
      $region47: #{tpu_custom_call.1} parent=5 // pred_region
        %s311 = ssub.s32 %s21, 1
        %s312 = sand.u32 %s48, 1
        %s313 = scalar_lea.sflag [#allocation4], %s312
        %s314 = sand.u32 %s48, 1
        %s315 = smul.addr %s314, 120
        %s316 = scalar_lea.vmem [#allocation3], %s315
        // Predicated region
        $region49: #{tpu_custom_call.1} parent=47 // pred_check
          %p317 = pneg %p61
        $region50: #{tpu_custom_call.1} parent=47 // pred_check_branch
          %319 = sbr.rel (%p317) target = $region52
        $region51: #{tpu_custom_call.1} parent=47 // pred_region
          %320 = dma.done %s313, 1920
        $region52: #{tpu_custom_call.1} parent=47 // pred_fallthru
          _
        // Predicated region
        $region53: #{tpu_custom_call.1} parent=47 // pred_check
          %p321 = pneg %p82
        $region54: #{tpu_custom_call.1} parent=47 // pred_check_branch
          %323 = sbr.rel (%p321) target = $region56
        $region55: #{tpu_custom_call.1} parent=47 // pred_region
          %324 = dma.done [#allocation7], 1024
        $region56: #{tpu_custom_call.1} parent=47 // pred_fallthru
          _
        // Predicated region
        $region57: #{tpu_custom_call.1} parent=47 // pred_check
          %p325 = pneg %p124
        $region58: #{tpu_custom_call.1} parent=47 // pred_check_branch
          %327 = sbr.rel (%p325) target = $region60
        $region59: #{tpu_custom_call.1} parent=47 // pred_region
          %328 = dma.done [#allocation7], 9216
        $region60: #{tpu_custom_call.1} parent=47 // pred_fallthru
          _
        // Predicated region
        $region61: #{tpu_custom_call.1} parent=47 // pred_check
          %p329 = pneg %p166
        $region62: #{tpu_custom_call.1} parent=47 // pred_check_branch
          %331 = sbr.rel (%p329) target = $region64
        $region63: #{tpu_custom_call.1} parent=47 // pred_region
          %332 = dma.done [#allocation10], 1024
        $region64: #{tpu_custom_call.1} parent=47 // pred_fallthru
          _
        %s333 = sand.u32 %s48, 1
        %s334 = scalar_lea.sflag [#allocation4], %s333
        %s335 = sand.u32 %s48, 1
        %s336 = smul.addr %s335, 120
        %s337 = scalar_lea.vmem [#allocation3], %s336
        %p338 = pneg %p61
        %p339 = pneg %p58
        %p340 = pneg %p82
        %p341 = pneg %p79
        %p342 = pneg %p103
        %p343 = pneg %p100
        %p344 = pneg %p124
        %p345 = pneg %p121
        %p346 = pneg %p145
        %p347 = pneg %p142
        %p348 = pneg %p166
        %p349 = pneg %p163
        %p350 = pneg %p187
        %p351 = pneg %p184
        %p352 = pneg %p215
        %p353 = pneg %p212
        %s354 = sand.u32 %s202, 1
        %s355 = scalar_lea.sflag [#allocation5], %s354
        %s356 = sand.u32 %s202, 1
        %s357 = smul.addr %s356, 192
        %s358 = scalar_lea.vmem [#allocation11], %s357
        %v360 = vld [vmem:[%s316] sm:$0xf]
        %v361 = vld [vmem:[%s316 + $0x4] sm:$0xf]
        %v362 = vld [vmem:[%s316 + $0x8] sm:$0xf]
        %v363 = vld [vmem:[%s316 + $0xc] sm:$0xf]
        %v364 = vld [vmem:[%s316 + $0x10] sm:$0xf]
        %v365 = vld [vmem:[%s316 + $0x14] sm:$0xf]
        %v366 = vld [vmem:[%s316 + $0x18] sm:$0xf]
        %v367 = vld [vmem:[%s316 + $0x1c] sm:$0xf]
        %v368 = vld [vmem:[%s316 + $0x20] sm:$0xf]
        %v369 = vld [vmem:[%s316 + $0x24] sm:$0xf]
        %v370 = vld [vmem:[%s316 + $0x28] sm:$0xf]
        %v371 = vld [vmem:[%s316 + $0x2c] sm:$0xf]
        %v372 = vld [vmem:[%s316 + $0x30] sm:$0xf]
        %v373 = vld [vmem:[%s316 + $0x34] sm:$0xf]
        %v374 = vld [vmem:[%s316 + $0x38] sm:$0xf]
        %v375 = vld [vmem:[%s316 + $0x3c] sm:$0xf]
        %v376 = vld [vmem:[%s316 + $0x40] sm:$0xf]
        %v377 = vld [vmem:[%s316 + $0x44] sm:$0xf]
        %v378 = vld [vmem:[%s316 + $0x48] sm:$0xf]
        %v379 = vld [vmem:[%s316 + $0x4c] sm:$0xf]
        %v380 = vld [vmem:[%s316 + $0x50] sm:$0xf]
        %v381 = vld [vmem:[%s316 + $0x54] sm:$0xf]
        %v382 = vld [vmem:[%s316 + $0x58] sm:$0xf]
        %v383 = vld [vmem:[%s316 + $0x5c] sm:$0xf]
        %v384 = vld [vmem:[%s316 + $0x60] sm:$0xf]
        %v385 = vld [vmem:[%s316 + $0x64] sm:$0xf]
        %v386 = vld [vmem:[%s316 + $0x68] sm:$0xf]
        %v387 = vld [vmem:[%s316 + $0x6c] sm:$0xf]
        %v388 = vld [vmem:[%s316 + $0x70] sm:$0xf]
        %v389 = vld [vmem:[%s316 + $0x74] sm:$0xf]
        %v390 = vld [vmem:[#allocation6] sm:$0xf]
        %v391 = vld [vmem:[#allocation6 + $0x4] sm:$0xf]
        %v392 = vld [vmem:[#allocation6 + $0x8] sm:$0xf]
        %v393 = vld [vmem:[#allocation6 + $0xc] sm:$0xf]
        %v394 = vld [vmem:[#allocation6 + $0x10] sm:$0xf]
        %v395 = vld [vmem:[#allocation6 + $0x14] sm:$0xf]
        %v396 = vld [vmem:[#allocation6 + $0x18] sm:$0xf]
        %v397 = vld [vmem:[#allocation6 + $0x1c] sm:$0xf]
        %v398 = vld [vmem:[#allocation6 + $0x20] sm:$0xf]
        %v399 = vld [vmem:[#allocation6 + $0x24] sm:$0xf]
        %v400 = vld [vmem:[#allocation6 + $0x28] sm:$0xf]
        %v401 = vld [vmem:[#allocation6 + $0x2c] sm:$0xf]
        %v402 = vld [vmem:[#allocation6 + $0x30] sm:$0xf]
        %v403 = vld [vmem:[#allocation6 + $0x34] sm:$0xf]
        %v404 = vld [vmem:[#allocation6 + $0x38] sm:$0xf]
        %v405 = vld [vmem:[#allocation6 + $0x3c] sm:$0xf]
        %v406 = vld [vmem:[%s2] sm:$0x1]
        %v408 = vlaneseq
        %v409 = vshrl.u32 %v408, 7
        %v410 = vsub.s32 0, %v409
        %v411 = vrot.slane %v406, %v410
        %v443 = vunpack.c.l.b16 %v360
        %v444 = vunpack.c.l.b16 %v361
        %v445 = vunpack.c.l.b16 %v362
        %v446 = vunpack.c.l.b16 %v363
        %v447 = vunpack.c.l.b16 %v364
        %v448 = vunpack.c.l.b16 %v365
        %v449 = vunpack.c.l.b16 %v366
        %v450 = vunpack.c.l.b16 %v367
        %v451 = vunpack.c.l.b16 %v368
        %v452 = vunpack.c.l.b16 %v369
        %v453 = vunpack.c.l.b16 %v370
        %v454 = vunpack.c.l.b16 %v371
        %v455 = vunpack.c.l.b16 %v372
        %v456 = vunpack.c.l.b16 %v373
        %v457 = vunpack.c.l.b16 %v374
        %v458 = vunpack.c.l.b16 %v375
        %v459 = vunpack.c.l.b16 %v376
        %v460 = vunpack.c.l.b16 %v377
        %v461 = vunpack.c.l.b16 %v378
        %v462 = vunpack.c.l.b16 %v379
        %v463 = vunpack.c.l.b16 %v380
        %v464 = vunpack.c.l.b16 %v381
        %v465 = vunpack.c.l.b16 %v382
        %v466 = vunpack.c.l.b16 %v383
        %v467 = vunpack.c.l.b16 %v384
        %v468 = vunpack.c.l.b16 %v385
        %v469 = vunpack.c.l.b16 %v386
        %v470 = vunpack.c.l.b16 %v387
        %v471 = vunpack.c.l.b16 %v388
        %v472 = vunpack.c.l.b16 %v389
        %v473 = vpack.c.b16 %v444, %v443
        %v474 = vpack.c.b16 %v446, %v445
        %v475 = vpack.c.b16 %v448, %v447
        %v476 = vpack.c.b16 %v450, %v449
        %v477 = vpack.c.b16 %v452, %v451
        %v478 = vpack.c.b16 %v454, %v453
        %v479 = vpack.c.b16 %v456, %v455
        %v480 = vpack.c.b16 %v458, %v457
        %v481 = vpack.c.b16 %v460, %v459
        %v482 = vpack.c.b16 %v462, %v461
        %v483 = vpack.c.b16 %v464, %v463
        %v484 = vpack.c.b16 %v466, %v465
        %v485 = vpack.c.b16 %v468, %v467
        %v486 = vpack.c.b16 %v470, %v469
        %v487 = vpack.c.b16 %v472, %v471
        %v519 = vunpack.c.l.b16 %v390
        %v520 = vunpack.c.l.b16 %v391
        %v521 = vunpack.c.l.b16 %v392
        %v522 = vunpack.c.l.b16 %v393
        %v523 = vunpack.c.l.b16 %v394
        %v524 = vunpack.c.l.b16 %v395
        %v525 = vunpack.c.l.b16 %v396
        %v526 = vunpack.c.l.b16 %v397
        %v527 = vunpack.c.l.b16 %v398
        %v528 = vunpack.c.l.b16 %v399
        %v529 = vunpack.c.l.b16 %v400
        %v530 = vunpack.c.l.b16 %v401
        %v531 = vunpack.c.l.b16 %v402
        %v532 = vunpack.c.l.b16 %v403
        %v533 = vunpack.c.l.b16 %v404
        %v534 = vunpack.c.l.b16 %v405
        %v535 = vpack.c.b16 %v520, %v519
        %v536 = vpack.c.b16 %v522, %v521
        %v537 = vpack.c.b16 %v524, %v523
        %v538 = vpack.c.b16 %v526, %v525
        %v539 = vpack.c.b16 %v528, %v527
        %v540 = vpack.c.b16 %v530, %v529
        %v541 = vpack.c.b16 %v532, %v531
        %v542 = vpack.c.b16 %v534, %v533
        %551 = vmatprep.subr.bf16.mxu0 0
        %552 = vmatpush1.bf16.msra.mxu0 %v542
        %553 = vmatprep.subr.bf16.mxu0 0
        %554 = vmatpush1.bf16.msra.mxu0 %v541
        %555 = vmatprep.subr.bf16.mxu0 0
        %556 = vmatpush1.bf16.msra.mxu0 %v540
        %557 = vmatprep.subr.bf16.mxu0 0
        %558 = vmatpush1.bf16.msra.mxu0 %v539
        %559 = vmatprep.subr.bf16.mxu0 0
        %560 = vmatpush1.bf16.msra.mxu0 %v538
        %561 = vmatprep.subr.bf16.mxu0 0
        %562 = vmatpush1.bf16.msra.mxu0 %v537
        %563 = vmatprep.subr.bf16.mxu0 0
        %564 = vmatpush1.bf16.msra.mxu0 %v536
        %565 = vmatprep.subr.bf16.mxu0 0
        %566 = vmatpush1.bf16.msra.mxu0 %v535
        %567 = vmatprep.subr.bf16.mxu0 0
        %568 = vmatpush2.bf16.msra.mxu0 0
        %569 = vmatprep.subr.bf16.mxu0 0
        %570 = vmatpush2.bf16.msra.mxu0 0
        %571 = vmatprep.subr.bf16.mxu0 0
        %572 = vmatpush2.bf16.msra.mxu0 0
        %573 = vmatprep.subr.bf16.mxu0 0
        %574 = vmatpush2.bf16.msra.mxu0 0
        %575 = vmatprep.subr.bf16.mxu0 0
        %576 = vmatpush2.bf16.msra.mxu0 0
        %577 = vmatprep.subr.bf16.mxu0 0
        %578 = vmatpush2.bf16.msra.mxu0 0
        %579 = vmatprep.subr.bf16.mxu0 0
        %580 = vmatpush2.bf16.msra.mxu0 0
        %581 = vmatprep.subr.bf16.mxu0 0
        %582 = vmatpush2.bf16.msra.mxu0 0
        %583 = vmatprep.mubr.bf16.mxu0 0
        %584 = vmatmul.mubr.bf16.gmra.mxu0 %v473
        %v585 = vpop.f32.mrf.mxu0
        %v586 = vadd.f32 %v411, %v585
        %v587 = vpop.f32.mrf.mxu0
        %v588 = vpop.f32.mrf.mxu0
        %v589 = vadd.f32 %v411, %v588
        %v590 = vpop.f32.mrf.mxu0
        %591 = vmatprep.mubr.bf16.mxu0 0
        %592 = vmatmul.mubr.bf16.gmra.mxu0 %v474
        %v593 = vpop.f32.mrf.mxu0
        %v594 = vadd.f32 %v411, %v593
        %v595 = vpop.f32.mrf.mxu0
        %v596 = vpop.f32.mrf.mxu0
        %v597 = vadd.f32 %v411, %v596
        %v598 = vpop.f32.mrf.mxu0
        %599 = vmatprep.mubr.bf16.mxu0 0
        %600 = vmatmul.mubr.bf16.gmra.mxu0 %v475
        %v601 = vpop.f32.mrf.mxu0
        %v602 = vadd.f32 %v411, %v601
        %v603 = vpop.f32.mrf.mxu0
        %v604 = vpop.f32.mrf.mxu0
        %v605 = vadd.f32 %v411, %v604
        %v606 = vpop.f32.mrf.mxu0
        %607 = vmatprep.mubr.bf16.mxu0 0
        %608 = vmatmul.mubr.bf16.gmra.mxu0 %v476
        %v609 = vpop.f32.mrf.mxu0
        %v610 = vadd.f32 %v411, %v609
        %v611 = vpop.f32.mrf.mxu0
        %v612 = vpop.f32.mrf.mxu0
        %v613 = vadd.f32 %v411, %v612
        %v614 = vpop.f32.mrf.mxu0
        %615 = vmatprep.mubr.bf16.mxu0 0
        %616 = vmatmul.mubr.bf16.gmra.mxu0 %v477
        %v617 = vpop.f32.mrf.mxu0
        %v618 = vadd.f32 %v411, %v617
        %v619 = vpop.f32.mrf.mxu0
        %v620 = vpop.f32.mrf.mxu0
        %v621 = vadd.f32 %v411, %v620
        %v622 = vpop.f32.mrf.mxu0
        %623 = vmatprep.mubr.bf16.mxu0 0
        %624 = vmatmul.mubr.bf16.gmra.mxu0 %v478
        %v625 = vpop.f32.mrf.mxu0
        %v626 = vadd.f32 %v411, %v625
        %v627 = vpop.f32.mrf.mxu0
        %v628 = vpop.f32.mrf.mxu0
        %v629 = vadd.f32 %v411, %v628
        %v630 = vpop.f32.mrf.mxu0
        %631 = vmatprep.mubr.bf16.mxu0 0
        %632 = vmatmul.mubr.bf16.gmra.mxu0 %v479
        %v633 = vpop.f32.mrf.mxu0
        %v634 = vadd.f32 %v411, %v633
        %v635 = vpop.f32.mrf.mxu0
        %v636 = vpop.f32.mrf.mxu0
        %v637 = vadd.f32 %v411, %v636
        %v638 = vpop.f32.mrf.mxu0
        %639 = vmatprep.mubr.bf16.mxu0 0
        %640 = vmatmul.mubr.bf16.gmra.mxu0 %v480
        %v641 = vpop.f32.mrf.mxu0
        %v642 = vadd.f32 %v411, %v641
        %v643 = vpop.f32.mrf.mxu0
        %v644 = vpop.f32.mrf.mxu0
        %v645 = vadd.f32 %v411, %v644
        %v646 = vpop.f32.mrf.mxu0
        %647 = vmatprep.mubr.bf16.mxu0 0
        %648 = vmatmul.mubr.bf16.gmra.mxu0 %v481
        %v649 = vpop.f32.mrf.mxu0
        %v650 = vadd.f32 %v411, %v649
        %v651 = vpop.f32.mrf.mxu0
        %v652 = vpop.f32.mrf.mxu0
        %v653 = vadd.f32 %v411, %v652
        %v654 = vpop.f32.mrf.mxu0
        %655 = vmatprep.mubr.bf16.mxu0 0
        %656 = vmatmul.mubr.bf16.gmra.mxu0 %v482
        %v657 = vpop.f32.mrf.mxu0
        %v658 = vadd.f32 %v411, %v657
        %v659 = vpop.f32.mrf.mxu0
        %v660 = vpop.f32.mrf.mxu0
        %v661 = vadd.f32 %v411, %v660
        %v662 = vpop.f32.mrf.mxu0
        %663 = vmatprep.mubr.bf16.mxu0 0
        %664 = vmatmul.mubr.bf16.gmra.mxu0 %v483
        %v665 = vpop.f32.mrf.mxu0
        %v666 = vadd.f32 %v411, %v665
        %v667 = vpop.f32.mrf.mxu0
        %v668 = vpop.f32.mrf.mxu0
        %v669 = vadd.f32 %v411, %v668
        %v670 = vpop.f32.mrf.mxu0
        %671 = vmatprep.mubr.bf16.mxu0 0
        %672 = vmatmul.mubr.bf16.gmra.mxu0 %v484
        %v673 = vpop.f32.mrf.mxu0
        %v674 = vadd.f32 %v411, %v673
        %v675 = vpop.f32.mrf.mxu0
        %v676 = vpop.f32.mrf.mxu0
        %v677 = vadd.f32 %v411, %v676
        %v678 = vpop.f32.mrf.mxu0
        %679 = vmatprep.mubr.bf16.mxu0 0
        %680 = vmatmul.mubr.bf16.gmra.mxu0 %v485
        %v681 = vpop.f32.mrf.mxu0
        %v682 = vadd.f32 %v411, %v681
        %v683 = vpop.f32.mrf.mxu0
        %v684 = vpop.f32.mrf.mxu0
        %v685 = vadd.f32 %v411, %v684
        %v686 = vpop.f32.mrf.mxu0
        %687 = vmatprep.mubr.bf16.mxu0 0
        %688 = vmatmul.mubr.bf16.gmra.mxu0 %v486
        %v689 = vpop.f32.mrf.mxu0
        %v690 = vadd.f32 %v411, %v689
        %v691 = vpop.f32.mrf.mxu0
        %v692 = vpop.f32.mrf.mxu0
        %v693 = vadd.f32 %v411, %v692
        %v694 = vpop.f32.mrf.mxu0
        %695 = vmatprep.mubr.bf16.mxu0 0
        %696 = vmatmul.mubr.bf16.gmra.mxu0 %v487
        %v697 = vpop.f32.mrf.mxu0
        %v698 = vadd.f32 %v411, %v697
        %v699 = vpop.f32.mrf.mxu0
        %v700 = vpop.f32.mrf.mxu0
        %v701 = vadd.f32 %v411, %v700
        %v702 = vpop.f32.mrf.mxu0
        %703 = vdwg.mxu0
        %v704 = vmax.f32 %v586, 0.0
        %v705 = vmax.f32 %v589, 0.0
        %v706 = vmax.f32 %v594, 0.0
        %v707 = vmax.f32 %v597, 0.0
        %v708 = vmax.f32 %v602, 0.0
        %v709 = vmax.f32 %v605, 0.0
        %v710 = vmax.f32 %v610, 0.0
        %v711 = vmax.f32 %v613, 0.0
        %v712 = vmax.f32 %v618, 0.0
        %v713 = vmax.f32 %v621, 0.0
        %v714 = vmax.f32 %v626, 0.0
        %v715 = vmax.f32 %v629, 0.0
        %v716 = vmax.f32 %v634, 0.0
        %v717 = vmax.f32 %v637, 0.0
        %v718 = vmax.f32 %v642, 0.0
        %v719 = vmax.f32 %v645, 0.0
        %v720 = vmax.f32 %v650, 0.0
        %v721 = vmax.f32 %v653, 0.0
        %v722 = vmax.f32 %v658, 0.0
        %v723 = vmax.f32 %v661, 0.0
        %v724 = vmax.f32 %v666, 0.0
        %v725 = vmax.f32 %v669, 0.0
        %v726 = vmax.f32 %v674, 0.0
        %v727 = vmax.f32 %v677, 0.0
        %v728 = vmax.f32 %v682, 0.0
        %v729 = vmax.f32 %v685, 0.0
        %v730 = vmax.f32 %v690, 0.0
        %v731 = vmax.f32 %v693, 0.0
        %v732 = vmax.f32 %v698, 0.0
        %v733 = vmax.f32 %v701, 0.0
        %s734 = smul.u32 %s31, 8
        %v735 = vstv %s734
        %v736 = vadd.s32 %v735, 1
        %v737 = vadd.s32 %v735, 2
        %v738 = vadd.s32 %v735, 3
        %v739 = vadd.s32 %v735, 4
        %v740 = vadd.s32 %v735, 5
        %v741 = vadd.s32 %v735, 6
        %v742 = vadd.s32 %v735, 7
        %v743 = vadd.s32 %v735, 8
        %v744 = vadd.s32 %v735, 9
        %v745 = vlaneseq
        %v746 = vshrl.u32 %v745, 7
        %v747 = vadd.s32 %v746, 8
        %v748 = vadd.s32 %v746, 16
        %vm749 = vcmp.ge.s32.totalorder %v735, 1
        %vm750 = vcmp.ge.s32.totalorder %v736, 1
        %vm751 = vcmp.ge.s32.totalorder %v737, 1
        %vm752 = vcmp.ge.s32.totalorder %v738, 1
        %vm753 = vcmp.ge.s32.totalorder %v739, 1
        %vm754 = vcmp.ge.s32.totalorder %v740, 1
        %vm755 = vcmp.ge.s32.totalorder %v741, 1
        %vm756 = vcmp.ge.s32.totalorder %v742, 1
        %vm757 = vcmp.ge.s32.totalorder %v743, 1
        %vm758 = vcmp.ge.s32.totalorder %v744, 1
        %vm759 = vcmp.lt.s32.totalorder %v735, 17
        %vm760 = vcmp.lt.s32.totalorder %v736, 17
        %vm761 = vcmp.lt.s32.totalorder %v737, 17
        %vm762 = vcmp.lt.s32.totalorder %v738, 17
        %vm763 = vcmp.lt.s32.totalorder %v739, 17
        %vm764 = vcmp.lt.s32.totalorder %v740, 17
        %vm765 = vcmp.lt.s32.totalorder %v741, 17
        %vm766 = vcmp.lt.s32.totalorder %v742, 17
        %vm767 = vcmp.lt.s32.totalorder %v743, 17
        %vm768 = vcmp.lt.s32.totalorder %v744, 17
        %vm769 = vmand %vm749, %vm759
        %vm770 = vmand %vm750, %vm760
        %vm771 = vmand %vm751, %vm761
        %vm772 = vmand %vm752, %vm762
        %vm773 = vmand %vm753, %vm763
        %vm774 = vmand %vm754, %vm764
        %vm775 = vmand %vm755, %vm765
        %vm776 = vmand %vm756, %vm766
        %vm777 = vmand %vm757, %vm767
        %vm778 = vmand %vm758, %vm768
        %vm779 = vcmp.ge.s32.totalorder %v746, 1
        %vm780 = vcmp.ge.s32.totalorder %v747, 1
        %vm781 = vcmp.ge.s32.totalorder %v748, 1
        %vm782 = vmand %vm769, %vm779
        %vm783 = vmand %vm769, %vm780
        %vm784 = vmand %vm769, %vm781
        %vm785 = vmand %vm770, %vm779
        %vm786 = vmand %vm770, %vm780
        %vm787 = vmand %vm770, %vm781
        %vm788 = vmand %vm771, %vm779
        %vm789 = vmand %vm771, %vm780
        %vm790 = vmand %vm771, %vm781
        %vm791 = vmand %vm772, %vm779
        %vm792 = vmand %vm772, %vm780
        %vm793 = vmand %vm772, %vm781
        %vm794 = vmand %vm773, %vm779
        %vm795 = vmand %vm773, %vm780
        %vm796 = vmand %vm773, %vm781
        %vm797 = vmand %vm774, %vm779
        %vm798 = vmand %vm774, %vm780
        %vm799 = vmand %vm774, %vm781
        %vm800 = vmand %vm775, %vm779
        %vm801 = vmand %vm775, %vm780
        %vm802 = vmand %vm775, %vm781
        %vm803 = vmand %vm776, %vm779
        %vm804 = vmand %vm776, %vm780
        %vm805 = vmand %vm776, %vm781
        %vm806 = vmand %vm777, %vm779
        %vm807 = vmand %vm777, %vm780
        %vm808 = vmand %vm777, %vm781
        %vm809 = vmand %vm778, %vm779
        %vm810 = vmand %vm778, %vm780
        %vm811 = vmand %vm778, %vm781
        %vm812 = vcmp.lt.s32.totalorder %v746, 17
        %vm813 = vcmp.lt.s32.totalorder %v747, 17
        %vm814 = vcmp.lt.s32.totalorder %v748, 17
        %vm815 = vmand %vm782, %vm812
        %vm816 = vmand %vm783, %vm813
        %vm817 = vmand %vm784, %vm814
        %vm818 = vmand %vm785, %vm812
        %vm819 = vmand %vm786, %vm813
        %vm820 = vmand %vm787, %vm814
        %vm821 = vmand %vm788, %vm812
        %vm822 = vmand %vm789, %vm813
        %vm823 = vmand %vm790, %vm814
        %vm824 = vmand %vm791, %vm812
        %vm825 = vmand %vm792, %vm813
        %vm826 = vmand %vm793, %vm814
        %vm827 = vmand %vm794, %vm812
        %vm828 = vmand %vm795, %vm813
        %vm829 = vmand %vm796, %vm814
        %vm830 = vmand %vm797, %vm812
        %vm831 = vmand %vm798, %vm813
        %vm832 = vmand %vm799, %vm814
        %vm833 = vmand %vm800, %vm812
        %vm834 = vmand %vm801, %vm813
        %vm835 = vmand %vm802, %vm814
        %vm836 = vmand %vm803, %vm812
        %vm837 = vmand %vm804, %vm813
        %vm838 = vmand %vm805, %vm814
        %vm839 = vmand %vm806, %vm812
        %vm840 = vmand %vm807, %vm813
        %vm841 = vmand %vm808, %vm814
        %vm842 = vmand %vm809, %vm812
        %vm843 = vmand %vm810, %vm813
        %vm844 = vmand %vm811, %vm814
        %v845 = vsel %vm815, %v704, 0.0
        %v846 = vsel %vm816, %v705, 0.0
        %v847 = vsel %vm817, %v706, 0.0
        %v848 = vsel %vm818, %v707, 0.0
        %v849 = vsel %vm819, %v708, 0.0
        %v850 = vsel %vm820, %v709, 0.0
        %v851 = vsel %vm821, %v710, 0.0
        %v852 = vsel %vm822, %v711, 0.0
        %v853 = vsel %vm823, %v712, 0.0
        %v854 = vsel %vm824, %v713, 0.0
        %v855 = vsel %vm825, %v714, 0.0
        %v856 = vsel %vm826, %v715, 0.0
        %v857 = vsel %vm827, %v716, 0.0
        %v858 = vsel %vm828, %v717, 0.0
        %v859 = vsel %vm829, %v718, 0.0
        %v860 = vsel %vm830, %v719, 0.0
        %v861 = vsel %vm831, %v720, 0.0
        %v862 = vsel %vm832, %v721, 0.0
        %v863 = vsel %vm833, %v722, 0.0
        %v864 = vsel %vm834, %v723, 0.0
        %v865 = vsel %vm835, %v724, 0.0
        %v866 = vsel %vm836, %v725, 0.0
        %v867 = vsel %vm837, %v726, 0.0
        %v868 = vsel %vm838, %v727, 0.0
        %v869 = vsel %vm839, %v728, 0.0
        %v870 = vsel %vm840, %v729, 0.0
        %v871 = vsel %vm841, %v730, 0.0
        %v872 = vsel %vm842, %v731, 0.0
        %v873 = vsel %vm843, %v732, 0.0
        %v874 = vsel %vm844, %v733, 0.0
        %v875 = vpack.c.bf16 %v846, %v845
        %v876 = vpack.c.bf16 %v848, %v847
        %v877 = vpack.c.bf16 %v850, %v849
        %v878 = vpack.c.bf16 %v852, %v851
        %v879 = vpack.c.bf16 %v854, %v853
        %v880 = vpack.c.bf16 %v856, %v855
        %v881 = vpack.c.bf16 %v858, %v857
        %v882 = vpack.c.bf16 %v860, %v859
        %v883 = vpack.c.bf16 %v862, %v861
        %v884 = vpack.c.bf16 %v864, %v863
        %v885 = vpack.c.bf16 %v866, %v865
        %v886 = vpack.c.bf16 %v868, %v867
        %v887 = vpack.c.bf16 %v870, %v869
        %v888 = vpack.c.bf16 %v872, %v871
        %v889 = vpack.c.bf16 %v874, %v873
        %v905 = vunpack.c.l.b16 %v875
        %v906 = vunpack.c.h.b16 %v875
        %v907 = vunpack.c.l.b16 %v876
        %v908 = vunpack.c.h.b16 %v876
        %v909 = vunpack.c.l.b16 %v877
        %v910 = vunpack.c.h.b16 %v877
        %v911 = vunpack.c.l.b16 %v878
        %v912 = vunpack.c.h.b16 %v878
        %v913 = vunpack.c.l.b16 %v879
        %v914 = vunpack.c.h.b16 %v879
        %v915 = vunpack.c.l.b16 %v880
        %v916 = vunpack.c.h.b16 %v880
        %v917 = vunpack.c.l.b16 %v881
        %v918 = vunpack.c.h.b16 %v881
        %v919 = vunpack.c.l.b16 %v882
        %v920 = vunpack.c.h.b16 %v882
        %v921 = vunpack.c.l.b16 %v883
        %v922 = vunpack.c.h.b16 %v883
        %v923 = vunpack.c.l.b16 %v884
        %v924 = vunpack.c.h.b16 %v884
        %v925 = vunpack.c.l.b16 %v885
        %v926 = vunpack.c.h.b16 %v885
        %v927 = vunpack.c.l.b16 %v886
        %v928 = vunpack.c.h.b16 %v886
        %v929 = vunpack.c.l.b16 %v887
        %v930 = vunpack.c.h.b16 %v887
        %v931 = vunpack.c.l.b16 %v888
        %v932 = vunpack.c.h.b16 %v888
        %v933 = vunpack.c.l.b16 %v889
        %v934 = vunpack.c.h.b16 %v889
        %v935 = vpack.c.b16 %v905, %v905
        %v936 = vpack.c.b16 %v906, %v906
        %v937 = vpack.c.b16 %v907, %v907
        %v938 = vpack.c.b16 %v908, %v908
        %v939 = vpack.c.b16 %v909, %v909
        %v940 = vpack.c.b16 %v910, %v910
        %v941 = vpack.c.b16 %v911, %v911
        %v942 = vpack.c.b16 %v912, %v912
        %v943 = vpack.c.b16 %v913, %v913
        %v944 = vpack.c.b16 %v914, %v914
        %v945 = vpack.c.b16 %v915, %v915
        %v946 = vpack.c.b16 %v916, %v916
        %v947 = vpack.c.b16 %v917, %v917
        %v948 = vpack.c.b16 %v918, %v918
        %v949 = vpack.c.b16 %v919, %v919
        %v950 = vpack.c.b16 %v920, %v920
        %v951 = vpack.c.b16 %v921, %v921
        %v952 = vpack.c.b16 %v922, %v922
        %v953 = vpack.c.b16 %v923, %v923
        %v954 = vpack.c.b16 %v924, %v924
        %v955 = vpack.c.b16 %v925, %v925
        %v956 = vpack.c.b16 %v926, %v926
        %v957 = vpack.c.b16 %v927, %v927
        %v958 = vpack.c.b16 %v928, %v928
        %v959 = vpack.c.b16 %v929, %v929
        %v960 = vpack.c.b16 %v930, %v930
        %v961 = vpack.c.b16 %v931, %v931
        %v962 = vpack.c.b16 %v932, %v932
        %v963 = vpack.c.b16 %v933, %v933
        %v964 = vpack.c.b16 %v934, %v934
        %995 = vst [vmem:[#allocation2 + $0x4] sm:$0xf] %v935
        %996 = vst [vmem:[#allocation2 + $0x8] sm:$0xf] %v936
        %997 = vst [vmem:[#allocation2 + $0xc] sm:$0xf] %v937
        %998 = vst [vmem:[#allocation2 + $0x10] sm:$0xf] %v938
        %999 = vst [vmem:[#allocation2 + $0x14] sm:$0xf] %v939
        %1000 = vst [vmem:[#allocation2 + $0x18] sm:$0xf] %v940
        %1001 = vst [vmem:[#allocation2 + $0x1c] sm:$0xf] %v941
        %1002 = vst [vmem:[#allocation2 + $0x20] sm:$0xf] %v942
        %1003 = vst [vmem:[#allocation2 + $0x24] sm:$0xf] %v943
        %1004 = vst [vmem:[#allocation2 + $0x28] sm:$0xf] %v944
        %1005 = vst [vmem:[#allocation2 + $0x2c] sm:$0xf] %v945
        %1006 = vst [vmem:[#allocation2 + $0x30] sm:$0xf] %v946
        %1007 = vst [vmem:[#allocation2 + $0x34] sm:$0xf] %v947
        %1008 = vst [vmem:[#allocation2 + $0x38] sm:$0xf] %v948
        %1009 = vst [vmem:[#allocation2 + $0x3c] sm:$0xf] %v949
        %1010 = vst [vmem:[#allocation2 + $0x40] sm:$0xf] %v950
        %1011 = vst [vmem:[#allocation2 + $0x44] sm:$0xf] %v951
        %1012 = vst [vmem:[#allocation2 + $0x48] sm:$0xf] %v952
        %1013 = vst [vmem:[#allocation2 + $0x4c] sm:$0xf] %v953
        %1014 = vst [vmem:[#allocation2 + $0x50] sm:$0xf] %v954
        %1015 = vst [vmem:[#allocation2 + $0x54] sm:$0xf] %v955
        %1016 = vst [vmem:[#allocation2 + $0x58] sm:$0xf] %v956
        %1017 = vst [vmem:[#allocation2 + $0x5c] sm:$0xf] %v957
        %1018 = vst [vmem:[#allocation2 + $0x60] sm:$0xf] %v958
        %1019 = vst [vmem:[#allocation2 + $0x64] sm:$0xf] %v959
        %1020 = vst [vmem:[#allocation2 + $0x68] sm:$0xf] %v960
        %1021 = vst [vmem:[#allocation2 + $0x6c] sm:$0xf] %v961
        %1022 = vst [vmem:[#allocation2 + $0x70] sm:$0xf] %v962
        %1023 = vst [vmem:[#allocation2 + $0x74] sm:$0xf] %v963
        %1024 = vst [vmem:[#allocation2 + $0x78] sm:$0xf] %v964
        %1025 = vst [vmem:[#allocation2] sm:$0xf] 0
        %1026 = vst [vmem:[#allocation2 + $0x7c] sm:$0xf] 0
        %v1027 = vld [vmem:[#allocation2] sm:$0x8]
        %v1028 = vld [vmem:[#allocation2 + $0x4] sm:$0xf]
        %v1029 = vld [vmem:[#allocation2 + $0x8] sm:$0xf]
        %v1030 = vld [vmem:[#allocation2 + $0xc] sm:$0xf]
        %v1031 = vld [vmem:[#allocation2 + $0x10] sm:$0xf]
        %v1032 = vld [vmem:[#allocation2 + $0x14] sm:$0xf]
        %v1033 = vld [vmem:[#allocation2 + $0x18] sm:$0xf]
        %v1034 = vld [vmem:[#allocation2 + $0x1c] sm:$0xf]
        %v1035 = vld [vmem:[#allocation2 + $0x20] sm:$0xf]
        %v1036 = vld [vmem:[#allocation2 + $0x24] sm:$0xf]
        %v1037 = vld [vmem:[#allocation2 + $0x28] sm:$0xf]
        %v1038 = vld [vmem:[#allocation2 + $0x2c] sm:$0xf]
        %v1039 = vld [vmem:[#allocation2 + $0x30] sm:$0xf]
        %v1040 = vld [vmem:[#allocation2 + $0x34] sm:$0xf]
        %v1041 = vld [vmem:[#allocation2 + $0x38] sm:$0xf]
        %v1042 = vld [vmem:[#allocation2 + $0x3c] sm:$0xf]
        %v1043 = vld [vmem:[#allocation2 + $0x40] sm:$0xf]
        %v1044 = vld [vmem:[#allocation2 + $0x44] sm:$0xf]
        %v1045 = vld [vmem:[#allocation2 + $0x48] sm:$0xf]
        %v1046 = vld [vmem:[#allocation2 + $0x4c] sm:$0xf]
        %v1047 = vld [vmem:[#allocation2 + $0x50] sm:$0xf]
        %v1048 = vld [vmem:[#allocation2 + $0x54] sm:$0xf]
        %v1049 = vld [vmem:[#allocation2 + $0x58] sm:$0xf]
        %v1050 = vld [vmem:[#allocation2 + $0x5c] sm:$0xf]
        %v1051 = vld [vmem:[#allocation2 + $0x60] sm:$0xf]
        %v1052 = vld [vmem:[#allocation8] sm:$0xf]
        %v1053 = vld [vmem:[#allocation8 + $0x4] sm:$0xf]
        %v1054 = vld [vmem:[#allocation8 + $0x8] sm:$0xf]
        %v1055 = vld [vmem:[#allocation8 + $0xc] sm:$0xf]
        %v1056 = vld [vmem:[#allocation8 + $0x10] sm:$0xf]
        %v1057 = vld [vmem:[#allocation8 + $0x14] sm:$0xf]
        %v1058 = vld [vmem:[#allocation8 + $0x18] sm:$0xf]
        %v1059 = vld [vmem:[#allocation8 + $0x1c] sm:$0xf]
        %v1060 = vld [vmem:[#allocation8 + $0x20] sm:$0xf]
        %v1061 = vld [vmem:[#allocation8 + $0x24] sm:$0xf]
        %v1062 = vld [vmem:[#allocation8 + $0x28] sm:$0xf]
        %v1063 = vld [vmem:[#allocation8 + $0x2c] sm:$0xf]
        %v1064 = vld [vmem:[#allocation8 + $0x30] sm:$0xf]
        %v1065 = vld [vmem:[#allocation8 + $0x34] sm:$0xf]
        %v1066 = vld [vmem:[#allocation8 + $0x38] sm:$0xf]
        %v1067 = vld [vmem:[#allocation8 + $0x3c] sm:$0xf]
        %s1068 = scalar_lea.vmem [#allocation8], 64
        %v1069 = vld [vmem:[%s1068] sm:$0xf]
        %v1070 = vld [vmem:[%s1068 + $0x4] sm:$0xf]
        %v1071 = vld [vmem:[%s1068 + $0x8] sm:$0xf]
        %v1072 = vld [vmem:[%s1068 + $0xc] sm:$0xf]
        %v1073 = vld [vmem:[%s1068 + $0x10] sm:$0xf]
        %v1074 = vld [vmem:[%s1068 + $0x14] sm:$0xf]
        %v1075 = vld [vmem:[%s1068 + $0x18] sm:$0xf]
        %v1076 = vld [vmem:[%s1068 + $0x1c] sm:$0xf]
        %v1077 = vld [vmem:[%s1068 + $0x20] sm:$0xf]
        %v1078 = vld [vmem:[%s1068 + $0x24] sm:$0xf]
        %v1079 = vld [vmem:[%s1068 + $0x28] sm:$0xf]
        %v1080 = vld [vmem:[%s1068 + $0x2c] sm:$0xf]
        %v1081 = vld [vmem:[%s1068 + $0x30] sm:$0xf]
        %v1082 = vld [vmem:[%s1068 + $0x34] sm:$0xf]
        %v1083 = vld [vmem:[%s1068 + $0x38] sm:$0xf]
        %v1084 = vld [vmem:[%s1068 + $0x3c] sm:$0xf]
        %v1109 = vunpack.c.l.b16 %v1028
        %v1110 = vunpack.c.l.b16 %v1029
        %v1111 = vunpack.c.l.b16 %v1030
        %v1112 = vunpack.c.l.b16 %v1031
        %v1113 = vunpack.c.l.b16 %v1032
        %v1114 = vunpack.c.l.b16 %v1033
        %v1115 = vunpack.c.l.b16 %v1034
        %v1116 = vunpack.c.l.b16 %v1035
        %v1117 = vunpack.c.l.b16 %v1036
        %v1118 = vunpack.c.l.b16 %v1037
        %v1119 = vunpack.c.l.b16 %v1038
        %v1120 = vunpack.c.l.b16 %v1039
        %v1121 = vunpack.c.l.b16 %v1040
        %v1122 = vunpack.c.l.b16 %v1041
        %v1123 = vunpack.c.l.b16 %v1042
        %v1124 = vunpack.c.l.b16 %v1043
        %v1125 = vunpack.c.l.b16 %v1044
        %v1126 = vunpack.c.l.b16 %v1045
        %v1127 = vunpack.c.l.b16 %v1046
        %v1128 = vunpack.c.l.b16 %v1047
        %v1129 = vunpack.c.l.b16 %v1048
        %v1130 = vunpack.c.l.b16 %v1049
        %v1131 = vunpack.c.l.b16 %v1050
        %v1132 = vunpack.c.l.b16 %v1051
        %v1133 = vpack.c.b16 %v1110, %v1109
        %v1134 = vpack.c.b16 %v1112, %v1111
        %v1135 = vpack.c.b16 %v1114, %v1113
        %v1136 = vpack.c.b16 %v1116, %v1115
        %v1137 = vpack.c.b16 %v1118, %v1117
        %v1138 = vpack.c.b16 %v1120, %v1119
        %v1139 = vpack.c.b16 %v1122, %v1121
        %v1140 = vpack.c.b16 %v1124, %v1123
        %v1141 = vpack.c.b16 %v1126, %v1125
        %v1142 = vpack.c.b16 %v1128, %v1127
        %v1143 = vpack.c.b16 %v1130, %v1129
        %v1144 = vpack.c.b16 %v1132, %v1131
        %v1173 = vunpack.c.l.b16 %v1069
        %v1174 = vunpack.c.l.b16 %v1070
        %v1175 = vunpack.c.l.b16 %v1071
        %v1176 = vunpack.c.l.b16 %v1072
        %v1177 = vunpack.c.l.b16 %v1073
        %v1178 = vunpack.c.l.b16 %v1074
        %v1179 = vunpack.c.l.b16 %v1075
        %v1180 = vunpack.c.l.b16 %v1076
        %v1181 = vunpack.c.l.b16 %v1077
        %v1182 = vunpack.c.l.b16 %v1078
        %v1183 = vunpack.c.l.b16 %v1079
        %v1184 = vunpack.c.l.b16 %v1080
        %v1185 = vunpack.c.l.b16 %v1081
        %v1186 = vunpack.c.l.b16 %v1082
        %v1187 = vunpack.c.l.b16 %v1083
        %v1188 = vunpack.c.l.b16 %v1084
        %v1189 = vpack.c.b16 %v1174, %v1173
        %v1190 = vpack.c.b16 %v1176, %v1175
        %v1191 = vpack.c.b16 %v1178, %v1177
        %v1192 = vpack.c.b16 %v1180, %v1179
        %v1193 = vpack.c.b16 %v1182, %v1181
        %v1194 = vpack.c.b16 %v1184, %v1183
        %v1195 = vpack.c.b16 %v1186, %v1185
        %v1196 = vpack.c.b16 %v1188, %v1187
        %1205 = vmatprep.subr.bf16.mxu0 0
        %1206 = vmatpush1.bf16.msra.mxu0 %v1196
        %1207 = vmatprep.subr.bf16.mxu0 0
        %1208 = vmatpush1.bf16.msra.mxu0 %v1195
        %1209 = vmatprep.subr.bf16.mxu0 0
        %1210 = vmatpush1.bf16.msra.mxu0 %v1194
        %1211 = vmatprep.subr.bf16.mxu0 0
        %1212 = vmatpush1.bf16.msra.mxu0 %v1193
        %1213 = vmatprep.subr.bf16.mxu0 0
        %1214 = vmatpush1.bf16.msra.mxu0 %v1192
        %1215 = vmatprep.subr.bf16.mxu0 0
        %1216 = vmatpush1.bf16.msra.mxu0 %v1191
        %1217 = vmatprep.subr.bf16.mxu0 0
        %1218 = vmatpush1.bf16.msra.mxu0 %v1190
        %1219 = vmatprep.subr.bf16.mxu0 0
        %1220 = vmatpush1.bf16.msra.mxu0 %v1189
        %1221 = vmatprep.subr.bf16.mxu0 0
        %1222 = vmatpush2.bf16.msra.mxu0 0
        %1223 = vmatprep.subr.bf16.mxu0 0
        %1224 = vmatpush2.bf16.msra.mxu0 0
        %1225 = vmatprep.subr.bf16.mxu0 0
        %1226 = vmatpush2.bf16.msra.mxu0 0
        %1227 = vmatprep.subr.bf16.mxu0 0
        %1228 = vmatpush2.bf16.msra.mxu0 0
        %1229 = vmatprep.subr.bf16.mxu0 0
        %1230 = vmatpush2.bf16.msra.mxu0 0
        %1231 = vmatprep.subr.bf16.mxu0 0
        %1232 = vmatpush2.bf16.msra.mxu0 0
        %1233 = vmatprep.subr.bf16.mxu0 0
        %1234 = vmatpush2.bf16.msra.mxu0 0
        %1235 = vmatprep.subr.bf16.mxu0 0
        %1236 = vmatpush2.bf16.msra.mxu0 0
        %1237 = vmatprep.mubr.bf16.mxu0 0
        %1238 = vmatmul.mubr.bf16.gmra.mxu0 %v1133
        %v1239 = vpop.f32.mrf.mxu0
        %v1240 = vadd.f32 0.0, %v1239
        %v1241 = vpop.f32.mrf.mxu0
        %v1242 = vpop.f32.mrf.mxu0
        %v1243 = vadd.f32 0.0, %v1242
        %v1244 = vpop.f32.mrf.mxu0
        %1245 = vmatprep.mubr.bf16.mxu0 0
        %1246 = vmatmul.mubr.bf16.gmra.mxu0 %v1134
        %v1247 = vpop.f32.mrf.mxu0
        %v1248 = vadd.f32 0.0, %v1247
        %v1249 = vpop.f32.mrf.mxu0
        %v1250 = vpop.f32.mrf.mxu0
        %v1251 = vadd.f32 0.0, %v1250
        %v1252 = vpop.f32.mrf.mxu0
        %1253 = vmatprep.mubr.bf16.mxu0 0
        %1254 = vmatmul.mubr.bf16.gmra.mxu0 %v1135
        %v1255 = vpop.f32.mrf.mxu0
        %v1256 = vadd.f32 0.0, %v1255
        %v1257 = vpop.f32.mrf.mxu0
        %v1258 = vpop.f32.mrf.mxu0
        %v1259 = vadd.f32 0.0, %v1258
        %v1260 = vpop.f32.mrf.mxu0
        %1261 = vmatprep.mubr.bf16.mxu0 0
        %1262 = vmatmul.mubr.bf16.gmra.mxu0 %v1136
        %v1263 = vpop.f32.mrf.mxu0
        %v1264 = vadd.f32 0.0, %v1263
        %v1265 = vpop.f32.mrf.mxu0
        %v1266 = vpop.f32.mrf.mxu0
        %v1267 = vadd.f32 0.0, %v1266
        %v1268 = vpop.f32.mrf.mxu0
        %1269 = vmatprep.mubr.bf16.mxu0 0
        %1270 = vmatmul.mubr.bf16.gmra.mxu0 %v1137
        %v1271 = vpop.f32.mrf.mxu0
        %v1272 = vadd.f32 0.0, %v1271
        %v1273 = vpop.f32.mrf.mxu0
        %v1274 = vpop.f32.mrf.mxu0
        %v1275 = vadd.f32 0.0, %v1274
        %v1276 = vpop.f32.mrf.mxu0
        %1277 = vmatprep.mubr.bf16.mxu0 0
        %1278 = vmatmul.mubr.bf16.gmra.mxu0 %v1138
        %v1279 = vpop.f32.mrf.mxu0
        %v1280 = vadd.f32 0.0, %v1279
        %v1281 = vpop.f32.mrf.mxu0
        %v1282 = vpop.f32.mrf.mxu0
        %v1283 = vadd.f32 0.0, %v1282
        %v1284 = vpop.f32.mrf.mxu0
        %1285 = vmatprep.mubr.bf16.mxu0 0
        %1286 = vmatmul.mubr.bf16.gmra.mxu0 %v1139
        %v1287 = vpop.f32.mrf.mxu0
        %v1288 = vadd.f32 0.0, %v1287
        %v1289 = vpop.f32.mrf.mxu0
        %v1290 = vpop.f32.mrf.mxu0
        %v1291 = vadd.f32 0.0, %v1290
        %v1292 = vpop.f32.mrf.mxu0
        %1293 = vmatprep.mubr.bf16.mxu0 0
        %1294 = vmatmul.mubr.bf16.gmra.mxu0 %v1140
        %v1295 = vpop.f32.mrf.mxu0
        %v1296 = vadd.f32 0.0, %v1295
        %v1297 = vpop.f32.mrf.mxu0
        %v1298 = vpop.f32.mrf.mxu0
        %v1299 = vadd.f32 0.0, %v1298
        %v1300 = vpop.f32.mrf.mxu0
        %1301 = vmatprep.mubr.bf16.mxu0 0
        %1302 = vmatmul.mubr.bf16.gmra.mxu0 %v1141
        %v1303 = vpop.f32.mrf.mxu0
        %v1304 = vadd.f32 0.0, %v1303
        %v1305 = vpop.f32.mrf.mxu0
        %v1306 = vpop.f32.mrf.mxu0
        %v1307 = vadd.f32 0.0, %v1306
        %v1308 = vpop.f32.mrf.mxu0
        %1309 = vmatprep.mubr.bf16.mxu0 0
        %1310 = vmatmul.mubr.bf16.gmra.mxu0 %v1142
        %v1311 = vpop.f32.mrf.mxu0
        %v1312 = vadd.f32 0.0, %v1311
        %v1313 = vpop.f32.mrf.mxu0
        %v1314 = vpop.f32.mrf.mxu0
        %v1315 = vadd.f32 0.0, %v1314
        %v1316 = vpop.f32.mrf.mxu0
        %1317 = vmatprep.mubr.bf16.mxu0 0
        %1318 = vmatmul.mubr.bf16.gmra.mxu0 %v1143
        %v1319 = vpop.f32.mrf.mxu0
        %v1320 = vadd.f32 0.0, %v1319
        %v1321 = vpop.f32.mrf.mxu0
        %v1322 = vpop.f32.mrf.mxu0
        %v1323 = vadd.f32 0.0, %v1322
        %v1324 = vpop.f32.mrf.mxu0
        %1325 = vmatprep.mubr.bf16.mxu0 0
        %1326 = vmatmul.mubr.bf16.gmra.mxu0 %v1144
        %v1327 = vpop.f32.mrf.mxu0
        %v1328 = vadd.f32 0.0, %v1327
        %v1329 = vpop.f32.mrf.mxu0
        %v1330 = vpop.f32.mrf.mxu0
        %v1331 = vadd.f32 0.0, %v1330
        %v1332 = vpop.f32.mrf.mxu0
        %1333 = vdwg.mxu0
        %v1335 = vunpack.c.l.b16 %v1027
        %v1336 = vpack.c.b16 %v1109, %v1335
        %v1337 = vpack.c.b16 %v1111, %v1110
        %v1338 = vpack.c.b16 %v1113, %v1112
        %v1339 = vpack.c.b16 %v1115, %v1114
        %v1340 = vpack.c.b16 %v1117, %v1116
        %v1341 = vpack.c.b16 %v1119, %v1118
        %v1342 = vpack.c.b16 %v1121, %v1120
        %v1343 = vpack.c.b16 %v1123, %v1122
        %v1344 = vpack.c.b16 %v1125, %v1124
        %v1345 = vpack.c.b16 %v1127, %v1126
        %v1346 = vpack.c.b16 %v1129, %v1128
        %v1347 = vpack.c.b16 %v1131, %v1130
        %v1348 = vpack.c.b16 %v1132, %v1132
        %vm1349 = vsmask.f32 4352
        %v1351 = vshrl.u32 %v1336, 16
        %v1353 = vrot.slane %v1351, 3
        %v1354 = vshll.u32 %v1336, 16
        %v1356 = vrot.slane %v1354, 4
        %v1357 = vor.u32 %v1353, %v1356
        %v1359 = vshrl.u32 %v1337, 16
        %v1361 = vrot.slane %v1359, 3
        %v1362 = vshll.u32 %v1337, 16
        %v1364 = vrot.slane %v1362, 4
        %v1365 = vor.u32 %v1361, %v1364
        %v1366 = vsel %vm1349, %v1357, %v1365
        %v1368 = vshrl.u32 %v1338, 16
        %v1370 = vrot.slane %v1368, 3
        %v1371 = vshll.u32 %v1338, 16
        %v1373 = vrot.slane %v1371, 4
        %v1374 = vor.u32 %v1370, %v1373
        %v1375 = vsel %vm1349, %v1365, %v1374
        %v1377 = vshrl.u32 %v1339, 16
        %v1379 = vrot.slane %v1377, 3
        %v1380 = vshll.u32 %v1339, 16
        %v1382 = vrot.slane %v1380, 4
        %v1383 = vor.u32 %v1379, %v1382
        %v1384 = vsel %vm1349, %v1374, %v1383
        %v1386 = vshrl.u32 %v1340, 16
        %v1388 = vrot.slane %v1386, 3
        %v1389 = vshll.u32 %v1340, 16
        %v1391 = vrot.slane %v1389, 4
        %v1392 = vor.u32 %v1388, %v1391
        %v1393 = vsel %vm1349, %v1383, %v1392
        %v1395 = vshrl.u32 %v1341, 16
        %v1397 = vrot.slane %v1395, 3
        %v1398 = vshll.u32 %v1341, 16
        %v1400 = vrot.slane %v1398, 4
        %v1401 = vor.u32 %v1397, %v1400
        %v1402 = vsel %vm1349, %v1392, %v1401
        %v1404 = vshrl.u32 %v1342, 16
        %v1406 = vrot.slane %v1404, 3
        %v1407 = vshll.u32 %v1342, 16
        %v1409 = vrot.slane %v1407, 4
        %v1410 = vor.u32 %v1406, %v1409
        %v1411 = vsel %vm1349, %v1401, %v1410
        %v1413 = vshrl.u32 %v1343, 16
        %v1415 = vrot.slane %v1413, 3
        %v1416 = vshll.u32 %v1343, 16
        %v1418 = vrot.slane %v1416, 4
        %v1419 = vor.u32 %v1415, %v1418
        %v1420 = vsel %vm1349, %v1410, %v1419
        %v1422 = vshrl.u32 %v1344, 16
        %v1424 = vrot.slane %v1422, 3
        %v1425 = vshll.u32 %v1344, 16
        %v1427 = vrot.slane %v1425, 4
        %v1428 = vor.u32 %v1424, %v1427
        %v1429 = vsel %vm1349, %v1419, %v1428
        %v1431 = vshrl.u32 %v1345, 16
        %v1433 = vrot.slane %v1431, 3
        %v1434 = vshll.u32 %v1345, 16
        %v1436 = vrot.slane %v1434, 4
        %v1437 = vor.u32 %v1433, %v1436
        %v1438 = vsel %vm1349, %v1428, %v1437
        %v1440 = vshrl.u32 %v1346, 16
        %v1442 = vrot.slane %v1440, 3
        %v1443 = vshll.u32 %v1346, 16
        %v1445 = vrot.slane %v1443, 4
        %v1446 = vor.u32 %v1442, %v1445
        %v1447 = vsel %vm1349, %v1437, %v1446
        %v1449 = vshrl.u32 %v1347, 16
        %v1451 = vrot.slane %v1449, 3
        %v1452 = vshll.u32 %v1347, 16
        %v1454 = vrot.slane %v1452, 4
        %v1455 = vor.u32 %v1451, %v1454
        %v1456 = vsel %vm1349, %v1446, %v1455
        %v1458 = vshrl.u32 %v1348, 16
        %v1460 = vrot.slane %v1458, 3
        %v1461 = vshll.u32 %v1348, 16
        %v1463 = vrot.slane %v1461, 4
        %v1464 = vor.u32 %v1460, %v1463
        %v1465 = vsel %vm1349, %v1455, %v1464
        %v1494 = vunpack.c.l.b16 %v1052
        %v1495 = vunpack.c.l.b16 %v1053
        %v1496 = vunpack.c.l.b16 %v1054
        %v1497 = vunpack.c.l.b16 %v1055
        %v1498 = vunpack.c.l.b16 %v1056
        %v1499 = vunpack.c.l.b16 %v1057
        %v1500 = vunpack.c.l.b16 %v1058
        %v1501 = vunpack.c.l.b16 %v1059
        %v1502 = vunpack.c.l.b16 %v1060
        %v1503 = vunpack.c.l.b16 %v1061
        %v1504 = vunpack.c.l.b16 %v1062
        %v1505 = vunpack.c.l.b16 %v1063
        %v1506 = vunpack.c.l.b16 %v1064
        %v1507 = vunpack.c.l.b16 %v1065
        %v1508 = vunpack.c.l.b16 %v1066
        %v1509 = vunpack.c.l.b16 %v1067
        %v1510 = vpack.c.b16 %v1495, %v1494
        %v1511 = vpack.c.b16 %v1497, %v1496
        %v1512 = vpack.c.b16 %v1499, %v1498
        %v1513 = vpack.c.b16 %v1501, %v1500
        %v1514 = vpack.c.b16 %v1503, %v1502
        %v1515 = vpack.c.b16 %v1505, %v1504
        %v1516 = vpack.c.b16 %v1507, %v1506
        %v1517 = vpack.c.b16 %v1509, %v1508
        %1526 = vmatprep.subr.bf16.mxu0 0
        %1527 = vmatpush1.bf16.msra.mxu0 %v1517
        %1528 = vmatprep.subr.bf16.mxu0 0
        %1529 = vmatpush1.bf16.msra.mxu0 %v1516
        %1530 = vmatprep.subr.bf16.mxu0 0
        %1531 = vmatpush1.bf16.msra.mxu0 %v1515
        %1532 = vmatprep.subr.bf16.mxu0 0
        %1533 = vmatpush1.bf16.msra.mxu0 %v1514
        %1534 = vmatprep.subr.bf16.mxu0 0
        %1535 = vmatpush1.bf16.msra.mxu0 %v1513
        %1536 = vmatprep.subr.bf16.mxu0 0
        %1537 = vmatpush1.bf16.msra.mxu0 %v1512
        %1538 = vmatprep.subr.bf16.mxu0 0
        %1539 = vmatpush1.bf16.msra.mxu0 %v1511
        %1540 = vmatprep.subr.bf16.mxu0 0
        %1541 = vmatpush1.bf16.msra.mxu0 %v1510
        %1542 = vmatprep.subr.bf16.mxu0 0
        %1543 = vmatpush2.bf16.msra.mxu0 0
        %1544 = vmatprep.subr.bf16.mxu0 0
        %1545 = vmatpush2.bf16.msra.mxu0 0
        %1546 = vmatprep.subr.bf16.mxu0 0
        %1547 = vmatpush2.bf16.msra.mxu0 0
        %1548 = vmatprep.subr.bf16.mxu0 0
        %1549 = vmatpush2.bf16.msra.mxu0 0
        %1550 = vmatprep.subr.bf16.mxu0 0
        %1551 = vmatpush2.bf16.msra.mxu0 0
        %1552 = vmatprep.subr.bf16.mxu0 0
        %1553 = vmatpush2.bf16.msra.mxu0 0
        %1554 = vmatprep.subr.bf16.mxu0 0
        %1555 = vmatpush2.bf16.msra.mxu0 0
        %1556 = vmatprep.subr.bf16.mxu0 0
        %1557 = vmatpush2.bf16.msra.mxu0 0
        %1558 = vmatprep.mubr.bf16.mxu0 0
        %1559 = vmatmul.mubr.bf16.gmra.mxu0 %v1366
        %v1560 = vpop.f32.mrf.mxu0
        %v1561 = vadd.f32 %v1240, %v1560
        %v1562 = vpop.f32.mrf.mxu0
        %v1563 = vpop.f32.mrf.mxu0
        %v1564 = vadd.f32 %v1243, %v1563
        %v1565 = vpop.f32.mrf.mxu0
        %1566 = vmatprep.mubr.bf16.mxu0 0
        %1567 = vmatmul.mubr.bf16.gmra.mxu0 %v1375
        %v1568 = vpop.f32.mrf.mxu0
        %v1569 = vadd.f32 %v1248, %v1568
        %v1570 = vpop.f32.mrf.mxu0
        %v1571 = vpop.f32.mrf.mxu0
        %v1572 = vadd.f32 %v1251, %v1571
        %v1573 = vpop.f32.mrf.mxu0
        %1574 = vmatprep.mubr.bf16.mxu0 0
        %1575 = vmatmul.mubr.bf16.gmra.mxu0 %v1384
        %v1576 = vpop.f32.mrf.mxu0
        %v1577 = vadd.f32 %v1256, %v1576
        %v1578 = vpop.f32.mrf.mxu0
        %v1579 = vpop.f32.mrf.mxu0
        %v1580 = vadd.f32 %v1259, %v1579
        %v1581 = vpop.f32.mrf.mxu0
        %1582 = vmatprep.mubr.bf16.mxu0 0
        %1583 = vmatmul.mubr.bf16.gmra.mxu0 %v1393
        %v1584 = vpop.f32.mrf.mxu0
        %v1585 = vadd.f32 %v1264, %v1584
        %v1586 = vpop.f32.mrf.mxu0
        %v1587 = vpop.f32.mrf.mxu0
        %v1588 = vadd.f32 %v1267, %v1587
        %v1589 = vpop.f32.mrf.mxu0
        %1590 = vmatprep.mubr.bf16.mxu0 0
        %1591 = vmatmul.mubr.bf16.gmra.mxu0 %v1402
        %v1592 = vpop.f32.mrf.mxu0
        %v1593 = vadd.f32 %v1272, %v1592
        %v1594 = vpop.f32.mrf.mxu0
        %v1595 = vpop.f32.mrf.mxu0
        %v1596 = vadd.f32 %v1275, %v1595
        %v1597 = vpop.f32.mrf.mxu0
        %1598 = vmatprep.mubr.bf16.mxu0 0
        %1599 = vmatmul.mubr.bf16.gmra.mxu0 %v1411
        %v1600 = vpop.f32.mrf.mxu0
        %v1601 = vadd.f32 %v1280, %v1600
        %v1602 = vpop.f32.mrf.mxu0
        %v1603 = vpop.f32.mrf.mxu0
        %v1604 = vadd.f32 %v1283, %v1603
        %v1605 = vpop.f32.mrf.mxu0
        %1606 = vmatprep.mubr.bf16.mxu0 0
        %1607 = vmatmul.mubr.bf16.gmra.mxu0 %v1420
        %v1608 = vpop.f32.mrf.mxu0
        %v1609 = vadd.f32 %v1288, %v1608
        %v1610 = vpop.f32.mrf.mxu0
        %v1611 = vpop.f32.mrf.mxu0
        %v1612 = vadd.f32 %v1291, %v1611
        %v1613 = vpop.f32.mrf.mxu0
        %1614 = vmatprep.mubr.bf16.mxu0 0
        %1615 = vmatmul.mubr.bf16.gmra.mxu0 %v1429
        %v1616 = vpop.f32.mrf.mxu0
        %v1617 = vadd.f32 %v1296, %v1616
        %v1618 = vpop.f32.mrf.mxu0
        %v1619 = vpop.f32.mrf.mxu0
        %v1620 = vadd.f32 %v1299, %v1619
        %v1621 = vpop.f32.mrf.mxu0
        %1622 = vmatprep.mubr.bf16.mxu0 0
        %1623 = vmatmul.mubr.bf16.gmra.mxu0 %v1438
        %v1624 = vpop.f32.mrf.mxu0
        %v1625 = vadd.f32 %v1304, %v1624
        %v1626 = vpop.f32.mrf.mxu0
        %v1627 = vpop.f32.mrf.mxu0
        %v1628 = vadd.f32 %v1307, %v1627
        %v1629 = vpop.f32.mrf.mxu0
        %1630 = vmatprep.mubr.bf16.mxu0 0
        %1631 = vmatmul.mubr.bf16.gmra.mxu0 %v1447
        %v1632 = vpop.f32.mrf.mxu0
        %v1633 = vadd.f32 %v1312, %v1632
        %v1634 = vpop.f32.mrf.mxu0
        %v1635 = vpop.f32.mrf.mxu0
        %v1636 = vadd.f32 %v1315, %v1635
        %v1637 = vpop.f32.mrf.mxu0
        %1638 = vmatprep.mubr.bf16.mxu0 0
        %1639 = vmatmul.mubr.bf16.gmra.mxu0 %v1456
        %v1640 = vpop.f32.mrf.mxu0
        %v1641 = vadd.f32 %v1320, %v1640
        %v1642 = vpop.f32.mrf.mxu0
        %v1643 = vpop.f32.mrf.mxu0
        %v1644 = vadd.f32 %v1323, %v1643
        %v1645 = vpop.f32.mrf.mxu0
        %1646 = vmatprep.mubr.bf16.mxu0 0
        %1647 = vmatmul.mubr.bf16.gmra.mxu0 %v1465
        %v1648 = vpop.f32.mrf.mxu0
        %v1649 = vadd.f32 %v1328, %v1648
        %v1650 = vpop.f32.mrf.mxu0
        %v1651 = vpop.f32.mrf.mxu0
        %v1652 = vadd.f32 %v1331, %v1651
        %v1653 = vpop.f32.mrf.mxu0
        %1654 = vdwg.mxu0
        %v1655 = vld [vmem:[#allocation2 + $0x4] sm:$0xf]
        %v1656 = vld [vmem:[#allocation2 + $0x8] sm:$0xf]
        %v1657 = vld [vmem:[#allocation2 + $0xc] sm:$0xf]
        %v1658 = vld [vmem:[#allocation2 + $0x10] sm:$0xf]
        %v1659 = vld [vmem:[#allocation2 + $0x14] sm:$0xf]
        %v1660 = vld [vmem:[#allocation2 + $0x18] sm:$0xf]
        %v1661 = vld [vmem:[#allocation2 + $0x1c] sm:$0xf]
        %v1662 = vld [vmem:[#allocation2 + $0x20] sm:$0xf]
        %v1663 = vld [vmem:[#allocation2 + $0x24] sm:$0xf]
        %v1664 = vld [vmem:[#allocation2 + $0x28] sm:$0xf]
        %v1665 = vld [vmem:[#allocation2 + $0x2c] sm:$0xf]
        %v1666 = vld [vmem:[#allocation2 + $0x30] sm:$0xf]
        %v1667 = vld [vmem:[#allocation2 + $0x34] sm:$0xf]
        %v1668 = vld [vmem:[#allocation2 + $0x38] sm:$0xf]
        %v1669 = vld [vmem:[#allocation2 + $0x3c] sm:$0xf]
        %v1670 = vld [vmem:[#allocation2 + $0x40] sm:$0xf]
        %v1671 = vld [vmem:[#allocation2 + $0x44] sm:$0xf]
        %v1672 = vld [vmem:[#allocation2 + $0x48] sm:$0xf]
        %v1673 = vld [vmem:[#allocation2 + $0x4c] sm:$0xf]
        %v1674 = vld [vmem:[#allocation2 + $0x50] sm:$0xf]
        %v1675 = vld [vmem:[#allocation2 + $0x54] sm:$0xf]
        %v1676 = vld [vmem:[#allocation2 + $0x58] sm:$0xf]
        %v1677 = vld [vmem:[#allocation2 + $0x5c] sm:$0xf]
        %v1678 = vld [vmem:[#allocation2 + $0x60] sm:$0xf]
        %v1679 = vld [vmem:[#allocation2 + $0x64] sm:$0x1]
        %s1680 = scalar_lea.vmem [#allocation8], 128
        %v1681 = vld [vmem:[%s1680] sm:$0xf]
        %v1682 = vld [vmem:[%s1680 + $0x4] sm:$0xf]
        %v1683 = vld [vmem:[%s1680 + $0x8] sm:$0xf]
        %v1684 = vld [vmem:[%s1680 + $0xc] sm:$0xf]
        %v1685 = vld [vmem:[%s1680 + $0x10] sm:$0xf]
        %v1686 = vld [vmem:[%s1680 + $0x14] sm:$0xf]
        %v1687 = vld [vmem:[%s1680 + $0x18] sm:$0xf]
        %v1688 = vld [vmem:[%s1680 + $0x1c] sm:$0xf]
        %v1689 = vld [vmem:[%s1680 + $0x20] sm:$0xf]
        %v1690 = vld [vmem:[%s1680 + $0x24] sm:$0xf]
        %v1691 = vld [vmem:[%s1680 + $0x28] sm:$0xf]
        %v1692 = vld [vmem:[%s1680 + $0x2c] sm:$0xf]
        %v1693 = vld [vmem:[%s1680 + $0x30] sm:$0xf]
        %v1694 = vld [vmem:[%s1680 + $0x34] sm:$0xf]
        %v1695 = vld [vmem:[%s1680 + $0x38] sm:$0xf]
        %v1696 = vld [vmem:[%s1680 + $0x3c] sm:$0xf]
        %v1722 = vunpack.c.l.b16 %v1655
        %v1723 = vunpack.c.l.b16 %v1656
        %v1724 = vunpack.c.l.b16 %v1657
        %v1725 = vunpack.c.l.b16 %v1658
        %v1726 = vunpack.c.l.b16 %v1659
        %v1727 = vunpack.c.l.b16 %v1660
        %v1728 = vunpack.c.l.b16 %v1661
        %v1729 = vunpack.c.l.b16 %v1662
        %v1730 = vunpack.c.l.b16 %v1663
        %v1731 = vunpack.c.l.b16 %v1664
        %v1732 = vunpack.c.l.b16 %v1665
        %v1733 = vunpack.c.l.b16 %v1666
        %v1734 = vunpack.c.l.b16 %v1667
        %v1735 = vunpack.c.l.b16 %v1668
        %v1736 = vunpack.c.l.b16 %v1669
        %v1737 = vunpack.c.l.b16 %v1670
        %v1738 = vunpack.c.l.b16 %v1671
        %v1739 = vunpack.c.l.b16 %v1672
        %v1740 = vunpack.c.l.b16 %v1673
        %v1741 = vunpack.c.l.b16 %v1674
        %v1742 = vunpack.c.l.b16 %v1675
        %v1743 = vunpack.c.l.b16 %v1676
        %v1744 = vunpack.c.l.b16 %v1677
        %v1745 = vunpack.c.l.b16 %v1678
        %v1746 = vunpack.c.l.b16 %v1679
        %v1747 = vpack.c.b16 %v1723, %v1722
        %v1748 = vpack.c.b16 %v1725, %v1724
        %v1749 = vpack.c.b16 %v1727, %v1726
        %v1750 = vpack.c.b16 %v1729, %v1728
        %v1751 = vpack.c.b16 %v1731, %v1730
        %v1752 = vpack.c.b16 %v1733, %v1732
        %v1753 = vpack.c.b16 %v1735, %v1734
        %v1754 = vpack.c.b16 %v1737, %v1736
        %v1755 = vpack.c.b16 %v1739, %v1738
        %v1756 = vpack.c.b16 %v1741, %v1740
        %v1757 = vpack.c.b16 %v1743, %v1742
        %v1758 = vpack.c.b16 %v1745, %v1744
        %v1759 = vpack.c.b16 %v1746, %v1746
        %vm1760 = vsmask.f32 7424
        %v1762 = vshrl.u32 %v1747, 16
        %v1764 = vshll.u32 %v1747, 16
        %v1766 = vrot.slane %v1764, 1
        %v1767 = vor.u32 %v1762, %v1766
        %v1769 = vshll.u32 %v1748, 16
        %v1771 = vrot.slane %v1769, 1
        %v1772 = vsel %vm1760, %v1767, %v1771
        %v1773 = vshrl.u32 %v1748, 16
        %v1775 = vor.u32 %v1773, %v1771
        %v1777 = vshll.u32 %v1749, 16
        %v1779 = vrot.slane %v1777, 1
        %v1780 = vsel %vm1760, %v1775, %v1779
        %v1781 = vshrl.u32 %v1749, 16
        %v1783 = vor.u32 %v1781, %v1779
        %v1785 = vshll.u32 %v1750, 16
        %v1787 = vrot.slane %v1785, 1
        %v1788 = vsel %vm1760, %v1783, %v1787
        %v1789 = vshrl.u32 %v1750, 16
        %v1791 = vor.u32 %v1789, %v1787
        %v1793 = vshll.u32 %v1751, 16
        %v1795 = vrot.slane %v1793, 1
        %v1796 = vsel %vm1760, %v1791, %v1795
        %v1797 = vshrl.u32 %v1751, 16
        %v1799 = vor.u32 %v1797, %v1795
        %v1801 = vshll.u32 %v1752, 16
        %v1803 = vrot.slane %v1801, 1
        %v1804 = vsel %vm1760, %v1799, %v1803
        %v1805 = vshrl.u32 %v1752, 16
        %v1807 = vor.u32 %v1805, %v1803
        %v1809 = vshll.u32 %v1753, 16
        %v1811 = vrot.slane %v1809, 1
        %v1812 = vsel %vm1760, %v1807, %v1811
        %v1813 = vshrl.u32 %v1753, 16
        %v1815 = vor.u32 %v1813, %v1811
        %v1817 = vshll.u32 %v1754, 16
        %v1819 = vrot.slane %v1817, 1
        %v1820 = vsel %vm1760, %v1815, %v1819
        %v1821 = vshrl.u32 %v1754, 16
        %v1823 = vor.u32 %v1821, %v1819
        %v1825 = vshll.u32 %v1755, 16
        %v1827 = vrot.slane %v1825, 1
        %v1828 = vsel %vm1760, %v1823, %v1827
        %v1829 = vshrl.u32 %v1755, 16
        %v1831 = vor.u32 %v1829, %v1827
        %v1833 = vshll.u32 %v1756, 16
        %v1835 = vrot.slane %v1833, 1
        %v1836 = vsel %vm1760, %v1831, %v1835
        %v1837 = vshrl.u32 %v1756, 16
        %v1839 = vor.u32 %v1837, %v1835
        %v1841 = vshll.u32 %v1757, 16
        %v1843 = vrot.slane %v1841, 1
        %v1844 = vsel %vm1760, %v1839, %v1843
        %v1845 = vshrl.u32 %v1757, 16
        %v1847 = vor.u32 %v1845, %v1843
        %v1849 = vshll.u32 %v1758, 16
        %v1851 = vrot.slane %v1849, 1
        %v1852 = vsel %vm1760, %v1847, %v1851
        %v1853 = vshrl.u32 %v1758, 16
        %v1855 = vor.u32 %v1853, %v1851
        %v1857 = vshll.u32 %v1759, 16
        %v1859 = vrot.slane %v1857, 1
        %v1860 = vsel %vm1760, %v1855, %v1859
        %v1889 = vunpack.c.l.b16 %v1681
        %v1890 = vunpack.c.l.b16 %v1682
        %v1891 = vunpack.c.l.b16 %v1683
        %v1892 = vunpack.c.l.b16 %v1684
        %v1893 = vunpack.c.l.b16 %v1685
        %v1894 = vunpack.c.l.b16 %v1686
        %v1895 = vunpack.c.l.b16 %v1687
        %v1896 = vunpack.c.l.b16 %v1688
        %v1897 = vunpack.c.l.b16 %v1689
        %v1898 = vunpack.c.l.b16 %v1690
        %v1899 = vunpack.c.l.b16 %v1691
        %v1900 = vunpack.c.l.b16 %v1692
        %v1901 = vunpack.c.l.b16 %v1693
        %v1902 = vunpack.c.l.b16 %v1694
        %v1903 = vunpack.c.l.b16 %v1695
        %v1904 = vunpack.c.l.b16 %v1696
        %v1905 = vpack.c.b16 %v1890, %v1889
        %v1906 = vpack.c.b16 %v1892, %v1891
        %v1907 = vpack.c.b16 %v1894, %v1893
        %v1908 = vpack.c.b16 %v1896, %v1895
        %v1909 = vpack.c.b16 %v1898, %v1897
        %v1910 = vpack.c.b16 %v1900, %v1899
        %v1911 = vpack.c.b16 %v1902, %v1901
        %v1912 = vpack.c.b16 %v1904, %v1903
        %1921 = vmatprep.subr.bf16.mxu0 0
        %1922 = vmatpush1.bf16.msra.mxu0 %v1912
        %1923 = vmatprep.subr.bf16.mxu0 0
        %1924 = vmatpush1.bf16.msra.mxu0 %v1911
        %1925 = vmatprep.subr.bf16.mxu0 0
        %1926 = vmatpush1.bf16.msra.mxu0 %v1910
        %1927 = vmatprep.subr.bf16.mxu0 0
        %1928 = vmatpush1.bf16.msra.mxu0 %v1909
        %1929 = vmatprep.subr.bf16.mxu0 0
        %1930 = vmatpush1.bf16.msra.mxu0 %v1908
        %1931 = vmatprep.subr.bf16.mxu0 0
        %1932 = vmatpush1.bf16.msra.mxu0 %v1907
        %1933 = vmatprep.subr.bf16.mxu0 0
        %1934 = vmatpush1.bf16.msra.mxu0 %v1906
        %1935 = vmatprep.subr.bf16.mxu0 0
        %1936 = vmatpush1.bf16.msra.mxu0 %v1905
        %1937 = vmatprep.subr.bf16.mxu0 0
        %1938 = vmatpush2.bf16.msra.mxu0 0
        %1939 = vmatprep.subr.bf16.mxu0 0
        %1940 = vmatpush2.bf16.msra.mxu0 0
        %1941 = vmatprep.subr.bf16.mxu0 0
        %1942 = vmatpush2.bf16.msra.mxu0 0
        %1943 = vmatprep.subr.bf16.mxu0 0
        %1944 = vmatpush2.bf16.msra.mxu0 0
        %1945 = vmatprep.subr.bf16.mxu0 0
        %1946 = vmatpush2.bf16.msra.mxu0 0
        %1947 = vmatprep.subr.bf16.mxu0 0
        %1948 = vmatpush2.bf16.msra.mxu0 0
        %1949 = vmatprep.subr.bf16.mxu0 0
        %1950 = vmatpush2.bf16.msra.mxu0 0
        %1951 = vmatprep.subr.bf16.mxu0 0
        %1952 = vmatpush2.bf16.msra.mxu0 0
        %1953 = vmatprep.mubr.bf16.mxu0 0
        %1954 = vmatmul.mubr.bf16.gmra.mxu0 %v1772
        %v1955 = vpop.f32.mrf.mxu0
        %v1956 = vadd.f32 0.0, %v1955
        %v1957 = vpop.f32.mrf.mxu0
        %v1958 = vpop.f32.mrf.mxu0
        %v1959 = vadd.f32 0.0, %v1958
        %v1960 = vpop.f32.mrf.mxu0
        %1961 = vmatprep.mubr.bf16.mxu0 0
        %1962 = vmatmul.mubr.bf16.gmra.mxu0 %v1780
        %v1963 = vpop.f32.mrf.mxu0
        %v1964 = vadd.f32 0.0, %v1963
        %v1965 = vpop.f32.mrf.mxu0
        %v1966 = vpop.f32.mrf.mxu0
        %v1967 = vadd.f32 0.0, %v1966
        %v1968 = vpop.f32.mrf.mxu0
        %1969 = vmatprep.mubr.bf16.mxu0 0
        %1970 = vmatmul.mubr.bf16.gmra.mxu0 %v1788
        %v1971 = vpop.f32.mrf.mxu0
        %v1972 = vadd.f32 0.0, %v1971
        %v1973 = vpop.f32.mrf.mxu0
        %v1974 = vpop.f32.mrf.mxu0
        %v1975 = vadd.f32 0.0, %v1974
        %v1976 = vpop.f32.mrf.mxu0
        %1977 = vmatprep.mubr.bf16.mxu0 0
        %1978 = vmatmul.mubr.bf16.gmra.mxu0 %v1796
        %v1979 = vpop.f32.mrf.mxu0
        %v1980 = vadd.f32 0.0, %v1979
        %v1981 = vpop.f32.mrf.mxu0
        %v1982 = vpop.f32.mrf.mxu0
        %v1983 = vadd.f32 0.0, %v1982
        %v1984 = vpop.f32.mrf.mxu0
        %1985 = vmatprep.mubr.bf16.mxu0 0
        %1986 = vmatmul.mubr.bf16.gmra.mxu0 %v1804
        %v1987 = vpop.f32.mrf.mxu0
        %v1988 = vadd.f32 0.0, %v1987
        %v1989 = vpop.f32.mrf.mxu0
        %v1990 = vpop.f32.mrf.mxu0
        %v1991 = vadd.f32 0.0, %v1990
        %v1992 = vpop.f32.mrf.mxu0
        %1993 = vmatprep.mubr.bf16.mxu0 0
        %1994 = vmatmul.mubr.bf16.gmra.mxu0 %v1812
        %v1995 = vpop.f32.mrf.mxu0
        %v1996 = vadd.f32 0.0, %v1995
        %v1997 = vpop.f32.mrf.mxu0
        %v1998 = vpop.f32.mrf.mxu0
        %v1999 = vadd.f32 0.0, %v1998
        %v2000 = vpop.f32.mrf.mxu0
        %2001 = vmatprep.mubr.bf16.mxu0 0
        %2002 = vmatmul.mubr.bf16.gmra.mxu0 %v1820
        %v2003 = vpop.f32.mrf.mxu0
        %v2004 = vadd.f32 0.0, %v2003
        %v2005 = vpop.f32.mrf.mxu0
        %v2006 = vpop.f32.mrf.mxu0
        %v2007 = vadd.f32 0.0, %v2006
        %v2008 = vpop.f32.mrf.mxu0
        %2009 = vmatprep.mubr.bf16.mxu0 0
        %2010 = vmatmul.mubr.bf16.gmra.mxu0 %v1828
        %v2011 = vpop.f32.mrf.mxu0
        %v2012 = vadd.f32 0.0, %v2011
        %v2013 = vpop.f32.mrf.mxu0
        %v2014 = vpop.f32.mrf.mxu0
        %v2015 = vadd.f32 0.0, %v2014
        %v2016 = vpop.f32.mrf.mxu0
        %2017 = vmatprep.mubr.bf16.mxu0 0
        %2018 = vmatmul.mubr.bf16.gmra.mxu0 %v1836
        %v2019 = vpop.f32.mrf.mxu0
        %v2020 = vadd.f32 0.0, %v2019
        %v2021 = vpop.f32.mrf.mxu0
        %v2022 = vpop.f32.mrf.mxu0
        %v2023 = vadd.f32 0.0, %v2022
        %v2024 = vpop.f32.mrf.mxu0
        %2025 = vmatprep.mubr.bf16.mxu0 0
        %2026 = vmatmul.mubr.bf16.gmra.mxu0 %v1844
        %v2027 = vpop.f32.mrf.mxu0
        %v2028 = vadd.f32 0.0, %v2027
        %v2029 = vpop.f32.mrf.mxu0
        %v2030 = vpop.f32.mrf.mxu0
        %v2031 = vadd.f32 0.0, %v2030
        %v2032 = vpop.f32.mrf.mxu0
        %2033 = vmatprep.mubr.bf16.mxu0 0
        %2034 = vmatmul.mubr.bf16.gmra.mxu0 %v1852
        %v2035 = vpop.f32.mrf.mxu0
        %v2036 = vadd.f32 0.0, %v2035
        %v2037 = vpop.f32.mrf.mxu0
        %v2038 = vpop.f32.mrf.mxu0
        %v2039 = vadd.f32 0.0, %v2038
        %v2040 = vpop.f32.mrf.mxu0
        %2041 = vmatprep.mubr.bf16.mxu0 0
        %2042 = vmatmul.mubr.bf16.gmra.mxu0 %v1860
        %v2043 = vpop.f32.mrf.mxu0
        %v2044 = vadd.f32 0.0, %v2043
        %v2045 = vpop.f32.mrf.mxu0
        %v2046 = vpop.f32.mrf.mxu0
        %v2047 = vadd.f32 0.0, %v2046
        %v2048 = vpop.f32.mrf.mxu0
        %2049 = vdwg.mxu0
        %v2050 = vadd.f32 %v1561, %v1956
        %v2051 = vadd.f32 %v1564, %v1959
        %v2052 = vadd.f32 %v1569, %v1964
        %v2053 = vadd.f32 %v1572, %v1967
        %v2054 = vadd.f32 %v1577, %v1972
        %v2055 = vadd.f32 %v1580, %v1975
        %v2056 = vadd.f32 %v1585, %v1980
        %v2057 = vadd.f32 %v1588, %v1983
        %v2058 = vadd.f32 %v1593, %v1988
        %v2059 = vadd.f32 %v1596, %v1991
        %v2060 = vadd.f32 %v1601, %v1996
        %v2061 = vadd.f32 %v1604, %v1999
        %v2062 = vadd.f32 %v1609, %v2004
        %v2063 = vadd.f32 %v1612, %v2007
        %v2064 = vadd.f32 %v1617, %v2012
        %v2065 = vadd.f32 %v1620, %v2015
        %v2066 = vadd.f32 %v1625, %v2020
        %v2067 = vadd.f32 %v1628, %v2023
        %v2068 = vadd.f32 %v1633, %v2028
        %v2069 = vadd.f32 %v1636, %v2031
        %v2070 = vadd.f32 %v1641, %v2036
        %v2071 = vadd.f32 %v1644, %v2039
        %v2072 = vadd.f32 %v1649, %v2044
        %v2073 = vadd.f32 %v1652, %v2047
        %v2074 = vld [vmem:[#allocation2 + $0xc] sm:$0x8]
        %v2075 = vld [vmem:[#allocation2 + $0x10] sm:$0xf]
        %v2076 = vld [vmem:[#allocation2 + $0x14] sm:$0xf]
        %v2077 = vld [vmem:[#allocation2 + $0x18] sm:$0xf]
        %v2078 = vld [vmem:[#allocation2 + $0x1c] sm:$0xf]
        %v2079 = vld [vmem:[#allocation2 + $0x20] sm:$0xf]
        %v2080 = vld [vmem:[#allocation2 + $0x24] sm:$0xf]
        %v2081 = vld [vmem:[#allocation2 + $0x28] sm:$0xf]
        %v2082 = vld [vmem:[#allocation2 + $0x2c] sm:$0xf]
        %v2083 = vld [vmem:[#allocation2 + $0x30] sm:$0xf]
        %v2084 = vld [vmem:[#allocation2 + $0x34] sm:$0xf]
        %v2085 = vld [vmem:[#allocation2 + $0x38] sm:$0xf]
        %v2086 = vld [vmem:[#allocation2 + $0x3c] sm:$0xf]
        %v2087 = vld [vmem:[#allocation2 + $0x40] sm:$0xf]
        %v2088 = vld [vmem:[#allocation2 + $0x44] sm:$0xf]
        %v2089 = vld [vmem:[#allocation2 + $0x48] sm:$0xf]
        %v2090 = vld [vmem:[#allocation2 + $0x4c] sm:$0xf]
        %v2091 = vld [vmem:[#allocation2 + $0x50] sm:$0xf]
        %v2092 = vld [vmem:[#allocation2 + $0x54] sm:$0xf]
        %v2093 = vld [vmem:[#allocation2 + $0x58] sm:$0xf]
        %v2094 = vld [vmem:[#allocation2 + $0x5c] sm:$0xf]
        %v2095 = vld [vmem:[#allocation2 + $0x60] sm:$0xf]
        %v2096 = vld [vmem:[#allocation2 + $0x64] sm:$0xf]
        %v2097 = vld [vmem:[#allocation2 + $0x68] sm:$0xf]
        %v2098 = vld [vmem:[#allocation2 + $0x6c] sm:$0xf]
        %s2099 = scalar_lea.vmem [#allocation8], 192
        %v2100 = vld [vmem:[%s2099] sm:$0xf]
        %v2101 = vld [vmem:[%s2099 + $0x4] sm:$0xf]
        %v2102 = vld [vmem:[%s2099 + $0x8] sm:$0xf]
        %v2103 = vld [vmem:[%s2099 + $0xc] sm:$0xf]
        %v2104 = vld [vmem:[%s2099 + $0x10] sm:$0xf]
        %v2105 = vld [vmem:[%s2099 + $0x14] sm:$0xf]
        %v2106 = vld [vmem:[%s2099 + $0x18] sm:$0xf]
        %v2107 = vld [vmem:[%s2099 + $0x1c] sm:$0xf]
        %v2108 = vld [vmem:[%s2099 + $0x20] sm:$0xf]
        %v2109 = vld [vmem:[%s2099 + $0x24] sm:$0xf]
        %v2110 = vld [vmem:[%s2099 + $0x28] sm:$0xf]
        %v2111 = vld [vmem:[%s2099 + $0x2c] sm:$0xf]
        %v2112 = vld [vmem:[%s2099 + $0x30] sm:$0xf]
        %v2113 = vld [vmem:[%s2099 + $0x34] sm:$0xf]
        %v2114 = vld [vmem:[%s2099 + $0x38] sm:$0xf]
        %v2115 = vld [vmem:[%s2099 + $0x3c] sm:$0xf]
        %v2141 = vunpack.c.l.b16 %v2074
        %v2142 = vunpack.c.l.b16 %v2075
        %v2143 = vunpack.c.l.b16 %v2076
        %v2144 = vunpack.c.l.b16 %v2077
        %v2145 = vunpack.c.l.b16 %v2078
        %v2146 = vunpack.c.l.b16 %v2079
        %v2147 = vunpack.c.l.b16 %v2080
        %v2148 = vunpack.c.l.b16 %v2081
        %v2149 = vunpack.c.l.b16 %v2082
        %v2150 = vunpack.c.l.b16 %v2083
        %v2151 = vunpack.c.l.b16 %v2084
        %v2152 = vunpack.c.l.b16 %v2085
        %v2153 = vunpack.c.l.b16 %v2086
        %v2154 = vunpack.c.l.b16 %v2087
        %v2155 = vunpack.c.l.b16 %v2088
        %v2156 = vunpack.c.l.b16 %v2089
        %v2157 = vunpack.c.l.b16 %v2090
        %v2158 = vunpack.c.l.b16 %v2091
        %v2159 = vunpack.c.l.b16 %v2092
        %v2160 = vunpack.c.l.b16 %v2093
        %v2161 = vunpack.c.l.b16 %v2094
        %v2162 = vunpack.c.l.b16 %v2095
        %v2163 = vunpack.c.l.b16 %v2096
        %v2164 = vunpack.c.l.b16 %v2097
        %v2165 = vunpack.c.l.b16 %v2098
        %v2166 = vpack.c.b16 %v2142, %v2141
        %v2167 = vpack.c.b16 %v2144, %v2143
        %v2168 = vpack.c.b16 %v2146, %v2145
        %v2169 = vpack.c.b16 %v2148, %v2147
        %v2170 = vpack.c.b16 %v2150, %v2149
        %v2171 = vpack.c.b16 %v2152, %v2151
        %v2172 = vpack.c.b16 %v2154, %v2153
        %v2173 = vpack.c.b16 %v2156, %v2155
        %v2174 = vpack.c.b16 %v2158, %v2157
        %v2175 = vpack.c.b16 %v2160, %v2159
        %v2176 = vpack.c.b16 %v2162, %v2161
        %v2177 = vpack.c.b16 %v2164, %v2163
        %v2178 = vpack.c.b16 %v2165, %v2165
        %v2180 = vshrl.u32 %v2166, 16
        %v2182 = vrot.slane %v2180, 3
        %v2183 = vshll.u32 %v2166, 16
        %v2185 = vrot.slane %v2183, 4
        %v2186 = vor.u32 %v2182, %v2185
        %v2188 = vshrl.u32 %v2167, 16
        %v2190 = vrot.slane %v2188, 3
        %v2191 = vshll.u32 %v2167, 16
        %v2193 = vrot.slane %v2191, 4
        %v2194 = vor.u32 %v2190, %v2193
        %v2195 = vsel %vm1349, %v2186, %v2194
        %v2197 = vshrl.u32 %v2168, 16
        %v2199 = vrot.slane %v2197, 3
        %v2200 = vshll.u32 %v2168, 16
        %v2202 = vrot.slane %v2200, 4
        %v2203 = vor.u32 %v2199, %v2202
        %v2204 = vsel %vm1349, %v2194, %v2203
        %v2206 = vshrl.u32 %v2169, 16
        %v2208 = vrot.slane %v2206, 3
        %v2209 = vshll.u32 %v2169, 16
        %v2211 = vrot.slane %v2209, 4
        %v2212 = vor.u32 %v2208, %v2211
        %v2213 = vsel %vm1349, %v2203, %v2212
        %v2215 = vshrl.u32 %v2170, 16
        %v2217 = vrot.slane %v2215, 3
        %v2218 = vshll.u32 %v2170, 16
        %v2220 = vrot.slane %v2218, 4
        %v2221 = vor.u32 %v2217, %v2220
        %v2222 = vsel %vm1349, %v2212, %v2221
        %v2224 = vshrl.u32 %v2171, 16
        %v2226 = vrot.slane %v2224, 3
        %v2227 = vshll.u32 %v2171, 16
        %v2229 = vrot.slane %v2227, 4
        %v2230 = vor.u32 %v2226, %v2229
        %v2231 = vsel %vm1349, %v2221, %v2230
        %v2233 = vshrl.u32 %v2172, 16
        %v2235 = vrot.slane %v2233, 3
        %v2236 = vshll.u32 %v2172, 16
        %v2238 = vrot.slane %v2236, 4
        %v2239 = vor.u32 %v2235, %v2238
        %v2240 = vsel %vm1349, %v2230, %v2239
        %v2242 = vshrl.u32 %v2173, 16
        %v2244 = vrot.slane %v2242, 3
        %v2245 = vshll.u32 %v2173, 16
        %v2247 = vrot.slane %v2245, 4
        %v2248 = vor.u32 %v2244, %v2247
        %v2249 = vsel %vm1349, %v2239, %v2248
        %v2251 = vshrl.u32 %v2174, 16
        %v2253 = vrot.slane %v2251, 3
        %v2254 = vshll.u32 %v2174, 16
        %v2256 = vrot.slane %v2254, 4
        %v2257 = vor.u32 %v2253, %v2256
        %v2258 = vsel %vm1349, %v2248, %v2257
        %v2260 = vshrl.u32 %v2175, 16
        %v2262 = vrot.slane %v2260, 3
        %v2263 = vshll.u32 %v2175, 16
        %v2265 = vrot.slane %v2263, 4
        %v2266 = vor.u32 %v2262, %v2265
        %v2267 = vsel %vm1349, %v2257, %v2266
        %v2269 = vshrl.u32 %v2176, 16
        %v2271 = vrot.slane %v2269, 3
        %v2272 = vshll.u32 %v2176, 16
        %v2274 = vrot.slane %v2272, 4
        %v2275 = vor.u32 %v2271, %v2274
        %v2276 = vsel %vm1349, %v2266, %v2275
        %v2278 = vshrl.u32 %v2177, 16
        %v2280 = vrot.slane %v2278, 3
        %v2281 = vshll.u32 %v2177, 16
        %v2283 = vrot.slane %v2281, 4
        %v2284 = vor.u32 %v2280, %v2283
        %v2285 = vsel %vm1349, %v2275, %v2284
        %v2287 = vshrl.u32 %v2178, 16
        %v2289 = vrot.slane %v2287, 3
        %v2290 = vshll.u32 %v2178, 16
        %v2292 = vrot.slane %v2290, 4
        %v2293 = vor.u32 %v2289, %v2292
        %v2294 = vsel %vm1349, %v2284, %v2293
        %v2323 = vunpack.c.l.b16 %v2100
        %v2324 = vunpack.c.l.b16 %v2101
        %v2325 = vunpack.c.l.b16 %v2102
        %v2326 = vunpack.c.l.b16 %v2103
        %v2327 = vunpack.c.l.b16 %v2104
        %v2328 = vunpack.c.l.b16 %v2105
        %v2329 = vunpack.c.l.b16 %v2106
        %v2330 = vunpack.c.l.b16 %v2107
        %v2331 = vunpack.c.l.b16 %v2108
        %v2332 = vunpack.c.l.b16 %v2109
        %v2333 = vunpack.c.l.b16 %v2110
        %v2334 = vunpack.c.l.b16 %v2111
        %v2335 = vunpack.c.l.b16 %v2112
        %v2336 = vunpack.c.l.b16 %v2113
        %v2337 = vunpack.c.l.b16 %v2114
        %v2338 = vunpack.c.l.b16 %v2115
        %v2339 = vpack.c.b16 %v2324, %v2323
        %v2340 = vpack.c.b16 %v2326, %v2325
        %v2341 = vpack.c.b16 %v2328, %v2327
        %v2342 = vpack.c.b16 %v2330, %v2329
        %v2343 = vpack.c.b16 %v2332, %v2331
        %v2344 = vpack.c.b16 %v2334, %v2333
        %v2345 = vpack.c.b16 %v2336, %v2335
        %v2346 = vpack.c.b16 %v2338, %v2337
        %2355 = vmatprep.subr.bf16.mxu0 0
        %2356 = vmatpush1.bf16.msra.mxu0 %v2346
        %2357 = vmatprep.subr.bf16.mxu0 0
        %2358 = vmatpush1.bf16.msra.mxu0 %v2345
        %2359 = vmatprep.subr.bf16.mxu0 0
        %2360 = vmatpush1.bf16.msra.mxu0 %v2344
        %2361 = vmatprep.subr.bf16.mxu0 0
        %2362 = vmatpush1.bf16.msra.mxu0 %v2343
        %2363 = vmatprep.subr.bf16.mxu0 0
        %2364 = vmatpush1.bf16.msra.mxu0 %v2342
        %2365 = vmatprep.subr.bf16.mxu0 0
        %2366 = vmatpush1.bf16.msra.mxu0 %v2341
        %2367 = vmatprep.subr.bf16.mxu0 0
        %2368 = vmatpush1.bf16.msra.mxu0 %v2340
        %2369 = vmatprep.subr.bf16.mxu0 0
        %2370 = vmatpush1.bf16.msra.mxu0 %v2339
        %2371 = vmatprep.subr.bf16.mxu0 0
        %2372 = vmatpush2.bf16.msra.mxu0 0
        %2373 = vmatprep.subr.bf16.mxu0 0
        %2374 = vmatpush2.bf16.msra.mxu0 0
        %2375 = vmatprep.subr.bf16.mxu0 0
        %2376 = vmatpush2.bf16.msra.mxu0 0
        %2377 = vmatprep.subr.bf16.mxu0 0
        %2378 = vmatpush2.bf16.msra.mxu0 0
        %2379 = vmatprep.subr.bf16.mxu0 0
        %2380 = vmatpush2.bf16.msra.mxu0 0
        %2381 = vmatprep.subr.bf16.mxu0 0
        %2382 = vmatpush2.bf16.msra.mxu0 0
        %2383 = vmatprep.subr.bf16.mxu0 0
        %2384 = vmatpush2.bf16.msra.mxu0 0
        %2385 = vmatprep.subr.bf16.mxu0 0
        %2386 = vmatpush2.bf16.msra.mxu0 0
        %2387 = vmatprep.mubr.bf16.mxu0 0
        %2388 = vmatmul.mubr.bf16.gmra.mxu0 %v2195
        %v2389 = vpop.f32.mrf.mxu0
        %v2390 = vadd.f32 0.0, %v2389
        %v2391 = vpop.f32.mrf.mxu0
        %v2392 = vpop.f32.mrf.mxu0
        %v2393 = vadd.f32 0.0, %v2392
        %v2394 = vpop.f32.mrf.mxu0
        %2395 = vmatprep.mubr.bf16.mxu0 0
        %2396 = vmatmul.mubr.bf16.gmra.mxu0 %v2204
        %v2397 = vpop.f32.mrf.mxu0
        %v2398 = vadd.f32 0.0, %v2397
        %v2399 = vpop.f32.mrf.mxu0
        %v2400 = vpop.f32.mrf.mxu0
        %v2401 = vadd.f32 0.0, %v2400
        %v2402 = vpop.f32.mrf.mxu0
        %2403 = vmatprep.mubr.bf16.mxu0 0
        %2404 = vmatmul.mubr.bf16.gmra.mxu0 %v2213
        %v2405 = vpop.f32.mrf.mxu0
        %v2406 = vadd.f32 0.0, %v2405
        %v2407 = vpop.f32.mrf.mxu0
        %v2408 = vpop.f32.mrf.mxu0
        %v2409 = vadd.f32 0.0, %v2408
        %v2410 = vpop.f32.mrf.mxu0
        %2411 = vmatprep.mubr.bf16.mxu0 0
        %2412 = vmatmul.mubr.bf16.gmra.mxu0 %v2222
        %v2413 = vpop.f32.mrf.mxu0
        %v2414 = vadd.f32 0.0, %v2413
        %v2415 = vpop.f32.mrf.mxu0
        %v2416 = vpop.f32.mrf.mxu0
        %v2417 = vadd.f32 0.0, %v2416
        %v2418 = vpop.f32.mrf.mxu0
        %2419 = vmatprep.mubr.bf16.mxu0 0
        %2420 = vmatmul.mubr.bf16.gmra.mxu0 %v2231
        %v2421 = vpop.f32.mrf.mxu0
        %v2422 = vadd.f32 0.0, %v2421
        %v2423 = vpop.f32.mrf.mxu0
        %v2424 = vpop.f32.mrf.mxu0
        %v2425 = vadd.f32 0.0, %v2424
        %v2426 = vpop.f32.mrf.mxu0
        %2427 = vmatprep.mubr.bf16.mxu0 0
        %2428 = vmatmul.mubr.bf16.gmra.mxu0 %v2240
        %v2429 = vpop.f32.mrf.mxu0
        %v2430 = vadd.f32 0.0, %v2429
        %v2431 = vpop.f32.mrf.mxu0
        %v2432 = vpop.f32.mrf.mxu0
        %v2433 = vadd.f32 0.0, %v2432
        %v2434 = vpop.f32.mrf.mxu0
        %2435 = vmatprep.mubr.bf16.mxu0 0
        %2436 = vmatmul.mubr.bf16.gmra.mxu0 %v2249
        %v2437 = vpop.f32.mrf.mxu0
        %v2438 = vadd.f32 0.0, %v2437
        %v2439 = vpop.f32.mrf.mxu0
        %v2440 = vpop.f32.mrf.mxu0
        %v2441 = vadd.f32 0.0, %v2440
        %v2442 = vpop.f32.mrf.mxu0
        %2443 = vmatprep.mubr.bf16.mxu0 0
        %2444 = vmatmul.mubr.bf16.gmra.mxu0 %v2258
        %v2445 = vpop.f32.mrf.mxu0
        %v2446 = vadd.f32 0.0, %v2445
        %v2447 = vpop.f32.mrf.mxu0
        %v2448 = vpop.f32.mrf.mxu0
        %v2449 = vadd.f32 0.0, %v2448
        %v2450 = vpop.f32.mrf.mxu0
        %2451 = vmatprep.mubr.bf16.mxu0 0
        %2452 = vmatmul.mubr.bf16.gmra.mxu0 %v2267
        %v2453 = vpop.f32.mrf.mxu0
        %v2454 = vadd.f32 0.0, %v2453
        %v2455 = vpop.f32.mrf.mxu0
        %v2456 = vpop.f32.mrf.mxu0
        %v2457 = vadd.f32 0.0, %v2456
        %v2458 = vpop.f32.mrf.mxu0
        %2459 = vmatprep.mubr.bf16.mxu0 0
        %2460 = vmatmul.mubr.bf16.gmra.mxu0 %v2276
        %v2461 = vpop.f32.mrf.mxu0
        %v2462 = vadd.f32 0.0, %v2461
        %v2463 = vpop.f32.mrf.mxu0
        %v2464 = vpop.f32.mrf.mxu0
        %v2465 = vadd.f32 0.0, %v2464
        %v2466 = vpop.f32.mrf.mxu0
        %2467 = vmatprep.mubr.bf16.mxu0 0
        %2468 = vmatmul.mubr.bf16.gmra.mxu0 %v2285
        %v2469 = vpop.f32.mrf.mxu0
        %v2470 = vadd.f32 0.0, %v2469
        %v2471 = vpop.f32.mrf.mxu0
        %v2472 = vpop.f32.mrf.mxu0
        %v2473 = vadd.f32 0.0, %v2472
        %v2474 = vpop.f32.mrf.mxu0
        %2475 = vmatprep.mubr.bf16.mxu0 0
        %2476 = vmatmul.mubr.bf16.gmra.mxu0 %v2294
        %v2477 = vpop.f32.mrf.mxu0
        %v2478 = vadd.f32 0.0, %v2477
        %v2479 = vpop.f32.mrf.mxu0
        %v2480 = vpop.f32.mrf.mxu0
        %v2481 = vadd.f32 0.0, %v2480
        %v2482 = vpop.f32.mrf.mxu0
        %2483 = vdwg.mxu0
        %v2484 = vadd.f32 %v2050, %v2390
        %v2485 = vadd.f32 %v2051, %v2393
        %v2486 = vadd.f32 %v2052, %v2398
        %v2487 = vadd.f32 %v2053, %v2401
        %v2488 = vadd.f32 %v2054, %v2406
        %v2489 = vadd.f32 %v2055, %v2409
        %v2490 = vadd.f32 %v2056, %v2414
        %v2491 = vadd.f32 %v2057, %v2417
        %v2492 = vadd.f32 %v2058, %v2422
        %v2493 = vadd.f32 %v2059, %v2425
        %v2494 = vadd.f32 %v2060, %v2430
        %v2495 = vadd.f32 %v2061, %v2433
        %v2496 = vadd.f32 %v2062, %v2438
        %v2497 = vadd.f32 %v2063, %v2441
        %v2498 = vadd.f32 %v2064, %v2446
        %v2499 = vadd.f32 %v2065, %v2449
        %v2500 = vadd.f32 %v2066, %v2454
        %v2501 = vadd.f32 %v2067, %v2457
        %v2502 = vadd.f32 %v2068, %v2462
        %v2503 = vadd.f32 %v2069, %v2465
        %v2504 = vadd.f32 %v2070, %v2470
        %v2505 = vadd.f32 %v2071, %v2473
        %v2506 = vadd.f32 %v2072, %v2478
        %v2507 = vadd.f32 %v2073, %v2481
        %s2508 = scalar_lea.vmem [#allocation8], 256
        %v2509 = vld [vmem:[%s2508] sm:$0xf]
        %v2510 = vld [vmem:[%s2508 + $0x4] sm:$0xf]
        %v2511 = vld [vmem:[%s2508 + $0x8] sm:$0xf]
        %v2512 = vld [vmem:[%s2508 + $0xc] sm:$0xf]
        %v2513 = vld [vmem:[%s2508 + $0x10] sm:$0xf]
        %v2514 = vld [vmem:[%s2508 + $0x14] sm:$0xf]
        %v2515 = vld [vmem:[%s2508 + $0x18] sm:$0xf]
        %v2516 = vld [vmem:[%s2508 + $0x1c] sm:$0xf]
        %v2517 = vld [vmem:[%s2508 + $0x20] sm:$0xf]
        %v2518 = vld [vmem:[%s2508 + $0x24] sm:$0xf]
        %v2519 = vld [vmem:[%s2508 + $0x28] sm:$0xf]
        %v2520 = vld [vmem:[%s2508 + $0x2c] sm:$0xf]
        %v2521 = vld [vmem:[%s2508 + $0x30] sm:$0xf]
        %v2522 = vld [vmem:[%s2508 + $0x34] sm:$0xf]
        %v2523 = vld [vmem:[%s2508 + $0x38] sm:$0xf]
        %v2524 = vld [vmem:[%s2508 + $0x3c] sm:$0xf]
        %v2525 = vpack.c.b16 %v2143, %v2142
        %v2526 = vpack.c.b16 %v2145, %v2144
        %v2527 = vpack.c.b16 %v2147, %v2146
        %v2528 = vpack.c.b16 %v2149, %v2148
        %v2529 = vpack.c.b16 %v2151, %v2150
        %v2530 = vpack.c.b16 %v2153, %v2152
        %v2531 = vpack.c.b16 %v2155, %v2154
        %v2532 = vpack.c.b16 %v2157, %v2156
        %v2533 = vpack.c.b16 %v2159, %v2158
        %v2534 = vpack.c.b16 %v2161, %v2160
        %v2535 = vpack.c.b16 %v2163, %v2162
        %v2536 = vpack.c.b16 %v2165, %v2164
        %v2565 = vunpack.c.l.b16 %v2509
        %v2566 = vunpack.c.l.b16 %v2510
        %v2567 = vunpack.c.l.b16 %v2511
        %v2568 = vunpack.c.l.b16 %v2512
        %v2569 = vunpack.c.l.b16 %v2513
        %v2570 = vunpack.c.l.b16 %v2514
        %v2571 = vunpack.c.l.b16 %v2515
        %v2572 = vunpack.c.l.b16 %v2516
        %v2573 = vunpack.c.l.b16 %v2517
        %v2574 = vunpack.c.l.b16 %v2518
        %v2575 = vunpack.c.l.b16 %v2519
        %v2576 = vunpack.c.l.b16 %v2520
        %v2577 = vunpack.c.l.b16 %v2521
        %v2578 = vunpack.c.l.b16 %v2522
        %v2579 = vunpack.c.l.b16 %v2523
        %v2580 = vunpack.c.l.b16 %v2524
        %v2581 = vpack.c.b16 %v2566, %v2565
        %v2582 = vpack.c.b16 %v2568, %v2567
        %v2583 = vpack.c.b16 %v2570, %v2569
        %v2584 = vpack.c.b16 %v2572, %v2571
        %v2585 = vpack.c.b16 %v2574, %v2573
        %v2586 = vpack.c.b16 %v2576, %v2575
        %v2587 = vpack.c.b16 %v2578, %v2577
        %v2588 = vpack.c.b16 %v2580, %v2579
        %2597 = vmatprep.subr.bf16.mxu0 0
        %2598 = vmatpush1.bf16.msra.mxu0 %v2588
        %2599 = vmatprep.subr.bf16.mxu0 0
        %2600 = vmatpush1.bf16.msra.mxu0 %v2587
        %2601 = vmatprep.subr.bf16.mxu0 0
        %2602 = vmatpush1.bf16.msra.mxu0 %v2586
        %2603 = vmatprep.subr.bf16.mxu0 0
        %2604 = vmatpush1.bf16.msra.mxu0 %v2585
        %2605 = vmatprep.subr.bf16.mxu0 0
        %2606 = vmatpush1.bf16.msra.mxu0 %v2584
        %2607 = vmatprep.subr.bf16.mxu0 0
        %2608 = vmatpush1.bf16.msra.mxu0 %v2583
        %2609 = vmatprep.subr.bf16.mxu0 0
        %2610 = vmatpush1.bf16.msra.mxu0 %v2582
        %2611 = vmatprep.subr.bf16.mxu0 0
        %2612 = vmatpush1.bf16.msra.mxu0 %v2581
        %2613 = vmatprep.subr.bf16.mxu0 0
        %2614 = vmatpush2.bf16.msra.mxu0 0
        %2615 = vmatprep.subr.bf16.mxu0 0
        %2616 = vmatpush2.bf16.msra.mxu0 0
        %2617 = vmatprep.subr.bf16.mxu0 0
        %2618 = vmatpush2.bf16.msra.mxu0 0
        %2619 = vmatprep.subr.bf16.mxu0 0
        %2620 = vmatpush2.bf16.msra.mxu0 0
        %2621 = vmatprep.subr.bf16.mxu0 0
        %2622 = vmatpush2.bf16.msra.mxu0 0
        %2623 = vmatprep.subr.bf16.mxu0 0
        %2624 = vmatpush2.bf16.msra.mxu0 0
        %2625 = vmatprep.subr.bf16.mxu0 0
        %2626 = vmatpush2.bf16.msra.mxu0 0
        %2627 = vmatprep.subr.bf16.mxu0 0
        %2628 = vmatpush2.bf16.msra.mxu0 0
        %2629 = vmatprep.mubr.bf16.mxu0 0
        %2630 = vmatmul.mubr.bf16.gmra.mxu0 %v2525
        %v2631 = vpop.f32.mrf.mxu0
        %v2632 = vadd.f32 0.0, %v2631
        %v2633 = vpop.f32.mrf.mxu0
        %v2634 = vpop.f32.mrf.mxu0
        %v2635 = vadd.f32 0.0, %v2634
        %v2636 = vpop.f32.mrf.mxu0
        %2637 = vmatprep.mubr.bf16.mxu0 0
        %2638 = vmatmul.mubr.bf16.gmra.mxu0 %v2526
        %v2639 = vpop.f32.mrf.mxu0
        %v2640 = vadd.f32 0.0, %v2639
        %v2641 = vpop.f32.mrf.mxu0
        %v2642 = vpop.f32.mrf.mxu0
        %v2643 = vadd.f32 0.0, %v2642
        %v2644 = vpop.f32.mrf.mxu0
        %2645 = vmatprep.mubr.bf16.mxu0 0
        %2646 = vmatmul.mubr.bf16.gmra.mxu0 %v2527
        %v2647 = vpop.f32.mrf.mxu0
        %v2648 = vadd.f32 0.0, %v2647
        %v2649 = vpop.f32.mrf.mxu0
        %v2650 = vpop.f32.mrf.mxu0
        %v2651 = vadd.f32 0.0, %v2650
        %v2652 = vpop.f32.mrf.mxu0
        %2653 = vmatprep.mubr.bf16.mxu0 0
        %2654 = vmatmul.mubr.bf16.gmra.mxu0 %v2528
        %v2655 = vpop.f32.mrf.mxu0
        %v2656 = vadd.f32 0.0, %v2655
        %v2657 = vpop.f32.mrf.mxu0
        %v2658 = vpop.f32.mrf.mxu0
        %v2659 = vadd.f32 0.0, %v2658
        %v2660 = vpop.f32.mrf.mxu0
        %2661 = vmatprep.mubr.bf16.mxu0 0
        %2662 = vmatmul.mubr.bf16.gmra.mxu0 %v2529
        %v2663 = vpop.f32.mrf.mxu0
        %v2664 = vadd.f32 0.0, %v2663
        %v2665 = vpop.f32.mrf.mxu0
        %v2666 = vpop.f32.mrf.mxu0
        %v2667 = vadd.f32 0.0, %v2666
        %v2668 = vpop.f32.mrf.mxu0
        %2669 = vmatprep.mubr.bf16.mxu0 0
        %2670 = vmatmul.mubr.bf16.gmra.mxu0 %v2530
        %v2671 = vpop.f32.mrf.mxu0
        %v2672 = vadd.f32 0.0, %v2671
        %v2673 = vpop.f32.mrf.mxu0
        %v2674 = vpop.f32.mrf.mxu0
        %v2675 = vadd.f32 0.0, %v2674
        %v2676 = vpop.f32.mrf.mxu0
        %2677 = vmatprep.mubr.bf16.mxu0 0
        %2678 = vmatmul.mubr.bf16.gmra.mxu0 %v2531
        %v2679 = vpop.f32.mrf.mxu0
        %v2680 = vadd.f32 0.0, %v2679
        %v2681 = vpop.f32.mrf.mxu0
        %v2682 = vpop.f32.mrf.mxu0
        %v2683 = vadd.f32 0.0, %v2682
        %v2684 = vpop.f32.mrf.mxu0
        %2685 = vmatprep.mubr.bf16.mxu0 0
        %2686 = vmatmul.mubr.bf16.gmra.mxu0 %v2532
        %v2687 = vpop.f32.mrf.mxu0
        %v2688 = vadd.f32 0.0, %v2687
        %v2689 = vpop.f32.mrf.mxu0
        %v2690 = vpop.f32.mrf.mxu0
        %v2691 = vadd.f32 0.0, %v2690
        %v2692 = vpop.f32.mrf.mxu0
        %2693 = vmatprep.mubr.bf16.mxu0 0
        %2694 = vmatmul.mubr.bf16.gmra.mxu0 %v2533
        %v2695 = vpop.f32.mrf.mxu0
        %v2696 = vadd.f32 0.0, %v2695
        %v2697 = vpop.f32.mrf.mxu0
        %v2698 = vpop.f32.mrf.mxu0
        %v2699 = vadd.f32 0.0, %v2698
        %v2700 = vpop.f32.mrf.mxu0
        %2701 = vmatprep.mubr.bf16.mxu0 0
        %2702 = vmatmul.mubr.bf16.gmra.mxu0 %v2534
        %v2703 = vpop.f32.mrf.mxu0
        %v2704 = vadd.f32 0.0, %v2703
        %v2705 = vpop.f32.mrf.mxu0
        %v2706 = vpop.f32.mrf.mxu0
        %v2707 = vadd.f32 0.0, %v2706
        %v2708 = vpop.f32.mrf.mxu0
        %2709 = vmatprep.mubr.bf16.mxu0 0
        %2710 = vmatmul.mubr.bf16.gmra.mxu0 %v2535
        %v2711 = vpop.f32.mrf.mxu0
        %v2712 = vadd.f32 0.0, %v2711
        %v2713 = vpop.f32.mrf.mxu0
        %v2714 = vpop.f32.mrf.mxu0
        %v2715 = vadd.f32 0.0, %v2714
        %v2716 = vpop.f32.mrf.mxu0
        %2717 = vmatprep.mubr.bf16.mxu0 0
        %2718 = vmatmul.mubr.bf16.gmra.mxu0 %v2536
        %v2719 = vpop.f32.mrf.mxu0
        %v2720 = vadd.f32 0.0, %v2719
        %v2721 = vpop.f32.mrf.mxu0
        %v2722 = vpop.f32.mrf.mxu0
        %v2723 = vadd.f32 0.0, %v2722
        %v2724 = vpop.f32.mrf.mxu0
        %2725 = vdwg.mxu0
        %v2726 = vadd.f32 %v2484, %v2632
        %v2727 = vadd.f32 %v2485, %v2635
        %v2728 = vadd.f32 %v2486, %v2640
        %v2729 = vadd.f32 %v2487, %v2643
        %v2730 = vadd.f32 %v2488, %v2648
        %v2731 = vadd.f32 %v2489, %v2651
        %v2732 = vadd.f32 %v2490, %v2656
        %v2733 = vadd.f32 %v2491, %v2659
        %v2734 = vadd.f32 %v2492, %v2664
        %v2735 = vadd.f32 %v2493, %v2667
        %v2736 = vadd.f32 %v2494, %v2672
        %v2737 = vadd.f32 %v2495, %v2675
        %v2738 = vadd.f32 %v2496, %v2680
        %v2739 = vadd.f32 %v2497, %v2683
        %v2740 = vadd.f32 %v2498, %v2688
        %v2741 = vadd.f32 %v2499, %v2691
        %v2742 = vadd.f32 %v2500, %v2696
        %v2743 = vadd.f32 %v2501, %v2699
        %v2744 = vadd.f32 %v2502, %v2704
        %v2745 = vadd.f32 %v2503, %v2707
        %v2746 = vadd.f32 %v2504, %v2712
        %v2747 = vadd.f32 %v2505, %v2715
        %v2748 = vadd.f32 %v2506, %v2720
        %v2749 = vadd.f32 %v2507, %v2723
        %v2750 = vld [vmem:[#allocation2 + $0x10] sm:$0xf]
        %v2751 = vld [vmem:[#allocation2 + $0x14] sm:$0xf]
        %v2752 = vld [vmem:[#allocation2 + $0x18] sm:$0xf]
        %v2753 = vld [vmem:[#allocation2 + $0x1c] sm:$0xf]
        %v2754 = vld [vmem:[#allocation2 + $0x20] sm:$0xf]
        %v2755 = vld [vmem:[#allocation2 + $0x24] sm:$0xf]
        %v2756 = vld [vmem:[#allocation2 + $0x28] sm:$0xf]
        %v2757 = vld [vmem:[#allocation2 + $0x2c] sm:$0xf]
        %v2758 = vld [vmem:[#allocation2 + $0x30] sm:$0xf]
        %v2759 = vld [vmem:[#allocation2 + $0x34] sm:$0xf]
        %v2760 = vld [vmem:[#allocation2 + $0x38] sm:$0xf]
        %v2761 = vld [vmem:[#allocation2 + $0x3c] sm:$0xf]
        %v2762 = vld [vmem:[#allocation2 + $0x40] sm:$0xf]
        %v2763 = vld [vmem:[#allocation2 + $0x44] sm:$0xf]
        %v2764 = vld [vmem:[#allocation2 + $0x48] sm:$0xf]
        %v2765 = vld [vmem:[#allocation2 + $0x4c] sm:$0xf]
        %v2766 = vld [vmem:[#allocation2 + $0x50] sm:$0xf]
        %v2767 = vld [vmem:[#allocation2 + $0x54] sm:$0xf]
        %v2768 = vld [vmem:[#allocation2 + $0x58] sm:$0xf]
        %v2769 = vld [vmem:[#allocation2 + $0x5c] sm:$0xf]
        %v2770 = vld [vmem:[#allocation2 + $0x60] sm:$0xf]
        %v2771 = vld [vmem:[#allocation2 + $0x64] sm:$0xf]
        %v2772 = vld [vmem:[#allocation2 + $0x68] sm:$0xf]
        %v2773 = vld [vmem:[#allocation2 + $0x6c] sm:$0xf]
        %v2774 = vld [vmem:[#allocation2 + $0x70] sm:$0x1]
        %s2775 = scalar_lea.vmem [#allocation8], 320
        %v2776 = vld [vmem:[%s2775] sm:$0xf]
        %v2777 = vld [vmem:[%s2775 + $0x4] sm:$0xf]
        %v2778 = vld [vmem:[%s2775 + $0x8] sm:$0xf]
        %v2779 = vld [vmem:[%s2775 + $0xc] sm:$0xf]
        %v2780 = vld [vmem:[%s2775 + $0x10] sm:$0xf]
        %v2781 = vld [vmem:[%s2775 + $0x14] sm:$0xf]
        %v2782 = vld [vmem:[%s2775 + $0x18] sm:$0xf]
        %v2783 = vld [vmem:[%s2775 + $0x1c] sm:$0xf]
        %v2784 = vld [vmem:[%s2775 + $0x20] sm:$0xf]
        %v2785 = vld [vmem:[%s2775 + $0x24] sm:$0xf]
        %v2786 = vld [vmem:[%s2775 + $0x28] sm:$0xf]
        %v2787 = vld [vmem:[%s2775 + $0x2c] sm:$0xf]
        %v2788 = vld [vmem:[%s2775 + $0x30] sm:$0xf]
        %v2789 = vld [vmem:[%s2775 + $0x34] sm:$0xf]
        %v2790 = vld [vmem:[%s2775 + $0x38] sm:$0xf]
        %v2791 = vld [vmem:[%s2775 + $0x3c] sm:$0xf]
        %v2817 = vunpack.c.l.b16 %v2750
        %v2818 = vunpack.c.l.b16 %v2751
        %v2819 = vunpack.c.l.b16 %v2752
        %v2820 = vunpack.c.l.b16 %v2753
        %v2821 = vunpack.c.l.b16 %v2754
        %v2822 = vunpack.c.l.b16 %v2755
        %v2823 = vunpack.c.l.b16 %v2756
        %v2824 = vunpack.c.l.b16 %v2757
        %v2825 = vunpack.c.l.b16 %v2758
        %v2826 = vunpack.c.l.b16 %v2759
        %v2827 = vunpack.c.l.b16 %v2760
        %v2828 = vunpack.c.l.b16 %v2761
        %v2829 = vunpack.c.l.b16 %v2762
        %v2830 = vunpack.c.l.b16 %v2763
        %v2831 = vunpack.c.l.b16 %v2764
        %v2832 = vunpack.c.l.b16 %v2765
        %v2833 = vunpack.c.l.b16 %v2766
        %v2834 = vunpack.c.l.b16 %v2767
        %v2835 = vunpack.c.l.b16 %v2768
        %v2836 = vunpack.c.l.b16 %v2769
        %v2837 = vunpack.c.l.b16 %v2770
        %v2838 = vunpack.c.l.b16 %v2771
        %v2839 = vunpack.c.l.b16 %v2772
        %v2840 = vunpack.c.l.b16 %v2773
        %v2841 = vunpack.c.l.b16 %v2774
        %v2842 = vpack.c.b16 %v2818, %v2817
        %v2843 = vpack.c.b16 %v2820, %v2819
        %v2844 = vpack.c.b16 %v2822, %v2821
        %v2845 = vpack.c.b16 %v2824, %v2823
        %v2846 = vpack.c.b16 %v2826, %v2825
        %v2847 = vpack.c.b16 %v2828, %v2827
        %v2848 = vpack.c.b16 %v2830, %v2829
        %v2849 = vpack.c.b16 %v2832, %v2831
        %v2850 = vpack.c.b16 %v2834, %v2833
        %v2851 = vpack.c.b16 %v2836, %v2835
        %v2852 = vpack.c.b16 %v2838, %v2837
        %v2853 = vpack.c.b16 %v2840, %v2839
        %v2854 = vpack.c.b16 %v2841, %v2841
        %v2856 = vshrl.u32 %v2842, 16
        %v2858 = vshll.u32 %v2842, 16
        %v2860 = vrot.slane %v2858, 1
        %v2861 = vor.u32 %v2856, %v2860
        %v2863 = vshll.u32 %v2843, 16
        %v2865 = vrot.slane %v2863, 1
        %v2866 = vsel %vm1760, %v2861, %v2865
        %v2867 = vshrl.u32 %v2843, 16
        %v2869 = vor.u32 %v2867, %v2865
        %v2871 = vshll.u32 %v2844, 16
        %v2873 = vrot.slane %v2871, 1
        %v2874 = vsel %vm1760, %v2869, %v2873
        %v2875 = vshrl.u32 %v2844, 16
        %v2877 = vor.u32 %v2875, %v2873
        %v2879 = vshll.u32 %v2845, 16
        %v2881 = vrot.slane %v2879, 1
        %v2882 = vsel %vm1760, %v2877, %v2881
        %v2883 = vshrl.u32 %v2845, 16
        %v2885 = vor.u32 %v2883, %v2881
        %v2887 = vshll.u32 %v2846, 16
        %v2889 = vrot.slane %v2887, 1
        %v2890 = vsel %vm1760, %v2885, %v2889
        %v2891 = vshrl.u32 %v2846, 16
        %v2893 = vor.u32 %v2891, %v2889
        %v2895 = vshll.u32 %v2847, 16
        %v2897 = vrot.slane %v2895, 1
        %v2898 = vsel %vm1760, %v2893, %v2897
        %v2899 = vshrl.u32 %v2847, 16
        %v2901 = vor.u32 %v2899, %v2897
        %v2903 = vshll.u32 %v2848, 16
        %v2905 = vrot.slane %v2903, 1
        %v2906 = vsel %vm1760, %v2901, %v2905
        %v2907 = vshrl.u32 %v2848, 16
        %v2909 = vor.u32 %v2907, %v2905
        %v2911 = vshll.u32 %v2849, 16
        %v2913 = vrot.slane %v2911, 1
        %v2914 = vsel %vm1760, %v2909, %v2913
        %v2915 = vshrl.u32 %v2849, 16
        %v2917 = vor.u32 %v2915, %v2913
        %v2919 = vshll.u32 %v2850, 16
        %v2921 = vrot.slane %v2919, 1
        %v2922 = vsel %vm1760, %v2917, %v2921
        %v2923 = vshrl.u32 %v2850, 16
        %v2925 = vor.u32 %v2923, %v2921
        %v2927 = vshll.u32 %v2851, 16
        %v2929 = vrot.slane %v2927, 1
        %v2930 = vsel %vm1760, %v2925, %v2929
        %v2931 = vshrl.u32 %v2851, 16
        %v2933 = vor.u32 %v2931, %v2929
        %v2935 = vshll.u32 %v2852, 16
        %v2937 = vrot.slane %v2935, 1
        %v2938 = vsel %vm1760, %v2933, %v2937
        %v2939 = vshrl.u32 %v2852, 16
        %v2941 = vor.u32 %v2939, %v2937
        %v2943 = vshll.u32 %v2853, 16
        %v2945 = vrot.slane %v2943, 1
        %v2946 = vsel %vm1760, %v2941, %v2945
        %v2947 = vshrl.u32 %v2853, 16
        %v2949 = vor.u32 %v2947, %v2945
        %v2951 = vshll.u32 %v2854, 16
        %v2953 = vrot.slane %v2951, 1
        %v2954 = vsel %vm1760, %v2949, %v2953
        %v2983 = vunpack.c.l.b16 %v2776
        %v2984 = vunpack.c.l.b16 %v2777
        %v2985 = vunpack.c.l.b16 %v2778
        %v2986 = vunpack.c.l.b16 %v2779
        %v2987 = vunpack.c.l.b16 %v2780
        %v2988 = vunpack.c.l.b16 %v2781
        %v2989 = vunpack.c.l.b16 %v2782
        %v2990 = vunpack.c.l.b16 %v2783
        %v2991 = vunpack.c.l.b16 %v2784
        %v2992 = vunpack.c.l.b16 %v2785
        %v2993 = vunpack.c.l.b16 %v2786
        %v2994 = vunpack.c.l.b16 %v2787
        %v2995 = vunpack.c.l.b16 %v2788
        %v2996 = vunpack.c.l.b16 %v2789
        %v2997 = vunpack.c.l.b16 %v2790
        %v2998 = vunpack.c.l.b16 %v2791
        %v2999 = vpack.c.b16 %v2984, %v2983
        %v3000 = vpack.c.b16 %v2986, %v2985
        %v3001 = vpack.c.b16 %v2988, %v2987
        %v3002 = vpack.c.b16 %v2990, %v2989
        %v3003 = vpack.c.b16 %v2992, %v2991
        %v3004 = vpack.c.b16 %v2994, %v2993
        %v3005 = vpack.c.b16 %v2996, %v2995
        %v3006 = vpack.c.b16 %v2998, %v2997
        %3015 = vmatprep.subr.bf16.mxu0 0
        %3016 = vmatpush1.bf16.msra.mxu0 %v3006
        %3017 = vmatprep.subr.bf16.mxu0 0
        %3018 = vmatpush1.bf16.msra.mxu0 %v3005
        %3019 = vmatprep.subr.bf16.mxu0 0
        %3020 = vmatpush1.bf16.msra.mxu0 %v3004
        %3021 = vmatprep.subr.bf16.mxu0 0
        %3022 = vmatpush1.bf16.msra.mxu0 %v3003
        %3023 = vmatprep.subr.bf16.mxu0 0
        %3024 = vmatpush1.bf16.msra.mxu0 %v3002
        %3025 = vmatprep.subr.bf16.mxu0 0
        %3026 = vmatpush1.bf16.msra.mxu0 %v3001
        %3027 = vmatprep.subr.bf16.mxu0 0
        %3028 = vmatpush1.bf16.msra.mxu0 %v3000
        %3029 = vmatprep.subr.bf16.mxu0 0
        %3030 = vmatpush1.bf16.msra.mxu0 %v2999
        %3031 = vmatprep.subr.bf16.mxu0 0
        %3032 = vmatpush2.bf16.msra.mxu0 0
        %3033 = vmatprep.subr.bf16.mxu0 0
        %3034 = vmatpush2.bf16.msra.mxu0 0
        %3035 = vmatprep.subr.bf16.mxu0 0
        %3036 = vmatpush2.bf16.msra.mxu0 0
        %3037 = vmatprep.subr.bf16.mxu0 0
        %3038 = vmatpush2.bf16.msra.mxu0 0
        %3039 = vmatprep.subr.bf16.mxu0 0
        %3040 = vmatpush2.bf16.msra.mxu0 0
        %3041 = vmatprep.subr.bf16.mxu0 0
        %3042 = vmatpush2.bf16.msra.mxu0 0
        %3043 = vmatprep.subr.bf16.mxu0 0
        %3044 = vmatpush2.bf16.msra.mxu0 0
        %3045 = vmatprep.subr.bf16.mxu0 0
        %3046 = vmatpush2.bf16.msra.mxu0 0
        %3047 = vmatprep.mubr.bf16.mxu0 0
        %3048 = vmatmul.mubr.bf16.gmra.mxu0 %v2866
        %v3049 = vpop.f32.mrf.mxu0
        %v3050 = vadd.f32 0.0, %v3049
        %v3051 = vpop.f32.mrf.mxu0
        %v3052 = vpop.f32.mrf.mxu0
        %v3053 = vadd.f32 0.0, %v3052
        %v3054 = vpop.f32.mrf.mxu0
        %3055 = vmatprep.mubr.bf16.mxu0 0
        %3056 = vmatmul.mubr.bf16.gmra.mxu0 %v2874
        %v3057 = vpop.f32.mrf.mxu0
        %v3058 = vadd.f32 0.0, %v3057
        %v3059 = vpop.f32.mrf.mxu0
        %v3060 = vpop.f32.mrf.mxu0
        %v3061 = vadd.f32 0.0, %v3060
        %v3062 = vpop.f32.mrf.mxu0
        %3063 = vmatprep.mubr.bf16.mxu0 0
        %3064 = vmatmul.mubr.bf16.gmra.mxu0 %v2882
        %v3065 = vpop.f32.mrf.mxu0
        %v3066 = vadd.f32 0.0, %v3065
        %v3067 = vpop.f32.mrf.mxu0
        %v3068 = vpop.f32.mrf.mxu0
        %v3069 = vadd.f32 0.0, %v3068
        %v3070 = vpop.f32.mrf.mxu0
        %3071 = vmatprep.mubr.bf16.mxu0 0
        %3072 = vmatmul.mubr.bf16.gmra.mxu0 %v2890
        %v3073 = vpop.f32.mrf.mxu0
        %v3074 = vadd.f32 0.0, %v3073
        %v3075 = vpop.f32.mrf.mxu0
        %v3076 = vpop.f32.mrf.mxu0
        %v3077 = vadd.f32 0.0, %v3076
        %v3078 = vpop.f32.mrf.mxu0
        %3079 = vmatprep.mubr.bf16.mxu0 0
        %3080 = vmatmul.mubr.bf16.gmra.mxu0 %v2898
        %v3081 = vpop.f32.mrf.mxu0
        %v3082 = vadd.f32 0.0, %v3081
        %v3083 = vpop.f32.mrf.mxu0
        %v3084 = vpop.f32.mrf.mxu0
        %v3085 = vadd.f32 0.0, %v3084
        %v3086 = vpop.f32.mrf.mxu0
        %3087 = vmatprep.mubr.bf16.mxu0 0
        %3088 = vmatmul.mubr.bf16.gmra.mxu0 %v2906
        %v3089 = vpop.f32.mrf.mxu0
        %v3090 = vadd.f32 0.0, %v3089
        %v3091 = vpop.f32.mrf.mxu0
        %v3092 = vpop.f32.mrf.mxu0
        %v3093 = vadd.f32 0.0, %v3092
        %v3094 = vpop.f32.mrf.mxu0
        %3095 = vmatprep.mubr.bf16.mxu0 0
        %3096 = vmatmul.mubr.bf16.gmra.mxu0 %v2914
        %v3097 = vpop.f32.mrf.mxu0
        %v3098 = vadd.f32 0.0, %v3097
        %v3099 = vpop.f32.mrf.mxu0
        %v3100 = vpop.f32.mrf.mxu0
        %v3101 = vadd.f32 0.0, %v3100
        %v3102 = vpop.f32.mrf.mxu0
        %3103 = vmatprep.mubr.bf16.mxu0 0
        %3104 = vmatmul.mubr.bf16.gmra.mxu0 %v2922
        %v3105 = vpop.f32.mrf.mxu0
        %v3106 = vadd.f32 0.0, %v3105
        %v3107 = vpop.f32.mrf.mxu0
        %v3108 = vpop.f32.mrf.mxu0
        %v3109 = vadd.f32 0.0, %v3108
        %v3110 = vpop.f32.mrf.mxu0
        %3111 = vmatprep.mubr.bf16.mxu0 0
        %3112 = vmatmul.mubr.bf16.gmra.mxu0 %v2930
        %v3113 = vpop.f32.mrf.mxu0
        %v3114 = vadd.f32 0.0, %v3113
        %v3115 = vpop.f32.mrf.mxu0
        %v3116 = vpop.f32.mrf.mxu0
        %v3117 = vadd.f32 0.0, %v3116
        %v3118 = vpop.f32.mrf.mxu0
        %3119 = vmatprep.mubr.bf16.mxu0 0
        %3120 = vmatmul.mubr.bf16.gmra.mxu0 %v2938
        %v3121 = vpop.f32.mrf.mxu0
        %v3122 = vadd.f32 0.0, %v3121
        %v3123 = vpop.f32.mrf.mxu0
        %v3124 = vpop.f32.mrf.mxu0
        %v3125 = vadd.f32 0.0, %v3124
        %v3126 = vpop.f32.mrf.mxu0
        %3127 = vmatprep.mubr.bf16.mxu0 0
        %3128 = vmatmul.mubr.bf16.gmra.mxu0 %v2946
        %v3129 = vpop.f32.mrf.mxu0
        %v3130 = vadd.f32 0.0, %v3129
        %v3131 = vpop.f32.mrf.mxu0
        %v3132 = vpop.f32.mrf.mxu0
        %v3133 = vadd.f32 0.0, %v3132
        %v3134 = vpop.f32.mrf.mxu0
        %3135 = vmatprep.mubr.bf16.mxu0 0
        %3136 = vmatmul.mubr.bf16.gmra.mxu0 %v2954
        %v3137 = vpop.f32.mrf.mxu0
        %v3138 = vadd.f32 0.0, %v3137
        %v3139 = vpop.f32.mrf.mxu0
        %v3140 = vpop.f32.mrf.mxu0
        %v3141 = vadd.f32 0.0, %v3140
        %v3142 = vpop.f32.mrf.mxu0
        %3143 = vdwg.mxu0
        %v3144 = vadd.f32 %v2726, %v3050
        %v3145 = vadd.f32 %v2727, %v3053
        %v3146 = vadd.f32 %v2728, %v3058
        %v3147 = vadd.f32 %v2729, %v3061
        %v3148 = vadd.f32 %v2730, %v3066
        %v3149 = vadd.f32 %v2731, %v3069
        %v3150 = vadd.f32 %v2732, %v3074
        %v3151 = vadd.f32 %v2733, %v3077
        %v3152 = vadd.f32 %v2734, %v3082
        %v3153 = vadd.f32 %v2735, %v3085
        %v3154 = vadd.f32 %v2736, %v3090
        %v3155 = vadd.f32 %v2737, %v3093
        %v3156 = vadd.f32 %v2738, %v3098
        %v3157 = vadd.f32 %v2739, %v3101
        %v3158 = vadd.f32 %v2740, %v3106
        %v3159 = vadd.f32 %v2741, %v3109
        %v3160 = vadd.f32 %v2742, %v3114
        %v3161 = vadd.f32 %v2743, %v3117
        %v3162 = vadd.f32 %v2744, %v3122
        %v3163 = vadd.f32 %v2745, %v3125
        %v3164 = vadd.f32 %v2746, %v3130
        %v3165 = vadd.f32 %v2747, %v3133
        %v3166 = vadd.f32 %v2748, %v3138
        %v3167 = vadd.f32 %v2749, %v3141
        %v3168 = vld [vmem:[#allocation2 + $0x18] sm:$0x8]
        %v3169 = vld [vmem:[#allocation2 + $0x1c] sm:$0xf]
        %v3170 = vld [vmem:[#allocation2 + $0x20] sm:$0xf]
        %v3171 = vld [vmem:[#allocation2 + $0x24] sm:$0xf]
        %v3172 = vld [vmem:[#allocation2 + $0x28] sm:$0xf]
        %v3173 = vld [vmem:[#allocation2 + $0x2c] sm:$0xf]
        %v3174 = vld [vmem:[#allocation2 + $0x30] sm:$0xf]
        %v3175 = vld [vmem:[#allocation2 + $0x34] sm:$0xf]
        %v3176 = vld [vmem:[#allocation2 + $0x38] sm:$0xf]
        %v3177 = vld [vmem:[#allocation2 + $0x3c] sm:$0xf]
        %v3178 = vld [vmem:[#allocation2 + $0x40] sm:$0xf]
        %v3179 = vld [vmem:[#allocation2 + $0x44] sm:$0xf]
        %v3180 = vld [vmem:[#allocation2 + $0x48] sm:$0xf]
        %v3181 = vld [vmem:[#allocation2 + $0x4c] sm:$0xf]
        %v3182 = vld [vmem:[#allocation2 + $0x50] sm:$0xf]
        %v3183 = vld [vmem:[#allocation2 + $0x54] sm:$0xf]
        %v3184 = vld [vmem:[#allocation2 + $0x58] sm:$0xf]
        %v3185 = vld [vmem:[#allocation2 + $0x5c] sm:$0xf]
        %v3186 = vld [vmem:[#allocation2 + $0x60] sm:$0xf]
        %v3187 = vld [vmem:[#allocation2 + $0x64] sm:$0xf]
        %v3188 = vld [vmem:[#allocation2 + $0x68] sm:$0xf]
        %v3189 = vld [vmem:[#allocation2 + $0x6c] sm:$0xf]
        %v3190 = vld [vmem:[#allocation2 + $0x70] sm:$0xf]
        %v3191 = vld [vmem:[#allocation2 + $0x74] sm:$0xf]
        %v3192 = vld [vmem:[#allocation2 + $0x78] sm:$0xf]
        %s3193 = scalar_lea.vmem [#allocation8], 384
        %v3194 = vld [vmem:[%s3193] sm:$0xf]
        %v3195 = vld [vmem:[%s3193 + $0x4] sm:$0xf]
        %v3196 = vld [vmem:[%s3193 + $0x8] sm:$0xf]
        %v3197 = vld [vmem:[%s3193 + $0xc] sm:$0xf]
        %v3198 = vld [vmem:[%s3193 + $0x10] sm:$0xf]
        %v3199 = vld [vmem:[%s3193 + $0x14] sm:$0xf]
        %v3200 = vld [vmem:[%s3193 + $0x18] sm:$0xf]
        %v3201 = vld [vmem:[%s3193 + $0x1c] sm:$0xf]
        %v3202 = vld [vmem:[%s3193 + $0x20] sm:$0xf]
        %v3203 = vld [vmem:[%s3193 + $0x24] sm:$0xf]
        %v3204 = vld [vmem:[%s3193 + $0x28] sm:$0xf]
        %v3205 = vld [vmem:[%s3193 + $0x2c] sm:$0xf]
        %v3206 = vld [vmem:[%s3193 + $0x30] sm:$0xf]
        %v3207 = vld [vmem:[%s3193 + $0x34] sm:$0xf]
        %v3208 = vld [vmem:[%s3193 + $0x38] sm:$0xf]
        %v3209 = vld [vmem:[%s3193 + $0x3c] sm:$0xf]
        %v3235 = vunpack.c.l.b16 %v3168
        %v3236 = vunpack.c.l.b16 %v3169
        %v3237 = vunpack.c.l.b16 %v3170
        %v3238 = vunpack.c.l.b16 %v3171
        %v3239 = vunpack.c.l.b16 %v3172
        %v3240 = vunpack.c.l.b16 %v3173
        %v3241 = vunpack.c.l.b16 %v3174
        %v3242 = vunpack.c.l.b16 %v3175
        %v3243 = vunpack.c.l.b16 %v3176
        %v3244 = vunpack.c.l.b16 %v3177
        %v3245 = vunpack.c.l.b16 %v3178
        %v3246 = vunpack.c.l.b16 %v3179
        %v3247 = vunpack.c.l.b16 %v3180
        %v3248 = vunpack.c.l.b16 %v3181
        %v3249 = vunpack.c.l.b16 %v3182
        %v3250 = vunpack.c.l.b16 %v3183
        %v3251 = vunpack.c.l.b16 %v3184
        %v3252 = vunpack.c.l.b16 %v3185
        %v3253 = vunpack.c.l.b16 %v3186
        %v3254 = vunpack.c.l.b16 %v3187
        %v3255 = vunpack.c.l.b16 %v3188
        %v3256 = vunpack.c.l.b16 %v3189
        %v3257 = vunpack.c.l.b16 %v3190
        %v3258 = vunpack.c.l.b16 %v3191
        %v3259 = vunpack.c.l.b16 %v3192
        %v3260 = vpack.c.b16 %v3236, %v3235
        %v3261 = vpack.c.b16 %v3238, %v3237
        %v3262 = vpack.c.b16 %v3240, %v3239
        %v3263 = vpack.c.b16 %v3242, %v3241
        %v3264 = vpack.c.b16 %v3244, %v3243
        %v3265 = vpack.c.b16 %v3246, %v3245
        %v3266 = vpack.c.b16 %v3248, %v3247
        %v3267 = vpack.c.b16 %v3250, %v3249
        %v3268 = vpack.c.b16 %v3252, %v3251
        %v3269 = vpack.c.b16 %v3254, %v3253
        %v3270 = vpack.c.b16 %v3256, %v3255
        %v3271 = vpack.c.b16 %v3258, %v3257
        %v3272 = vpack.c.b16 %v3259, %v3259
        %v3274 = vshrl.u32 %v3260, 16
        %v3276 = vrot.slane %v3274, 3
        %v3277 = vshll.u32 %v3260, 16
        %v3279 = vrot.slane %v3277, 4
        %v3280 = vor.u32 %v3276, %v3279
        %v3282 = vshrl.u32 %v3261, 16
        %v3284 = vrot.slane %v3282, 3
        %v3285 = vshll.u32 %v3261, 16
        %v3287 = vrot.slane %v3285, 4
        %v3288 = vor.u32 %v3284, %v3287
        %v3289 = vsel %vm1349, %v3280, %v3288
        %v3291 = vshrl.u32 %v3262, 16
        %v3293 = vrot.slane %v3291, 3
        %v3294 = vshll.u32 %v3262, 16
        %v3296 = vrot.slane %v3294, 4
        %v3297 = vor.u32 %v3293, %v3296
        %v3298 = vsel %vm1349, %v3288, %v3297
        %v3300 = vshrl.u32 %v3263, 16
        %v3302 = vrot.slane %v3300, 3
        %v3303 = vshll.u32 %v3263, 16
        %v3305 = vrot.slane %v3303, 4
        %v3306 = vor.u32 %v3302, %v3305
        %v3307 = vsel %vm1349, %v3297, %v3306
        %v3309 = vshrl.u32 %v3264, 16
        %v3311 = vrot.slane %v3309, 3
        %v3312 = vshll.u32 %v3264, 16
        %v3314 = vrot.slane %v3312, 4
        %v3315 = vor.u32 %v3311, %v3314
        %v3316 = vsel %vm1349, %v3306, %v3315
        %v3318 = vshrl.u32 %v3265, 16
        %v3320 = vrot.slane %v3318, 3
        %v3321 = vshll.u32 %v3265, 16
        %v3323 = vrot.slane %v3321, 4
        %v3324 = vor.u32 %v3320, %v3323
        %v3325 = vsel %vm1349, %v3315, %v3324
        %v3327 = vshrl.u32 %v3266, 16
        %v3329 = vrot.slane %v3327, 3
        %v3330 = vshll.u32 %v3266, 16
        %v3332 = vrot.slane %v3330, 4
        %v3333 = vor.u32 %v3329, %v3332
        %v3334 = vsel %vm1349, %v3324, %v3333
        %v3336 = vshrl.u32 %v3267, 16
        %v3338 = vrot.slane %v3336, 3
        %v3339 = vshll.u32 %v3267, 16
        %v3341 = vrot.slane %v3339, 4
        %v3342 = vor.u32 %v3338, %v3341
        %v3343 = vsel %vm1349, %v3333, %v3342
        %v3345 = vshrl.u32 %v3268, 16
        %v3347 = vrot.slane %v3345, 3
        %v3348 = vshll.u32 %v3268, 16
        %v3350 = vrot.slane %v3348, 4
        %v3351 = vor.u32 %v3347, %v3350
        %v3352 = vsel %vm1349, %v3342, %v3351
        %v3354 = vshrl.u32 %v3269, 16
        %v3356 = vrot.slane %v3354, 3
        %v3357 = vshll.u32 %v3269, 16
        %v3359 = vrot.slane %v3357, 4
        %v3360 = vor.u32 %v3356, %v3359
        %v3361 = vsel %vm1349, %v3351, %v3360
        %v3363 = vshrl.u32 %v3270, 16
        %v3365 = vrot.slane %v3363, 3
        %v3366 = vshll.u32 %v3270, 16
        %v3368 = vrot.slane %v3366, 4
        %v3369 = vor.u32 %v3365, %v3368
        %v3370 = vsel %vm1349, %v3360, %v3369
        %v3372 = vshrl.u32 %v3271, 16
        %v3374 = vrot.slane %v3372, 3
        %v3375 = vshll.u32 %v3271, 16
        %v3377 = vrot.slane %v3375, 4
        %v3378 = vor.u32 %v3374, %v3377
        %v3379 = vsel %vm1349, %v3369, %v3378
        %v3381 = vshrl.u32 %v3272, 16
        %v3383 = vrot.slane %v3381, 3
        %v3384 = vshll.u32 %v3272, 16
        %v3386 = vrot.slane %v3384, 4
        %v3387 = vor.u32 %v3383, %v3386
        %v3388 = vsel %vm1349, %v3378, %v3387
        %v3417 = vunpack.c.l.b16 %v3194
        %v3418 = vunpack.c.l.b16 %v3195
        %v3419 = vunpack.c.l.b16 %v3196
        %v3420 = vunpack.c.l.b16 %v3197
        %v3421 = vunpack.c.l.b16 %v3198
        %v3422 = vunpack.c.l.b16 %v3199
        %v3423 = vunpack.c.l.b16 %v3200
        %v3424 = vunpack.c.l.b16 %v3201
        %v3425 = vunpack.c.l.b16 %v3202
        %v3426 = vunpack.c.l.b16 %v3203
        %v3427 = vunpack.c.l.b16 %v3204
        %v3428 = vunpack.c.l.b16 %v3205
        %v3429 = vunpack.c.l.b16 %v3206
        %v3430 = vunpack.c.l.b16 %v3207
        %v3431 = vunpack.c.l.b16 %v3208
        %v3432 = vunpack.c.l.b16 %v3209
        %v3433 = vpack.c.b16 %v3418, %v3417
        %v3434 = vpack.c.b16 %v3420, %v3419
        %v3435 = vpack.c.b16 %v3422, %v3421
        %v3436 = vpack.c.b16 %v3424, %v3423
        %v3437 = vpack.c.b16 %v3426, %v3425
        %v3438 = vpack.c.b16 %v3428, %v3427
        %v3439 = vpack.c.b16 %v3430, %v3429
        %v3440 = vpack.c.b16 %v3432, %v3431
        %3449 = vmatprep.subr.bf16.mxu0 0
        %3450 = vmatpush1.bf16.msra.mxu0 %v3440
        %3451 = vmatprep.subr.bf16.mxu0 0
        %3452 = vmatpush1.bf16.msra.mxu0 %v3439
        %3453 = vmatprep.subr.bf16.mxu0 0
        %3454 = vmatpush1.bf16.msra.mxu0 %v3438
        %3455 = vmatprep.subr.bf16.mxu0 0
        %3456 = vmatpush1.bf16.msra.mxu0 %v3437
        %3457 = vmatprep.subr.bf16.mxu0 0
        %3458 = vmatpush1.bf16.msra.mxu0 %v3436
        %3459 = vmatprep.subr.bf16.mxu0 0
        %3460 = vmatpush1.bf16.msra.mxu0 %v3435
        %3461 = vmatprep.subr.bf16.mxu0 0
        %3462 = vmatpush1.bf16.msra.mxu0 %v3434
        %3463 = vmatprep.subr.bf16.mxu0 0
        %3464 = vmatpush1.bf16.msra.mxu0 %v3433
        %3465 = vmatprep.subr.bf16.mxu0 0
        %3466 = vmatpush2.bf16.msra.mxu0 0
        %3467 = vmatprep.subr.bf16.mxu0 0
        %3468 = vmatpush2.bf16.msra.mxu0 0
        %3469 = vmatprep.subr.bf16.mxu0 0
        %3470 = vmatpush2.bf16.msra.mxu0 0
        %3471 = vmatprep.subr.bf16.mxu0 0
        %3472 = vmatpush2.bf16.msra.mxu0 0
        %3473 = vmatprep.subr.bf16.mxu0 0
        %3474 = vmatpush2.bf16.msra.mxu0 0
        %3475 = vmatprep.subr.bf16.mxu0 0
        %3476 = vmatpush2.bf16.msra.mxu0 0
        %3477 = vmatprep.subr.bf16.mxu0 0
        %3478 = vmatpush2.bf16.msra.mxu0 0
        %3479 = vmatprep.subr.bf16.mxu0 0
        %3480 = vmatpush2.bf16.msra.mxu0 0
        %3481 = vmatprep.mubr.bf16.mxu0 0
        %3482 = vmatmul.mubr.bf16.gmra.mxu0 %v3289
        %v3483 = vpop.f32.mrf.mxu0
        %v3484 = vadd.f32 0.0, %v3483
        %v3485 = vpop.f32.mrf.mxu0
        %v3486 = vpop.f32.mrf.mxu0
        %v3487 = vadd.f32 0.0, %v3486
        %v3488 = vpop.f32.mrf.mxu0
        %3489 = vmatprep.mubr.bf16.mxu0 0
        %3490 = vmatmul.mubr.bf16.gmra.mxu0 %v3298
        %v3491 = vpop.f32.mrf.mxu0
        %v3492 = vadd.f32 0.0, %v3491
        %v3493 = vpop.f32.mrf.mxu0
        %v3494 = vpop.f32.mrf.mxu0
        %v3495 = vadd.f32 0.0, %v3494
        %v3496 = vpop.f32.mrf.mxu0
        %3497 = vmatprep.mubr.bf16.mxu0 0
        %3498 = vmatmul.mubr.bf16.gmra.mxu0 %v3307
        %v3499 = vpop.f32.mrf.mxu0
        %v3500 = vadd.f32 0.0, %v3499
        %v3501 = vpop.f32.mrf.mxu0
        %v3502 = vpop.f32.mrf.mxu0
        %v3503 = vadd.f32 0.0, %v3502
        %v3504 = vpop.f32.mrf.mxu0
        %3505 = vmatprep.mubr.bf16.mxu0 0
        %3506 = vmatmul.mubr.bf16.gmra.mxu0 %v3316
        %v3507 = vpop.f32.mrf.mxu0
        %v3508 = vadd.f32 0.0, %v3507
        %v3509 = vpop.f32.mrf.mxu0
        %v3510 = vpop.f32.mrf.mxu0
        %v3511 = vadd.f32 0.0, %v3510
        %v3512 = vpop.f32.mrf.mxu0
        %3513 = vmatprep.mubr.bf16.mxu0 0
        %3514 = vmatmul.mubr.bf16.gmra.mxu0 %v3325
        %v3515 = vpop.f32.mrf.mxu0
        %v3516 = vadd.f32 0.0, %v3515
        %v3517 = vpop.f32.mrf.mxu0
        %v3518 = vpop.f32.mrf.mxu0
        %v3519 = vadd.f32 0.0, %v3518
        %v3520 = vpop.f32.mrf.mxu0
        %3521 = vmatprep.mubr.bf16.mxu0 0
        %3522 = vmatmul.mubr.bf16.gmra.mxu0 %v3334
        %v3523 = vpop.f32.mrf.mxu0
        %v3524 = vadd.f32 0.0, %v3523
        %v3525 = vpop.f32.mrf.mxu0
        %v3526 = vpop.f32.mrf.mxu0
        %v3527 = vadd.f32 0.0, %v3526
        %v3528 = vpop.f32.mrf.mxu0
        %3529 = vmatprep.mubr.bf16.mxu0 0
        %3530 = vmatmul.mubr.bf16.gmra.mxu0 %v3343
        %v3531 = vpop.f32.mrf.mxu0
        %v3532 = vadd.f32 0.0, %v3531
        %v3533 = vpop.f32.mrf.mxu0
        %v3534 = vpop.f32.mrf.mxu0
        %v3535 = vadd.f32 0.0, %v3534
        %v3536 = vpop.f32.mrf.mxu0
        %3537 = vmatprep.mubr.bf16.mxu0 0
        %3538 = vmatmul.mubr.bf16.gmra.mxu0 %v3352
        %v3539 = vpop.f32.mrf.mxu0
        %v3540 = vadd.f32 0.0, %v3539
        %v3541 = vpop.f32.mrf.mxu0
        %v3542 = vpop.f32.mrf.mxu0
        %v3543 = vadd.f32 0.0, %v3542
        %v3544 = vpop.f32.mrf.mxu0
        %3545 = vmatprep.mubr.bf16.mxu0 0
        %3546 = vmatmul.mubr.bf16.gmra.mxu0 %v3361
        %v3547 = vpop.f32.mrf.mxu0
        %v3548 = vadd.f32 0.0, %v3547
        %v3549 = vpop.f32.mrf.mxu0
        %v3550 = vpop.f32.mrf.mxu0
        %v3551 = vadd.f32 0.0, %v3550
        %v3552 = vpop.f32.mrf.mxu0
        %3553 = vmatprep.mubr.bf16.mxu0 0
        %3554 = vmatmul.mubr.bf16.gmra.mxu0 %v3370
        %v3555 = vpop.f32.mrf.mxu0
        %v3556 = vadd.f32 0.0, %v3555
        %v3557 = vpop.f32.mrf.mxu0
        %v3558 = vpop.f32.mrf.mxu0
        %v3559 = vadd.f32 0.0, %v3558
        %v3560 = vpop.f32.mrf.mxu0
        %3561 = vmatprep.mubr.bf16.mxu0 0
        %3562 = vmatmul.mubr.bf16.gmra.mxu0 %v3379
        %v3563 = vpop.f32.mrf.mxu0
        %v3564 = vadd.f32 0.0, %v3563
        %v3565 = vpop.f32.mrf.mxu0
        %v3566 = vpop.f32.mrf.mxu0
        %v3567 = vadd.f32 0.0, %v3566
        %v3568 = vpop.f32.mrf.mxu0
        %3569 = vmatprep.mubr.bf16.mxu0 0
        %3570 = vmatmul.mubr.bf16.gmra.mxu0 %v3388
        %v3571 = vpop.f32.mrf.mxu0
        %v3572 = vadd.f32 0.0, %v3571
        %v3573 = vpop.f32.mrf.mxu0
        %v3574 = vpop.f32.mrf.mxu0
        %v3575 = vadd.f32 0.0, %v3574
        %v3576 = vpop.f32.mrf.mxu0
        %3577 = vdwg.mxu0
        %v3578 = vadd.f32 %v3144, %v3484
        %v3579 = vadd.f32 %v3145, %v3487
        %v3580 = vadd.f32 %v3146, %v3492
        %v3581 = vadd.f32 %v3147, %v3495
        %v3582 = vadd.f32 %v3148, %v3500
        %v3583 = vadd.f32 %v3149, %v3503
        %v3584 = vadd.f32 %v3150, %v3508
        %v3585 = vadd.f32 %v3151, %v3511
        %v3586 = vadd.f32 %v3152, %v3516
        %v3587 = vadd.f32 %v3153, %v3519
        %v3588 = vadd.f32 %v3154, %v3524
        %v3589 = vadd.f32 %v3155, %v3527
        %v3590 = vadd.f32 %v3156, %v3532
        %v3591 = vadd.f32 %v3157, %v3535
        %v3592 = vadd.f32 %v3158, %v3540
        %v3593 = vadd.f32 %v3159, %v3543
        %v3594 = vadd.f32 %v3160, %v3548
        %v3595 = vadd.f32 %v3161, %v3551
        %v3596 = vadd.f32 %v3162, %v3556
        %v3597 = vadd.f32 %v3163, %v3559
        %v3598 = vadd.f32 %v3164, %v3564
        %v3599 = vadd.f32 %v3165, %v3567
        %v3600 = vadd.f32 %v3166, %v3572
        %v3601 = vadd.f32 %v3167, %v3575
        %s3602 = scalar_lea.vmem [#allocation8], 448
        %v3603 = vld [vmem:[%s3602] sm:$0xf]
        %v3604 = vld [vmem:[%s3602 + $0x4] sm:$0xf]
        %v3605 = vld [vmem:[%s3602 + $0x8] sm:$0xf]
        %v3606 = vld [vmem:[%s3602 + $0xc] sm:$0xf]
        %v3607 = vld [vmem:[%s3602 + $0x10] sm:$0xf]
        %v3608 = vld [vmem:[%s3602 + $0x14] sm:$0xf]
        %v3609 = vld [vmem:[%s3602 + $0x18] sm:$0xf]
        %v3610 = vld [vmem:[%s3602 + $0x1c] sm:$0xf]
        %v3611 = vld [vmem:[%s3602 + $0x20] sm:$0xf]
        %v3612 = vld [vmem:[%s3602 + $0x24] sm:$0xf]
        %v3613 = vld [vmem:[%s3602 + $0x28] sm:$0xf]
        %v3614 = vld [vmem:[%s3602 + $0x2c] sm:$0xf]
        %v3615 = vld [vmem:[%s3602 + $0x30] sm:$0xf]
        %v3616 = vld [vmem:[%s3602 + $0x34] sm:$0xf]
        %v3617 = vld [vmem:[%s3602 + $0x38] sm:$0xf]
        %v3618 = vld [vmem:[%s3602 + $0x3c] sm:$0xf]
        %v3619 = vpack.c.b16 %v3237, %v3236
        %v3620 = vpack.c.b16 %v3239, %v3238
        %v3621 = vpack.c.b16 %v3241, %v3240
        %v3622 = vpack.c.b16 %v3243, %v3242
        %v3623 = vpack.c.b16 %v3245, %v3244
        %v3624 = vpack.c.b16 %v3247, %v3246
        %v3625 = vpack.c.b16 %v3249, %v3248
        %v3626 = vpack.c.b16 %v3251, %v3250
        %v3627 = vpack.c.b16 %v3253, %v3252
        %v3628 = vpack.c.b16 %v3255, %v3254
        %v3629 = vpack.c.b16 %v3257, %v3256
        %v3630 = vpack.c.b16 %v3259, %v3258
        %v3659 = vunpack.c.l.b16 %v3603
        %v3660 = vunpack.c.l.b16 %v3604
        %v3661 = vunpack.c.l.b16 %v3605
        %v3662 = vunpack.c.l.b16 %v3606
        %v3663 = vunpack.c.l.b16 %v3607
        %v3664 = vunpack.c.l.b16 %v3608
        %v3665 = vunpack.c.l.b16 %v3609
        %v3666 = vunpack.c.l.b16 %v3610
        %v3667 = vunpack.c.l.b16 %v3611
        %v3668 = vunpack.c.l.b16 %v3612
        %v3669 = vunpack.c.l.b16 %v3613
        %v3670 = vunpack.c.l.b16 %v3614
        %v3671 = vunpack.c.l.b16 %v3615
        %v3672 = vunpack.c.l.b16 %v3616
        %v3673 = vunpack.c.l.b16 %v3617
        %v3674 = vunpack.c.l.b16 %v3618
        %v3675 = vpack.c.b16 %v3660, %v3659
        %v3676 = vpack.c.b16 %v3662, %v3661
        %v3677 = vpack.c.b16 %v3664, %v3663
        %v3678 = vpack.c.b16 %v3666, %v3665
        %v3679 = vpack.c.b16 %v3668, %v3667
        %v3680 = vpack.c.b16 %v3670, %v3669
        %v3681 = vpack.c.b16 %v3672, %v3671
        %v3682 = vpack.c.b16 %v3674, %v3673
        %3691 = vmatprep.subr.bf16.mxu0 0
        %3692 = vmatpush1.bf16.msra.mxu0 %v3682
        %3693 = vmatprep.subr.bf16.mxu0 0
        %3694 = vmatpush1.bf16.msra.mxu0 %v3681
        %3695 = vmatprep.subr.bf16.mxu0 0
        %3696 = vmatpush1.bf16.msra.mxu0 %v3680
        %3697 = vmatprep.subr.bf16.mxu0 0
        %3698 = vmatpush1.bf16.msra.mxu0 %v3679
        %3699 = vmatprep.subr.bf16.mxu0 0
        %3700 = vmatpush1.bf16.msra.mxu0 %v3678
        %3701 = vmatprep.subr.bf16.mxu0 0
        %3702 = vmatpush1.bf16.msra.mxu0 %v3677
        %3703 = vmatprep.subr.bf16.mxu0 0
        %3704 = vmatpush1.bf16.msra.mxu0 %v3676
        %3705 = vmatprep.subr.bf16.mxu0 0
        %3706 = vmatpush1.bf16.msra.mxu0 %v3675
        %3707 = vmatprep.subr.bf16.mxu0 0
        %3708 = vmatpush2.bf16.msra.mxu0 0
        %3709 = vmatprep.subr.bf16.mxu0 0
        %3710 = vmatpush2.bf16.msra.mxu0 0
        %3711 = vmatprep.subr.bf16.mxu0 0
        %3712 = vmatpush2.bf16.msra.mxu0 0
        %3713 = vmatprep.subr.bf16.mxu0 0
        %3714 = vmatpush2.bf16.msra.mxu0 0
        %3715 = vmatprep.subr.bf16.mxu0 0
        %3716 = vmatpush2.bf16.msra.mxu0 0
        %3717 = vmatprep.subr.bf16.mxu0 0
        %3718 = vmatpush2.bf16.msra.mxu0 0
        %3719 = vmatprep.subr.bf16.mxu0 0
        %3720 = vmatpush2.bf16.msra.mxu0 0
        %3721 = vmatprep.subr.bf16.mxu0 0
        %3722 = vmatpush2.bf16.msra.mxu0 0
        %3723 = vmatprep.mubr.bf16.mxu0 0
        %3724 = vmatmul.mubr.bf16.gmra.mxu0 %v3619
        %v3725 = vpop.f32.mrf.mxu0
        %v3726 = vadd.f32 0.0, %v3725
        %v3727 = vpop.f32.mrf.mxu0
        %v3728 = vpop.f32.mrf.mxu0
        %v3729 = vadd.f32 0.0, %v3728
        %v3730 = vpop.f32.mrf.mxu0
        %3731 = vmatprep.mubr.bf16.mxu0 0
        %3732 = vmatmul.mubr.bf16.gmra.mxu0 %v3620
        %v3733 = vpop.f32.mrf.mxu0
        %v3734 = vadd.f32 0.0, %v3733
        %v3735 = vpop.f32.mrf.mxu0
        %v3736 = vpop.f32.mrf.mxu0
        %v3737 = vadd.f32 0.0, %v3736
        %v3738 = vpop.f32.mrf.mxu0
        %3739 = vmatprep.mubr.bf16.mxu0 0
        %3740 = vmatmul.mubr.bf16.gmra.mxu0 %v3621
        %v3741 = vpop.f32.mrf.mxu0
        %v3742 = vadd.f32 0.0, %v3741
        %v3743 = vpop.f32.mrf.mxu0
        %v3744 = vpop.f32.mrf.mxu0
        %v3745 = vadd.f32 0.0, %v3744
        %v3746 = vpop.f32.mrf.mxu0
        %3747 = vmatprep.mubr.bf16.mxu0 0
        %3748 = vmatmul.mubr.bf16.gmra.mxu0 %v3622
        %v3749 = vpop.f32.mrf.mxu0
        %v3750 = vadd.f32 0.0, %v3749
        %v3751 = vpop.f32.mrf.mxu0
        %v3752 = vpop.f32.mrf.mxu0
        %v3753 = vadd.f32 0.0, %v3752
        %v3754 = vpop.f32.mrf.mxu0
        %3755 = vmatprep.mubr.bf16.mxu0 0
        %3756 = vmatmul.mubr.bf16.gmra.mxu0 %v3623
        %v3757 = vpop.f32.mrf.mxu0
        %v3758 = vadd.f32 0.0, %v3757
        %v3759 = vpop.f32.mrf.mxu0
        %v3760 = vpop.f32.mrf.mxu0
        %v3761 = vadd.f32 0.0, %v3760
        %v3762 = vpop.f32.mrf.mxu0
        %3763 = vmatprep.mubr.bf16.mxu0 0
        %3764 = vmatmul.mubr.bf16.gmra.mxu0 %v3624
        %v3765 = vpop.f32.mrf.mxu0
        %v3766 = vadd.f32 0.0, %v3765
        %v3767 = vpop.f32.mrf.mxu0
        %v3768 = vpop.f32.mrf.mxu0
        %v3769 = vadd.f32 0.0, %v3768
        %v3770 = vpop.f32.mrf.mxu0
        %3771 = vmatprep.mubr.bf16.mxu0 0
        %3772 = vmatmul.mubr.bf16.gmra.mxu0 %v3625
        %v3773 = vpop.f32.mrf.mxu0
        %v3774 = vadd.f32 0.0, %v3773
        %v3775 = vpop.f32.mrf.mxu0
        %v3776 = vpop.f32.mrf.mxu0
        %v3777 = vadd.f32 0.0, %v3776
        %v3778 = vpop.f32.mrf.mxu0
        %3779 = vmatprep.mubr.bf16.mxu0 0
        %3780 = vmatmul.mubr.bf16.gmra.mxu0 %v3626
        %v3781 = vpop.f32.mrf.mxu0
        %v3782 = vadd.f32 0.0, %v3781
        %v3783 = vpop.f32.mrf.mxu0
        %v3784 = vpop.f32.mrf.mxu0
        %v3785 = vadd.f32 0.0, %v3784
        %v3786 = vpop.f32.mrf.mxu0
        %3787 = vmatprep.mubr.bf16.mxu0 0
        %3788 = vmatmul.mubr.bf16.gmra.mxu0 %v3627
        %v3789 = vpop.f32.mrf.mxu0
        %v3790 = vadd.f32 0.0, %v3789
        %v3791 = vpop.f32.mrf.mxu0
        %v3792 = vpop.f32.mrf.mxu0
        %v3793 = vadd.f32 0.0, %v3792
        %v3794 = vpop.f32.mrf.mxu0
        %3795 = vmatprep.mubr.bf16.mxu0 0
        %3796 = vmatmul.mubr.bf16.gmra.mxu0 %v3628
        %v3797 = vpop.f32.mrf.mxu0
        %v3798 = vadd.f32 0.0, %v3797
        %v3799 = vpop.f32.mrf.mxu0
        %v3800 = vpop.f32.mrf.mxu0
        %v3801 = vadd.f32 0.0, %v3800
        %v3802 = vpop.f32.mrf.mxu0
        %3803 = vmatprep.mubr.bf16.mxu0 0
        %3804 = vmatmul.mubr.bf16.gmra.mxu0 %v3629
        %v3805 = vpop.f32.mrf.mxu0
        %v3806 = vadd.f32 0.0, %v3805
        %v3807 = vpop.f32.mrf.mxu0
        %v3808 = vpop.f32.mrf.mxu0
        %v3809 = vadd.f32 0.0, %v3808
        %v3810 = vpop.f32.mrf.mxu0
        %3811 = vmatprep.mubr.bf16.mxu0 0
        %3812 = vmatmul.mubr.bf16.gmra.mxu0 %v3630
        %v3813 = vpop.f32.mrf.mxu0
        %v3814 = vadd.f32 0.0, %v3813
        %v3815 = vpop.f32.mrf.mxu0
        %v3816 = vpop.f32.mrf.mxu0
        %v3817 = vadd.f32 0.0, %v3816
        %v3818 = vpop.f32.mrf.mxu0
        %3819 = vdwg.mxu0
        %v3820 = vadd.f32 %v3578, %v3726
        %v3821 = vadd.f32 %v3579, %v3729
        %v3822 = vadd.f32 %v3580, %v3734
        %v3823 = vadd.f32 %v3581, %v3737
        %v3824 = vadd.f32 %v3582, %v3742
        %v3825 = vadd.f32 %v3583, %v3745
        %v3826 = vadd.f32 %v3584, %v3750
        %v3827 = vadd.f32 %v3585, %v3753
        %v3828 = vadd.f32 %v3586, %v3758
        %v3829 = vadd.f32 %v3587, %v3761
        %v3830 = vadd.f32 %v3588, %v3766
        %v3831 = vadd.f32 %v3589, %v3769
        %v3832 = vadd.f32 %v3590, %v3774
        %v3833 = vadd.f32 %v3591, %v3777
        %v3834 = vadd.f32 %v3592, %v3782
        %v3835 = vadd.f32 %v3593, %v3785
        %v3836 = vadd.f32 %v3594, %v3790
        %v3837 = vadd.f32 %v3595, %v3793
        %v3838 = vadd.f32 %v3596, %v3798
        %v3839 = vadd.f32 %v3597, %v3801
        %v3840 = vadd.f32 %v3598, %v3806
        %v3841 = vadd.f32 %v3599, %v3809
        %v3842 = vadd.f32 %v3600, %v3814
        %v3843 = vadd.f32 %v3601, %v3817
        %v3844 = vld [vmem:[#allocation2 + $0x1c] sm:$0xf]
        %v3845 = vld [vmem:[#allocation2 + $0x20] sm:$0xf]
        %v3846 = vld [vmem:[#allocation2 + $0x24] sm:$0xf]
        %v3847 = vld [vmem:[#allocation2 + $0x28] sm:$0xf]
        %v3848 = vld [vmem:[#allocation2 + $0x2c] sm:$0xf]
        %v3849 = vld [vmem:[#allocation2 + $0x30] sm:$0xf]
        %v3850 = vld [vmem:[#allocation2 + $0x34] sm:$0xf]
        %v3851 = vld [vmem:[#allocation2 + $0x38] sm:$0xf]
        %v3852 = vld [vmem:[#allocation2 + $0x3c] sm:$0xf]
        %v3853 = vld [vmem:[#allocation2 + $0x40] sm:$0xf]
        %v3854 = vld [vmem:[#allocation2 + $0x44] sm:$0xf]
        %v3855 = vld [vmem:[#allocation2 + $0x48] sm:$0xf]
        %v3856 = vld [vmem:[#allocation2 + $0x4c] sm:$0xf]
        %v3857 = vld [vmem:[#allocation2 + $0x50] sm:$0xf]
        %v3858 = vld [vmem:[#allocation2 + $0x54] sm:$0xf]
        %v3859 = vld [vmem:[#allocation2 + $0x58] sm:$0xf]
        %v3860 = vld [vmem:[#allocation2 + $0x5c] sm:$0xf]
        %v3861 = vld [vmem:[#allocation2 + $0x60] sm:$0xf]
        %v3862 = vld [vmem:[#allocation2 + $0x64] sm:$0xf]
        %v3863 = vld [vmem:[#allocation2 + $0x68] sm:$0xf]
        %v3864 = vld [vmem:[#allocation2 + $0x6c] sm:$0xf]
        %v3865 = vld [vmem:[#allocation2 + $0x70] sm:$0xf]
        %v3866 = vld [vmem:[#allocation2 + $0x74] sm:$0xf]
        %v3867 = vld [vmem:[#allocation2 + $0x78] sm:$0xf]
        %v3868 = vld [vmem:[#allocation2 + $0x7c] sm:$0x1]
        %s3869 = scalar_lea.vmem [#allocation8], 512
        %v3870 = vld [vmem:[%s3869] sm:$0xf]
        %v3871 = vld [vmem:[%s3869 + $0x4] sm:$0xf]
        %v3872 = vld [vmem:[%s3869 + $0x8] sm:$0xf]
        %v3873 = vld [vmem:[%s3869 + $0xc] sm:$0xf]
        %v3874 = vld [vmem:[%s3869 + $0x10] sm:$0xf]
        %v3875 = vld [vmem:[%s3869 + $0x14] sm:$0xf]
        %v3876 = vld [vmem:[%s3869 + $0x18] sm:$0xf]
        %v3877 = vld [vmem:[%s3869 + $0x1c] sm:$0xf]
        %v3878 = vld [vmem:[%s3869 + $0x20] sm:$0xf]
        %v3879 = vld [vmem:[%s3869 + $0x24] sm:$0xf]
        %v3880 = vld [vmem:[%s3869 + $0x28] sm:$0xf]
        %v3881 = vld [vmem:[%s3869 + $0x2c] sm:$0xf]
        %v3882 = vld [vmem:[%s3869 + $0x30] sm:$0xf]
        %v3883 = vld [vmem:[%s3869 + $0x34] sm:$0xf]
        %v3884 = vld [vmem:[%s3869 + $0x38] sm:$0xf]
        %v3885 = vld [vmem:[%s3869 + $0x3c] sm:$0xf]
        %v3911 = vunpack.c.l.b16 %v3844
        %v3912 = vunpack.c.l.b16 %v3845
        %v3913 = vunpack.c.l.b16 %v3846
        %v3914 = vunpack.c.l.b16 %v3847
        %v3915 = vunpack.c.l.b16 %v3848
        %v3916 = vunpack.c.l.b16 %v3849
        %v3917 = vunpack.c.l.b16 %v3850
        %v3918 = vunpack.c.l.b16 %v3851
        %v3919 = vunpack.c.l.b16 %v3852
        %v3920 = vunpack.c.l.b16 %v3853
        %v3921 = vunpack.c.l.b16 %v3854
        %v3922 = vunpack.c.l.b16 %v3855
        %v3923 = vunpack.c.l.b16 %v3856
        %v3924 = vunpack.c.l.b16 %v3857
        %v3925 = vunpack.c.l.b16 %v3858
        %v3926 = vunpack.c.l.b16 %v3859
        %v3927 = vunpack.c.l.b16 %v3860
        %v3928 = vunpack.c.l.b16 %v3861
        %v3929 = vunpack.c.l.b16 %v3862
        %v3930 = vunpack.c.l.b16 %v3863
        %v3931 = vunpack.c.l.b16 %v3864
        %v3932 = vunpack.c.l.b16 %v3865
        %v3933 = vunpack.c.l.b16 %v3866
        %v3934 = vunpack.c.l.b16 %v3867
        %v3935 = vunpack.c.l.b16 %v3868
        %v3936 = vpack.c.b16 %v3912, %v3911
        %v3937 = vpack.c.b16 %v3914, %v3913
        %v3938 = vpack.c.b16 %v3916, %v3915
        %v3939 = vpack.c.b16 %v3918, %v3917
        %v3940 = vpack.c.b16 %v3920, %v3919
        %v3941 = vpack.c.b16 %v3922, %v3921
        %v3942 = vpack.c.b16 %v3924, %v3923
        %v3943 = vpack.c.b16 %v3926, %v3925
        %v3944 = vpack.c.b16 %v3928, %v3927
        %v3945 = vpack.c.b16 %v3930, %v3929
        %v3946 = vpack.c.b16 %v3932, %v3931
        %v3947 = vpack.c.b16 %v3934, %v3933
        %v3948 = vpack.c.b16 %v3935, %v3935
        %v3950 = vshrl.u32 %v3936, 16
        %v3952 = vshll.u32 %v3936, 16
        %v3954 = vrot.slane %v3952, 1
        %v3955 = vor.u32 %v3950, %v3954
        %v3957 = vshll.u32 %v3937, 16
        %v3959 = vrot.slane %v3957, 1
        %v3960 = vsel %vm1760, %v3955, %v3959
        %v3961 = vshrl.u32 %v3937, 16
        %v3963 = vor.u32 %v3961, %v3959
        %v3965 = vshll.u32 %v3938, 16
        %v3967 = vrot.slane %v3965, 1
        %v3968 = vsel %vm1760, %v3963, %v3967
        %v3969 = vshrl.u32 %v3938, 16
        %v3971 = vor.u32 %v3969, %v3967
        %v3973 = vshll.u32 %v3939, 16
        %v3975 = vrot.slane %v3973, 1
        %v3976 = vsel %vm1760, %v3971, %v3975
        %v3977 = vshrl.u32 %v3939, 16
        %v3979 = vor.u32 %v3977, %v3975
        %v3981 = vshll.u32 %v3940, 16
        %v3983 = vrot.slane %v3981, 1
        %v3984 = vsel %vm1760, %v3979, %v3983
        %v3985 = vshrl.u32 %v3940, 16
        %v3987 = vor.u32 %v3985, %v3983
        %v3989 = vshll.u32 %v3941, 16
        %v3991 = vrot.slane %v3989, 1
        %v3992 = vsel %vm1760, %v3987, %v3991
        %v3993 = vshrl.u32 %v3941, 16
        %v3995 = vor.u32 %v3993, %v3991
        %v3997 = vshll.u32 %v3942, 16
        %v3999 = vrot.slane %v3997, 1
        %v4000 = vsel %vm1760, %v3995, %v3999
        %v4001 = vshrl.u32 %v3942, 16
        %v4003 = vor.u32 %v4001, %v3999
        %v4005 = vshll.u32 %v3943, 16
        %v4007 = vrot.slane %v4005, 1
        %v4008 = vsel %vm1760, %v4003, %v4007
        %v4009 = vshrl.u32 %v3943, 16
        %v4011 = vor.u32 %v4009, %v4007
        %v4013 = vshll.u32 %v3944, 16
        %v4015 = vrot.slane %v4013, 1
        %v4016 = vsel %vm1760, %v4011, %v4015
        %v4017 = vshrl.u32 %v3944, 16
        %v4019 = vor.u32 %v4017, %v4015
        %v4021 = vshll.u32 %v3945, 16
        %v4023 = vrot.slane %v4021, 1
        %v4024 = vsel %vm1760, %v4019, %v4023
        %v4025 = vshrl.u32 %v3945, 16
        %v4027 = vor.u32 %v4025, %v4023
        %v4029 = vshll.u32 %v3946, 16
        %v4031 = vrot.slane %v4029, 1
        %v4032 = vsel %vm1760, %v4027, %v4031
        %v4033 = vshrl.u32 %v3946, 16
        %v4035 = vor.u32 %v4033, %v4031
        %v4037 = vshll.u32 %v3947, 16
        %v4039 = vrot.slane %v4037, 1
        %v4040 = vsel %vm1760, %v4035, %v4039
        %v4041 = vshrl.u32 %v3947, 16
        %v4043 = vor.u32 %v4041, %v4039
        %v4045 = vshll.u32 %v3948, 16
        %v4047 = vrot.slane %v4045, 1
        %v4048 = vsel %vm1760, %v4043, %v4047
        %v4077 = vunpack.c.l.b16 %v3870
        %v4078 = vunpack.c.l.b16 %v3871
        %v4079 = vunpack.c.l.b16 %v3872
        %v4080 = vunpack.c.l.b16 %v3873
        %v4081 = vunpack.c.l.b16 %v3874
        %v4082 = vunpack.c.l.b16 %v3875
        %v4083 = vunpack.c.l.b16 %v3876
        %v4084 = vunpack.c.l.b16 %v3877
        %v4085 = vunpack.c.l.b16 %v3878
        %v4086 = vunpack.c.l.b16 %v3879
        %v4087 = vunpack.c.l.b16 %v3880
        %v4088 = vunpack.c.l.b16 %v3881
        %v4089 = vunpack.c.l.b16 %v3882
        %v4090 = vunpack.c.l.b16 %v3883
        %v4091 = vunpack.c.l.b16 %v3884
        %v4092 = vunpack.c.l.b16 %v3885
        %v4093 = vpack.c.b16 %v4078, %v4077
        %v4094 = vpack.c.b16 %v4080, %v4079
        %v4095 = vpack.c.b16 %v4082, %v4081
        %v4096 = vpack.c.b16 %v4084, %v4083
        %v4097 = vpack.c.b16 %v4086, %v4085
        %v4098 = vpack.c.b16 %v4088, %v4087
        %v4099 = vpack.c.b16 %v4090, %v4089
        %v4100 = vpack.c.b16 %v4092, %v4091
        %4109 = vmatprep.subr.bf16.mxu0 0
        %4110 = vmatpush1.bf16.msra.mxu0 %v4100
        %4111 = vmatprep.subr.bf16.mxu0 0
        %4112 = vmatpush1.bf16.msra.mxu0 %v4099
        %4113 = vmatprep.subr.bf16.mxu0 0
        %4114 = vmatpush1.bf16.msra.mxu0 %v4098
        %4115 = vmatprep.subr.bf16.mxu0 0
        %4116 = vmatpush1.bf16.msra.mxu0 %v4097
        %4117 = vmatprep.subr.bf16.mxu0 0
        %4118 = vmatpush1.bf16.msra.mxu0 %v4096
        %4119 = vmatprep.subr.bf16.mxu0 0
        %4120 = vmatpush1.bf16.msra.mxu0 %v4095
        %4121 = vmatprep.subr.bf16.mxu0 0
        %4122 = vmatpush1.bf16.msra.mxu0 %v4094
        %4123 = vmatprep.subr.bf16.mxu0 0
        %4124 = vmatpush1.bf16.msra.mxu0 %v4093
        %4125 = vmatprep.subr.bf16.mxu0 0
        %4126 = vmatpush2.bf16.msra.mxu0 0
        %4127 = vmatprep.subr.bf16.mxu0 0
        %4128 = vmatpush2.bf16.msra.mxu0 0
        %4129 = vmatprep.subr.bf16.mxu0 0
        %4130 = vmatpush2.bf16.msra.mxu0 0
        %4131 = vmatprep.subr.bf16.mxu0 0
        %4132 = vmatpush2.bf16.msra.mxu0 0
        %4133 = vmatprep.subr.bf16.mxu0 0
        %4134 = vmatpush2.bf16.msra.mxu0 0
        %4135 = vmatprep.subr.bf16.mxu0 0
        %4136 = vmatpush2.bf16.msra.mxu0 0
        %4137 = vmatprep.subr.bf16.mxu0 0
        %4138 = vmatpush2.bf16.msra.mxu0 0
        %4139 = vmatprep.subr.bf16.mxu0 0
        %4140 = vmatpush2.bf16.msra.mxu0 0
        %4141 = vmatprep.mubr.bf16.mxu0 0
        %4142 = vmatmul.mubr.bf16.gmra.mxu0 %v3960
        %v4143 = vpop.f32.mrf.mxu0
        %v4144 = vadd.f32 0.0, %v4143
        %v4145 = vpop.f32.mrf.mxu0
        %v4146 = vpop.f32.mrf.mxu0
        %v4147 = vadd.f32 0.0, %v4146
        %v4148 = vpop.f32.mrf.mxu0
        %4149 = vmatprep.mubr.bf16.mxu0 0
        %4150 = vmatmul.mubr.bf16.gmra.mxu0 %v3968
        %v4151 = vpop.f32.mrf.mxu0
        %v4152 = vadd.f32 0.0, %v4151
        %v4153 = vpop.f32.mrf.mxu0
        %v4154 = vpop.f32.mrf.mxu0
        %v4155 = vadd.f32 0.0, %v4154
        %v4156 = vpop.f32.mrf.mxu0
        %4157 = vmatprep.mubr.bf16.mxu0 0
        %4158 = vmatmul.mubr.bf16.gmra.mxu0 %v3976
        %v4159 = vpop.f32.mrf.mxu0
        %v4160 = vadd.f32 0.0, %v4159
        %v4161 = vpop.f32.mrf.mxu0
        %v4162 = vpop.f32.mrf.mxu0
        %v4163 = vadd.f32 0.0, %v4162
        %v4164 = vpop.f32.mrf.mxu0
        %4165 = vmatprep.mubr.bf16.mxu0 0
        %4166 = vmatmul.mubr.bf16.gmra.mxu0 %v3984
        %v4167 = vpop.f32.mrf.mxu0
        %v4168 = vadd.f32 0.0, %v4167
        %v4169 = vpop.f32.mrf.mxu0
        %v4170 = vpop.f32.mrf.mxu0
        %v4171 = vadd.f32 0.0, %v4170
        %v4172 = vpop.f32.mrf.mxu0
        %4173 = vmatprep.mubr.bf16.mxu0 0
        %4174 = vmatmul.mubr.bf16.gmra.mxu0 %v3992
        %v4175 = vpop.f32.mrf.mxu0
        %v4176 = vadd.f32 0.0, %v4175
        %v4177 = vpop.f32.mrf.mxu0
        %v4178 = vpop.f32.mrf.mxu0
        %v4179 = vadd.f32 0.0, %v4178
        %v4180 = vpop.f32.mrf.mxu0
        %4181 = vmatprep.mubr.bf16.mxu0 0
        %4182 = vmatmul.mubr.bf16.gmra.mxu0 %v4000
        %v4183 = vpop.f32.mrf.mxu0
        %v4184 = vadd.f32 0.0, %v4183
        %v4185 = vpop.f32.mrf.mxu0
        %v4186 = vpop.f32.mrf.mxu0
        %v4187 = vadd.f32 0.0, %v4186
        %v4188 = vpop.f32.mrf.mxu0
        %4189 = vmatprep.mubr.bf16.mxu0 0
        %4190 = vmatmul.mubr.bf16.gmra.mxu0 %v4008
        %v4191 = vpop.f32.mrf.mxu0
        %v4192 = vadd.f32 0.0, %v4191
        %v4193 = vpop.f32.mrf.mxu0
        %v4194 = vpop.f32.mrf.mxu0
        %v4195 = vadd.f32 0.0, %v4194
        %v4196 = vpop.f32.mrf.mxu0
        %4197 = vmatprep.mubr.bf16.mxu0 0
        %4198 = vmatmul.mubr.bf16.gmra.mxu0 %v4016
        %v4199 = vpop.f32.mrf.mxu0
        %v4200 = vadd.f32 0.0, %v4199
        %v4201 = vpop.f32.mrf.mxu0
        %v4202 = vpop.f32.mrf.mxu0
        %v4203 = vadd.f32 0.0, %v4202
        %v4204 = vpop.f32.mrf.mxu0
        %4205 = vmatprep.mubr.bf16.mxu0 0
        %4206 = vmatmul.mubr.bf16.gmra.mxu0 %v4024
        %v4207 = vpop.f32.mrf.mxu0
        %v4208 = vadd.f32 0.0, %v4207
        %v4209 = vpop.f32.mrf.mxu0
        %v4210 = vpop.f32.mrf.mxu0
        %v4211 = vadd.f32 0.0, %v4210
        %v4212 = vpop.f32.mrf.mxu0
        %4213 = vmatprep.mubr.bf16.mxu0 0
        %4214 = vmatmul.mubr.bf16.gmra.mxu0 %v4032
        %v4215 = vpop.f32.mrf.mxu0
        %v4216 = vadd.f32 0.0, %v4215
        %v4217 = vpop.f32.mrf.mxu0
        %v4218 = vpop.f32.mrf.mxu0
        %v4219 = vadd.f32 0.0, %v4218
        %v4220 = vpop.f32.mrf.mxu0
        %4221 = vmatprep.mubr.bf16.mxu0 0
        %4222 = vmatmul.mubr.bf16.gmra.mxu0 %v4040
        %v4223 = vpop.f32.mrf.mxu0
        %v4224 = vadd.f32 0.0, %v4223
        %v4225 = vpop.f32.mrf.mxu0
        %v4226 = vpop.f32.mrf.mxu0
        %v4227 = vadd.f32 0.0, %v4226
        %v4228 = vpop.f32.mrf.mxu0
        %4229 = vmatprep.mubr.bf16.mxu0 0
        %4230 = vmatmul.mubr.bf16.gmra.mxu0 %v4048
        %v4231 = vpop.f32.mrf.mxu0
        %v4232 = vadd.f32 0.0, %v4231
        %v4233 = vpop.f32.mrf.mxu0
        %v4234 = vpop.f32.mrf.mxu0
        %v4235 = vadd.f32 0.0, %v4234
        %v4236 = vpop.f32.mrf.mxu0
        %4237 = vdwg.mxu0
        %v4238 = vadd.f32 %v3820, %v4144
        %v4239 = vadd.f32 %v3821, %v4147
        %v4240 = vadd.f32 %v3822, %v4152
        %v4241 = vadd.f32 %v3823, %v4155
        %v4242 = vadd.f32 %v3824, %v4160
        %v4243 = vadd.f32 %v3825, %v4163
        %v4244 = vadd.f32 %v3826, %v4168
        %v4245 = vadd.f32 %v3827, %v4171
        %v4246 = vadd.f32 %v3828, %v4176
        %v4247 = vadd.f32 %v3829, %v4179
        %v4248 = vadd.f32 %v3830, %v4184
        %v4249 = vadd.f32 %v3831, %v4187
        %v4250 = vadd.f32 %v3832, %v4192
        %v4251 = vadd.f32 %v3833, %v4195
        %v4252 = vadd.f32 %v3834, %v4200
        %v4253 = vadd.f32 %v3835, %v4203
        %v4254 = vadd.f32 %v3836, %v4208
        %v4255 = vadd.f32 %v3837, %v4211
        %v4256 = vadd.f32 %v3838, %v4216
        %v4257 = vadd.f32 %v3839, %v4219
        %v4258 = vadd.f32 %v3840, %v4224
        %v4259 = vadd.f32 %v3841, %v4227
        %v4260 = vadd.f32 %v3842, %v4232
        %v4261 = vadd.f32 %v3843, %v4235
        %v4262 = vld [vmem:[%s4] sm:$0x1]
        %v4264 = vlaneseq
        %v4265 = vshrl.u32 %v4264, 7
        %v4266 = vsub.s32 0, %v4265
        %v4267 = vrot.slane %v4262, %v4266
        %v4269 = vadd.f32 %v4238, %v4267
        %v4270 = vadd.f32 %v4239, %v4267
        %v4271 = vadd.f32 %v4240, %v4267
        %v4272 = vadd.f32 %v4241, %v4267
        %v4273 = vadd.f32 %v4242, %v4267
        %v4274 = vadd.f32 %v4243, %v4267
        %v4275 = vadd.f32 %v4244, %v4267
        %v4276 = vadd.f32 %v4245, %v4267
        %v4277 = vadd.f32 %v4246, %v4267
        %v4278 = vadd.f32 %v4247, %v4267
        %v4279 = vadd.f32 %v4248, %v4267
        %v4280 = vadd.f32 %v4249, %v4267
        %v4281 = vadd.f32 %v4250, %v4267
        %v4282 = vadd.f32 %v4251, %v4267
        %v4283 = vadd.f32 %v4252, %v4267
        %v4284 = vadd.f32 %v4253, %v4267
        %v4285 = vadd.f32 %v4254, %v4267
        %v4286 = vadd.f32 %v4255, %v4267
        %v4287 = vadd.f32 %v4256, %v4267
        %v4288 = vadd.f32 %v4257, %v4267
        %v4289 = vadd.f32 %v4258, %v4267
        %v4290 = vadd.f32 %v4259, %v4267
        %v4291 = vadd.f32 %v4260, %v4267
        %v4292 = vadd.f32 %v4261, %v4267
        %v4293 = vmax.f32 %v4269, 0.0
        %v4294 = vmax.f32 %v4270, 0.0
        %v4295 = vmax.f32 %v4271, 0.0
        %v4296 = vmax.f32 %v4272, 0.0
        %v4297 = vmax.f32 %v4273, 0.0
        %v4298 = vmax.f32 %v4274, 0.0
        %v4299 = vmax.f32 %v4275, 0.0
        %v4300 = vmax.f32 %v4276, 0.0
        %v4301 = vmax.f32 %v4277, 0.0
        %v4302 = vmax.f32 %v4278, 0.0
        %v4303 = vmax.f32 %v4279, 0.0
        %v4304 = vmax.f32 %v4280, 0.0
        %v4305 = vmax.f32 %v4281, 0.0
        %v4306 = vmax.f32 %v4282, 0.0
        %v4307 = vmax.f32 %v4283, 0.0
        %v4308 = vmax.f32 %v4284, 0.0
        %v4309 = vmax.f32 %v4285, 0.0
        %v4310 = vmax.f32 %v4286, 0.0
        %v4311 = vmax.f32 %v4287, 0.0
        %v4312 = vmax.f32 %v4288, 0.0
        %v4313 = vmax.f32 %v4289, 0.0
        %v4314 = vmax.f32 %v4290, 0.0
        %v4315 = vmax.f32 %v4291, 0.0
        %v4316 = vmax.f32 %v4292, 0.0
        %v4317 = vpack.c.bf16 %v4294, %v4293
        %v4318 = vpack.c.bf16 %v4296, %v4295
        %v4319 = vpack.c.bf16 %v4298, %v4297
        %v4320 = vpack.c.bf16 %v4300, %v4299
        %v4321 = vpack.c.bf16 %v4302, %v4301
        %v4322 = vpack.c.bf16 %v4304, %v4303
        %v4323 = vpack.c.bf16 %v4306, %v4305
        %v4324 = vpack.c.bf16 %v4308, %v4307
        %v4325 = vpack.c.bf16 %v4310, %v4309
        %v4326 = vpack.c.bf16 %v4312, %v4311
        %v4327 = vpack.c.bf16 %v4314, %v4313
        %v4328 = vpack.c.bf16 %v4316, %v4315
        %v4329 = vld [vmem:[#allocation9] sm:$0xf]
        %v4330 = vld [vmem:[#allocation9 + $0x4] sm:$0xf]
        %v4331 = vld [vmem:[#allocation9 + $0x8] sm:$0xf]
        %v4332 = vld [vmem:[#allocation9 + $0xc] sm:$0xf]
        %v4333 = vld [vmem:[#allocation9 + $0x10] sm:$0xf]
        %v4334 = vld [vmem:[#allocation9 + $0x14] sm:$0xf]
        %v4335 = vld [vmem:[#allocation9 + $0x18] sm:$0xf]
        %v4336 = vld [vmem:[#allocation9 + $0x1c] sm:$0xf]
        %v4337 = vld [vmem:[#allocation9 + $0x20] sm:$0xf]
        %v4338 = vld [vmem:[#allocation9 + $0x24] sm:$0xf]
        %v4339 = vld [vmem:[#allocation9 + $0x28] sm:$0xf]
        %v4340 = vld [vmem:[#allocation9 + $0x2c] sm:$0xf]
        %v4341 = vld [vmem:[#allocation9 + $0x30] sm:$0xf]
        %v4342 = vld [vmem:[#allocation9 + $0x34] sm:$0xf]
        %v4343 = vld [vmem:[#allocation9 + $0x38] sm:$0xf]
        %v4344 = vld [vmem:[#allocation9 + $0x3c] sm:$0xf]
        %v4345 = vld [vmem:[%s6] sm:$0x1]
        %v4347 = vlaneseq
        %v4348 = vshrl.u32 %v4347, 7
        %v4349 = vsub.s32 0, %v4348
        %v4350 = vrot.slane %v4345, %v4349
        %v4368 = vunpack.c.l.b16 %v4329
        %v4369 = vunpack.c.l.b16 %v4330
        %v4370 = vunpack.c.l.b16 %v4331
        %v4371 = vunpack.c.l.b16 %v4332
        %v4372 = vunpack.c.l.b16 %v4333
        %v4373 = vunpack.c.l.b16 %v4334
        %v4374 = vunpack.c.l.b16 %v4335
        %v4375 = vunpack.c.l.b16 %v4336
        %v4376 = vunpack.c.l.b16 %v4337
        %v4377 = vunpack.c.l.b16 %v4338
        %v4378 = vunpack.c.l.b16 %v4339
        %v4379 = vunpack.c.l.b16 %v4340
        %v4380 = vunpack.c.l.b16 %v4341
        %v4381 = vunpack.c.l.b16 %v4342
        %v4382 = vunpack.c.l.b16 %v4343
        %v4383 = vunpack.c.l.b16 %v4344
        %v4384 = vpack.c.b16 %v4369, %v4368
        %v4385 = vpack.c.b16 %v4371, %v4370
        %v4386 = vpack.c.b16 %v4373, %v4372
        %v4387 = vpack.c.b16 %v4375, %v4374
        %v4388 = vpack.c.b16 %v4377, %v4376
        %v4389 = vpack.c.b16 %v4379, %v4378
        %v4390 = vpack.c.b16 %v4381, %v4380
        %v4391 = vpack.c.b16 %v4383, %v4382
        %4400 = vmatprep.subr.bf16.mxu0 0
        %4401 = vmatpush1.bf16.msra.mxu0 %v4391
        %4402 = vmatprep.subr.bf16.mxu0 0
        %4403 = vmatpush1.bf16.msra.mxu0 %v4390
        %4404 = vmatprep.subr.bf16.mxu0 0
        %4405 = vmatpush1.bf16.msra.mxu0 %v4389
        %4406 = vmatprep.subr.bf16.mxu0 0
        %4407 = vmatpush1.bf16.msra.mxu0 %v4388
        %4408 = vmatprep.subr.bf16.mxu0 0
        %4409 = vmatpush1.bf16.msra.mxu0 %v4387
        %4410 = vmatprep.subr.bf16.mxu0 0
        %4411 = vmatpush1.bf16.msra.mxu0 %v4386
        %4412 = vmatprep.subr.bf16.mxu0 0
        %4413 = vmatpush1.bf16.msra.mxu0 %v4385
        %4414 = vmatprep.subr.bf16.mxu0 0
        %4415 = vmatpush1.bf16.msra.mxu0 %v4384
        %4416 = vmatprep.subr.bf16.mxu0 0
        %4417 = vmatpush2.bf16.msra.mxu0 0
        %4418 = vmatprep.subr.bf16.mxu0 0
        %4419 = vmatpush2.bf16.msra.mxu0 0
        %4420 = vmatprep.subr.bf16.mxu0 0
        %4421 = vmatpush2.bf16.msra.mxu0 0
        %4422 = vmatprep.subr.bf16.mxu0 0
        %4423 = vmatpush2.bf16.msra.mxu0 0
        %4424 = vmatprep.subr.bf16.mxu0 0
        %4425 = vmatpush2.bf16.msra.mxu0 0
        %4426 = vmatprep.subr.bf16.mxu0 0
        %4427 = vmatpush2.bf16.msra.mxu0 0
        %4428 = vmatprep.subr.bf16.mxu0 0
        %4429 = vmatpush2.bf16.msra.mxu0 0
        %4430 = vmatprep.subr.bf16.mxu0 0
        %4431 = vmatpush2.bf16.msra.mxu0 0
        %4432 = vmatprep.mubr.bf16.mxu0 0
        %4433 = vmatmul.mubr.bf16.gmra.mxu0 %v4317
        %v4434 = vpop.f32.mrf.mxu0
        %v4435 = vadd.f32 %v4350, %v4434
        %v4436 = vpop.f32.mrf.mxu0
        %v4437 = vpop.f32.mrf.mxu0
        %v4438 = vadd.f32 %v4350, %v4437
        %v4439 = vpop.f32.mrf.mxu0
        %4440 = vmatprep.mubr.bf16.mxu0 0
        %4441 = vmatmul.mubr.bf16.gmra.mxu0 %v4318
        %v4442 = vpop.f32.mrf.mxu0
        %v4443 = vadd.f32 %v4350, %v4442
        %v4444 = vpop.f32.mrf.mxu0
        %v4445 = vpop.f32.mrf.mxu0
        %v4446 = vadd.f32 %v4350, %v4445
        %v4447 = vpop.f32.mrf.mxu0
        %4448 = vmatprep.mubr.bf16.mxu0 0
        %4449 = vmatmul.mubr.bf16.gmra.mxu0 %v4319
        %v4450 = vpop.f32.mrf.mxu0
        %v4451 = vadd.f32 %v4350, %v4450
        %v4452 = vpop.f32.mrf.mxu0
        %v4453 = vpop.f32.mrf.mxu0
        %v4454 = vadd.f32 %v4350, %v4453
        %v4455 = vpop.f32.mrf.mxu0
        %4456 = vmatprep.mubr.bf16.mxu0 0
        %4457 = vmatmul.mubr.bf16.gmra.mxu0 %v4320
        %v4458 = vpop.f32.mrf.mxu0
        %v4459 = vadd.f32 %v4350, %v4458
        %v4460 = vpop.f32.mrf.mxu0
        %v4461 = vpop.f32.mrf.mxu0
        %v4462 = vadd.f32 %v4350, %v4461
        %v4463 = vpop.f32.mrf.mxu0
        %4464 = vmatprep.mubr.bf16.mxu0 0
        %4465 = vmatmul.mubr.bf16.gmra.mxu0 %v4321
        %v4466 = vpop.f32.mrf.mxu0
        %v4467 = vadd.f32 %v4350, %v4466
        %v4468 = vpop.f32.mrf.mxu0
        %v4469 = vpop.f32.mrf.mxu0
        %v4470 = vadd.f32 %v4350, %v4469
        %v4471 = vpop.f32.mrf.mxu0
        %4472 = vmatprep.mubr.bf16.mxu0 0
        %4473 = vmatmul.mubr.bf16.gmra.mxu0 %v4322
        %v4474 = vpop.f32.mrf.mxu0
        %v4475 = vadd.f32 %v4350, %v4474
        %v4476 = vpop.f32.mrf.mxu0
        %v4477 = vpop.f32.mrf.mxu0
        %v4478 = vadd.f32 %v4350, %v4477
        %v4479 = vpop.f32.mrf.mxu0
        %4480 = vmatprep.mubr.bf16.mxu0 0
        %4481 = vmatmul.mubr.bf16.gmra.mxu0 %v4323
        %v4482 = vpop.f32.mrf.mxu0
        %v4483 = vadd.f32 %v4350, %v4482
        %v4484 = vpop.f32.mrf.mxu0
        %v4485 = vpop.f32.mrf.mxu0
        %v4486 = vadd.f32 %v4350, %v4485
        %v4487 = vpop.f32.mrf.mxu0
        %4488 = vmatprep.mubr.bf16.mxu0 0
        %4489 = vmatmul.mubr.bf16.gmra.mxu0 %v4324
        %v4490 = vpop.f32.mrf.mxu0
        %v4491 = vadd.f32 %v4350, %v4490
        %v4492 = vpop.f32.mrf.mxu0
        %v4493 = vpop.f32.mrf.mxu0
        %v4494 = vadd.f32 %v4350, %v4493
        %v4495 = vpop.f32.mrf.mxu0
        %4496 = vmatprep.mubr.bf16.mxu0 0
        %4497 = vmatmul.mubr.bf16.gmra.mxu0 %v4325
        %v4498 = vpop.f32.mrf.mxu0
        %v4499 = vadd.f32 %v4350, %v4498
        %v4500 = vpop.f32.mrf.mxu0
        %v4501 = vpop.f32.mrf.mxu0
        %v4502 = vadd.f32 %v4350, %v4501
        %v4503 = vpop.f32.mrf.mxu0
        %4504 = vmatprep.mubr.bf16.mxu0 0
        %4505 = vmatmul.mubr.bf16.gmra.mxu0 %v4326
        %v4506 = vpop.f32.mrf.mxu0
        %v4507 = vadd.f32 %v4350, %v4506
        %v4508 = vpop.f32.mrf.mxu0
        %v4509 = vpop.f32.mrf.mxu0
        %v4510 = vadd.f32 %v4350, %v4509
        %v4511 = vpop.f32.mrf.mxu0
        %4512 = vmatprep.mubr.bf16.mxu0 0
        %4513 = vmatmul.mubr.bf16.gmra.mxu0 %v4327
        %v4514 = vpop.f32.mrf.mxu0
        %v4515 = vadd.f32 %v4350, %v4514
        %v4516 = vpop.f32.mrf.mxu0
        %v4517 = vpop.f32.mrf.mxu0
        %v4518 = vadd.f32 %v4350, %v4517
        %v4519 = vpop.f32.mrf.mxu0
        %4520 = vmatprep.mubr.bf16.mxu0 0
        %4521 = vmatmul.mubr.bf16.gmra.mxu0 %v4328
        %v4522 = vpop.f32.mrf.mxu0
        %v4523 = vadd.f32 %v4350, %v4522
        %v4524 = vpop.f32.mrf.mxu0
        %v4525 = vpop.f32.mrf.mxu0
        %v4526 = vadd.f32 %v4350, %v4525
        %v4527 = vpop.f32.mrf.mxu0
        %4528 = vdwg.mxu0
        %v4529 = vunpack.c.l.bf16 %v363
        %v4530 = vunpack.c.l.bf16 %v364
        %v4531 = vunpack.c.l.bf16 %v365
        %v4532 = vunpack.c.l.bf16 %v366
        %v4533 = vunpack.c.l.bf16 %v367
        %v4534 = vunpack.c.l.bf16 %v368
        %v4535 = vunpack.c.l.bf16 %v369
        %v4536 = vunpack.c.l.bf16 %v370
        %v4537 = vunpack.c.l.bf16 %v371
        %v4538 = vunpack.c.l.bf16 %v372
        %v4539 = vunpack.c.l.bf16 %v373
        %v4540 = vunpack.c.l.bf16 %v374
        %v4541 = vunpack.c.l.bf16 %v375
        %v4542 = vunpack.c.l.bf16 %v376
        %v4543 = vunpack.c.l.bf16 %v377
        %v4544 = vunpack.c.l.bf16 %v378
        %v4545 = vunpack.c.l.bf16 %v379
        %v4546 = vunpack.c.l.bf16 %v380
        %v4547 = vunpack.c.l.bf16 %v381
        %v4548 = vunpack.c.l.bf16 %v382
        %v4549 = vunpack.c.l.bf16 %v383
        %v4550 = vunpack.c.l.bf16 %v384
        %v4551 = vunpack.c.l.bf16 %v385
        %v4552 = vunpack.c.l.bf16 %v386
        %v4553 = vadd.f32 %v4435, %v4529
        %v4554 = vadd.f32 %v4438, %v4530
        %v4555 = vadd.f32 %v4443, %v4531
        %v4556 = vadd.f32 %v4446, %v4532
        %v4557 = vadd.f32 %v4451, %v4533
        %v4558 = vadd.f32 %v4454, %v4534
        %v4559 = vadd.f32 %v4459, %v4535
        %v4560 = vadd.f32 %v4462, %v4536
        %v4561 = vadd.f32 %v4467, %v4537
        %v4562 = vadd.f32 %v4470, %v4538
        %v4563 = vadd.f32 %v4475, %v4539
        %v4564 = vadd.f32 %v4478, %v4540
        %v4565 = vadd.f32 %v4483, %v4541
        %v4566 = vadd.f32 %v4486, %v4542
        %v4567 = vadd.f32 %v4491, %v4543
        %v4568 = vadd.f32 %v4494, %v4544
        %v4569 = vadd.f32 %v4499, %v4545
        %v4570 = vadd.f32 %v4502, %v4546
        %v4571 = vadd.f32 %v4507, %v4547
        %v4572 = vadd.f32 %v4510, %v4548
        %v4573 = vadd.f32 %v4515, %v4549
        %v4574 = vadd.f32 %v4518, %v4550
        %v4575 = vadd.f32 %v4523, %v4551
        %v4576 = vadd.f32 %v4526, %v4552
        %v4577 = vmax.f32 %v4553, 0.0
        %v4578 = vmax.f32 %v4554, 0.0
        %v4579 = vmax.f32 %v4555, 0.0
        %v4580 = vmax.f32 %v4556, 0.0
        %v4581 = vmax.f32 %v4557, 0.0
        %v4582 = vmax.f32 %v4558, 0.0
        %v4583 = vmax.f32 %v4559, 0.0
        %v4584 = vmax.f32 %v4560, 0.0
        %v4585 = vmax.f32 %v4561, 0.0
        %v4586 = vmax.f32 %v4562, 0.0
        %v4587 = vmax.f32 %v4563, 0.0
        %v4588 = vmax.f32 %v4564, 0.0
        %v4589 = vmax.f32 %v4565, 0.0
        %v4590 = vmax.f32 %v4566, 0.0
        %v4591 = vmax.f32 %v4567, 0.0
        %v4592 = vmax.f32 %v4568, 0.0
        %v4593 = vmax.f32 %v4569, 0.0
        %v4594 = vmax.f32 %v4570, 0.0
        %v4595 = vmax.f32 %v4571, 0.0
        %v4596 = vmax.f32 %v4572, 0.0
        %v4597 = vmax.f32 %v4573, 0.0
        %v4598 = vmax.f32 %v4574, 0.0
        %v4599 = vmax.f32 %v4575, 0.0
        %v4600 = vmax.f32 %v4576, 0.0
        %4601 = vst [vmem:[%s358] sm:$0xff] %v4577
        %4602 = vst [vmem:[%s358 + $0x8] sm:$0xff] %v4578
        %4603 = vst [vmem:[%s358 + $0x10] sm:$0xff] %v4579
        %4604 = vst [vmem:[%s358 + $0x18] sm:$0xff] %v4580
        %4605 = vst [vmem:[%s358 + $0x20] sm:$0xff] %v4581
        %4606 = vst [vmem:[%s358 + $0x28] sm:$0xff] %v4582
        %4607 = vst [vmem:[%s358 + $0x30] sm:$0xff] %v4583
        %4608 = vst [vmem:[%s358 + $0x38] sm:$0xff] %v4584
        %4609 = vst [vmem:[%s358 + $0x40] sm:$0xff] %v4585
        %4610 = vst [vmem:[%s358 + $0x48] sm:$0xff] %v4586
        %4611 = vst [vmem:[%s358 + $0x50] sm:$0xff] %v4587
        %4612 = vst [vmem:[%s358 + $0x58] sm:$0xff] %v4588
        %4613 = vst [vmem:[%s358 + $0x60] sm:$0xff] %v4589
        %4614 = vst [vmem:[%s358 + $0x68] sm:$0xff] %v4590
        %4615 = vst [vmem:[%s358 + $0x70] sm:$0xff] %v4591
        %4616 = vst [vmem:[%s358 + $0x78] sm:$0xff] %v4592
        %4617 = vst [vmem:[%s358 + $0x80] sm:$0xff] %v4593
        %4618 = vst [vmem:[%s358 + $0x88] sm:$0xff] %v4594
        %4619 = vst [vmem:[%s358 + $0x90] sm:$0xff] %v4595
        %4620 = vst [vmem:[%s358 + $0x98] sm:$0xff] %v4596
        %4621 = vst [vmem:[%s358 + $0xa0] sm:$0xff] %v4597
        %4622 = vst [vmem:[%s358 + $0xa8] sm:$0xff] %v4598
        %4623 = vst [vmem:[%s358 + $0xb0] sm:$0xff] %v4599
        %4624 = vst [vmem:[%s358 + $0xb8] sm:$0xff] %v4600
        %s4625 = sand.u32 %s202, 1
        %s4626 = scalar_lea.sflag [#allocation5], %s4625
        %s4627 = sand.u32 %s202, 1
        %s4628 = smul.addr %s4627, 192
        %s4629 = scalar_lea.vmem [#allocation11], %s4628
        // Predicated region
        $region65: #{tpu_custom_call.1} parent=47 // pred_check
          %p4630 = pneg %p212
        $region66: #{tpu_custom_call.1} parent=47 // pred_check_branch
          %4632 = sbr.rel (%p4630) target = $region68
        $region67: #{tpu_custom_call.1} parent=47 // pred_region
          %s4634 = ssub.s32 3072, 3072
          %4635 = vsyncadd %s4626, %s4634
          %s4636 = smul.addr %s31, 24
          %s4637 = smul.addr %s30, 48
          %s4638 = sadd.s32 %s4636, %s4637
          %s4639 = smul.addr %s4638, 128
          %s4640 = scalar_lea.hbm %s7, %s4639
          %s4641 = sshll.u32 %s4629, 4
          %s4642 = int_to_ptr.vmem [resolvable:$true] %s4641
          %4647 = dma.vmem_to_hbm [thread:$0]  %s4642, 3072, %s4640, %s4626, 128, 128, 8
        $region68: #{tpu_custom_call.1} parent=47 // pred_fallthru
          _
      $region48: #{tpu_custom_call.1} parent=5 // pred_fallthru
        _
      %p4648 = scmp.le.s32.totalorder 2, %s21
      // Predicated region
      $region69: #{tpu_custom_call.1} parent=5 // pred_check
        %p4649 = pneg %p4648
      $region70: #{tpu_custom_call.1} parent=5 // pred_check_branch
        %4651 = sbr.rel (%p4649) target = $region72
      $region71: #{tpu_custom_call.1} parent=5 // pred_region
        %s4652 = ssub.s32 %s21, 2
        // Predicated region
        $region73: #{tpu_custom_call.1} parent=71 // pred_check
          %p4653 = pneg %p218
        $region74: #{tpu_custom_call.1} parent=71 // pred_check_branch
          %4655 = sbr.rel (%p4653) target = $region76
        $region75: #{tpu_custom_call.1} parent=71 // pred_region
          %s4656 = sand.u32 %s203, 1
          %s4657 = scalar_lea.sflag [#allocation5], %s4656
          %s4658 = sand.u32 %s203, 1
          %s4659 = smul.addr %s4658, 192
          %s4660 = scalar_lea.vmem [#allocation11], %s4659
          %4661 = dma.done %s4657, 3072
        $region76: #{tpu_custom_call.1} parent=71 // pred_fallthru
          _
      $region72: #{tpu_custom_call.1} parent=5 // pred_fallthru
        _
    $region6: #{tpu_custom_call.1} parent=1 // loop_footer
      %s25 = sadd.s32 1, %s21
    $region7: #{tpu_custom_call.1} parent=1 // loop_footer_branch
      %20 = sbr.rel target = $region3
    $region8: #{tpu_custom_call.1} parent=1 // loop_exit
      _
    %4662 = vsyncpa [#allocation4], 1
    %s4663 = scalar_lea.sflag [#allocation4], 1
    %4664 = vsyncpa %s4663, 1
    %4665 = vsyncpa [#allocation7], 1
    %4666 = vsyncpa [#allocation10], 1
    %4667 = vsyncpa [#allocation5], 1
    %s4668 = scalar_lea.sflag [#allocation5], 1
    %4669 = vsyncpa %s4668, 1

// kernel: tpu_custom_call.1
$region0: #{tpu_custom_call.1}
  #allocation0 [shape = 'u32[]', space=smem, size = 0x4, offset = 0x4, fixed_abs, tag = 'smem constant byte address 0x4 - core index']
  #allocation1 [shape = 'u32[144,128]{1,0:T(1,128)}', space=vmem, size = 0x12000, scoped, tag = 'internal scratch']
  #allocation2 [shape = 'bf16[256,128]{1,0:T(8,128)(2,1)}', space=vmem, size = 0x10000, scoped, tag = 'scratch operand']
  %s0 = inlined_call_operand.hbm [shape: bf16[2,2,240,128], index: 0, kind: input, shape index: {}]
  %s1 = inlined_call_operand.hbm [shape: bf16[128,128], index: 1, kind: input, shape index: {}]
  %s2 = inlined_call_operand.vmem [shape: f32[1,128], index: 2, kind: input, shape index: {}]
  %s3 = inlined_call_operand.hbm [shape: bf16[9,128,128], index: 3, kind: input, shape index: {}]
  %s4 = inlined_call_operand.vmem [shape: f32[1,128], index: 4, kind: input, shape index: {}]
  %s5 = inlined_call_operand.hbm [shape: bf16[128,128], index: 5, kind: input, shape index: {}]
  %s6 = inlined_call_operand.vmem [shape: f32[1,128], index: 6, kind: input, shape index: {}]
  %s7 = inlined_call_operand.hbm [shape: f32[2,2,192,128], index: 7, kind: output, shape index: {}]
  %s8 = sld [smem:[#allocation0]]
  $region77: #{tpu_custom_call.1} parent=0
    _
  %s10 = ssub.s32 1, %s8
  %s11 = scalar_select 0, %s10, %s8
  $region1: #{tpu_custom_call.1} parent=0
    #allocation3 [shape = 'u8[122880]{0}', space=vmem, size = 0x1e000, scoped, tag = 'input window, operand 0']
    #allocation4 [shape = 's32[2]{0}', space=sflag, size = 0x8, scoped, tag = 'scoped memory for tpu_custom_call.1']
    #allocation5 [shape = 's32[2]{0}', space=sflag, size = 0x8, scoped, tag = 'scoped memory for tpu_custom_call.1']
    #allocation6 [shape = 'u8[32768]{0}', space=vmem, size = 0x8000, scoped, tag = 'input window, operand 1, single buffered']
    #allocation7 [shape = 's32[1]{0}', space=sflag, size = 0x4, scoped, tag = 'scoped memory for tpu_custom_call.1']
    #allocation8 [shape = 'u8[294912]{0}', space=vmem, size = 0x48000, scoped, tag = 'input window, operand 3, single buffered']
    #allocation9 [shape = 'u8[32768]{0}', space=vmem, size = 0x8000, scoped, tag = 'input window, operand 5, single buffered']
    #allocation10 [shape = 's32[1]{0}', space=sflag, size = 0x4, scoped, tag = 'scoped memory for tpu_custom_call.1']
    #allocation11 [shape = 'u8[196608]{0}', space=vmem, size = 0x30000, scoped, tag = 'output window, operand 0']
    %12 = vsyncpa [#allocation4], 0
    %s13 = scalar_lea.sflag [#allocation4], 1
    %14 = vsyncpa %s13, 0
    %15 = vsyncpa [#allocation7], 0
    %16 = vsyncpa [#allocation10], 0
    %17 = vsyncpa [#allocation5], 0
    %s18 = scalar_lea.sflag [#allocation5], 1
    %19 = vsyncpa %s18, 0
    loop: start=0, step=1, limit=6
    $region2: #{tpu_custom_call.1} parent=1 // loop_pre_header
      _
    $region3: #{tpu_custom_call.1} parent=1 // loop_header
      %s21 = sphi 0, %s25
      %p22 = scmp.ge.s32.totalorder %s21, 6
      %s28 = sphi 0, %s40
      %s29 = sphi 0, %s36
      %s30 = sphi 0, %s28
      %s31 = sphi 0, %s29
      %s32 = sphi 0, %s30
      %s33 = sphi 0, %s31
      %s45 = sphi 0, %s47
      %s48 = sphi 0, %s45
      %s49 = sphi 0, %s48
      %s65 = sphi 0, %s49
      %s69 = sphi 0, %s69
      %s71 = sphi 0, %s69
      %s72 = sphi 0, %s71
      %s86 = sphi 0, %s72
      %s90 = sphi 0, %s90
      %s92 = sphi 0, %s90
      %s93 = sphi 0, %s92
      %s107 = sphi 0, %s93
      %s111 = sphi 0, %s111
      %s113 = sphi 0, %s111
      %s114 = sphi 0, %s113
      %s128 = sphi 0, %s114
      %s132 = sphi 0, %s132
      %s134 = sphi 0, %s132
      %s135 = sphi 0, %s134
      %s149 = sphi 0, %s135
      %s153 = sphi 0, %s153
      %s155 = sphi 0, %s153
      %s156 = sphi 0, %s155
      %s170 = sphi 0, %s156
      %s174 = sphi 0, %s174
      %s176 = sphi 0, %s174
      %s177 = sphi 0, %s176
      %s191 = sphi 0, %s177
      %s199 = sphi 0, %s201
      %s202 = sphi 0, %s199
      %s203 = sphi 0, %s202
      %s219 = sphi 0, %s203
    $region4: #{tpu_custom_call.1} parent=1 // loop_header_branch
      %24 = sbr.rel (%p22) target = $region8
    $region5: #{tpu_custom_call.1} parent=1 // loop_body
      %s26 = ssub.s32 %s21, 1
      %s27 = ssub.s32 %s21, 2
      %s34 = sadd.s32 1, %s29
      %p35 = scmp.ge.s32.totalorder %s34, 2
      %s36 = scalar_select %p35, 0, %s34
      %s37 = sadd.s32 1, %s28
      %s38 = scalar_select %p35, %s37, %s28
      %p39 = scmp.ge.s32.totalorder %s38, 2
      %s40 = scalar_select %p39, 0, %s38
      %s41 = ssub.s32 %s28, %s40
      %s42 = ssub.s32 %s29, %s36
      %s43 = sor.u32 %s41, %s42
      %p44 = scmp.eq.s32.totalorder %s43, 0
      %s46 = sadd.s32 %s45, 1
      %s47 = scalar_select %p44, %s45, %s46
      %p50 = pneg %p44
      %p51 = scmp.eq.s32.totalorder %s21, 3
      %p52 = por %p50, %p51
      %p53 = scmp.ne.s32.totalorder %s45, %s48
      %p54 = scmp.eq.s32.totalorder %s21, 0
      %p55 = por %p53, %p54
      %p56 = scmp.ne.s32.totalorder %s45, %s48
      %p57 = scmp.eq.s32.totalorder %s26, 3
      %p58 = por %p56, %p57
      %p59 = scmp.ne.s32.totalorder %s48, %s49
      %p60 = scmp.eq.s32.totalorder %s26, 0
      %p61 = por %p59, %p60
      %p62 = scmp.ne.s32.totalorder %s48, %s49
      %p63 = scmp.eq.s32.totalorder %s27, 3
      %p64 = por %p62, %p63
      %p66 = scmp.ne.s32.totalorder %s49, %s65
      %p67 = scmp.eq.s32.totalorder %s27, 0
      %p68 = por %p66, %p67
      %s70 = sadd.s32 %s69, 1
      %p73 = scmp.eq.s32.totalorder %s21, 3
      %p74 = scmp.ne.s32.totalorder %s69, %s71
      %p75 = scmp.eq.s32.totalorder %s21, 0
      %p76 = por %p74, %p75
      %p77 = scmp.ne.s32.totalorder %s69, %s71
      %p78 = scmp.eq.s32.totalorder %s26, 3
      %p79 = por %p77, %p78
      %p80 = scmp.ne.s32.totalorder %s71, %s72
      %p81 = scmp.eq.s32.totalorder %s26, 0
      %p82 = por %p80, %p81
      %p83 = scmp.ne.s32.totalorder %s71, %s72
      %p84 = scmp.eq.s32.totalorder %s27, 3
      %p85 = por %p83, %p84
      %p87 = scmp.ne.s32.totalorder %s72, %s86
      %p88 = scmp.eq.s32.totalorder %s27, 0
      %p89 = por %p87, %p88
      %s91 = sadd.s32 %s90, 1
      %p94 = scmp.eq.s32.totalorder %s21, 3
      %p95 = scmp.ne.s32.totalorder %s90, %s92
      %p96 = scmp.eq.s32.totalorder %s21, 0
      %p97 = por %p95, %p96
      %p98 = scmp.ne.s32.totalorder %s90, %s92
      %p99 = scmp.eq.s32.totalorder %s26, 3
      %p100 = por %p98, %p99
      %p101 = scmp.ne.s32.totalorder %s92, %s93
      %p102 = scmp.eq.s32.totalorder %s26, 0
      %p103 = por %p101, %p102
      %p104 = scmp.ne.s32.totalorder %s92, %s93
      %p105 = scmp.eq.s32.totalorder %s27, 3
      %p106 = por %p104, %p105
      %p108 = scmp.ne.s32.totalorder %s93, %s107
      %p109 = scmp.eq.s32.totalorder %s27, 0
      %p110 = por %p108, %p109
      %s112 = sadd.s32 %s111, 1
      %p115 = scmp.eq.s32.totalorder %s21, 3
      %p116 = scmp.ne.s32.totalorder %s111, %s113
      %p117 = scmp.eq.s32.totalorder %s21, 0
      %p118 = por %p116, %p117
      %p119 = scmp.ne.s32.totalorder %s111, %s113
      %p120 = scmp.eq.s32.totalorder %s26, 3
      %p121 = por %p119, %p120
      %p122 = scmp.ne.s32.totalorder %s113, %s114
      %p123 = scmp.eq.s32.totalorder %s26, 0
      %p124 = por %p122, %p123
      %p125 = scmp.ne.s32.totalorder %s113, %s114
      %p126 = scmp.eq.s32.totalorder %s27, 3
      %p127 = por %p125, %p126
      %p129 = scmp.ne.s32.totalorder %s114, %s128
      %p130 = scmp.eq.s32.totalorder %s27, 0
      %p131 = por %p129, %p130
      %s133 = sadd.s32 %s132, 1
      %p136 = scmp.eq.s32.totalorder %s21, 3
      %p137 = scmp.ne.s32.totalorder %s132, %s134
      %p138 = scmp.eq.s32.totalorder %s21, 0
      %p139 = por %p137, %p138
      %p140 = scmp.ne.s32.totalorder %s132, %s134
      %p141 = scmp.eq.s32.totalorder %s26, 3
      %p142 = por %p140, %p141
      %p143 = scmp.ne.s32.totalorder %s134, %s135
      %p144 = scmp.eq.s32.totalorder %s26, 0
      %p145 = por %p143, %p144
      %p146 = scmp.ne.s32.totalorder %s134, %s135
      %p147 = scmp.eq.s32.totalorder %s27, 3
      %p148 = por %p146, %p147
      %p150 = scmp.ne.s32.totalorder %s135, %s149
      %p151 = scmp.eq.s32.totalorder %s27, 0
      %p152 = por %p150, %p151
      %s154 = sadd.s32 %s153, 1
      %p157 = scmp.eq.s32.totalorder %s21, 3
      %p158 = scmp.ne.s32.totalorder %s153, %s155
      %p159 = scmp.eq.s32.totalorder %s21, 0
      %p160 = por %p158, %p159
      %p161 = scmp.ne.s32.totalorder %s153, %s155
      %p162 = scmp.eq.s32.totalorder %s26, 3
      %p163 = por %p161, %p162
      %p164 = scmp.ne.s32.totalorder %s155, %s156
      %p165 = scmp.eq.s32.totalorder %s26, 0
      %p166 = por %p164, %p165
      %p167 = scmp.ne.s32.totalorder %s155, %s156
      %p168 = scmp.eq.s32.totalorder %s27, 3
      %p169 = por %p167, %p168
      %p171 = scmp.ne.s32.totalorder %s156, %s170
      %p172 = scmp.eq.s32.totalorder %s27, 0
      %p173 = por %p171, %p172
      %s175 = sadd.s32 %s174, 1
      %p178 = scmp.eq.s32.totalorder %s21, 3
      %p179 = scmp.ne.s32.totalorder %s174, %s176
      %p180 = scmp.eq.s32.totalorder %s21, 0
      %p181 = por %p179, %p180
      %p182 = scmp.ne.s32.totalorder %s174, %s176
      %p183 = scmp.eq.s32.totalorder %s26, 3
      %p184 = por %p182, %p183
      %p185 = scmp.ne.s32.totalorder %s176, %s177
      %p186 = scmp.eq.s32.totalorder %s26, 0
      %p187 = por %p185, %p186
      %p188 = scmp.ne.s32.totalorder %s176, %s177
      %p189 = scmp.eq.s32.totalorder %s27, 3
      %p190 = por %p188, %p189
      %p192 = scmp.ne.s32.totalorder %s177, %s191
      %p193 = scmp.eq.s32.totalorder %s27, 0
      %p194 = por %p192, %p193
      %s195 = ssub.s32 %s28, %s40
      %s196 = ssub.s32 %s29, %s36
      %s197 = sor.u32 %s195, %s196
      %p198 = scmp.eq.s32.totalorder %s197, 0
      %s200 = sadd.s32 %s199, 1
      %s201 = scalar_select %p198, %s199, %s200
      %p204 = pneg %p198
      %p205 = scmp.eq.s32.totalorder %s21, 3
      %p206 = por %p204, %p205
      %p207 = scmp.ne.s32.totalorder %s199, %s202
      %p208 = scmp.eq.s32.totalorder %s21, 0
      %p209 = por %p207, %p208
      %p210 = scmp.ne.s32.totalorder %s199, %s202
      %p211 = scmp.eq.s32.totalorder %s26, 3
      %p212 = por %p210, %p211
      %p213 = scmp.ne.s32.totalorder %s202, %s203
      %p214 = scmp.eq.s32.totalorder %s26, 0
      %p215 = por %p213, %p214
      %p216 = scmp.ne.s32.totalorder %s202, %s203
      %p217 = scmp.eq.s32.totalorder %s27, 3
      %p218 = por %p216, %p217
      %p220 = scmp.ne.s32.totalorder %s203, %s219
      %p221 = scmp.eq.s32.totalorder %s27, 0
      %p222 = por %p220, %p221
      %p223 = scmp.le.s32.totalorder 1, %s21
      %p224 = scmp.lt.s32.totalorder %s21, 5
      %p225 = pnand %p223, %p224
      %p226 = pneg %p225
      // Predicated region
      $region9: #{tpu_custom_call.1} parent=5 // pred_check
        _
      $region10: #{tpu_custom_call.1} parent=5 // pred_check_branch
        %228 = sbr.rel (%p225) target = $region12
      $region11: #{tpu_custom_call.1} parent=5 // pred_region
        %s229 = ssub.s32 %s21, 1
        // Predicated region
        $region13: #{tpu_custom_call.1} parent=11 // pred_check
          %p230 = pneg %p82
        $region14: #{tpu_custom_call.1} parent=11 // pred_check_branch
          %232 = sbr.rel (%p230) target = $region16
        $region15: #{tpu_custom_call.1} parent=11 // pred_region
          %s234 = ssub.s32 1024, 1024
          %235 = vsyncadd [#allocation7], %s234
          %s236 = sshll.u32 [#allocation6], 4
          %s237 = int_to_ptr.vmem [resolvable:$true] %s236
          %242 = dma.hbm_to_vmem [thread:$0]  %s1, 1024, %s237, [#allocation7], 64, 64, 4
        $region16: #{tpu_custom_call.1} parent=11 // pred_fallthru
          _
        // Predicated region
        $region17: #{tpu_custom_call.1} parent=11 // pred_check
          %p243 = pneg %p103
        $region18: #{tpu_custom_call.1} parent=11 // pred_check_branch
          %245 = sbr.rel (%p243) target = $region20
        $region19: #{tpu_custom_call.1} parent=11 // pred_region
          _
        $region20: #{tpu_custom_call.1} parent=11 // pred_fallthru
          _
        // Predicated region
        $region21: #{tpu_custom_call.1} parent=11 // pred_check
          %p246 = pneg %p124
        $region22: #{tpu_custom_call.1} parent=11 // pred_check_branch
          %248 = sbr.rel (%p246) target = $region24
        $region23: #{tpu_custom_call.1} parent=11 // pred_region
          %s250 = ssub.s32 9216, 9216
          %251 = vsyncadd [#allocation7], %s250
          %s252 = sshll.u32 [#allocation8], 4
          %s253 = int_to_ptr.vmem [resolvable:$true] %s252
          %258 = dma.hbm_to_vmem [thread:$0]  %s3, 9216, %s253, [#allocation7], 64, 64, 4
        $region24: #{tpu_custom_call.1} parent=11 // pred_fallthru
          _
        // Predicated region
        $region25: #{tpu_custom_call.1} parent=11 // pred_check
          %p259 = pneg %p145
        $region26: #{tpu_custom_call.1} parent=11 // pred_check_branch
          %261 = sbr.rel (%p259) target = $region28
        $region27: #{tpu_custom_call.1} parent=11 // pred_region
          _
        $region28: #{tpu_custom_call.1} parent=11 // pred_fallthru
          _
        // Predicated region
        $region29: #{tpu_custom_call.1} parent=11 // pred_check
          %p262 = pneg %p166
        $region30: #{tpu_custom_call.1} parent=11 // pred_check_branch
          %264 = sbr.rel (%p262) target = $region32
        $region31: #{tpu_custom_call.1} parent=11 // pred_region
          %s266 = ssub.s32 1024, 1024
          %267 = vsyncadd [#allocation10], %s266
          %s268 = sshll.u32 [#allocation9], 4
          %s269 = int_to_ptr.vmem [resolvable:$true] %s268
          %274 = dma.hbm_to_vmem [thread:$0]  %s5, 1024, %s269, [#allocation10], 64, 64, 4
        $region32: #{tpu_custom_call.1} parent=11 // pred_fallthru
          _
        // Predicated region
        $region33: #{tpu_custom_call.1} parent=11 // pred_check
          %p275 = pneg %p187
        $region34: #{tpu_custom_call.1} parent=11 // pred_check_branch
          %277 = sbr.rel (%p275) target = $region36
        $region35: #{tpu_custom_call.1} parent=11 // pred_region
          _
        $region36: #{tpu_custom_call.1} parent=11 // pred_fallthru
          _
      $region12: #{tpu_custom_call.1} parent=5 // pred_fallthru
        _
      %p278 = scmp.lt.s32.totalorder %s21, 4
      // Predicated region
      $region37: #{tpu_custom_call.1} parent=5 // pred_check
        %p279 = pneg %p278
      $region38: #{tpu_custom_call.1} parent=5 // pred_check_branch
        %281 = sbr.rel (%p279) target = $region40
      $region39: #{tpu_custom_call.1} parent=5 // pred_region
        // Predicated region
        $region41: #{tpu_custom_call.1} parent=39 // pred_check
          %p282 = pneg %p55
        $region42: #{tpu_custom_call.1} parent=39 // pred_check_branch
          %284 = sbr.rel (%p282) target = $region44
        $region43: #{tpu_custom_call.1} parent=39 // pred_region
          %s285 = sand.u32 %s45, 1
          %s286 = scalar_lea.sflag [#allocation4], %s285
          %s287 = sand.u32 %s45, 1
          %s288 = smul.addr %s287, 120
          %s289 = scalar_lea.vmem [#allocation3], %s288
          %s291 = ssub.s32 1920, 1920
          %292 = vsyncadd %s286, %s291
          %s293 = smul.addr %s29, 30
          %s294 = smul.addr %s28, 60
          %s295 = sadd.s32 %s293, %s294
          %s296 = smul.addr %s295, 64
          %s297 = scalar_lea.hbm %s0, %s296
          %s298 = sshll.u32 %s289, 4
          %s299 = int_to_ptr.vmem [resolvable:$true] %s298
          %304 = dma.hbm_to_vmem [thread:$0]  %s297, 1920, %s299, %s286, 64, 64, 4
        $region44: #{tpu_custom_call.1} parent=39 // pred_fallthru
          _
      $region40: #{tpu_custom_call.1} parent=5 // pred_fallthru
        _
      %p305 = scmp.le.s32.totalorder 1, %s21
      %p306 = scmp.lt.s32.totalorder %s21, 5
      %p307 = pnand %p305, %p306
      %p308 = pneg %p307
      // Predicated region
      $region45: #{tpu_custom_call.1} parent=5 // pred_check
        _
      $region46: #{tpu_custom_call.1} parent=5 // pred_check_branch
        %310 = sbr.rel (%p307) target = $region48
      $region47: #{tpu_custom_call.1} parent=5 // pred_region
        %s311 = ssub.s32 %s21, 1
        %s312 = sand.u32 %s48, 1
        %s313 = scalar_lea.sflag [#allocation4], %s312
        %s314 = sand.u32 %s48, 1
        %s315 = smul.addr %s314, 120
        %s316 = scalar_lea.vmem [#allocation3], %s315
        // Predicated region
        $region49: #{tpu_custom_call.1} parent=47 // pred_check
          %p317 = pneg %p61
        $region50: #{tpu_custom_call.1} parent=47 // pred_check_branch
          %319 = sbr.rel (%p317) target = $region52
        $region51: #{tpu_custom_call.1} parent=47 // pred_region
          %320 = dma.done %s313, 1920
        $region52: #{tpu_custom_call.1} parent=47 // pred_fallthru
          _
        // Predicated region
        $region53: #{tpu_custom_call.1} parent=47 // pred_check
          %p321 = pneg %p82
        $region54: #{tpu_custom_call.1} parent=47 // pred_check_branch
          %323 = sbr.rel (%p321) target = $region56
        $region55: #{tpu_custom_call.1} parent=47 // pred_region
          %324 = dma.done [#allocation7], 1024
        $region56: #{tpu_custom_call.1} parent=47 // pred_fallthru
          _
        // Predicated region
        $region57: #{tpu_custom_call.1} parent=47 // pred_check
          %p325 = pneg %p124
        $region58: #{tpu_custom_call.1} parent=47 // pred_check_branch
          %327 = sbr.rel (%p325) target = $region60
        $region59: #{tpu_custom_call.1} parent=47 // pred_region
          %328 = dma.done [#allocation7], 9216
        $region60: #{tpu_custom_call.1} parent=47 // pred_fallthru
          _
        // Predicated region
        $region61: #{tpu_custom_call.1} parent=47 // pred_check
          %p329 = pneg %p166
        $region62: #{tpu_custom_call.1} parent=47 // pred_check_branch
          %331 = sbr.rel (%p329) target = $region64
        $region63: #{tpu_custom_call.1} parent=47 // pred_region
          %332 = dma.done [#allocation10], 1024
        $region64: #{tpu_custom_call.1} parent=47 // pred_fallthru
          _
        %s333 = sand.u32 %s48, 1
        %s334 = scalar_lea.sflag [#allocation4], %s333
        %s335 = sand.u32 %s48, 1
        %s336 = smul.addr %s335, 120
        %s337 = scalar_lea.vmem [#allocation3], %s336
        %p338 = pneg %p61
        %p339 = pneg %p58
        %p340 = pneg %p82
        %p341 = pneg %p79
        %p342 = pneg %p103
        %p343 = pneg %p100
        %p344 = pneg %p124
        %p345 = pneg %p121
        %p346 = pneg %p145
        %p347 = pneg %p142
        %p348 = pneg %p166
        %p349 = pneg %p163
        %p350 = pneg %p187
        %p351 = pneg %p184
        %p352 = pneg %p215
        %p353 = pneg %p212
        %s354 = sand.u32 %s202, 1
        %s355 = scalar_lea.sflag [#allocation5], %s354
        %s356 = sand.u32 %s202, 1
        %s357 = smul.addr %s356, 192
        %s358 = scalar_lea.vmem [#allocation11], %s357
        %v360 = vld [vmem:[%s316] sm:$0xf]
        %v361 = vld [vmem:[%s316 + $0x4] sm:$0xf]
        %v362 = vld [vmem:[%s316 + $0x8] sm:$0xf]
        %v363 = vld [vmem:[%s316 + $0xc] sm:$0xf]
        %v364 = vld [vmem:[%s316 + $0x10] sm:$0xf]
        %v365 = vld [vmem:[%s316 + $0x14] sm:$0xf]
        %v366 = vld [vmem:[%s316 + $0x18] sm:$0xf]
        %v367 = vld [vmem:[%s316 + $0x1c] sm:$0xf]
        %v368 = vld [vmem:[%s316 + $0x20] sm:$0xf]
        %v369 = vld [vmem:[%s316 + $0x24] sm:$0xf]
        %v370 = vld [vmem:[%s316 + $0x28] sm:$0xf]
        %v371 = vld [vmem:[%s316 + $0x2c] sm:$0xf]
        %v372 = vld [vmem:[%s316 + $0x30] sm:$0xf]
        %v373 = vld [vmem:[%s316 + $0x34] sm:$0xf]
        %v374 = vld [vmem:[%s316 + $0x38] sm:$0xf]
        %v375 = vld [vmem:[%s316 + $0x3c] sm:$0xf]
        %v376 = vld [vmem:[%s316 + $0x40] sm:$0xf]
        %v377 = vld [vmem:[%s316 + $0x44] sm:$0xf]
        %v378 = vld [vmem:[%s316 + $0x48] sm:$0xf]
        %v379 = vld [vmem:[%s316 + $0x4c] sm:$0xf]
        %v380 = vld [vmem:[%s316 + $0x50] sm:$0xf]
        %v381 = vld [vmem:[%s316 + $0x54] sm:$0xf]
        %v382 = vld [vmem:[%s316 + $0x58] sm:$0xf]
        %v383 = vld [vmem:[%s316 + $0x5c] sm:$0xf]
        %v384 = vld [vmem:[%s316 + $0x60] sm:$0xf]
        %v385 = vld [vmem:[%s316 + $0x64] sm:$0xf]
        %v386 = vld [vmem:[%s316 + $0x68] sm:$0xf]
        %v387 = vld [vmem:[%s316 + $0x6c] sm:$0xf]
        %v388 = vld [vmem:[%s316 + $0x70] sm:$0xf]
        %v389 = vld [vmem:[%s316 + $0x74] sm:$0xf]
        %v390 = vld [vmem:[#allocation6] sm:$0xf]
        %v391 = vld [vmem:[#allocation6 + $0x4] sm:$0xf]
        %v392 = vld [vmem:[#allocation6 + $0x8] sm:$0xf]
        %v393 = vld [vmem:[#allocation6 + $0xc] sm:$0xf]
        %v394 = vld [vmem:[#allocation6 + $0x10] sm:$0xf]
        %v395 = vld [vmem:[#allocation6 + $0x14] sm:$0xf]
        %v396 = vld [vmem:[#allocation6 + $0x18] sm:$0xf]
        %v397 = vld [vmem:[#allocation6 + $0x1c] sm:$0xf]
        %v398 = vld [vmem:[#allocation6 + $0x20] sm:$0xf]
        %v399 = vld [vmem:[#allocation6 + $0x24] sm:$0xf]
        %v400 = vld [vmem:[#allocation6 + $0x28] sm:$0xf]
        %v401 = vld [vmem:[#allocation6 + $0x2c] sm:$0xf]
        %v402 = vld [vmem:[#allocation6 + $0x30] sm:$0xf]
        %v403 = vld [vmem:[#allocation6 + $0x34] sm:$0xf]
        %v404 = vld [vmem:[#allocation6 + $0x38] sm:$0xf]
        %v405 = vld [vmem:[#allocation6 + $0x3c] sm:$0xf]
        %v406 = vld [vmem:[%s2] sm:$0x1]
        %v408 = vlaneseq
        %v409 = vshrl.u32 %v408, 7
        %v410 = vsub.s32 0, %v409
        %v411 = vrot.slane %v406, %v410
        %v443 = vunpack.c.l.b16 %v360
        %v444 = vunpack.c.l.b16 %v361
        %v445 = vunpack.c.l.b16 %v362
        %v446 = vunpack.c.l.b16 %v363
        %v447 = vunpack.c.l.b16 %v364
        %v448 = vunpack.c.l.b16 %v365
        %v449 = vunpack.c.l.b16 %v366
        %v450 = vunpack.c.l.b16 %v367
        %v451 = vunpack.c.l.b16 %v368
        %v452 = vunpack.c.l.b16 %v369
        %v453 = vunpack.c.l.b16 %v370
        %v454 = vunpack.c.l.b16 %v371
        %v455 = vunpack.c.l.b16 %v372
        %v456 = vunpack.c.l.b16 %v373
        %v457 = vunpack.c.l.b16 %v374
        %v458 = vunpack.c.l.b16 %v375
        %v459 = vunpack.c.l.b16 %v376
        %v460 = vunpack.c.l.b16 %v377
        %v461 = vunpack.c.l.b16 %v378
        %v462 = vunpack.c.l.b16 %v379
        %v463 = vunpack.c.l.b16 %v380
        %v464 = vunpack.c.l.b16 %v381
        %v465 = vunpack.c.l.b16 %v382
        %v466 = vunpack.c.l.b16 %v383
        %v467 = vunpack.c.l.b16 %v384
        %v468 = vunpack.c.l.b16 %v385
        %v469 = vunpack.c.l.b16 %v386
        %v470 = vunpack.c.l.b16 %v387
        %v471 = vunpack.c.l.b16 %v388
        %v472 = vunpack.c.l.b16 %v389
        %v473 = vpack.c.b16 %v444, %v443
        %v474 = vpack.c.b16 %v446, %v445
        %v475 = vpack.c.b16 %v448, %v447
        %v476 = vpack.c.b16 %v450, %v449
        %v477 = vpack.c.b16 %v452, %v451
        %v478 = vpack.c.b16 %v454, %v453
        %v479 = vpack.c.b16 %v456, %v455
        %v480 = vpack.c.b16 %v458, %v457
        %v481 = vpack.c.b16 %v460, %v459
        %v482 = vpack.c.b16 %v462, %v461
        %v483 = vpack.c.b16 %v464, %v463
        %v484 = vpack.c.b16 %v466, %v465
        %v485 = vpack.c.b16 %v468, %v467
        %v486 = vpack.c.b16 %v470, %v469
        %v487 = vpack.c.b16 %v472, %v471
        %v519 = vunpack.c.l.b16 %v390
        %v520 = vunpack.c.l.b16 %v391
        %v521 = vunpack.c.l.b16 %v392
        %v522 = vunpack.c.l.b16 %v393
        %v523 = vunpack.c.l.b16 %v394
        %v524 = vunpack.c.l.b16 %v395
        %v525 = vunpack.c.l.b16 %v396
        %v526 = vunpack.c.l.b16 %v397
        %v527 = vunpack.c.l.b16 %v398
        %v528 = vunpack.c.l.b16 %v399
        %v529 = vunpack.c.l.b16 %v400
        %v530 = vunpack.c.l.b16 %v401
        %v531 = vunpack.c.l.b16 %v402
        %v532 = vunpack.c.l.b16 %v403
        %v533 = vunpack.c.l.b16 %v404
        %v534 = vunpack.c.l.b16 %v405
        %v535 = vpack.c.b16 %v520, %v519
        %v536 = vpack.c.b16 %v522, %v521
        %v537 = vpack.c.b16 %v524, %v523
        %v538 = vpack.c.b16 %v526, %v525
        %v539 = vpack.c.b16 %v528, %v527
        %v540 = vpack.c.b16 %v530, %v529
        %v541 = vpack.c.b16 %v532, %v531
        %v542 = vpack.c.b16 %v534, %v533
        %551 = vmatprep.subr.bf16.mxu0 0
        %552 = vmatpush1.bf16.msra.mxu0 %v542
        %553 = vmatprep.subr.bf16.mxu0 0
        %554 = vmatpush1.bf16.msra.mxu0 %v541
        %555 = vmatprep.subr.bf16.mxu0 0
        %556 = vmatpush1.bf16.msra.mxu0 %v540
        %557 = vmatprep.subr.bf16.mxu0 0
        %558 = vmatpush1.bf16.msra.mxu0 %v539
        %559 = vmatprep.subr.bf16.mxu0 0
        %560 = vmatpush1.bf16.msra.mxu0 %v538
        %561 = vmatprep.subr.bf16.mxu0 0
        %562 = vmatpush1.bf16.msra.mxu0 %v537
        %563 = vmatprep.subr.bf16.mxu0 0
        %564 = vmatpush1.bf16.msra.mxu0 %v536
        %565 = vmatprep.subr.bf16.mxu0 0
        %566 = vmatpush1.bf16.msra.mxu0 %v535
        %567 = vmatprep.subr.bf16.mxu0 0
        %568 = vmatpush2.bf16.msra.mxu0 0
        %569 = vmatprep.subr.bf16.mxu0 0
        %570 = vmatpush2.bf16.msra.mxu0 0
        %571 = vmatprep.subr.bf16.mxu0 0
        %572 = vmatpush2.bf16.msra.mxu0 0
        %573 = vmatprep.subr.bf16.mxu0 0
        %574 = vmatpush2.bf16.msra.mxu0 0
        %575 = vmatprep.subr.bf16.mxu0 0
        %576 = vmatpush2.bf16.msra.mxu0 0
        %577 = vmatprep.subr.bf16.mxu0 0
        %578 = vmatpush2.bf16.msra.mxu0 0
        %579 = vmatprep.subr.bf16.mxu0 0
        %580 = vmatpush2.bf16.msra.mxu0 0
        %581 = vmatprep.subr.bf16.mxu0 0
        %582 = vmatpush2.bf16.msra.mxu0 0
        %583 = vmatprep.mubr.bf16.mxu0 0
        %584 = vmatmul.mubr.bf16.gmra.mxu0 %v473
        %v585 = vpop.f32.mrf.mxu0
        %v586 = vadd.f32 %v411, %v585
        %v587 = vpop.f32.mrf.mxu0
        %v588 = vpop.f32.mrf.mxu0
        %v589 = vadd.f32 %v411, %v588
        %v590 = vpop.f32.mrf.mxu0
        %591 = vmatprep.mubr.bf16.mxu0 0
        %592 = vmatmul.mubr.bf16.gmra.mxu0 %v474
        %v593 = vpop.f32.mrf.mxu0
        %v594 = vadd.f32 %v411, %v593
        %v595 = vpop.f32.mrf.mxu0
        %v596 = vpop.f32.mrf.mxu0
        %v597 = vadd.f32 %v411, %v596
        %v598 = vpop.f32.mrf.mxu0
        %599 = vmatprep.mubr.bf16.mxu0 0
        %600 = vmatmul.mubr.bf16.gmra.mxu0 %v475
        %v601 = vpop.f32.mrf.mxu0
        %v602 = vadd.f32 %v411, %v601
        %v603 = vpop.f32.mrf.mxu0
        %v604 = vpop.f32.mrf.mxu0
        %v605 = vadd.f32 %v411, %v604
        %v606 = vpop.f32.mrf.mxu0
        %607 = vmatprep.mubr.bf16.mxu0 0
        %608 = vmatmul.mubr.bf16.gmra.mxu0 %v476
        %v609 = vpop.f32.mrf.mxu0
        %v610 = vadd.f32 %v411, %v609
        %v611 = vpop.f32.mrf.mxu0
        %v612 = vpop.f32.mrf.mxu0
        %v613 = vadd.f32 %v411, %v612
        %v614 = vpop.f32.mrf.mxu0
        %615 = vmatprep.mubr.bf16.mxu0 0
        %616 = vmatmul.mubr.bf16.gmra.mxu0 %v477
        %v617 = vpop.f32.mrf.mxu0
        %v618 = vadd.f32 %v411, %v617
        %v619 = vpop.f32.mrf.mxu0
        %v620 = vpop.f32.mrf.mxu0
        %v621 = vadd.f32 %v411, %v620
        %v622 = vpop.f32.mrf.mxu0
        %623 = vmatprep.mubr.bf16.mxu0 0
        %624 = vmatmul.mubr.bf16.gmra.mxu0 %v478
        %v625 = vpop.f32.mrf.mxu0
        %v626 = vadd.f32 %v411, %v625
        %v627 = vpop.f32.mrf.mxu0
        %v628 = vpop.f32.mrf.mxu0
        %v629 = vadd.f32 %v411, %v628
        %v630 = vpop.f32.mrf.mxu0
        %631 = vmatprep.mubr.bf16.mxu0 0
        %632 = vmatmul.mubr.bf16.gmra.mxu0 %v479
        %v633 = vpop.f32.mrf.mxu0
        %v634 = vadd.f32 %v411, %v633
        %v635 = vpop.f32.mrf.mxu0
        %v636 = vpop.f32.mrf.mxu0
        %v637 = vadd.f32 %v411, %v636
        %v638 = vpop.f32.mrf.mxu0
        %639 = vmatprep.mubr.bf16.mxu0 0
        %640 = vmatmul.mubr.bf16.gmra.mxu0 %v480
        %v641 = vpop.f32.mrf.mxu0
        %v642 = vadd.f32 %v411, %v641
        %v643 = vpop.f32.mrf.mxu0
        %v644 = vpop.f32.mrf.mxu0
        %v645 = vadd.f32 %v411, %v644
        %v646 = vpop.f32.mrf.mxu0
        %647 = vmatprep.mubr.bf16.mxu0 0
        %648 = vmatmul.mubr.bf16.gmra.mxu0 %v481
        %v649 = vpop.f32.mrf.mxu0
        %v650 = vadd.f32 %v411, %v649
        %v651 = vpop.f32.mrf.mxu0
        %v652 = vpop.f32.mrf.mxu0
        %v653 = vadd.f32 %v411, %v652
        %v654 = vpop.f32.mrf.mxu0
        %655 = vmatprep.mubr.bf16.mxu0 0
        %656 = vmatmul.mubr.bf16.gmra.mxu0 %v482
        %v657 = vpop.f32.mrf.mxu0
        %v658 = vadd.f32 %v411, %v657
        %v659 = vpop.f32.mrf.mxu0
        %v660 = vpop.f32.mrf.mxu0
        %v661 = vadd.f32 %v411, %v660
        %v662 = vpop.f32.mrf.mxu0
        %663 = vmatprep.mubr.bf16.mxu0 0
        %664 = vmatmul.mubr.bf16.gmra.mxu0 %v483
        %v665 = vpop.f32.mrf.mxu0
        %v666 = vadd.f32 %v411, %v665
        %v667 = vpop.f32.mrf.mxu0
        %v668 = vpop.f32.mrf.mxu0
        %v669 = vadd.f32 %v411, %v668
        %v670 = vpop.f32.mrf.mxu0
        %671 = vmatprep.mubr.bf16.mxu0 0
        %672 = vmatmul.mubr.bf16.gmra.mxu0 %v484
        %v673 = vpop.f32.mrf.mxu0
        %v674 = vadd.f32 %v411, %v673
        %v675 = vpop.f32.mrf.mxu0
        %v676 = vpop.f32.mrf.mxu0
        %v677 = vadd.f32 %v411, %v676
        %v678 = vpop.f32.mrf.mxu0
        %679 = vmatprep.mubr.bf16.mxu0 0
        %680 = vmatmul.mubr.bf16.gmra.mxu0 %v485
        %v681 = vpop.f32.mrf.mxu0
        %v682 = vadd.f32 %v411, %v681
        %v683 = vpop.f32.mrf.mxu0
        %v684 = vpop.f32.mrf.mxu0
        %v685 = vadd.f32 %v411, %v684
        %v686 = vpop.f32.mrf.mxu0
        %687 = vmatprep.mubr.bf16.mxu0 0
        %688 = vmatmul.mubr.bf16.gmra.mxu0 %v486
        %v689 = vpop.f32.mrf.mxu0
        %v690 = vadd.f32 %v411, %v689
        %v691 = vpop.f32.mrf.mxu0
        %v692 = vpop.f32.mrf.mxu0
        %v693 = vadd.f32 %v411, %v692
        %v694 = vpop.f32.mrf.mxu0
        %695 = vmatprep.mubr.bf16.mxu0 0
        %696 = vmatmul.mubr.bf16.gmra.mxu0 %v487
        %v697 = vpop.f32.mrf.mxu0
        %v698 = vadd.f32 %v411, %v697
        %v699 = vpop.f32.mrf.mxu0
        %v700 = vpop.f32.mrf.mxu0
        %v701 = vadd.f32 %v411, %v700
        %v702 = vpop.f32.mrf.mxu0
        %703 = vdwg.mxu0
        %v704 = vmax.f32 %v586, 0.0
        %v705 = vmax.f32 %v589, 0.0
        %v706 = vmax.f32 %v594, 0.0
        %v707 = vmax.f32 %v597, 0.0
        %v708 = vmax.f32 %v602, 0.0
        %v709 = vmax.f32 %v605, 0.0
        %v710 = vmax.f32 %v610, 0.0
        %v711 = vmax.f32 %v613, 0.0
        %v712 = vmax.f32 %v618, 0.0
        %v713 = vmax.f32 %v621, 0.0
        %v714 = vmax.f32 %v626, 0.0
        %v715 = vmax.f32 %v629, 0.0
        %v716 = vmax.f32 %v634, 0.0
        %v717 = vmax.f32 %v637, 0.0
        %v718 = vmax.f32 %v642, 0.0
        %v719 = vmax.f32 %v645, 0.0
        %v720 = vmax.f32 %v650, 0.0
        %v721 = vmax.f32 %v653, 0.0
        %v722 = vmax.f32 %v658, 0.0
        %v723 = vmax.f32 %v661, 0.0
        %v724 = vmax.f32 %v666, 0.0
        %v725 = vmax.f32 %v669, 0.0
        %v726 = vmax.f32 %v674, 0.0
        %v727 = vmax.f32 %v677, 0.0
        %v728 = vmax.f32 %v682, 0.0
        %v729 = vmax.f32 %v685, 0.0
        %v730 = vmax.f32 %v690, 0.0
        %v731 = vmax.f32 %v693, 0.0
        %v732 = vmax.f32 %v698, 0.0
        %v733 = vmax.f32 %v701, 0.0
        %s734 = smul.u32 %s31, 8
        %v735 = vstv %s734
        %v736 = vadd.s32 %v735, 1
        %v737 = vadd.s32 %v735, 2
        %v738 = vadd.s32 %v735, 3
        %v739 = vadd.s32 %v735, 4
        %v740 = vadd.s32 %v735, 5
        %v741 = vadd.s32 %v735, 6
        %v742 = vadd.s32 %v735, 7
        %v743 = vadd.s32 %v735, 8
        %v744 = vadd.s32 %v735, 9
        %v745 = vlaneseq
        %v746 = vshrl.u32 %v745, 7
        %v747 = vadd.s32 %v746, 8
        %v748 = vadd.s32 %v746, 16
        %vm749 = vcmp.ge.s32.totalorder %v735, 1
        %vm750 = vcmp.ge.s32.totalorder %v736, 1
        %vm751 = vcmp.ge.s32.totalorder %v737, 1
        %vm752 = vcmp.ge.s32.totalorder %v738, 1
        %vm753 = vcmp.ge.s32.totalorder %v739, 1
        %vm754 = vcmp.ge.s32.totalorder %v740, 1
        %vm755 = vcmp.ge.s32.totalorder %v741, 1
        %vm756 = vcmp.ge.s32.totalorder %v742, 1
        %vm757 = vcmp.ge.s32.totalorder %v743, 1
        %vm758 = vcmp.ge.s32.totalorder %v744, 1
        %vm759 = vcmp.lt.s32.totalorder %v735, 17
        %vm760 = vcmp.lt.s32.totalorder %v736, 17
        %vm761 = vcmp.lt.s32.totalorder %v737, 17
        %vm762 = vcmp.lt.s32.totalorder %v738, 17
        %vm763 = vcmp.lt.s32.totalorder %v739, 17
        %vm764 = vcmp.lt.s32.totalorder %v740, 17
        %vm765 = vcmp.lt.s32.totalorder %v741, 17
        %vm766 = vcmp.lt.s32.totalorder %v742, 17
        %vm767 = vcmp.lt.s32.totalorder %v743, 17
        %vm768 = vcmp.lt.s32.totalorder %v744, 17
        %vm769 = vmand %vm749, %vm759
        %vm770 = vmand %vm750, %vm760
        %vm771 = vmand %vm751, %vm761
        %vm772 = vmand %vm752, %vm762
        %vm773 = vmand %vm753, %vm763
        %vm774 = vmand %vm754, %vm764
        %vm775 = vmand %vm755, %vm765
        %vm776 = vmand %vm756, %vm766
        %vm777 = vmand %vm757, %vm767
        %vm778 = vmand %vm758, %vm768
        %vm779 = vcmp.ge.s32.totalorder %v746, 1
        %vm780 = vcmp.ge.s32.totalorder %v747, 1
        %vm781 = vcmp.ge.s32.totalorder %v748, 1
        %vm782 = vmand %vm769, %vm779
        %vm783 = vmand %vm769, %vm780
        %vm784 = vmand %vm769, %vm781
        %vm785 = vmand %vm770, %vm779
        %vm786 = vmand %vm770, %vm780
        %vm787 = vmand %vm770, %vm781
        %vm788 = vmand %vm771, %vm779
        %vm789 = vmand %vm771, %vm780
        %vm790 = vmand %vm771, %vm781
        %vm791 = vmand %vm772, %vm779
        %vm792 = vmand %vm772, %vm780
        %vm793 = vmand %vm772, %vm781
        %vm794 = vmand %vm773, %vm779
        %vm795 = vmand %vm773, %vm780
        %vm796 = vmand %vm773, %vm781
        %vm797 = vmand %vm774, %vm779
        %vm798 = vmand %vm774, %vm780
        %vm799 = vmand %vm774, %vm781
        %vm800 = vmand %vm775, %vm779
        %vm801 = vmand %vm775, %vm780
        %vm802 = vmand %vm775, %vm781
        %vm803 = vmand %vm776, %vm779
        %vm804 = vmand %vm776, %vm780
        %vm805 = vmand %vm776, %vm781
        %vm806 = vmand %vm777, %vm779
        %vm807 = vmand %vm777, %vm780
        %vm808 = vmand %vm777, %vm781
        %vm809 = vmand %vm778, %vm779
        %vm810 = vmand %vm778, %vm780
        %vm811 = vmand %vm778, %vm781
        %vm812 = vcmp.lt.s32.totalorder %v746, 17
        %vm813 = vcmp.lt.s32.totalorder %v747, 17
        %vm814 = vcmp.lt.s32.totalorder %v748, 17
        %vm815 = vmand %vm782, %vm812
        %vm816 = vmand %vm783, %vm813
        %vm817 = vmand %vm784, %vm814
        %vm818 = vmand %vm785, %vm812
        %vm819 = vmand %vm786, %vm813
        %vm820 = vmand %vm787, %vm814
        %vm821 = vmand %vm788, %vm812
        %vm822 = vmand %vm789, %vm813
        %vm823 = vmand %vm790, %vm814
        %vm824 = vmand %vm791, %vm812
        %vm825 = vmand %vm792, %vm813
        %vm826 = vmand %vm793, %vm814
        %vm827 = vmand %vm794, %vm812
        %vm828 = vmand %vm795, %vm813
        %vm829 = vmand %vm796, %vm814
        %vm830 = vmand %vm797, %vm812
        %vm831 = vmand %vm798, %vm813
        %vm832 = vmand %vm799, %vm814
        %vm833 = vmand %vm800, %vm812
        %vm834 = vmand %vm801, %vm813
        %vm835 = vmand %vm802, %vm814
        %vm836 = vmand %vm803, %vm812
        %vm837 = vmand %vm804, %vm813
        %vm838 = vmand %vm805, %vm814
        %vm839 = vmand %vm806, %vm812
        %vm840 = vmand %vm807, %vm813
        %vm841 = vmand %vm808, %vm814
        %vm842 = vmand %vm809, %vm812
        %vm843 = vmand %vm810, %vm813
        %vm844 = vmand %vm811, %vm814
        %v845 = vsel %vm815, %v704, 0.0
        %v846 = vsel %vm816, %v705, 0.0
        %v847 = vsel %vm817, %v706, 0.0
        %v848 = vsel %vm818, %v707, 0.0
        %v849 = vsel %vm819, %v708, 0.0
        %v850 = vsel %vm820, %v709, 0.0
        %v851 = vsel %vm821, %v710, 0.0
        %v852 = vsel %vm822, %v711, 0.0
        %v853 = vsel %vm823, %v712, 0.0
        %v854 = vsel %vm824, %v713, 0.0
        %v855 = vsel %vm825, %v714, 0.0
        %v856 = vsel %vm826, %v715, 0.0
        %v857 = vsel %vm827, %v716, 0.0
        %v858 = vsel %vm828, %v717, 0.0
        %v859 = vsel %vm829, %v718, 0.0
        %v860 = vsel %vm830, %v719, 0.0
        %v861 = vsel %vm831, %v720, 0.0
        %v862 = vsel %vm832, %v721, 0.0
        %v863 = vsel %vm833, %v722, 0.0
        %v864 = vsel %vm834, %v723, 0.0
        %v865 = vsel %vm835, %v724, 0.0
        %v866 = vsel %vm836, %v725, 0.0
        %v867 = vsel %vm837, %v726, 0.0
        %v868 = vsel %vm838, %v727, 0.0
        %v869 = vsel %vm839, %v728, 0.0
        %v870 = vsel %vm840, %v729, 0.0
        %v871 = vsel %vm841, %v730, 0.0
        %v872 = vsel %vm842, %v731, 0.0
        %v873 = vsel %vm843, %v732, 0.0
        %v874 = vsel %vm844, %v733, 0.0
        %v875 = vpack.c.bf16 %v846, %v845
        %v876 = vpack.c.bf16 %v848, %v847
        %v877 = vpack.c.bf16 %v850, %v849
        %v878 = vpack.c.bf16 %v852, %v851
        %v879 = vpack.c.bf16 %v854, %v853
        %v880 = vpack.c.bf16 %v856, %v855
        %v881 = vpack.c.bf16 %v858, %v857
        %v882 = vpack.c.bf16 %v860, %v859
        %v883 = vpack.c.bf16 %v862, %v861
        %v884 = vpack.c.bf16 %v864, %v863
        %v885 = vpack.c.bf16 %v866, %v865
        %v886 = vpack.c.bf16 %v868, %v867
        %v887 = vpack.c.bf16 %v870, %v869
        %v888 = vpack.c.bf16 %v872, %v871
        %v889 = vpack.c.bf16 %v874, %v873
        %v905 = vunpack.c.l.b16 %v875
        %v906 = vunpack.c.h.b16 %v875
        %v907 = vunpack.c.l.b16 %v876
        %v908 = vunpack.c.h.b16 %v876
        %v909 = vunpack.c.l.b16 %v877
        %v910 = vunpack.c.h.b16 %v877
        %v911 = vunpack.c.l.b16 %v878
        %v912 = vunpack.c.h.b16 %v878
        %v913 = vunpack.c.l.b16 %v879
        %v914 = vunpack.c.h.b16 %v879
        %v915 = vunpack.c.l.b16 %v880
        %v916 = vunpack.c.h.b16 %v880
        %v917 = vunpack.c.l.b16 %v881
        %v918 = vunpack.c.h.b16 %v881
        %v919 = vunpack.c.l.b16 %v882
        %v920 = vunpack.c.h.b16 %v882
        %v921 = vunpack.c.l.b16 %v883
        %v922 = vunpack.c.h.b16 %v883
        %v923 = vunpack.c.l.b16 %v884
        %v924 = vunpack.c.h.b16 %v884
        %v925 = vunpack.c.l.b16 %v885
        %v926 = vunpack.c.h.b16 %v885
        %v927 = vunpack.c.l.b16 %v886
        %v928 = vunpack.c.h.b16 %v886
        %v929 = vunpack.c.l.b16 %v887
        %v930 = vunpack.c.h.b16 %v887
        %v931 = vunpack.c.l.b16 %v888
        %v932 = vunpack.c.h.b16 %v888
        %v933 = vunpack.c.l.b16 %v889
        %v934 = vunpack.c.h.b16 %v889
        %v935 = vpack.c.b16 %v905, %v905
        %v936 = vpack.c.b16 %v906, %v906
        %v937 = vpack.c.b16 %v907, %v907
        %v938 = vpack.c.b16 %v908, %v908
        %v939 = vpack.c.b16 %v909, %v909
        %v940 = vpack.c.b16 %v910, %v910
        %v941 = vpack.c.b16 %v911, %v911
        %v942 = vpack.c.b16 %v912, %v912
        %v943 = vpack.c.b16 %v913, %v913
        %v944 = vpack.c.b16 %v914, %v914
        %v945 = vpack.c.b16 %v915, %v915
        %v946 = vpack.c.b16 %v916, %v916
        %v947 = vpack.c.b16 %v917, %v917
        %v948 = vpack.c.b16 %v918, %v918
        %v949 = vpack.c.b16 %v919, %v919
        %v950 = vpack.c.b16 %v920, %v920
        %v951 = vpack.c.b16 %v921, %v921
        %v952 = vpack.c.b16 %v922, %v922
        %v953 = vpack.c.b16 %v923, %v923
        %v954 = vpack.c.b16 %v924, %v924
        %v955 = vpack.c.b16 %v925, %v925
        %v956 = vpack.c.b16 %v926, %v926
        %v957 = vpack.c.b16 %v927, %v927
        %v958 = vpack.c.b16 %v928, %v928
        %v959 = vpack.c.b16 %v929, %v929
        %v960 = vpack.c.b16 %v930, %v930
        %v961 = vpack.c.b16 %v931, %v931
        %v962 = vpack.c.b16 %v932, %v932
        %v963 = vpack.c.b16 %v933, %v933
        %v964 = vpack.c.b16 %v934, %v934
        %995 = vst [vmem:[#allocation2 + $0x4] sm:$0xf] %v935
        %996 = vst [vmem:[#allocation2 + $0x8] sm:$0xf] %v936
        %997 = vst [vmem:[#allocation2 + $0xc] sm:$0xf] %v937
        %998 = vst [vmem:[#allocation2 + $0x10] sm:$0xf] %v938
        %999 = vst [vmem:[#allocation2 + $0x14] sm:$0xf] %v939
        %1000 = vst [vmem:[#allocation2 + $0x18] sm:$0xf] %v940
        %1001 = vst [vmem:[#allocation2 + $0x1c] sm:$0xf] %v941
        %1002 = vst [vmem:[#allocation2 + $0x20] sm:$0xf] %v942
        %1003 = vst [vmem:[#allocation2 + $0x24] sm:$0xf] %v943
        %1004 = vst [vmem:[#allocation2 + $0x28] sm:$0xf] %v944
        %1005 = vst [vmem:[#allocation2 + $0x2c] sm:$0xf] %v945
        %1006 = vst [vmem:[#allocation2 + $0x30] sm:$0xf] %v946
        %1007 = vst [vmem:[#allocation2 + $0x34] sm:$0xf] %v947
        %1008 = vst [vmem:[#allocation2 + $0x38] sm:$0xf] %v948
        %1009 = vst [vmem:[#allocation2 + $0x3c] sm:$0xf] %v949
        %1010 = vst [vmem:[#allocation2 + $0x40] sm:$0xf] %v950
        %1011 = vst [vmem:[#allocation2 + $0x44] sm:$0xf] %v951
        %1012 = vst [vmem:[#allocation2 + $0x48] sm:$0xf] %v952
        %1013 = vst [vmem:[#allocation2 + $0x4c] sm:$0xf] %v953
        %1014 = vst [vmem:[#allocation2 + $0x50] sm:$0xf] %v954
        %1015 = vst [vmem:[#allocation2 + $0x54] sm:$0xf] %v955
        %1016 = vst [vmem:[#allocation2 + $0x58] sm:$0xf] %v956
        %1017 = vst [vmem:[#allocation2 + $0x5c] sm:$0xf] %v957
        %1018 = vst [vmem:[#allocation2 + $0x60] sm:$0xf] %v958
        %1019 = vst [vmem:[#allocation2 + $0x64] sm:$0xf] %v959
        %1020 = vst [vmem:[#allocation2 + $0x68] sm:$0xf] %v960
        %1021 = vst [vmem:[#allocation2 + $0x6c] sm:$0xf] %v961
        %1022 = vst [vmem:[#allocation2 + $0x70] sm:$0xf] %v962
        %1023 = vst [vmem:[#allocation2 + $0x74] sm:$0xf] %v963
        %1024 = vst [vmem:[#allocation2 + $0x78] sm:$0xf] %v964
        %1025 = vst [vmem:[#allocation2] sm:$0xf] 0
        %1026 = vst [vmem:[#allocation2 + $0x7c] sm:$0xf] 0
        %v1027 = vld [vmem:[#allocation2] sm:$0x8]
        %v1028 = vld [vmem:[#allocation2 + $0x4] sm:$0xf]
        %v1029 = vld [vmem:[#allocation2 + $0x8] sm:$0xf]
        %v1030 = vld [vmem:[#allocation2 + $0xc] sm:$0xf]
        %v1031 = vld [vmem:[#allocation2 + $0x10] sm:$0xf]
        %v1032 = vld [vmem:[#allocation2 + $0x14] sm:$0xf]
        %v1033 = vld [vmem:[#allocation2 + $0x18] sm:$0xf]
        %v1034 = vld [vmem:[#allocation2 + $0x1c] sm:$0xf]
        %v1035 = vld [vmem:[#allocation2 + $0x20] sm:$0xf]
        %v1036 = vld [vmem:[#allocation2 + $0x24] sm:$0xf]
        %v1037 = vld [vmem:[#allocation2 + $0x28] sm:$0xf]
        %v1038 = vld [vmem:[#allocation2 + $0x2c] sm:$0xf]
        %v1039 = vld [vmem:[#allocation2 + $0x30] sm:$0xf]
        %v1040 = vld [vmem:[#allocation2 + $0x34] sm:$0xf]
        %v1041 = vld [vmem:[#allocation2 + $0x38] sm:$0xf]
        %v1042 = vld [vmem:[#allocation2 + $0x3c] sm:$0xf]
        %v1043 = vld [vmem:[#allocation2 + $0x40] sm:$0xf]
        %v1044 = vld [vmem:[#allocation2 + $0x44] sm:$0xf]
        %v1045 = vld [vmem:[#allocation2 + $0x48] sm:$0xf]
        %v1046 = vld [vmem:[#allocation2 + $0x4c] sm:$0xf]
        %v1047 = vld [vmem:[#allocation2 + $0x50] sm:$0xf]
        %v1048 = vld [vmem:[#allocation2 + $0x54] sm:$0xf]
        %v1049 = vld [vmem:[#allocation2 + $0x58] sm:$0xf]
        %v1050 = vld [vmem:[#allocation2 + $0x5c] sm:$0xf]
        %v1051 = vld [vmem:[#allocation2 + $0x60] sm:$0xf]
        %v1052 = vld [vmem:[#allocation8] sm:$0xf]
        %v1053 = vld [vmem:[#allocation8 + $0x4] sm:$0xf]
        %v1054 = vld [vmem:[#allocation8 + $0x8] sm:$0xf]
        %v1055 = vld [vmem:[#allocation8 + $0xc] sm:$0xf]
        %v1056 = vld [vmem:[#allocation8 + $0x10] sm:$0xf]
        %v1057 = vld [vmem:[#allocation8 + $0x14] sm:$0xf]
        %v1058 = vld [vmem:[#allocation8 + $0x18] sm:$0xf]
        %v1059 = vld [vmem:[#allocation8 + $0x1c] sm:$0xf]
        %v1060 = vld [vmem:[#allocation8 + $0x20] sm:$0xf]
        %v1061 = vld [vmem:[#allocation8 + $0x24] sm:$0xf]
        %v1062 = vld [vmem:[#allocation8 + $0x28] sm:$0xf]
        %v1063 = vld [vmem:[#allocation8 + $0x2c] sm:$0xf]
        %v1064 = vld [vmem:[#allocation8 + $0x30] sm:$0xf]
        %v1065 = vld [vmem:[#allocation8 + $0x34] sm:$0xf]
        %v1066 = vld [vmem:[#allocation8 + $0x38] sm:$0xf]
        %v1067 = vld [vmem:[#allocation8 + $0x3c] sm:$0xf]
        %s1068 = scalar_lea.vmem [#allocation8], 64
        %v1069 = vld [vmem:[%s1068] sm:$0xf]
        %v1070 = vld [vmem:[%s1068 + $0x4] sm:$0xf]
        %v1071 = vld [vmem:[%s1068 + $0x8] sm:$0xf]
        %v1072 = vld [vmem:[%s1068 + $0xc] sm:$0xf]
        %v1073 = vld [vmem:[%s1068 + $0x10] sm:$0xf]
        %v1074 = vld [vmem:[%s1068 + $0x14] sm:$0xf]
        %v1075 = vld [vmem:[%s1068 + $0x18] sm:$0xf]
        %v1076 = vld [vmem:[%s1068 + $0x1c] sm:$0xf]
        %v1077 = vld [vmem:[%s1068 + $0x20] sm:$0xf]
        %v1078 = vld [vmem:[%s1068 + $0x24] sm:$0xf]
        %v1079 = vld [vmem:[%s1068 + $0x28] sm:$0xf]
        %v1080 = vld [vmem:[%s1068 + $0x2c] sm:$0xf]
        %v1081 = vld [vmem:[%s1068 + $0x30] sm:$0xf]
        %v1082 = vld [vmem:[%s1068 + $0x34] sm:$0xf]
        %v1083 = vld [vmem:[%s1068 + $0x38] sm:$0xf]
        %v1084 = vld [vmem:[%s1068 + $0x3c] sm:$0xf]
        %v1109 = vunpack.c.l.b16 %v1028
        %v1110 = vunpack.c.l.b16 %v1029
        %v1111 = vunpack.c.l.b16 %v1030
        %v1112 = vunpack.c.l.b16 %v1031
        %v1113 = vunpack.c.l.b16 %v1032
        %v1114 = vunpack.c.l.b16 %v1033
        %v1115 = vunpack.c.l.b16 %v1034
        %v1116 = vunpack.c.l.b16 %v1035
        %v1117 = vunpack.c.l.b16 %v1036
        %v1118 = vunpack.c.l.b16 %v1037
        %v1119 = vunpack.c.l.b16 %v1038
        %v1120 = vunpack.c.l.b16 %v1039
        %v1121 = vunpack.c.l.b16 %v1040
        %v1122 = vunpack.c.l.b16 %v1041
        %v1123 = vunpack.c.l.b16 %v1042
        %v1124 = vunpack.c.l.b16 %v1043
        %v1125 = vunpack.c.l.b16 %v1044
        %v1126 = vunpack.c.l.b16 %v1045
        %v1127 = vunpack.c.l.b16 %v1046
        %v1128 = vunpack.c.l.b16 %v1047
        %v1129 = vunpack.c.l.b16 %v1048
        %v1130 = vunpack.c.l.b16 %v1049
        %v1131 = vunpack.c.l.b16 %v1050
        %v1132 = vunpack.c.l.b16 %v1051
        %v1133 = vpack.c.b16 %v1110, %v1109
        %v1134 = vpack.c.b16 %v1112, %v1111
        %v1135 = vpack.c.b16 %v1114, %v1113
        %v1136 = vpack.c.b16 %v1116, %v1115
        %v1137 = vpack.c.b16 %v1118, %v1117
        %v1138 = vpack.c.b16 %v1120, %v1119
        %v1139 = vpack.c.b16 %v1122, %v1121
        %v1140 = vpack.c.b16 %v1124, %v1123
        %v1141 = vpack.c.b16 %v1126, %v1125
        %v1142 = vpack.c.b16 %v1128, %v1127
        %v1143 = vpack.c.b16 %v1130, %v1129
        %v1144 = vpack.c.b16 %v1132, %v1131
        %v1173 = vunpack.c.l.b16 %v1069
        %v1174 = vunpack.c.l.b16 %v1070
        %v1175 = vunpack.c.l.b16 %v1071
        %v1176 = vunpack.c.l.b16 %v1072
        %v1177 = vunpack.c.l.b16 %v1073
        %v1178 = vunpack.c.l.b16 %v1074
        %v1179 = vunpack.c.l.b16 %v1075
        %v1180 = vunpack.c.l.b16 %v1076
        %v1181 = vunpack.c.l.b16 %v1077
        %v1182 = vunpack.c.l.b16 %v1078
        %v1183 = vunpack.c.l.b16 %v1079
        %v1184 = vunpack.c.l.b16 %v1080
        %v1185 = vunpack.c.l.b16 %v1081
        %v1186 = vunpack.c.l.b16 %v1082
        %v1187 = vunpack.c.l.b16 %v1083
        %v1188 = vunpack.c.l.b16 %v1084
        %v1189 = vpack.c.b16 %v1174, %v1173
        %v1190 = vpack.c.b16 %v1176, %v1175
        %v1191 = vpack.c.b16 %v1178, %v1177
        %v1192 = vpack.c.b16 %v1180, %v1179
        %v1193 = vpack.c.b16 %v1182, %v1181
        %v1194 = vpack.c.b16 %v1184, %v1183
        %v1195 = vpack.c.b16 %v1186, %v1185
        %v1196 = vpack.c.b16 %v1188, %v1187
        %1205 = vmatprep.subr.bf16.mxu0 0
        %1206 = vmatpush1.bf16.msra.mxu0 %v1196
        %1207 = vmatprep.subr.bf16.mxu0 0
        %1208 = vmatpush1.bf16.msra.mxu0 %v1195
        %1209 = vmatprep.subr.bf16.mxu0 0
        %1210 = vmatpush1.bf16.msra.mxu0 %v1194
        %1211 = vmatprep.subr.bf16.mxu0 0
        %1212 = vmatpush1.bf16.msra.mxu0 %v1193
        %1213 = vmatprep.subr.bf16.mxu0 0
        %1214 = vmatpush1.bf16.msra.mxu0 %v1192
        %1215 = vmatprep.subr.bf16.mxu0 0
        %1216 = vmatpush1.bf16.msra.mxu0 %v1191
        %1217 = vmatprep.subr.bf16.mxu0 0
        %1218 = vmatpush1.bf16.msra.mxu0 %v1190
        %1219 = vmatprep.subr.bf16.mxu0 0
        %1220 = vmatpush1.bf16.msra.mxu0 %v1189
        %1221 = vmatprep.subr.bf16.mxu0 0
        %1222 = vmatpush2.bf16.msra.mxu0 0
        %1223 = vmatprep.subr.bf16.mxu0 0
        %1224 = vmatpush2.bf16.msra.mxu0 0
        %1225 = vmatprep.subr.bf16.mxu0 0
        %1226 = vmatpush2.bf16.msra.mxu0 0
        %1227 = vmatprep.subr.bf16.mxu0 0
        %1228 = vmatpush2.bf16.msra.mxu0 0
        %1229 = vmatprep.subr.bf16.mxu0 0
        %1230 = vmatpush2.bf16.msra.mxu0 0
        %1231 = vmatprep.subr.bf16.mxu0 0
        %1232 = vmatpush2.bf16.msra.mxu0 0
        %1233 = vmatprep.subr.bf16.mxu0 0
        %1234 = vmatpush2.bf16.msra.mxu0 0
        %1235 = vmatprep.subr.bf16.mxu0 0
        %1236 = vmatpush2.bf16.msra.mxu0 0
        %1237 = vmatprep.mubr.bf16.mxu0 0
        %1238 = vmatmul.mubr.bf16.gmra.mxu0 %v1133
        %v1239 = vpop.f32.mrf.mxu0
        %v1240 = vadd.f32 0.0, %v1239
        %v1241 = vpop.f32.mrf.mxu0
        %v1242 = vpop.f32.mrf.mxu0
        %v1243 = vadd.f32 0.0, %v1242
        %v1244 = vpop.f32.mrf.mxu0
        %1245 = vmatprep.mubr.bf16.mxu0 0
        %1246 = vmatmul.mubr.bf16.gmra.mxu0 %v1134
        %v1247 = vpop.f32.mrf.mxu0
        %v1248 = vadd.f32 0.0, %v1247
        %v1249 = vpop.f32.mrf.mxu0
        %v1250 = vpop.f32.mrf.mxu0
        %v1251 = vadd.f32 0.0, %v1250
        %v1252 = vpop.f32.mrf.mxu0
        %1253 = vmatprep.mubr.bf16.mxu0 0
        %1254 = vmatmul.mubr.bf16.gmra.mxu0 %v1135
        %v1255 = vpop.f32.mrf.mxu0
        %v1256 = vadd.f32 0.0, %v1255
        %v1257 = vpop.f32.mrf.mxu0
        %v1258 = vpop.f32.mrf.mxu0
        %v1259 = vadd.f32 0.0, %v1258
        %v1260 = vpop.f32.mrf.mxu0
        %1261 = vmatprep.mubr.bf16.mxu0 0
        %1262 = vmatmul.mubr.bf16.gmra.mxu0 %v1136
        %v1263 = vpop.f32.mrf.mxu0
        %v1264 = vadd.f32 0.0, %v1263
        %v1265 = vpop.f32.mrf.mxu0
        %v1266 = vpop.f32.mrf.mxu0
        %v1267 = vadd.f32 0.0, %v1266
        %v1268 = vpop.f32.mrf.mxu0
        %1269 = vmatprep.mubr.bf16.mxu0 0
        %1270 = vmatmul.mubr.bf16.gmra.mxu0 %v1137
        %v1271 = vpop.f32.mrf.mxu0
        %v1272 = vadd.f32 0.0, %v1271
        %v1273 = vpop.f32.mrf.mxu0
        %v1274 = vpop.f32.mrf.mxu0
        %v1275 = vadd.f32 0.0, %v1274
        %v1276 = vpop.f32.mrf.mxu0
        %1277 = vmatprep.mubr.bf16.mxu0 0
        %1278 = vmatmul.mubr.bf16.gmra.mxu0 %v1138
        %v1279 = vpop.f32.mrf.mxu0
        %v1280 = vadd.f32 0.0, %v1279
        %v1281 = vpop.f32.mrf.mxu0
        %v1282 = vpop.f32.mrf.mxu0
        %v1283 = vadd.f32 0.0, %v1282
        %v1284 = vpop.f32.mrf.mxu0
        %1285 = vmatprep.mubr.bf16.mxu0 0
        %1286 = vmatmul.mubr.bf16.gmra.mxu0 %v1139
        %v1287 = vpop.f32.mrf.mxu0
        %v1288 = vadd.f32 0.0, %v1287
        %v1289 = vpop.f32.mrf.mxu0
        %v1290 = vpop.f32.mrf.mxu0
        %v1291 = vadd.f32 0.0, %v1290
        %v1292 = vpop.f32.mrf.mxu0
        %1293 = vmatprep.mubr.bf16.mxu0 0
        %1294 = vmatmul.mubr.bf16.gmra.mxu0 %v1140
        %v1295 = vpop.f32.mrf.mxu0
        %v1296 = vadd.f32 0.0, %v1295
        %v1297 = vpop.f32.mrf.mxu0
        %v1298 = vpop.f32.mrf.mxu0
        %v1299 = vadd.f32 0.0, %v1298
        %v1300 = vpop.f32.mrf.mxu0
        %1301 = vmatprep.mubr.bf16.mxu0 0
        %1302 = vmatmul.mubr.bf16.gmra.mxu0 %v1141
        %v1303 = vpop.f32.mrf.mxu0
        %v1304 = vadd.f32 0.0, %v1303
        %v1305 = vpop.f32.mrf.mxu0
        %v1306 = vpop.f32.mrf.mxu0
        %v1307 = vadd.f32 0.0, %v1306
        %v1308 = vpop.f32.mrf.mxu0
        %1309 = vmatprep.mubr.bf16.mxu0 0
        %1310 = vmatmul.mubr.bf16.gmra.mxu0 %v1142
        %v1311 = vpop.f32.mrf.mxu0
        %v1312 = vadd.f32 0.0, %v1311
        %v1313 = vpop.f32.mrf.mxu0
        %v1314 = vpop.f32.mrf.mxu0
        %v1315 = vadd.f32 0.0, %v1314
        %v1316 = vpop.f32.mrf.mxu0
        %1317 = vmatprep.mubr.bf16.mxu0 0
        %1318 = vmatmul.mubr.bf16.gmra.mxu0 %v1143
        %v1319 = vpop.f32.mrf.mxu0
        %v1320 = vadd.f32 0.0, %v1319
        %v1321 = vpop.f32.mrf.mxu0
        %v1322 = vpop.f32.mrf.mxu0
        %v1323 = vadd.f32 0.0, %v1322
        %v1324 = vpop.f32.mrf.mxu0
        %1325 = vmatprep.mubr.bf16.mxu0 0
        %1326 = vmatmul.mubr.bf16.gmra.mxu0 %v1144
        %v1327 = vpop.f32.mrf.mxu0
        %v1328 = vadd.f32 0.0, %v1327
        %v1329 = vpop.f32.mrf.mxu0
        %v1330 = vpop.f32.mrf.mxu0
        %v1331 = vadd.f32 0.0, %v1330
        %v1332 = vpop.f32.mrf.mxu0
        %1333 = vdwg.mxu0
        %v1335 = vunpack.c.l.b16 %v1027
        %v1336 = vpack.c.b16 %v1109, %v1335
        %v1337 = vpack.c.b16 %v1111, %v1110
        %v1338 = vpack.c.b16 %v1113, %v1112
        %v1339 = vpack.c.b16 %v1115, %v1114
        %v1340 = vpack.c.b16 %v1117, %v1116
        %v1341 = vpack.c.b16 %v1119, %v1118
        %v1342 = vpack.c.b16 %v1121, %v1120
        %v1343 = vpack.c.b16 %v1123, %v1122
        %v1344 = vpack.c.b16 %v1125, %v1124
        %v1345 = vpack.c.b16 %v1127, %v1126
        %v1346 = vpack.c.b16 %v1129, %v1128
        %v1347 = vpack.c.b16 %v1131, %v1130
        %v1348 = vpack.c.b16 %v1132, %v1132
        %vm1349 = vsmask.f32 4352
        %v1351 = vshrl.u32 %v1336, 16
        %v1353 = vrot.slane %v1351, 3
        %v1354 = vshll.u32 %v1336, 16
        %v1356 = vrot.slane %v1354, 4
        %v1357 = vor.u32 %v1353, %v1356
        %v1359 = vshrl.u32 %v1337, 16
        %v1361 = vrot.slane %v1359, 3
        %v1362 = vshll.u32 %v1337, 16
        %v1364 = vrot.slane %v1362, 4
        %v1365 = vor.u32 %v1361, %v1364
        %v1366 = vsel %vm1349, %v1357, %v1365
        %v1368 = vshrl.u32 %v1338, 16
        %v1370 = vrot.slane %v1368, 3
        %v1371 = vshll.u32 %v1338, 16
        %v1373 = vrot.slane %v1371, 4
        %v1374 = vor.u32 %v1370, %v1373
        %v1375 = vsel %vm1349, %v1365, %v1374
        %v1377 = vshrl.u32 %v1339, 16
        %v1379 = vrot.slane %v1377, 3
        %v1380 = vshll.u32 %v1339, 16
        %v1382 = vrot.slane %v1380, 4
        %v1383 = vor.u32 %v1379, %v1382
        %v1384 = vsel %vm1349, %v1374, %v1383
        %v1386 = vshrl.u32 %v1340, 16
        %v1388 = vrot.slane %v1386, 3
        %v1389 = vshll.u32 %v1340, 16
        %v1391 = vrot.slane %v1389, 4
        %v1392 = vor.u32 %v1388, %v1391
        %v1393 = vsel %vm1349, %v1383, %v1392
        %v1395 = vshrl.u32 %v1341, 16
        %v1397 = vrot.slane %v1395, 3
        %v1398 = vshll.u32 %v1341, 16
        %v1400 = vrot.slane %v1398, 4
        %v1401 = vor.u32 %v1397, %v1400
        %v1402 = vsel %vm1349, %v1392, %v1401
        %v1404 = vshrl.u32 %v1342, 16
        %v1406 = vrot.slane %v1404, 3
        %v1407 = vshll.u32 %v1342, 16
        %v1409 = vrot.slane %v1407, 4
        %v1410 = vor.u32 %v1406, %v1409
        %v1411 = vsel %vm1349, %v1401, %v1410
        %v1413 = vshrl.u32 %v1343, 16
        %v1415 = vrot.slane %v1413, 3
        %v1416 = vshll.u32 %v1343, 16
        %v1418 = vrot.slane %v1416, 4
        %v1419 = vor.u32 %v1415, %v1418
        %v1420 = vsel %vm1349, %v1410, %v1419
        %v1422 = vshrl.u32 %v1344, 16
        %v1424 = vrot.slane %v1422, 3
        %v1425 = vshll.u32 %v1344, 16
        %v1427 = vrot.slane %v1425, 4
        %v1428 = vor.u32 %v1424, %v1427
        %v1429 = vsel %vm1349, %v1419, %v1428
        %v1431 = vshrl.u32 %v1345, 16
        %v1433 = vrot.slane %v1431, 3
        %v1434 = vshll.u32 %v1345, 16
        %v1436 = vrot.slane %v1434, 4
        %v1437 = vor.u32 %v1433, %v1436
        %v1438 = vsel %vm1349, %v1428, %v1437
        %v1440 = vshrl.u32 %v1346, 16
        %v1442 = vrot.slane %v1440, 3
        %v1443 = vshll.u32 %v1346, 16
        %v1445 = vrot.slane %v1443, 4
        %v1446 = vor.u32 %v1442, %v1445
        %v1447 = vsel %vm1349, %v1437, %v1446
        %v1449 = vshrl.u32 %v1347, 16
        %v1451 = vrot.slane %v1449, 3
        %v1452 = vshll.u32 %v1347, 16
        %v1454 = vrot.slane %v1452, 4
        %v1455 = vor.u32 %v1451, %v1454
        %v1456 = vsel %vm1349, %v1446, %v1455
        %v1458 = vshrl.u32 %v1348, 16
        %v1460 = vrot.slane %v1458, 3
        %v1461 = vshll.u32 %v1348, 16
        %v1463 = vrot.slane %v1461, 4
        %v1464 = vor.u32 %v1460, %v1463
        %v1465 = vsel %vm1349, %v1455, %v1464
        %v1494 = vunpack.c.l.b16 %v1052
        %v1495 = vunpack.c.l.b16 %v1053
        %v1496 = vunpack.c.l.b16 %v1054
        %v1497 = vunpack.c.l.b16 %v1055
        %v1498 = vunpack.c.l.b16 %v1056
        %v1499 = vunpack.c.l.b16 %v1057
        %v1500 = vunpack.c.l.b16 %v1058
        %v1501 = vunpack.c.l.b16 %v1059
        %v1502 = vunpack.c.l.b16 %v1060
        %v1503 = vunpack.c.l.b16 %v1061
        %v1504 = vunpack.c.l.b16 %v1062
        %v1505 = vunpack.c.l.b16 %v1063
        %v1506 = vunpack.c.l.b16 %v1064
        %v1507 = vunpack.c.l.b16 %v1065
        %v1508 = vunpack.c.l.b16 %v1066
        %v1509 = vunpack.c.l.b16 %v1067
        %v1510 = vpack.c.b16 %v1495, %v1494
        %v1511 = vpack.c.b16 %v1497, %v1496
        %v1512 = vpack.c.b16 %v1499, %v1498
        %v1513 = vpack.c.b16 %v1501, %v1500
        %v1514 = vpack.c.b16 %v1503, %v1502
        %v1515 = vpack.c.b16 %v1505, %v1504
        %v1516 = vpack.c.b16 %v1507, %v1506
        %v1517 = vpack.c.b16 %v1509, %v1508
        %1526 = vmatprep.subr.bf16.mxu0 0
        %1527 = vmatpush1.bf16.msra.mxu0 %v1517
        %1528 = vmatprep.subr.bf16.mxu0 0
        %1529 = vmatpush1.bf16.msra.mxu0 %v1516
        %1530 = vmatprep.subr.bf16.mxu0 0
        %1531 = vmatpush1.bf16.msra.mxu0 %v1515
        %1532 = vmatprep.subr.bf16.mxu0 0
        %1533 = vmatpush1.bf16.msra.mxu0 %v1514
        %1534 = vmatprep.subr.bf16.mxu0 0
        %1535 = vmatpush1.bf16.msra.mxu0 %v1513
        %1536 = vmatprep.subr.bf16.mxu0 0
        %1537 = vmatpush1.bf16.msra.mxu0 %v1512
        %1538 = vmatprep.subr.bf16.mxu0 0
        %1539 = vmatpush1.bf16.msra.mxu0 %v1511
        %1540 = vmatprep.subr.bf16.mxu0 0
        %1541 = vmatpush1.bf16.msra.mxu0 %v1510
        %1542 = vmatprep.subr.bf16.mxu0 0
        %1543 = vmatpush2.bf16.msra.mxu0 0
        %1544 = vmatprep.subr.bf16.mxu0 0
        %1545 = vmatpush2.bf16.msra.mxu0 0
        %1546 = vmatprep.subr.bf16.mxu0 0
        %1547 = vmatpush2.bf16.msra.mxu0 0
        %1548 = vmatprep.subr.bf16.mxu0 0
        %1549 = vmatpush2.bf16.msra.mxu0 0
        %1550 = vmatprep.subr.bf16.mxu0 0
        %1551 = vmatpush2.bf16.msra.mxu0 0
        %1552 = vmatprep.subr.bf16.mxu0 0
        %1553 = vmatpush2.bf16.msra.mxu0 0
        %1554 = vmatprep.subr.bf16.mxu0 0
        %1555 = vmatpush2.bf16.msra.mxu0 0
        %1556 = vmatprep.subr.bf16.mxu0 0
        %1557 = vmatpush2.bf16.msra.mxu0 0
        %1558 = vmatprep.mubr.bf16.mxu0 0
        %1559 = vmatmul.mubr.bf16.gmra.mxu0 %v1366
        %v1560 = vpop.f32.mrf.mxu0
        %v1561 = vadd.f32 %v1240, %v1560
        %v1562 = vpop.f32.mrf.mxu0
        %v1563 = vpop.f32.mrf.mxu0
        %v1564 = vadd.f32 %v1243, %v1563
        %v1565 = vpop.f32.mrf.mxu0
        %1566 = vmatprep.mubr.bf16.mxu0 0
        %1567 = vmatmul.mubr.bf16.gmra.mxu0 %v1375
        %v1568 = vpop.f32.mrf.mxu0
        %v1569 = vadd.f32 %v1248, %v1568
        %v1570 = vpop.f32.mrf.mxu0
        %v1571 = vpop.f32.mrf.mxu0
        %v1572 = vadd.f32 %v1251, %v1571
        %v1573 = vpop.f32.mrf.mxu0
        %1574 = vmatprep.mubr.bf16.mxu0 0
        %1575 = vmatmul.mubr.bf16.gmra.mxu0 %v1384
        %v1576 = vpop.f32.mrf.mxu0
        %v1577 = vadd.f32 %v1256, %v1576
        %v1578 = vpop.f32.mrf.mxu0
        %v1579 = vpop.f32.mrf.mxu0
        %v1580 = vadd.f32 %v1259, %v1579
        %v1581 = vpop.f32.mrf.mxu0
        %1582 = vmatprep.mubr.bf16.mxu0 0
        %1583 = vmatmul.mubr.bf16.gmra.mxu0 %v1393
        %v1584 = vpop.f32.mrf.mxu0
        %v1585 = vadd.f32 %v1264, %v1584
        %v1586 = vpop.f32.mrf.mxu0
        %v1587 = vpop.f32.mrf.mxu0
        %v1588 = vadd.f32 %v1267, %v1587
        %v1589 = vpop.f32.mrf.mxu0
        %1590 = vmatprep.mubr.bf16.mxu0 0
        %1591 = vmatmul.mubr.bf16.gmra.mxu0 %v1402
        %v1592 = vpop.f32.mrf.mxu0
        %v1593 = vadd.f32 %v1272, %v1592
        %v1594 = vpop.f32.mrf.mxu0
        %v1595 = vpop.f32.mrf.mxu0
        %v1596 = vadd.f32 %v1275, %v1595
        %v1597 = vpop.f32.mrf.mxu0
        %1598 = vmatprep.mubr.bf16.mxu0 0
        %1599 = vmatmul.mubr.bf16.gmra.mxu0 %v1411
        %v1600 = vpop.f32.mrf.mxu0
        %v1601 = vadd.f32 %v1280, %v1600
        %v1602 = vpop.f32.mrf.mxu0
        %v1603 = vpop.f32.mrf.mxu0
        %v1604 = vadd.f32 %v1283, %v1603
        %v1605 = vpop.f32.mrf.mxu0
        %1606 = vmatprep.mubr.bf16.mxu0 0
        %1607 = vmatmul.mubr.bf16.gmra.mxu0 %v1420
        %v1608 = vpop.f32.mrf.mxu0
        %v1609 = vadd.f32 %v1288, %v1608
        %v1610 = vpop.f32.mrf.mxu0
        %v1611 = vpop.f32.mrf.mxu0
        %v1612 = vadd.f32 %v1291, %v1611
        %v1613 = vpop.f32.mrf.mxu0
        %1614 = vmatprep.mubr.bf16.mxu0 0
        %1615 = vmatmul.mubr.bf16.gmra.mxu0 %v1429
        %v1616 = vpop.f32.mrf.mxu0
        %v1617 = vadd.f32 %v1296, %v1616
        %v1618 = vpop.f32.mrf.mxu0
        %v1619 = vpop.f32.mrf.mxu0
        %v1620 = vadd.f32 %v1299, %v1619
        %v1621 = vpop.f32.mrf.mxu0
        %1622 = vmatprep.mubr.bf16.mxu0 0
        %1623 = vmatmul.mubr.bf16.gmra.mxu0 %v1438
        %v1624 = vpop.f32.mrf.mxu0
        %v1625 = vadd.f32 %v1304, %v1624
        %v1626 = vpop.f32.mrf.mxu0
        %v1627 = vpop.f32.mrf.mxu0
        %v1628 = vadd.f32 %v1307, %v1627
        %v1629 = vpop.f32.mrf.mxu0
        %1630 = vmatprep.mubr.bf16.mxu0 0
        %1631 = vmatmul.mubr.bf16.gmra.mxu0 %v1447
        %v1632 = vpop.f32.mrf.mxu0
        %v1633 = vadd.f32 %v1312, %v1632
        %v1634 = vpop.f32.mrf.mxu0
        %v1635 = vpop.f32.mrf.mxu0
        %v1636 = vadd.f32 %v1315, %v1635
        %v1637 = vpop.f32.mrf.mxu0
        %1638 = vmatprep.mubr.bf16.mxu0 0
        %1639 = vmatmul.mubr.bf16.gmra.mxu0 %v1456
        %v1640 = vpop.f32.mrf.mxu0
        %v1641 = vadd.f32 %v1320, %v1640
        %v1642 = vpop.f32.mrf.mxu0
        %v1643 = vpop.f32.mrf.mxu0
        %v1644 = vadd.f32 %v1323, %v1643
        %v1645 = vpop.f32.mrf.mxu0
        %1646 = vmatprep.mubr.bf16.mxu0 0
        %1647 = vmatmul.mubr.bf16.gmra.mxu0 %v1465
        %v1648 = vpop.f32.mrf.mxu0
        %v1649 = vadd.f32 %v1328, %v1648
        %v1650 = vpop.f32.mrf.mxu0
        %v1651 = vpop.f32.mrf.mxu0
        %v1652 = vadd.f32 %v1331, %v1651
        %v1653 = vpop.f32.mrf.mxu0
        %1654 = vdwg.mxu0
        %v1655 = vld [vmem:[#allocation2 + $0x4] sm:$0xf]
        %v1656 = vld [vmem:[#allocation2 + $0x8] sm:$0xf]
        %v1657 = vld [vmem:[#allocation2 + $0xc] sm:$0xf]
        %v1658 = vld [vmem:[#allocation2 + $0x10] sm:$0xf]
        %v1659 = vld [vmem:[#allocation2 + $0x14] sm:$0xf]
        %v1660 = vld [vmem:[#allocation2 + $0x18] sm:$0xf]
        %v1661 = vld [vmem:[#allocation2 + $0x1c] sm:$0xf]
        %v1662 = vld [vmem:[#allocation2 + $0x20] sm:$0xf]
        %v1663 = vld [vmem:[#allocation2 + $0x24] sm:$0xf]
        %v1664 = vld [vmem:[#allocation2 + $0x28] sm:$0xf]
        %v1665 = vld [vmem:[#allocation2 + $0x2c] sm:$0xf]
        %v1666 = vld [vmem:[#allocation2 + $0x30] sm:$0xf]
        %v1667 = vld [vmem:[#allocation2 + $0x34] sm:$0xf]
        %v1668 = vld [vmem:[#allocation2 + $0x38] sm:$0xf]
        %v1669 = vld [vmem:[#allocation2 + $0x3c] sm:$0xf]
        %v1670 = vld [vmem:[#allocation2 + $0x40] sm:$0xf]
        %v1671 = vld [vmem:[#allocation2 + $0x44] sm:$0xf]
        %v1672 = vld [vmem:[#allocation2 + $0x48] sm:$0xf]
        %v1673 = vld [vmem:[#allocation2 + $0x4c] sm:$0xf]
        %v1674 = vld [vmem:[#allocation2 + $0x50] sm:$0xf]
        %v1675 = vld [vmem:[#allocation2 + $0x54] sm:$0xf]
        %v1676 = vld [vmem:[#allocation2 + $0x58] sm:$0xf]
        %v1677 = vld [vmem:[#allocation2 + $0x5c] sm:$0xf]
        %v1678 = vld [vmem:[#allocation2 + $0x60] sm:$0xf]
        %v1679 = vld [vmem:[#allocation2 + $0x64] sm:$0x1]
        %s1680 = scalar_lea.vmem [#allocation8], 128
        %v1681 = vld [vmem:[%s1680] sm:$0xf]
        %v1682 = vld [vmem:[%s1680 + $0x4] sm:$0xf]
        %v1683 = vld [vmem:[%s1680 + $0x8] sm:$0xf]
        %v1684 = vld [vmem:[%s1680 + $0xc] sm:$0xf]
        %v1685 = vld [vmem:[%s1680 + $0x10] sm:$0xf]
        %v1686 = vld [vmem:[%s1680 + $0x14] sm:$0xf]
        %v1687 = vld [vmem:[%s1680 + $0x18] sm:$0xf]
        %v1688 = vld [vmem:[%s1680 + $0x1c] sm:$0xf]
        %v1689 = vld [vmem:[%s1680 + $0x20] sm:$0xf]
        %v1690 = vld [vmem:[%s1680 + $0x24] sm:$0xf]
        %v1691 = vld [vmem:[%s1680 + $0x28] sm:$0xf]
        %v1692 = vld [vmem:[%s1680 + $0x2c] sm:$0xf]
        %v1693 = vld [vmem:[%s1680 + $0x30] sm:$0xf]
        %v1694 = vld [vmem:[%s1680 + $0x34] sm:$0xf]
        %v1695 = vld [vmem:[%s1680 + $0x38] sm:$0xf]
        %v1696 = vld [vmem:[%s1680 + $0x3c] sm:$0xf]
        %v1722 = vunpack.c.l.b16 %v1655
        %v1723 = vunpack.c.l.b16 %v1656
        %v1724 = vunpack.c.l.b16 %v1657
        %v1725 = vunpack.c.l.b16 %v1658
        %v1726 = vunpack.c.l.b16 %v1659
        %v1727 = vunpack.c.l.b16 %v1660
        %v1728 = vunpack.c.l.b16 %v1661
        %v1729 = vunpack.c.l.b16 %v1662
        %v1730 = vunpack.c.l.b16 %v1663
        %v1731 = vunpack.c.l.b16 %v1664
        %v1732 = vunpack.c.l.b16 %v1665
        %v1733 = vunpack.c.l.b16 %v1666
        %v1734 = vunpack.c.l.b16 %v1667
        %v1735 = vunpack.c.l.b16 %v1668
        %v1736 = vunpack.c.l.b16 %v1669
        %v1737 = vunpack.c.l.b16 %v1670
        %v1738 = vunpack.c.l.b16 %v1671
        %v1739 = vunpack.c.l.b16 %v1672
        %v1740 = vunpack.c.l.b16 %v1673
        %v1741 = vunpack.c.l.b16 %v1674
        %v1742 = vunpack.c.l.b16 %v1675
        %v1743 = vunpack.c.l.b16 %v1676
        %v1744 = vunpack.c.l.b16 %v1677
        %v1745 = vunpack.c.l.b16 %v1678
        %v1746 = vunpack.c.l.b16 %v1679
        %v1747 = vpack.c.b16 %v1723, %v1722
        %v1748 = vpack.c.b16 %v1725, %v1724
        %v1749 = vpack.c.b16 %v1727, %v1726
        %v1750 = vpack.c.b16 %v1729, %v1728
        %v1751 = vpack.c.b16 %v1731, %v1730
        %v1752 = vpack.c.b16 %v1733, %v1732
        %v1753 = vpack.c.b16 %v1735, %v1734
        %v1754 = vpack.c.b16 %v1737, %v1736
        %v1755 = vpack.c.b16 %v1739, %v1738
        %v1756 = vpack.c.b16 %v1741, %v1740
        %v1757 = vpack.c.b16 %v1743, %v1742
        %v1758 = vpack.c.b16 %v1745, %v1744
        %v1759 = vpack.c.b16 %v1746, %v1746
        %vm1760 = vsmask.f32 7424
        %v1762 = vshrl.u32 %v1747, 16
        %v1764 = vshll.u32 %v1747, 16
        %v1766 = vrot.slane %v1764, 1
        %v1767 = vor.u32 %v1762, %v1766
        %v1769 = vshll.u32 %v1748, 16
        %v1771 = vrot.slane %v1769, 1
        %v1772 = vsel %vm1760, %v1767, %v1771
        %v1773 = vshrl.u32 %v1748, 16
        %v1775 = vor.u32 %v1773, %v1771
        %v1777 = vshll.u32 %v1749, 16
        %v1779 = vrot.slane %v1777, 1
        %v1780 = vsel %vm1760, %v1775, %v1779
        %v1781 = vshrl.u32 %v1749, 16
        %v1783 = vor.u32 %v1781, %v1779
        %v1785 = vshll.u32 %v1750, 16
        %v1787 = vrot.slane %v1785, 1
        %v1788 = vsel %vm1760, %v1783, %v1787
        %v1789 = vshrl.u32 %v1750, 16
        %v1791 = vor.u32 %v1789, %v1787
        %v1793 = vshll.u32 %v1751, 16
        %v1795 = vrot.slane %v1793, 1
        %v1796 = vsel %vm1760, %v1791, %v1795
        %v1797 = vshrl.u32 %v1751, 16
        %v1799 = vor.u32 %v1797, %v1795
        %v1801 = vshll.u32 %v1752, 16
        %v1803 = vrot.slane %v1801, 1
        %v1804 = vsel %vm1760, %v1799, %v1803
        %v1805 = vshrl.u32 %v1752, 16
        %v1807 = vor.u32 %v1805, %v1803
        %v1809 = vshll.u32 %v1753, 16
        %v1811 = vrot.slane %v1809, 1
        %v1812 = vsel %vm1760, %v1807, %v1811
        %v1813 = vshrl.u32 %v1753, 16
        %v1815 = vor.u32 %v1813, %v1811
        %v1817 = vshll.u32 %v1754, 16
        %v1819 = vrot.slane %v1817, 1
        %v1820 = vsel %vm1760, %v1815, %v1819
        %v1821 = vshrl.u32 %v1754, 16
        %v1823 = vor.u32 %v1821, %v1819
        %v1825 = vshll.u32 %v1755, 16
        %v1827 = vrot.slane %v1825, 1
        %v1828 = vsel %vm1760, %v1823, %v1827
        %v1829 = vshrl.u32 %v1755, 16
        %v1831 = vor.u32 %v1829, %v1827
        %v1833 = vshll.u32 %v1756, 16
        %v1835 = vrot.slane %v1833, 1
        %v1836 = vsel %vm1760, %v1831, %v1835
        %v1837 = vshrl.u32 %v1756, 16
        %v1839 = vor.u32 %v1837, %v1835
        %v1841 = vshll.u32 %v1757, 16
        %v1843 = vrot.slane %v1841, 1
        %v1844 = vsel %vm1760, %v1839, %v1843
        %v1845 = vshrl.u32 %v1757, 16
        %v1847 = vor.u32 %v1845, %v1843
        %v1849 = vshll.u32 %v1758, 16
        %v1851 = vrot.slane %v1849, 1
        %v1852 = vsel %vm1760, %v1847, %v1851
        %v1853 = vshrl.u32 %v1758, 16
        %v1855 = vor.u32 %v1853, %v1851
        %v1857 = vshll.u32 %v1759, 16
        %v1859 = vrot.slane %v1857, 1
        %v1860 = vsel %vm1760, %v1855, %v1859
        %v1889 = vunpack.c.l.b16 %v1681
        %v1890 = vunpack.c.l.b16 %v1682
        %v1891 = vunpack.c.l.b16 %v1683
        %v1892 = vunpack.c.l.b16 %v1684
        %v1893 = vunpack.c.l.b16 %v1685
        %v1894 = vunpack.c.l.b16 %v1686
        %v1895 = vunpack.c.l.b16 %v1687
        %v1896 = vunpack.c.l.b16 %v1688
        %v1897 = vunpack.c.l.b16 %v1689
        %v1898 = vunpack.c.l.b16 %v1690
        %v1899 = vunpack.c.l.b16 %v1691
        %v1900 = vunpack.c.l.b16 %v1692
        %v1901 = vunpack.c.l.b16 %v1693
        %v1902 = vunpack.c.l.b16 %v1694
        %v1903 = vunpack.c.l.b16 %v1695
        %v1904 = vunpack.c.l.b16 %v1696
        %v1905 = vpack.c.b16 %v1890, %v1889
        %v1906 = vpack.c.b16 %v1892, %v1891
        %v1907 = vpack.c.b16 %v1894, %v1893
        %v1908 = vpack.c.b16 %v1896, %v1895
        %v1909 = vpack.c.b16 %v1898, %v1897
        %v1910 = vpack.c.b16 %v1900, %v1899
        %v1911 = vpack.c.b16 %v1902, %v1901
        %v1912 = vpack.c.b16 %v1904, %v1903
        %1921 = vmatprep.subr.bf16.mxu0 0
        %1922 = vmatpush1.bf16.msra.mxu0 %v1912
        %1923 = vmatprep.subr.bf16.mxu0 0
        %1924 = vmatpush1.bf16.msra.mxu0 %v1911
        %1925 = vmatprep.subr.bf16.mxu0 0
        %1926 = vmatpush1.bf16.msra.mxu0 %v1910
        %1927 = vmatprep.subr.bf16.mxu0 0
        %1928 = vmatpush1.bf16.msra.mxu0 %v1909
        %1929 = vmatprep.subr.bf16.mxu0 0
        %1930 = vmatpush1.bf16.msra.mxu0 %v1908
        %1931 = vmatprep.subr.bf16.mxu0 0
        %1932 = vmatpush1.bf16.msra.mxu0 %v1907
        %1933 = vmatprep.subr.bf16.mxu0 0
        %1934 = vmatpush1.bf16.msra.mxu0 %v1906
        %1935 = vmatprep.subr.bf16.mxu0 0
        %1936 = vmatpush1.bf16.msra.mxu0 %v1905
        %1937 = vmatprep.subr.bf16.mxu0 0
        %1938 = vmatpush2.bf16.msra.mxu0 0
        %1939 = vmatprep.subr.bf16.mxu0 0
        %1940 = vmatpush2.bf16.msra.mxu0 0
        %1941 = vmatprep.subr.bf16.mxu0 0
        %1942 = vmatpush2.bf16.msra.mxu0 0
        %1943 = vmatprep.subr.bf16.mxu0 0
        %1944 = vmatpush2.bf16.msra.mxu0 0
        %1945 = vmatprep.subr.bf16.mxu0 0
        %1946 = vmatpush2.bf16.msra.mxu0 0
        %1947 = vmatprep.subr.bf16.mxu0 0
        %1948 = vmatpush2.bf16.msra.mxu0 0
        %1949 = vmatprep.subr.bf16.mxu0 0
        %1950 = vmatpush2.bf16.msra.mxu0 0
        %1951 = vmatprep.subr.bf16.mxu0 0
        %1952 = vmatpush2.bf16.msra.mxu0 0
        %1953 = vmatprep.mubr.bf16.mxu0 0
        %1954 = vmatmul.mubr.bf16.gmra.mxu0 %v1772
        %v1955 = vpop.f32.mrf.mxu0
        %v1956 = vadd.f32 0.0, %v1955
        %v1957 = vpop.f32.mrf.mxu0
        %v1958 = vpop.f32.mrf.mxu0
        %v1959 = vadd.f32 0.0, %v1958
        %v1960 = vpop.f32.mrf.mxu0
        %1961 = vmatprep.mubr.bf16.mxu0 0
        %1962 = vmatmul.mubr.bf16.gmra.mxu0 %v1780
        %v1963 = vpop.f32.mrf.mxu0
        %v1964 = vadd.f32 0.0, %v1963
        %v1965 = vpop.f32.mrf.mxu0
        %v1966 = vpop.f32.mrf.mxu0
        %v1967 = vadd.f32 0.0, %v1966
        %v1968 = vpop.f32.mrf.mxu0
        %1969 = vmatprep.mubr.bf16.mxu0 0
        %1970 = vmatmul.mubr.bf16.gmra.mxu0 %v1788
        %v1971 = vpop.f32.mrf.mxu0
        %v1972 = vadd.f32 0.0, %v1971
        %v1973 = vpop.f32.mrf.mxu0
        %v1974 = vpop.f32.mrf.mxu0
        %v1975 = vadd.f32 0.0, %v1974
        %v1976 = vpop.f32.mrf.mxu0
        %1977 = vmatprep.mubr.bf16.mxu0 0
        %1978 = vmatmul.mubr.bf16.gmra.mxu0 %v1796
        %v1979 = vpop.f32.mrf.mxu0
        %v1980 = vadd.f32 0.0, %v1979
        %v1981 = vpop.f32.mrf.mxu0
        %v1982 = vpop.f32.mrf.mxu0
        %v1983 = vadd.f32 0.0, %v1982
        %v1984 = vpop.f32.mrf.mxu0
        %1985 = vmatprep.mubr.bf16.mxu0 0
        %1986 = vmatmul.mubr.bf16.gmra.mxu0 %v1804
        %v1987 = vpop.f32.mrf.mxu0
        %v1988 = vadd.f32 0.0, %v1987
        %v1989 = vpop.f32.mrf.mxu0
        %v1990 = vpop.f32.mrf.mxu0
        %v1991 = vadd.f32 0.0, %v1990
        %v1992 = vpop.f32.mrf.mxu0
        %1993 = vmatprep.mubr.bf16.mxu0 0
        %1994 = vmatmul.mubr.bf16.gmra.mxu0 %v1812
        %v1995 = vpop.f32.mrf.mxu0
        %v1996 = vadd.f32 0.0, %v1995
        %v1997 = vpop.f32.mrf.mxu0
        %v1998 = vpop.f32.mrf.mxu0
        %v1999 = vadd.f32 0.0, %v1998
        %v2000 = vpop.f32.mrf.mxu0
        %2001 = vmatprep.mubr.bf16.mxu0 0
        %2002 = vmatmul.mubr.bf16.gmra.mxu0 %v1820
        %v2003 = vpop.f32.mrf.mxu0
        %v2004 = vadd.f32 0.0, %v2003
        %v2005 = vpop.f32.mrf.mxu0
        %v2006 = vpop.f32.mrf.mxu0
        %v2007 = vadd.f32 0.0, %v2006
        %v2008 = vpop.f32.mrf.mxu0
        %2009 = vmatprep.mubr.bf16.mxu0 0
        %2010 = vmatmul.mubr.bf16.gmra.mxu0 %v1828
        %v2011 = vpop.f32.mrf.mxu0
        %v2012 = vadd.f32 0.0, %v2011
        %v2013 = vpop.f32.mrf.mxu0
        %v2014 = vpop.f32.mrf.mxu0
        %v2015 = vadd.f32 0.0, %v2014
        %v2016 = vpop.f32.mrf.mxu0
        %2017 = vmatprep.mubr.bf16.mxu0 0
        %2018 = vmatmul.mubr.bf16.gmra.mxu0 %v1836
        %v2019 = vpop.f32.mrf.mxu0
        %v2020 = vadd.f32 0.0, %v2019
        %v2021 = vpop.f32.mrf.mxu0
        %v2022 = vpop.f32.mrf.mxu0
        %v2023 = vadd.f32 0.0, %v2022
        %v2024 = vpop.f32.mrf.mxu0
        %2025 = vmatprep.mubr.bf16.mxu0 0
        %2026 = vmatmul.mubr.bf16.gmra.mxu0 %v1844
        %v2027 = vpop.f32.mrf.mxu0
        %v2028 = vadd.f32 0.0, %v2027
        %v2029 = vpop.f32.mrf.mxu0
        %v2030 = vpop.f32.mrf.mxu0
        %v2031 = vadd.f32 0.0, %v2030
        %v2032 = vpop.f32.mrf.mxu0
        %2033 = vmatprep.mubr.bf16.mxu0 0
        %2034 = vmatmul.mubr.bf16.gmra.mxu0 %v1852
        %v2035 = vpop.f32.mrf.mxu0
        %v2036 = vadd.f32 0.0, %v2035
        %v2037 = vpop.f32.mrf.mxu0
        %v2038 = vpop.f32.mrf.mxu0
        %v2039 = vadd.f32 0.0, %v2038
        %v2040 = vpop.f32.mrf.mxu0
        %2041 = vmatprep.mubr.bf16.mxu0 0
        %2042 = vmatmul.mubr.bf16.gmra.mxu0 %v1860
        %v2043 = vpop.f32.mrf.mxu0
        %v2044 = vadd.f32 0.0, %v2043
        %v2045 = vpop.f32.mrf.mxu0
        %v2046 = vpop.f32.mrf.mxu0
        %v2047 = vadd.f32 0.0, %v2046
        %v2048 = vpop.f32.mrf.mxu0
        %2049 = vdwg.mxu0
        %v2050 = vadd.f32 %v1561, %v1956
        %v2051 = vadd.f32 %v1564, %v1959
        %v2052 = vadd.f32 %v1569, %v1964
        %v2053 = vadd.f32 %v1572, %v1967
        %v2054 = vadd.f32 %v1577, %v1972
        %v2055 = vadd.f32 %v1580, %v1975
        %v2056 = vadd.f32 %v1585, %v1980
        %v2057 = vadd.f32 %v1588, %v1983
        %v2058 = vadd.f32 %v1593, %v1988
        %v2059 = vadd.f32 %v1596, %v1991
        %v2060 = vadd.f32 %v1601, %v1996
        %v2061 = vadd.f32 %v1604, %v1999
        %v2062 = vadd.f32 %v1609, %v2004
        %v2063 = vadd.f32 %v1612, %v2007
        %v2064 = vadd.f32 %v1617, %v2012
        %v2065 = vadd.f32 %v1620, %v2015
        %v2066 = vadd.f32 %v1625, %v2020
        %v2067 = vadd.f32 %v1628, %v2023
        %v2068 = vadd.f32 %v1633, %v2028
        %v2069 = vadd.f32 %v1636, %v2031
        %v2070 = vadd.f32 %v1641, %v2036
        %v2071 = vadd.f32 %v1644, %v2039
        %v2072 = vadd.f32 %v1649, %v2044
        %v2073 = vadd.f32 %v1652, %v2047
        %v2074 = vld [vmem:[#allocation2 + $0xc] sm:$0x8]
        %v2075 = vld [vmem:[#allocation2 + $0x10] sm:$0xf]
        %v2076 = vld [vmem:[#allocation2 + $0x14] sm:$0xf]
        %v2077 = vld [vmem:[#allocation2 + $0x18] sm:$0xf]
        %v2078 = vld [vmem:[#allocation2 + $0x1c] sm:$0xf]
        %v2079 = vld [vmem:[#allocation2 + $0x20] sm:$0xf]
        %v2080 = vld [vmem:[#allocation2 + $0x24] sm:$0xf]
        %v2081 = vld [vmem:[#allocation2 + $0x28] sm:$0xf]
        %v2082 = vld [vmem:[#allocation2 + $0x2c] sm:$0xf]
        %v2083 = vld [vmem:[#allocation2 + $0x30] sm:$0xf]
        %v2084 = vld [vmem:[#allocation2 + $0x34] sm:$0xf]
        %v2085 = vld [vmem:[#allocation2 + $0x38] sm:$0xf]
        %v2086 = vld [vmem:[#allocation2 + $0x3c] sm:$0xf]
        %v2087 = vld [vmem:[#allocation2 + $0x40] sm:$0xf]
        %v2088 = vld [vmem:[#allocation2 + $0x44] sm:$0xf]
        %v2089 = vld [vmem:[#allocation2 + $0x48] sm:$0xf]
        %v2090 = vld [vmem:[#allocation2 + $0x4c] sm:$0xf]
        %v2091 = vld [vmem:[#allocation2 + $0x50] sm:$0xf]
        %v2092 = vld [vmem:[#allocation2 + $0x54] sm:$0xf]
        %v2093 = vld [vmem:[#allocation2 + $0x58] sm:$0xf]
        %v2094 = vld [vmem:[#allocation2 + $0x5c] sm:$0xf]
        %v2095 = vld [vmem:[#allocation2 + $0x60] sm:$0xf]
        %v2096 = vld [vmem:[#allocation2 + $0x64] sm:$0xf]
        %v2097 = vld [vmem:[#allocation2 + $0x68] sm:$0xf]
        %v2098 = vld [vmem:[#allocation2 + $0x6c] sm:$0xf]
        %s2099 = scalar_lea.vmem [#allocation8], 192
        %v2100 = vld [vmem:[%s2099] sm:$0xf]
        %v2101 = vld [vmem:[%s2099 + $0x4] sm:$0xf]
        %v2102 = vld [vmem:[%s2099 + $0x8] sm:$0xf]
        %v2103 = vld [vmem:[%s2099 + $0xc] sm:$0xf]
        %v2104 = vld [vmem:[%s2099 + $0x10] sm:$0xf]
        %v2105 = vld [vmem:[%s2099 + $0x14] sm:$0xf]
        %v2106 = vld [vmem:[%s2099 + $0x18] sm:$0xf]
        %v2107 = vld [vmem:[%s2099 + $0x1c] sm:$0xf]
        %v2108 = vld [vmem:[%s2099 + $0x20] sm:$0xf]
        %v2109 = vld [vmem:[%s2099 + $0x24] sm:$0xf]
        %v2110 = vld [vmem:[%s2099 + $0x28] sm:$0xf]
        %v2111 = vld [vmem:[%s2099 + $0x2c] sm:$0xf]
        %v2112 = vld [vmem:[%s2099 + $0x30] sm:$0xf]
        %v2113 = vld [vmem:[%s2099 + $0x34] sm:$0xf]
        %v2114 = vld [vmem:[%s2099 + $0x38] sm:$0xf]
        %v2115 = vld [vmem:[%s2099 + $0x3c] sm:$0xf]
        %v2141 = vunpack.c.l.b16 %v2074
        %v2142 = vunpack.c.l.b16 %v2075
        %v2143 = vunpack.c.l.b16 %v2076
        %v2144 = vunpack.c.l.b16 %v2077
        %v2145 = vunpack.c.l.b16 %v2078
        %v2146 = vunpack.c.l.b16 %v2079
        %v2147 = vunpack.c.l.b16 %v2080
        %v2148 = vunpack.c.l.b16 %v2081
        %v2149 = vunpack.c.l.b16 %v2082
        %v2150 = vunpack.c.l.b16 %v2083
        %v2151 = vunpack.c.l.b16 %v2084
        %v2152 = vunpack.c.l.b16 %v2085
        %v2153 = vunpack.c.l.b16 %v2086
        %v2154 = vunpack.c.l.b16 %v2087
        %v2155 = vunpack.c.l.b16 %v2088
        %v2156 = vunpack.c.l.b16 %v2089
        %v2157 = vunpack.c.l.b16 %v2090
        %v2158 = vunpack.c.l.b16 %v2091
        %v2159 = vunpack.c.l.b16 %v2092
        %v2160 = vunpack.c.l.b16 %v2093
        %v2161 = vunpack.c.l.b16 %v2094
        %v2162 = vunpack.c.l.b16 %v2095
        %v2163 = vunpack.c.l.b16 %v2096
        %v2164 = vunpack.c.l.b16 %v2097
        %v2165 = vunpack.c.l.b16 %v2098
        %v2166 = vpack.c.b16 %v2142, %v2141
        %v2167 = vpack.c.b16 %v2144, %v2143
        %v2168 = vpack.c.b16 %v2146, %v2145
        %v2169 = vpack.c.b16 %v2148, %v2147
        %v2170 = vpack.c.b16 %v2150, %v2149
        %v2171 = vpack.c.b16 %v2152, %v2151
        %v2172 = vpack.c.b16 %v2154, %v2153
        %v2173 = vpack.c.b16 %v2156, %v2155
        %v2174 = vpack.c.b16 %v2158, %v2157
        %v2175 = vpack.c.b16 %v2160, %v2159
        %v2176 = vpack.c.b16 %v2162, %v2161
        %v2177 = vpack.c.b16 %v2164, %v2163
        %v2178 = vpack.c.b16 %v2165, %v2165
        %v2180 = vshrl.u32 %v2166, 16
        %v2182 = vrot.slane %v2180, 3
        %v2183 = vshll.u32 %v2166, 16
        %v2185 = vrot.slane %v2183, 4
        %v2186 = vor.u32 %v2182, %v2185
        %v2188 = vshrl.u32 %v2167, 16
        %v2190 = vrot.slane %v2188, 3
        %v2191 = vshll.u32 %v2167, 16
        %v2193 = vrot.slane %v2191, 4
        %v2194 = vor.u32 %v2190, %v2193
        %v2195 = vsel %vm1349, %v2186, %v2194
        %v2197 = vshrl.u32 %v2168, 16
        %v2199 = vrot.slane %v2197, 3
        %v2200 = vshll.u32 %v2168, 16
        %v2202 = vrot.slane %v2200, 4
        %v2203 = vor.u32 %v2199, %v2202
        %v2204 = vsel %vm1349, %v2194, %v2203
        %v2206 = vshrl.u32 %v2169, 16
        %v2208 = vrot.slane %v2206, 3
        %v2209 = vshll.u32 %v2169, 16
        %v2211 = vrot.slane %v2209, 4
        %v2212 = vor.u32 %v2208, %v2211
        %v2213 = vsel %vm1349, %v2203, %v2212
        %v2215 = vshrl.u32 %v2170, 16
        %v2217 = vrot.slane %v2215, 3
        %v2218 = vshll.u32 %v2170, 16
        %v2220 = vrot.slane %v2218, 4
        %v2221 = vor.u32 %v2217, %v2220
        %v2222 = vsel %vm1349, %v2212, %v2221
        %v2224 = vshrl.u32 %v2171, 16
        %v2226 = vrot.slane %v2224, 3
        %v2227 = vshll.u32 %v2171, 16
        %v2229 = vrot.slane %v2227, 4
        %v2230 = vor.u32 %v2226, %v2229
        %v2231 = vsel %vm1349, %v2221, %v2230
        %v2233 = vshrl.u32 %v2172, 16
        %v2235 = vrot.slane %v2233, 3
        %v2236 = vshll.u32 %v2172, 16
        %v2238 = vrot.slane %v2236, 4
        %v2239 = vor.u32 %v2235, %v2238
        %v2240 = vsel %vm1349, %v2230, %v2239
        %v2242 = vshrl.u32 %v2173, 16
        %v2244 = vrot.slane %v2242, 3
        %v2245 = vshll.u32 %v2173, 16
        %v2247 = vrot.slane %v2245, 4
        %v2248 = vor.u32 %v2244, %v2247
        %v2249 = vsel %vm1349, %v2239, %v2248
        %v2251 = vshrl.u32 %v2174, 16
        %v2253 = vrot.slane %v2251, 3
        %v2254 = vshll.u32 %v2174, 16
        %v2256 = vrot.slane %v2254, 4
        %v2257 = vor.u32 %v2253, %v2256
        %v2258 = vsel %vm1349, %v2248, %v2257
        %v2260 = vshrl.u32 %v2175, 16
        %v2262 = vrot.slane %v2260, 3
        %v2263 = vshll.u32 %v2175, 16
        %v2265 = vrot.slane %v2263, 4
        %v2266 = vor.u32 %v2262, %v2265
        %v2267 = vsel %vm1349, %v2257, %v2266
        %v2269 = vshrl.u32 %v2176, 16
        %v2271 = vrot.slane %v2269, 3
        %v2272 = vshll.u32 %v2176, 16
        %v2274 = vrot.slane %v2272, 4
        %v2275 = vor.u32 %v2271, %v2274
        %v2276 = vsel %vm1349, %v2266, %v2275
        %v2278 = vshrl.u32 %v2177, 16
        %v2280 = vrot.slane %v2278, 3
        %v2281 = vshll.u32 %v2177, 16
        %v2283 = vrot.slane %v2281, 4
        %v2284 = vor.u32 %v2280, %v2283
        %v2285 = vsel %vm1349, %v2275, %v2284
        %v2287 = vshrl.u32 %v2178, 16
        %v2289 = vrot.slane %v2287, 3
        %v2290 = vshll.u32 %v2178, 16
        %v2292 = vrot.slane %v2290, 4
        %v2293 = vor.u32 %v2289, %v2292
        %v2294 = vsel %vm1349, %v2284, %v2293
        %v2323 = vunpack.c.l.b16 %v2100
        %v2324 = vunpack.c.l.b16 %v2101
        %v2325 = vunpack.c.l.b16 %v2102
        %v2326 = vunpack.c.l.b16 %v2103
        %v2327 = vunpack.c.l.b16 %v2104
        %v2328 = vunpack.c.l.b16 %v2105
        %v2329 = vunpack.c.l.b16 %v2106
        %v2330 = vunpack.c.l.b16 %v2107
        %v2331 = vunpack.c.l.b16 %v2108
        %v2332 = vunpack.c.l.b16 %v2109
        %v2333 = vunpack.c.l.b16 %v2110
        %v2334 = vunpack.c.l.b16 %v2111
        %v2335 = vunpack.c.l.b16 %v2112
        %v2336 = vunpack.c.l.b16 %v2113
        %v2337 = vunpack.c.l.b16 %v2114
        %v2338 = vunpack.c.l.b16 %v2115
        %v2339 = vpack.c.b16 %v2324, %v2323
        %v2340 = vpack.c.b16 %v2326, %v2325
        %v2341 = vpack.c.b16 %v2328, %v2327
        %v2342 = vpack.c.b16 %v2330, %v2329
        %v2343 = vpack.c.b16 %v2332, %v2331
        %v2344 = vpack.c.b16 %v2334, %v2333
        %v2345 = vpack.c.b16 %v2336, %v2335
        %v2346 = vpack.c.b16 %v2338, %v2337
        %2355 = vmatprep.subr.bf16.mxu0 0
        %2356 = vmatpush1.bf16.msra.mxu0 %v2346
        %2357 = vmatprep.subr.bf16.mxu0 0
        %2358 = vmatpush1.bf16.msra.mxu0 %v2345
        %2359 = vmatprep.subr.bf16.mxu0 0
        %2360 = vmatpush1.bf16.msra.mxu0 %v2344
        %2361 = vmatprep.subr.bf16.mxu0 0
        %2362 = vmatpush1.bf16.msra.mxu0 %v2343
        %2363 = vmatprep.subr.bf16.mxu0 0
        %2364 = vmatpush1.bf16.msra.mxu0 %v2342
        %2365 = vmatprep.subr.bf16.mxu0 0
        %2366 = vmatpush1.bf16.msra.mxu0 %v2341
        %2367 = vmatprep.subr.bf16.mxu0 0
        %2368 = vmatpush1.bf16.msra.mxu0 %v2340
        %2369 = vmatprep.subr.bf16.mxu0 0
        %2370 = vmatpush1.bf16.msra.mxu0 %v2339
        %2371 = vmatprep.subr.bf16.mxu0 0
        %2372 = vmatpush2.bf16.msra.mxu0 0
        %2373 = vmatprep.subr.bf16.mxu0 0
        %2374 = vmatpush2.bf16.msra.mxu0 0
        %2375 = vmatprep.subr.bf16.mxu0 0
        %2376 = vmatpush2.bf16.msra.mxu0 0
        %2377 = vmatprep.subr.bf16.mxu0 0
        %2378 = vmatpush2.bf16.msra.mxu0 0
        %2379 = vmatprep.subr.bf16.mxu0 0
        %2380 = vmatpush2.bf16.msra.mxu0 0
        %2381 = vmatprep.subr.bf16.mxu0 0
        %2382 = vmatpush2.bf16.msra.mxu0 0
        %2383 = vmatprep.subr.bf16.mxu0 0
        %2384 = vmatpush2.bf16.msra.mxu0 0
        %2385 = vmatprep.subr.bf16.mxu0 0
        %2386 = vmatpush2.bf16.msra.mxu0 0
        %2387 = vmatprep.mubr.bf16.mxu0 0
        %2388 = vmatmul.mubr.bf16.gmra.mxu0 %v2195
        %v2389 = vpop.f32.mrf.mxu0
        %v2390 = vadd.f32 0.0, %v2389
        %v2391 = vpop.f32.mrf.mxu0
        %v2392 = vpop.f32.mrf.mxu0
        %v2393 = vadd.f32 0.0, %v2392
        %v2394 = vpop.f32.mrf.mxu0
        %2395 = vmatprep.mubr.bf16.mxu0 0
        %2396 = vmatmul.mubr.bf16.gmra.mxu0 %v2204
        %v2397 = vpop.f32.mrf.mxu0
        %v2398 = vadd.f32 0.0, %v2397
        %v2399 = vpop.f32.mrf.mxu0
        %v2400 = vpop.f32.mrf.mxu0
        %v2401 = vadd.f32 0.0, %v2400
        %v2402 = vpop.f32.mrf.mxu0
        %2403 = vmatprep.mubr.bf16.mxu0 0
        %2404 = vmatmul.mubr.bf16.gmra.mxu0 %v2213
        %v2405 = vpop.f32.mrf.mxu0
        %v2406 = vadd.f32 0.0, %v2405
        %v2407 = vpop.f32.mrf.mxu0
        %v2408 = vpop.f32.mrf.mxu0
        %v2409 = vadd.f32 0.0, %v2408
        %v2410 = vpop.f32.mrf.mxu0
        %2411 = vmatprep.mubr.bf16.mxu0 0
        %2412 = vmatmul.mubr.bf16.gmra.mxu0 %v2222
        %v2413 = vpop.f32.mrf.mxu0
        %v2414 = vadd.f32 0.0, %v2413
        %v2415 = vpop.f32.mrf.mxu0
        %v2416 = vpop.f32.mrf.mxu0
        %v2417 = vadd.f32 0.0, %v2416
        %v2418 = vpop.f32.mrf.mxu0
        %2419 = vmatprep.mubr.bf16.mxu0 0
        %2420 = vmatmul.mubr.bf16.gmra.mxu0 %v2231
        %v2421 = vpop.f32.mrf.mxu0
        %v2422 = vadd.f32 0.0, %v2421
        %v2423 = vpop.f32.mrf.mxu0
        %v2424 = vpop.f32.mrf.mxu0
        %v2425 = vadd.f32 0.0, %v2424
        %v2426 = vpop.f32.mrf.mxu0
        %2427 = vmatprep.mubr.bf16.mxu0 0
        %2428 = vmatmul.mubr.bf16.gmra.mxu0 %v2240
        %v2429 = vpop.f32.mrf.mxu0
        %v2430 = vadd.f32 0.0, %v2429
        %v2431 = vpop.f32.mrf.mxu0
        %v2432 = vpop.f32.mrf.mxu0
        %v2433 = vadd.f32 0.0, %v2432
        %v2434 = vpop.f32.mrf.mxu0
        %2435 = vmatprep.mubr.bf16.mxu0 0
        %2436 = vmatmul.mubr.bf16.gmra.mxu0 %v2249
        %v2437 = vpop.f32.mrf.mxu0
        %v2438 = vadd.f32 0.0, %v2437
        %v2439 = vpop.f32.mrf.mxu0
        %v2440 = vpop.f32.mrf.mxu0
        %v2441 = vadd.f32 0.0, %v2440
        %v2442 = vpop.f32.mrf.mxu0
        %2443 = vmatprep.mubr.bf16.mxu0 0
        %2444 = vmatmul.mubr.bf16.gmra.mxu0 %v2258
        %v2445 = vpop.f32.mrf.mxu0
        %v2446 = vadd.f32 0.0, %v2445
        %v2447 = vpop.f32.mrf.mxu0
        %v2448 = vpop.f32.mrf.mxu0
        %v2449 = vadd.f32 0.0, %v2448
        %v2450 = vpop.f32.mrf.mxu0
        %2451 = vmatprep.mubr.bf16.mxu0 0
        %2452 = vmatmul.mubr.bf16.gmra.mxu0 %v2267
        %v2453 = vpop.f32.mrf.mxu0
        %v2454 = vadd.f32 0.0, %v2453
        %v2455 = vpop.f32.mrf.mxu0
        %v2456 = vpop.f32.mrf.mxu0
        %v2457 = vadd.f32 0.0, %v2456
        %v2458 = vpop.f32.mrf.mxu0
        %2459 = vmatprep.mubr.bf16.mxu0 0
        %2460 = vmatmul.mubr.bf16.gmra.mxu0 %v2276
        %v2461 = vpop.f32.mrf.mxu0
        %v2462 = vadd.f32 0.0, %v2461
        %v2463 = vpop.f32.mrf.mxu0
        %v2464 = vpop.f32.mrf.mxu0
        %v2465 = vadd.f32 0.0, %v2464
        %v2466 = vpop.f32.mrf.mxu0
        %2467 = vmatprep.mubr.bf16.mxu0 0
        %2468 = vmatmul.mubr.bf16.gmra.mxu0 %v2285
        %v2469 = vpop.f32.mrf.mxu0
        %v2470 = vadd.f32 0.0, %v2469
        %v2471 = vpop.f32.mrf.mxu0
        %v2472 = vpop.f32.mrf.mxu0
        %v2473 = vadd.f32 0.0, %v2472
        %v2474 = vpop.f32.mrf.mxu0
        %2475 = vmatprep.mubr.bf16.mxu0 0
        %2476 = vmatmul.mubr.bf16.gmra.mxu0 %v2294
        %v2477 = vpop.f32.mrf.mxu0
        %v2478 = vadd.f32 0.0, %v2477
        %v2479 = vpop.f32.mrf.mxu0
        %v2480 = vpop.f32.mrf.mxu0
        %v2481 = vadd.f32 0.0, %v2480
        %v2482 = vpop.f32.mrf.mxu0
        %2483 = vdwg.mxu0
        %v2484 = vadd.f32 %v2050, %v2390
        %v2485 = vadd.f32 %v2051, %v2393
        %v2486 = vadd.f32 %v2052, %v2398
        %v2487 = vadd.f32 %v2053, %v2401
        %v2488 = vadd.f32 %v2054, %v2406
        %v2489 = vadd.f32 %v2055, %v2409
        %v2490 = vadd.f32 %v2056, %v2414
        %v2491 = vadd.f32 %v2057, %v2417
        %v2492 = vadd.f32 %v2058, %v2422
        %v2493 = vadd.f32 %v2059, %v2425
        %v2494 = vadd.f32 %v2060, %v2430
        %v2495 = vadd.f32 %v2061, %v2433
        %v2496 = vadd.f32 %v2062, %v2438
        %v2497 = vadd.f32 %v2063, %v2441
        %v2498 = vadd.f32 %v2064, %v2446
        %v2499 = vadd.f32 %v2065, %v2449
        %v2500 = vadd.f32 %v2066, %v2454
        %v2501 = vadd.f32 %v2067, %v2457
        %v2502 = vadd.f32 %v2068, %v2462
        %v2503 = vadd.f32 %v2069, %v2465
        %v2504 = vadd.f32 %v2070, %v2470
        %v2505 = vadd.f32 %v2071, %v2473
        %v2506 = vadd.f32 %v2072, %v2478
        %v2507 = vadd.f32 %v2073, %v2481
        %s2508 = scalar_lea.vmem [#allocation8], 256
        %v2509 = vld [vmem:[%s2508] sm:$0xf]
        %v2510 = vld [vmem:[%s2508 + $0x4] sm:$0xf]
        %v2511 = vld [vmem:[%s2508 + $0x8] sm:$0xf]
        %v2512 = vld [vmem:[%s2508 + $0xc] sm:$0xf]
        %v2513 = vld [vmem:[%s2508 + $0x10] sm:$0xf]
        %v2514 = vld [vmem:[%s2508 + $0x14] sm:$0xf]
        %v2515 = vld [vmem:[%s2508 + $0x18] sm:$0xf]
        %v2516 = vld [vmem:[%s2508 + $0x1c] sm:$0xf]
        %v2517 = vld [vmem:[%s2508 + $0x20] sm:$0xf]
        %v2518 = vld [vmem:[%s2508 + $0x24] sm:$0xf]
        %v2519 = vld [vmem:[%s2508 + $0x28] sm:$0xf]
        %v2520 = vld [vmem:[%s2508 + $0x2c] sm:$0xf]
        %v2521 = vld [vmem:[%s2508 + $0x30] sm:$0xf]
        %v2522 = vld [vmem:[%s2508 + $0x34] sm:$0xf]
        %v2523 = vld [vmem:[%s2508 + $0x38] sm:$0xf]
        %v2524 = vld [vmem:[%s2508 + $0x3c] sm:$0xf]
        %v2525 = vpack.c.b16 %v2143, %v2142
        %v2526 = vpack.c.b16 %v2145, %v2144
        %v2527 = vpack.c.b16 %v2147, %v2146
        %v2528 = vpack.c.b16 %v2149, %v2148
        %v2529 = vpack.c.b16 %v2151, %v2150
        %v2530 = vpack.c.b16 %v2153, %v2152
        %v2531 = vpack.c.b16 %v2155, %v2154
        %v2532 = vpack.c.b16 %v2157, %v2156
        %v2533 = vpack.c.b16 %v2159, %v2158
        %v2534 = vpack.c.b16 %v2161, %v2160
        %v2535 = vpack.c.b16 %v2163, %v2162
        %v2536 = vpack.c.b16 %v2165, %v2164
        %v2565 = vunpack.c.l.b16 %v2509
        %v2566 = vunpack.c.l.b16 %v2510
        %v2567 = vunpack.c.l.b16 %v2511
        %v2568 = vunpack.c.l.b16 %v2512
        %v2569 = vunpack.c.l.b16 %v2513
        %v2570 = vunpack.c.l.b16 %v2514
        %v2571 = vunpack.c.l.b16 %v2515
        %v2572 = vunpack.c.l.b16 %v2516
        %v2573 = vunpack.c.l.b16 %v2517
        %v2574 = vunpack.c.l.b16 %v2518
        %v2575 = vunpack.c.l.b16 %v2519
        %v2576 = vunpack.c.l.b16 %v2520
        %v2577 = vunpack.c.l.b16 %v2521
        %v2578 = vunpack.c.l.b16 %v2522
        %v2579 = vunpack.c.l.b16 %v2523
        %v2580 = vunpack.c.l.b16 %v2524
        %v2581 = vpack.c.b16 %v2566, %v2565
        %v2582 = vpack.c.b16 %v2568, %v2567
        %v2583 = vpack.c.b16 %v2570, %v2569
        %v2584 = vpack.c.b16 %v2572, %v2571
        %v2585 = vpack.c.b16 %v2574, %v2573
        %v2586 = vpack.c.b16 %v2576, %v2575
        %v2587 = vpack.c.b16 %v2578, %v2577
        %v2588 = vpack.c.b16 %v2580, %v2579
        %2597 = vmatprep.subr.bf16.mxu0 0
        %2598 = vmatpush1.bf16.msra.mxu0 %v2588
        %2599 = vmatprep.subr.bf16.mxu0 0
        %2600 = vmatpush1.bf16.msra.mxu0 %v2587
        %2601 = vmatprep.subr.bf16.mxu0 0
        %2602 = vmatpush1.bf16.msra.mxu0 %v2586
        %2603 = vmatprep.subr.bf16.mxu0 0
        %2604 = vmatpush1.bf16.msra.mxu0 %v2585
        %2605 = vmatprep.subr.bf16.mxu0 0
        %2606 = vmatpush1.bf16.msra.mxu0 %v2584
        %2607 = vmatprep.subr.bf16.mxu0 0
        %2608 = vmatpush1.bf16.msra.mxu0 %v2583
        %2609 = vmatprep.subr.bf16.mxu0 0
        %2610 = vmatpush1.bf16.msra.mxu0 %v2582
        %2611 = vmatprep.subr.bf16.mxu0 0
        %2612 = vmatpush1.bf16.msra.mxu0 %v2581
        %2613 = vmatprep.subr.bf16.mxu0 0
        %2614 = vmatpush2.bf16.msra.mxu0 0
        %2615 = vmatprep.subr.bf16.mxu0 0
        %2616 = vmatpush2.bf16.msra.mxu0 0
        %2617 = vmatprep.subr.bf16.mxu0 0
        %2618 = vmatpush2.bf16.msra.mxu0 0
        %2619 = vmatprep.subr.bf16.mxu0 0
        %2620 = vmatpush2.bf16.msra.mxu0 0
        %2621 = vmatprep.subr.bf16.mxu0 0
        %2622 = vmatpush2.bf16.msra.mxu0 0
        %2623 = vmatprep.subr.bf16.mxu0 0
        %2624 = vmatpush2.bf16.msra.mxu0 0
        %2625 = vmatprep.subr.bf16.mxu0 0
        %2626 = vmatpush2.bf16.msra.mxu0 0
        %2627 = vmatprep.subr.bf16.mxu0 0
        %2628 = vmatpush2.bf16.msra.mxu0 0
        %2629 = vmatprep.mubr.bf16.mxu0 0
        %2630 = vmatmul.mubr.bf16.gmra.mxu0 %v2525
        %v2631 = vpop.f32.mrf.mxu0
        %v2632 = vadd.f32 0.0, %v2631
        %v2633 = vpop.f32.mrf.mxu0
        %v2634 = vpop.f32.mrf.mxu0
        %v2635 = vadd.f32 0.0, %v2634
        %v2636 = vpop.f32.mrf.mxu0
        %2637 = vmatprep.mubr.bf16.mxu0 0
        %2638 = vmatmul.mubr.bf16.gmra.mxu0 %v2526
        %v2639 = vpop.f32.mrf.mxu0
        %v2640 = vadd.f32 0.0, %v2639
        %v2641 = vpop.f32.mrf.mxu0
        %v2642 = vpop.f32.mrf.mxu0
        %v2643 = vadd.f32 0.0, %v2642
        %v2644 = vpop.f32.mrf.mxu0
        %2645 = vmatprep.mubr.bf16.mxu0 0
        %2646 = vmatmul.mubr.bf16.gmra.mxu0 %v2527
        %v2647 = vpop.f32.mrf.mxu0
        %v2648 = vadd.f32 0.0, %v2647
        %v2649 = vpop.f32.mrf.mxu0
        %v2650 = vpop.f32.mrf.mxu0
        %v2651 = vadd.f32 0.0, %v2650
        %v2652 = vpop.f32.mrf.mxu0
        %2653 = vmatprep.mubr.bf16.mxu0 0
        %2654 = vmatmul.mubr.bf16.gmra.mxu0 %v2528
        %v2655 = vpop.f32.mrf.mxu0
        %v2656 = vadd.f32 0.0, %v2655
        %v2657 = vpop.f32.mrf.mxu0
        %v2658 = vpop.f32.mrf.mxu0
        %v2659 = vadd.f32 0.0, %v2658
        %v2660 = vpop.f32.mrf.mxu0
        %2661 = vmatprep.mubr.bf16.mxu0 0
        %2662 = vmatmul.mubr.bf16.gmra.mxu0 %v2529
        %v2663 = vpop.f32.mrf.mxu0
        %v2664 = vadd.f32 0.0, %v2663
        %v2665 = vpop.f32.mrf.mxu0
        %v2666 = vpop.f32.mrf.mxu0
        %v2667 = vadd.f32 0.0, %v2666
        %v2668 = vpop.f32.mrf.mxu0
        %2669 = vmatprep.mubr.bf16.mxu0 0
        %2670 = vmatmul.mubr.bf16.gmra.mxu0 %v2530
        %v2671 = vpop.f32.mrf.mxu0
        %v2672 = vadd.f32 0.0, %v2671
        %v2673 = vpop.f32.mrf.mxu0
        %v2674 = vpop.f32.mrf.mxu0
        %v2675 = vadd.f32 0.0, %v2674
        %v2676 = vpop.f32.mrf.mxu0
        %2677 = vmatprep.mubr.bf16.mxu0 0
        %2678 = vmatmul.mubr.bf16.gmra.mxu0 %v2531
        %v2679 = vpop.f32.mrf.mxu0
        %v2680 = vadd.f32 0.0, %v2679
        %v2681 = vpop.f32.mrf.mxu0
        %v2682 = vpop.f32.mrf.mxu0
        %v2683 = vadd.f32 0.0, %v2682
        %v2684 = vpop.f32.mrf.mxu0
        %2685 = vmatprep.mubr.bf16.mxu0 0
        %2686 = vmatmul.mubr.bf16.gmra.mxu0 %v2532
        %v2687 = vpop.f32.mrf.mxu0
        %v2688 = vadd.f32 0.0, %v2687
        %v2689 = vpop.f32.mrf.mxu0
        %v2690 = vpop.f32.mrf.mxu0
        %v2691 = vadd.f32 0.0, %v2690
        %v2692 = vpop.f32.mrf.mxu0
        %2693 = vmatprep.mubr.bf16.mxu0 0
        %2694 = vmatmul.mubr.bf16.gmra.mxu0 %v2533
        %v2695 = vpop.f32.mrf.mxu0
        %v2696 = vadd.f32 0.0, %v2695
        %v2697 = vpop.f32.mrf.mxu0
        %v2698 = vpop.f32.mrf.mxu0
        %v2699 = vadd.f32 0.0, %v2698
        %v2700 = vpop.f32.mrf.mxu0
        %2701 = vmatprep.mubr.bf16.mxu0 0
        %2702 = vmatmul.mubr.bf16.gmra.mxu0 %v2534
        %v2703 = vpop.f32.mrf.mxu0
        %v2704 = vadd.f32 0.0, %v2703
        %v2705 = vpop.f32.mrf.mxu0
        %v2706 = vpop.f32.mrf.mxu0
        %v2707 = vadd.f32 0.0, %v2706
        %v2708 = vpop.f32.mrf.mxu0
        %2709 = vmatprep.mubr.bf16.mxu0 0
        %2710 = vmatmul.mubr.bf16.gmra.mxu0 %v2535
        %v2711 = vpop.f32.mrf.mxu0
        %v2712 = vadd.f32 0.0, %v2711
        %v2713 = vpop.f32.mrf.mxu0
        %v2714 = vpop.f32.mrf.mxu0
        %v2715 = vadd.f32 0.0, %v2714
        %v2716 = vpop.f32.mrf.mxu0
        %2717 = vmatprep.mubr.bf16.mxu0 0
        %2718 = vmatmul.mubr.bf16.gmra.mxu0 %v2536
        %v2719 = vpop.f32.mrf.mxu0
        %v2720 = vadd.f32 0.0, %v2719
        %v2721 = vpop.f32.mrf.mxu0
        %v2722 = vpop.f32.mrf.mxu0
        %v2723 = vadd.f32 0.0, %v2722
        %v2724 = vpop.f32.mrf.mxu0
        %2725 = vdwg.mxu0
        %v2726 = vadd.f32 %v2484, %v2632
        %v2727 = vadd.f32 %v2485, %v2635
        %v2728 = vadd.f32 %v2486, %v2640
        %v2729 = vadd.f32 %v2487, %v2643
        %v2730 = vadd.f32 %v2488, %v2648
        %v2731 = vadd.f32 %v2489, %v2651
        %v2732 = vadd.f32 %v2490, %v2656
        %v2733 = vadd.f32 %v2491, %v2659
        %v2734 = vadd.f32 %v2492, %v2664
        %v2735 = vadd.f32 %v2493, %v2667
        %v2736 = vadd.f32 %v2494, %v2672
        %v2737 = vadd.f32 %v2495, %v2675
        %v2738 = vadd.f32 %v2496, %v2680
        %v2739 = vadd.f32 %v2497, %v2683
        %v2740 = vadd.f32 %v2498, %v2688
        %v2741 = vadd.f32 %v2499, %v2691
        %v2742 = vadd.f32 %v2500, %v2696
        %v2743 = vadd.f32 %v2501, %v2699
        %v2744 = vadd.f32 %v2502, %v2704
        %v2745 = vadd.f32 %v2503, %v2707
        %v2746 = vadd.f32 %v2504, %v2712
        %v2747 = vadd.f32 %v2505, %v2715
        %v2748 = vadd.f32 %v2506, %v2720
        %v2749 = vadd.f32 %v2507, %v2723
        %v2750 = vld [vmem:[#allocation2 + $0x10] sm:$0xf]
        %v2751 = vld [vmem:[#allocation2 + $0x14] sm:$0xf]
        %v2752 = vld [vmem:[#allocation2 + $0x18] sm:$0xf]
        %v2753 = vld [vmem:[#allocation2 + $0x1c] sm:$0xf]
        %v2754 = vld [vmem:[#allocation2 + $0x20] sm:$0xf]
        %v2755 = vld [vmem:[#allocation2 + $0x24] sm:$0xf]
        %v2756 = vld [vmem:[#allocation2 + $0x28] sm:$0xf]
        %v2757 = vld [vmem:[#allocation2 + $0x2c] sm:$0xf]
        %v2758 = vld [vmem:[#allocation2 + $0x30] sm:$0xf]
        %v2759 = vld [vmem:[#allocation2 + $0x34] sm:$0xf]
        %v2760 = vld [vmem:[#allocation2 + $0x38] sm:$0xf]
        %v2761 = vld [vmem:[#allocation2 + $0x3c] sm:$0xf]
        %v2762 = vld [vmem:[#allocation2 + $0x40] sm:$0xf]
        %v2763 = vld [vmem:[#allocation2 + $0x44] sm:$0xf]
        %v2764 = vld [vmem:[#allocation2 + $0x48] sm:$0xf]
        %v2765 = vld [vmem:[#allocation2 + $0x4c] sm:$0xf]
        %v2766 = vld [vmem:[#allocation2 + $0x50] sm:$0xf]
        %v2767 = vld [vmem:[#allocation2 + $0x54] sm:$0xf]
        %v2768 = vld [vmem:[#allocation2 + $0x58] sm:$0xf]
        %v2769 = vld [vmem:[#allocation2 + $0x5c] sm:$0xf]
        %v2770 = vld [vmem:[#allocation2 + $0x60] sm:$0xf]
        %v2771 = vld [vmem:[#allocation2 + $0x64] sm:$0xf]
        %v2772 = vld [vmem:[#allocation2 + $0x68] sm:$0xf]
        %v2773 = vld [vmem:[#allocation2 + $0x6c] sm:$0xf]
        %v2774 = vld [vmem:[#allocation2 + $0x70] sm:$0x1]
        %s2775 = scalar_lea.vmem [#allocation8], 320
        %v2776 = vld [vmem:[%s2775] sm:$0xf]
        %v2777 = vld [vmem:[%s2775 + $0x4] sm:$0xf]
        %v2778 = vld [vmem:[%s2775 + $0x8] sm:$0xf]
        %v2779 = vld [vmem:[%s2775 + $0xc] sm:$0xf]
        %v2780 = vld [vmem:[%s2775 + $0x10] sm:$0xf]
        %v2781 = vld [vmem:[%s2775 + $0x14] sm:$0xf]
        %v2782 = vld [vmem:[%s2775 + $0x18] sm:$0xf]
        %v2783 = vld [vmem:[%s2775 + $0x1c] sm:$0xf]
        %v2784 = vld [vmem:[%s2775 + $0x20] sm:$0xf]
        %v2785 = vld [vmem:[%s2775 + $0x24] sm:$0xf]
        %v2786 = vld [vmem:[%s2775 + $0x28] sm:$0xf]
        %v2787 = vld [vmem:[%s2775 + $0x2c] sm:$0xf]
        %v2788 = vld [vmem:[%s2775 + $0x30] sm:$0xf]
        %v2789 = vld [vmem:[%s2775 + $0x34] sm:$0xf]
        %v2790 = vld [vmem:[%s2775 + $0x38] sm:$0xf]
        %v2791 = vld [vmem:[%s2775 + $0x3c] sm:$0xf]
        %v2817 = vunpack.c.l.b16 %v2750
        %v2818 = vunpack.c.l.b16 %v2751
        %v2819 = vunpack.c.l.b16 %v2752
        %v2820 = vunpack.c.l.b16 %v2753
        %v2821 = vunpack.c.l.b16 %v2754
        %v2822 = vunpack.c.l.b16 %v2755
        %v2823 = vunpack.c.l.b16 %v2756
        %v2824 = vunpack.c.l.b16 %v2757
        %v2825 = vunpack.c.l.b16 %v2758
        %v2826 = vunpack.c.l.b16 %v2759
        %v2827 = vunpack.c.l.b16 %v2760
        %v2828 = vunpack.c.l.b16 %v2761
        %v2829 = vunpack.c.l.b16 %v2762
        %v2830 = vunpack.c.l.b16 %v2763
        %v2831 = vunpack.c.l.b16 %v2764
        %v2832 = vunpack.c.l.b16 %v2765
        %v2833 = vunpack.c.l.b16 %v2766
        %v2834 = vunpack.c.l.b16 %v2767
        %v2835 = vunpack.c.l.b16 %v2768
        %v2836 = vunpack.c.l.b16 %v2769
        %v2837 = vunpack.c.l.b16 %v2770
        %v2838 = vunpack.c.l.b16 %v2771
        %v2839 = vunpack.c.l.b16 %v2772
        %v2840 = vunpack.c.l.b16 %v2773
        %v2841 = vunpack.c.l.b16 %v2774
        %v2842 = vpack.c.b16 %v2818, %v2817
        %v2843 = vpack.c.b16 %v2820, %v2819
        %v2844 = vpack.c.b16 %v2822, %v2821
        %v2845 = vpack.c.b16 %v2824, %v2823
        %v2846 = vpack.c.b16 %v2826, %v2825
        %v2847 = vpack.c.b16 %v2828, %v2827
        %v2848 = vpack.c.b16 %v2830, %v2829
        %v2849 = vpack.c.b16 %v2832, %v2831
        %v2850 = vpack.c.b16 %v2834, %v2833
        %v2851 = vpack.c.b16 %v2836, %v2835
        %v2852 = vpack.c.b16 %v2838, %v2837
        %v2853 = vpack.c.b16 %v2840, %v2839
        %v2854 = vpack.c.b16 %v2841, %v2841
        %v2856 = vshrl.u32 %v2842, 16
        %v2858 = vshll.u32 %v2842, 16
        %v2860 = vrot.slane %v2858, 1
        %v2861 = vor.u32 %v2856, %v2860
        %v2863 = vshll.u32 %v2843, 16
        %v2865 = vrot.slane %v2863, 1
        %v2866 = vsel %vm1760, %v2861, %v2865
        %v2867 = vshrl.u32 %v2843, 16
        %v2869 = vor.u32 %v2867, %v2865
        %v2871 = vshll.u32 %v2844, 16
        %v2873 = vrot.slane %v2871, 1
        %v2874 = vsel %vm1760, %v2869, %v2873
        %v2875 = vshrl.u32 %v2844, 16
        %v2877 = vor.u32 %v2875, %v2873
        %v2879 = vshll.u32 %v2845, 16
        %v2881 = vrot.slane %v2879, 1
        %v2882 = vsel %vm1760, %v2877, %v2881
        %v2883 = vshrl.u32 %v2845, 16
        %v2885 = vor.u32 %v2883, %v2881
        %v2887 = vshll.u32 %v2846, 16
        %v2889 = vrot.slane %v2887, 1
        %v2890 = vsel %vm1760, %v2885, %v2889
        %v2891 = vshrl.u32 %v2846, 16
        %v2893 = vor.u32 %v2891, %v2889
        %v2895 = vshll.u32 %v2847, 16
        %v2897 = vrot.slane %v2895, 1
        %v2898 = vsel %vm1760, %v2893, %v2897
        %v2899 = vshrl.u32 %v2847, 16
        %v2901 = vor.u32 %v2899, %v2897
        %v2903 = vshll.u32 %v2848, 16
        %v2905 = vrot.slane %v2903, 1
        %v2906 = vsel %vm1760, %v2901, %v2905
        %v2907 = vshrl.u32 %v2848, 16
        %v2909 = vor.u32 %v2907, %v2905
        %v2911 = vshll.u32 %v2849, 16
        %v2913 = vrot.slane %v2911, 1
        %v2914 = vsel %vm1760, %v2909, %v2913
        %v2915 = vshrl.u32 %v2849, 16
        %v2917 = vor.u32 %v2915, %v2913
        %v2919 = vshll.u32 %v2850, 16
        %v2921 = vrot.slane %v2919, 1
        %v2922 = vsel %vm1760, %v2917, %v2921
        %v2923 = vshrl.u32 %v2850, 16
        %v2925 = vor.u32 %v2923, %v2921
        %v2927 = vshll.u32 %v2851, 16
        %v2929 = vrot.slane %v2927, 1
        %v2930 = vsel %vm1760, %v2925, %v2929
        %v2931 = vshrl.u32 %v2851, 16
        %v2933 = vor.u32 %v2931, %v2929
        %v2935 = vshll.u32 %v2852, 16
        %v2937 = vrot.slane %v2935, 1
        %v2938 = vsel %vm1760, %v2933, %v2937
        %v2939 = vshrl.u32 %v2852, 16
        %v2941 = vor.u32 %v2939, %v2937
        %v2943 = vshll.u32 %v2853, 16
        %v2945 = vrot.slane %v2943, 1
        %v2946 = vsel %vm1760, %v2941, %v2945
        %v2947 = vshrl.u32 %v2853, 16
        %v2949 = vor.u32 %v2947, %v2945
        %v2951 = vshll.u32 %v2854, 16
        %v2953 = vrot.slane %v2951, 1
        %v2954 = vsel %vm1760, %v2949, %v2953
        %v2983 = vunpack.c.l.b16 %v2776
        %v2984 = vunpack.c.l.b16 %v2777
        %v2985 = vunpack.c.l.b16 %v2778
        %v2986 = vunpack.c.l.b16 %v2779
        %v2987 = vunpack.c.l.b16 %v2780
        %v2988 = vunpack.c.l.b16 %v2781
        %v2989 = vunpack.c.l.b16 %v2782
        %v2990 = vunpack.c.l.b16 %v2783
        %v2991 = vunpack.c.l.b16 %v2784
        %v2992 = vunpack.c.l.b16 %v2785
        %v2993 = vunpack.c.l.b16 %v2786
        %v2994 = vunpack.c.l.b16 %v2787
        %v2995 = vunpack.c.l.b16 %v2788
        %v2996 = vunpack.c.l.b16 %v2789
        %v2997 = vunpack.c.l.b16 %v2790
        %v2998 = vunpack.c.l.b16 %v2791
        %v2999 = vpack.c.b16 %v2984, %v2983
        %v3000 = vpack.c.b16 %v2986, %v2985
        %v3001 = vpack.c.b16 %v2988, %v2987
        %v3002 = vpack.c.b16 %v2990, %v2989
        %v3003 = vpack.c.b16 %v2992, %v2991
        %v3004 = vpack.c.b16 %v2994, %v2993
        %v3005 = vpack.c.b16 %v2996, %v2995
        %v3006 = vpack.c.b16 %v2998, %v2997
        %3015 = vmatprep.subr.bf16.mxu0 0
        %3016 = vmatpush1.bf16.msra.mxu0 %v3006
        %3017 = vmatprep.subr.bf16.mxu0 0
        %3018 = vmatpush1.bf16.msra.mxu0 %v3005
        %3019 = vmatprep.subr.bf16.mxu0 0
        %3020 = vmatpush1.bf16.msra.mxu0 %v3004
        %3021 = vmatprep.subr.bf16.mxu0 0
        %3022 = vmatpush1.bf16.msra.mxu0 %v3003
        %3023 = vmatprep.subr.bf16.mxu0 0
        %3024 = vmatpush1.bf16.msra.mxu0 %v3002
        %3025 = vmatprep.subr.bf16.mxu0 0
        %3026 = vmatpush1.bf16.msra.mxu0 %v3001
        %3027 = vmatprep.subr.bf16.mxu0 0
        %3028 = vmatpush1.bf16.msra.mxu0 %v3000
        %3029 = vmatprep.subr.bf16.mxu0 0
        %3030 = vmatpush1.bf16.msra.mxu0 %v2999
        %3031 = vmatprep.subr.bf16.mxu0 0
        %3032 = vmatpush2.bf16.msra.mxu0 0
        %3033 = vmatprep.subr.bf16.mxu0 0
        %3034 = vmatpush2.bf16.msra.mxu0 0
        %3035 = vmatprep.subr.bf16.mxu0 0
        %3036 = vmatpush2.bf16.msra.mxu0 0
        %3037 = vmatprep.subr.bf16.mxu0 0
        %3038 = vmatpush2.bf16.msra.mxu0 0
        %3039 = vmatprep.subr.bf16.mxu0 0
        %3040 = vmatpush2.bf16.msra.mxu0 0
        %3041 = vmatprep.subr.bf16.mxu0 0
        %3042 = vmatpush2.bf16.msra.mxu0 0
        %3043 = vmatprep.subr.bf16.mxu0 0
        %3044 = vmatpush2.bf16.msra.mxu0 0
        %3045 = vmatprep.subr.bf16.mxu0 0
        %3046 = vmatpush2.bf16.msra.mxu0 0
        %3047 = vmatprep.mubr.bf16.mxu0 0
        %3048 = vmatmul.mubr.bf16.gmra.mxu0 %v2866
        %v3049 = vpop.f32.mrf.mxu0
        %v3050 = vadd.f32 0.0, %v3049
        %v3051 = vpop.f32.mrf.mxu0
        %v3052 = vpop.f32.mrf.mxu0
        %v3053 = vadd.f32 0.0, %v3052
        %v3054 = vpop.f32.mrf.mxu0
        %3055 = vmatprep.mubr.bf16.mxu0 0
        %3056 = vmatmul.mubr.bf16.gmra.mxu0 %v2874
        %v3057 = vpop.f32.mrf.mxu0
        %v3058 = vadd.f32 0.0, %v3057
        %v3059 = vpop.f32.mrf.mxu0
        %v3060 = vpop.f32.mrf.mxu0
        %v3061 = vadd.f32 0.0, %v3060
        %v3062 = vpop.f32.mrf.mxu0
        %3063 = vmatprep.mubr.bf16.mxu0 0
        %3064 = vmatmul.mubr.bf16.gmra.mxu0 %v2882
        %v3065 = vpop.f32.mrf.mxu0
        %v3066 = vadd.f32 0.0, %v3065
        %v3067 = vpop.f32.mrf.mxu0
        %v3068 = vpop.f32.mrf.mxu0
        %v3069 = vadd.f32 0.0, %v3068
        %v3070 = vpop.f32.mrf.mxu0
        %3071 = vmatprep.mubr.bf16.mxu0 0
        %3072 = vmatmul.mubr.bf16.gmra.mxu0 %v2890
        %v3073 = vpop.f32.mrf.mxu0
        %v3074 = vadd.f32 0.0, %v3073
        %v3075 = vpop.f32.mrf.mxu0
        %v3076 = vpop.f32.mrf.mxu0
        %v3077 = vadd.f32 0.0, %v3076
        %v3078 = vpop.f32.mrf.mxu0
        %3079 = vmatprep.mubr.bf16.mxu0 0
        %3080 = vmatmul.mubr.bf16.gmra.mxu0 %v2898
        %v3081 = vpop.f32.mrf.mxu0
        %v3082 = vadd.f32 0.0, %v3081
        %v3083 = vpop.f32.mrf.mxu0
        %v3084 = vpop.f32.mrf.mxu0
        %v3085 = vadd.f32 0.0, %v3084
        %v3086 = vpop.f32.mrf.mxu0
        %3087 = vmatprep.mubr.bf16.mxu0 0
        %3088 = vmatmul.mubr.bf16.gmra.mxu0 %v2906
        %v3089 = vpop.f32.mrf.mxu0
        %v3090 = vadd.f32 0.0, %v3089
        %v3091 = vpop.f32.mrf.mxu0
        %v3092 = vpop.f32.mrf.mxu0
        %v3093 = vadd.f32 0.0, %v3092
        %v3094 = vpop.f32.mrf.mxu0
        %3095 = vmatprep.mubr.bf16.mxu0 0
        %3096 = vmatmul.mubr.bf16.gmra.mxu0 %v2914
        %v3097 = vpop.f32.mrf.mxu0
        %v3098 = vadd.f32 0.0, %v3097
        %v3099 = vpop.f32.mrf.mxu0
        %v3100 = vpop.f32.mrf.mxu0
        %v3101 = vadd.f32 0.0, %v3100
        %v3102 = vpop.f32.mrf.mxu0
        %3103 = vmatprep.mubr.bf16.mxu0 0
        %3104 = vmatmul.mubr.bf16.gmra.mxu0 %v2922
        %v3105 = vpop.f32.mrf.mxu0
        %v3106 = vadd.f32 0.0, %v3105
        %v3107 = vpop.f32.mrf.mxu0
        %v3108 = vpop.f32.mrf.mxu0
        %v3109 = vadd.f32 0.0, %v3108
        %v3110 = vpop.f32.mrf.mxu0
        %3111 = vmatprep.mubr.bf16.mxu0 0
        %3112 = vmatmul.mubr.bf16.gmra.mxu0 %v2930
        %v3113 = vpop.f32.mrf.mxu0
        %v3114 = vadd.f32 0.0, %v3113
        %v3115 = vpop.f32.mrf.mxu0
        %v3116 = vpop.f32.mrf.mxu0
        %v3117 = vadd.f32 0.0, %v3116
        %v3118 = vpop.f32.mrf.mxu0
        %3119 = vmatprep.mubr.bf16.mxu0 0
        %3120 = vmatmul.mubr.bf16.gmra.mxu0 %v2938
        %v3121 = vpop.f32.mrf.mxu0
        %v3122 = vadd.f32 0.0, %v3121
        %v3123 = vpop.f32.mrf.mxu0
        %v3124 = vpop.f32.mrf.mxu0
        %v3125 = vadd.f32 0.0, %v3124
        %v3126 = vpop.f32.mrf.mxu0
        %3127 = vmatprep.mubr.bf16.mxu0 0
        %3128 = vmatmul.mubr.bf16.gmra.mxu0 %v2946
        %v3129 = vpop.f32.mrf.mxu0
        %v3130 = vadd.f32 0.0, %v3129
        %v3131 = vpop.f32.mrf.mxu0
        %v3132 = vpop.f32.mrf.mxu0
        %v3133 = vadd.f32 0.0, %v3132
        %v3134 = vpop.f32.mrf.mxu0
        %3135 = vmatprep.mubr.bf16.mxu0 0
        %3136 = vmatmul.mubr.bf16.gmra.mxu0 %v2954
        %v3137 = vpop.f32.mrf.mxu0
        %v3138 = vadd.f32 0.0, %v3137
        %v3139 = vpop.f32.mrf.mxu0
        %v3140 = vpop.f32.mrf.mxu0
        %v3141 = vadd.f32 0.0, %v3140
        %v3142 = vpop.f32.mrf.mxu0
        %3143 = vdwg.mxu0
        %v3144 = vadd.f32 %v2726, %v3050
        %v3145 = vadd.f32 %v2727, %v3053
        %v3146 = vadd.f32 %v2728, %v3058
        %v3147 = vadd.f32 %v2729, %v3061
        %v3148 = vadd.f32 %v2730, %v3066
        %v3149 = vadd.f32 %v2731, %v3069
        %v3150 = vadd.f32 %v2732, %v3074
        %v3151 = vadd.f32 %v2733, %v3077
        %v3152 = vadd.f32 %v2734, %v3082
        %v3153 = vadd.f32 %v2735, %v3085
        %v3154 = vadd.f32 %v2736, %v3090
        %v3155 = vadd.f32 %v2737, %v3093
        %v3156 = vadd.f32 %v2738, %v3098
        %v3157 = vadd.f32 %v2739, %v3101
        %v3158 = vadd.f32 %v2740, %v3106
        %v3159 = vadd.f32 %v2741, %v3109
        %v3160 = vadd.f32 %v2742, %v3114
        %v3161 = vadd.f32 %v2743, %v3117
        %v3162 = vadd.f32 %v2744, %v3122
        %v3163 = vadd.f32 %v2745, %v3125
        %v3164 = vadd.f32 %v2746, %v3130
        %v3165 = vadd.f32 %v2747, %v3133
        %v3166 = vadd.f32 %v2748, %v3138
        %v3167 = vadd.f32 %v2749, %v3141
        %v3168 = vld [vmem:[#allocation2 + $0x18] sm:$0x8]
        %v3169 = vld [vmem:[#allocation2 + $0x1c] sm:$0xf]
        %v3170 = vld [vmem:[#allocation2 + $0x20] sm:$0xf]
        %v3171 = vld [vmem:[#allocation2 + $0x24] sm:$0xf]
        %v3172 = vld [vmem:[#allocation2 + $0x28] sm:$0xf]
        %v3173 = vld [vmem:[#allocation2 + $0x2c] sm:$0xf]
        %v3174 = vld [vmem:[#allocation2 + $0x30] sm:$0xf]
        %v3175 = vld [vmem:[#allocation2 + $0x34] sm:$0xf]
        %v3176 = vld [vmem:[#allocation2 + $0x38] sm:$0xf]
        %v3177 = vld [vmem:[#allocation2 + $0x3c] sm:$0xf]
        %v3178 = vld [vmem:[#allocation2 + $0x40] sm:$0xf]
        %v3179 = vld [vmem:[#allocation2 + $0x44] sm:$0xf]
        %v3180 = vld [vmem:[#allocation2 + $0x48] sm:$0xf]
        %v3181 = vld [vmem:[#allocation2 + $0x4c] sm:$0xf]
        %v3182 = vld [vmem:[#allocation2 + $0x50] sm:$0xf]
        %v3183 = vld [vmem:[#allocation2 + $0x54] sm:$0xf]
        %v3184 = vld [vmem:[#allocation2 + $0x58] sm:$0xf]
        %v3185 = vld [vmem:[#allocation2 + $0x5c] sm:$0xf]
        %v3186 = vld [vmem:[#allocation2 + $0x60] sm:$0xf]
        %v3187 = vld [vmem:[#allocation2 + $0x64] sm:$0xf]
        %v3188 = vld [vmem:[#allocation2 + $0x68] sm:$0xf]
        %v3189 = vld [vmem:[#allocation2 + $0x6c] sm:$0xf]
        %v3190 = vld [vmem:[#allocation2 + $0x70] sm:$0xf]
        %v3191 = vld [vmem:[#allocation2 + $0x74] sm:$0xf]
        %v3192 = vld [vmem:[#allocation2 + $0x78] sm:$0xf]
        %s3193 = scalar_lea.vmem [#allocation8], 384
        %v3194 = vld [vmem:[%s3193] sm:$0xf]
        %v3195 = vld [vmem:[%s3193 + $0x4] sm:$0xf]
        %v3196 = vld [vmem:[%s3193 + $0x8] sm:$0xf]
        %v3197 = vld [vmem:[%s3193 + $0xc] sm:$0xf]
        %v3198 = vld [vmem:[%s3193 + $0x10] sm:$0xf]
        %v3199 = vld [vmem:[%s3193 + $0x14] sm:$0xf]
        %v3200 = vld [vmem:[%s3193 + $0x18] sm:$0xf]
        %v3201 = vld [vmem:[%s3193 + $0x1c] sm:$0xf]
        %v3202 = vld [vmem:[%s3193 + $0x20] sm:$0xf]
        %v3203 = vld [vmem:[%s3193 + $0x24] sm:$0xf]
        %v3204 = vld [vmem:[%s3193 + $0x28] sm:$0xf]
        %v3205 = vld [vmem:[%s3193 + $0x2c] sm:$0xf]
        %v3206 = vld [vmem:[%s3193 + $0x30] sm:$0xf]
        %v3207 = vld [vmem:[%s3193 + $0x34] sm:$0xf]
        %v3208 = vld [vmem:[%s3193 + $0x38] sm:$0xf]
        %v3209 = vld [vmem:[%s3193 + $0x3c] sm:$0xf]
        %v3235 = vunpack.c.l.b16 %v3168
        %v3236 = vunpack.c.l.b16 %v3169
        %v3237 = vunpack.c.l.b16 %v3170
        %v3238 = vunpack.c.l.b16 %v3171
        %v3239 = vunpack.c.l.b16 %v3172
        %v3240 = vunpack.c.l.b16 %v3173
        %v3241 = vunpack.c.l.b16 %v3174
        %v3242 = vunpack.c.l.b16 %v3175
        %v3243 = vunpack.c.l.b16 %v3176
        %v3244 = vunpack.c.l.b16 %v3177
        %v3245 = vunpack.c.l.b16 %v3178
        %v3246 = vunpack.c.l.b16 %v3179
        %v3247 = vunpack.c.l.b16 %v3180
        %v3248 = vunpack.c.l.b16 %v3181
        %v3249 = vunpack.c.l.b16 %v3182
        %v3250 = vunpack.c.l.b16 %v3183
        %v3251 = vunpack.c.l.b16 %v3184
        %v3252 = vunpack.c.l.b16 %v3185
        %v3253 = vunpack.c.l.b16 %v3186
        %v3254 = vunpack.c.l.b16 %v3187
        %v3255 = vunpack.c.l.b16 %v3188
        %v3256 = vunpack.c.l.b16 %v3189
        %v3257 = vunpack.c.l.b16 %v3190
        %v3258 = vunpack.c.l.b16 %v3191
        %v3259 = vunpack.c.l.b16 %v3192
        %v3260 = vpack.c.b16 %v3236, %v3235
        %v3261 = vpack.c.b16 %v3238, %v3237
        %v3262 = vpack.c.b16 %v3240, %v3239
        %v3263 = vpack.c.b16 %v3242, %v3241
        %v3264 = vpack.c.b16 %v3244, %v3243
        %v3265 = vpack.c.b16 %v3246, %v3245
        %v3266 = vpack.c.b16 %v3248, %v3247
        %v3267 = vpack.c.b16 %v3250, %v3249
        %v3268 = vpack.c.b16 %v3252, %v3251
        %v3269 = vpack.c.b16 %v3254, %v3253
        %v3270 = vpack.c.b16 %v3256, %v3255
        %v3271 = vpack.c.b16 %v3258, %v3257
        %v3272 = vpack.c.b16 %v3259, %v3259
        %v3274 = vshrl.u32 %v3260, 16
        %v3276 = vrot.slane %v3274, 3
        %v3277 = vshll.u32 %v3260, 16
        %v3279 = vrot.slane %v3277, 4
        %v3280 = vor.u32 %v3276, %v3279
        %v3282 = vshrl.u32 %v3261, 16
        %v3284 = vrot.slane %v3282, 3
        %v3285 = vshll.u32 %v3261, 16
        %v3287 = vrot.slane %v3285, 4
        %v3288 = vor.u32 %v3284, %v3287
        %v3289 = vsel %vm1349, %v3280, %v3288
        %v3291 = vshrl.u32 %v3262, 16
        %v3293 = vrot.slane %v3291, 3
        %v3294 = vshll.u32 %v3262, 16
        %v3296 = vrot.slane %v3294, 4
        %v3297 = vor.u32 %v3293, %v3296
        %v3298 = vsel %vm1349, %v3288, %v3297
        %v3300 = vshrl.u32 %v3263, 16
        %v3302 = vrot.slane %v3300, 3
        %v3303 = vshll.u32 %v3263, 16
        %v3305 = vrot.slane %v3303, 4
        %v3306 = vor.u32 %v3302, %v3305
        %v3307 = vsel %vm1349, %v3297, %v3306
        %v3309 = vshrl.u32 %v3264, 16
        %v3311 = vrot.slane %v3309, 3
        %v3312 = vshll.u32 %v3264, 16
        %v3314 = vrot.slane %v3312, 4
        %v3315 = vor.u32 %v3311, %v3314
        %v3316 = vsel %vm1349, %v3306, %v3315
        %v3318 = vshrl.u32 %v3265, 16
        %v3320 = vrot.slane %v3318, 3
        %v3321 = vshll.u32 %v3265, 16
        %v3323 = vrot.slane %v3321, 4
        %v3324 = vor.u32 %v3320, %v3323
        %v3325 = vsel %vm1349, %v3315, %v3324
        %v3327 = vshrl.u32 %v3266, 16
        %v3329 = vrot.slane %v3327, 3
        %v3330 = vshll.u32 %v3266, 16
        %v3332 = vrot.slane %v3330, 4
        %v3333 = vor.u32 %v3329, %v3332
        %v3334 = vsel %vm1349, %v3324, %v3333
        %v3336 = vshrl.u32 %v3267, 16
        %v3338 = vrot.slane %v3336, 3
        %v3339 = vshll.u32 %v3267, 16
        %v3341 = vrot.slane %v3339, 4
        %v3342 = vor.u32 %v3338, %v3341
        %v3343 = vsel %vm1349, %v3333, %v3342
        %v3345 = vshrl.u32 %v3268, 16
        %v3347 = vrot.slane %v3345, 3
        %v3348 = vshll.u32 %v3268, 16
        %v3350 = vrot.slane %v3348, 4
        %v3351 = vor.u32 %v3347, %v3350
        %v3352 = vsel %vm1349, %v3342, %v3351
        %v3354 = vshrl.u32 %v3269, 16
        %v3356 = vrot.slane %v3354, 3
        %v3357 = vshll.u32 %v3269, 16
        %v3359 = vrot.slane %v3357, 4
        %v3360 = vor.u32 %v3356, %v3359
        %v3361 = vsel %vm1349, %v3351, %v3360
        %v3363 = vshrl.u32 %v3270, 16
        %v3365 = vrot.slane %v3363, 3
        %v3366 = vshll.u32 %v3270, 16
        %v3368 = vrot.slane %v3366, 4
        %v3369 = vor.u32 %v3365, %v3368
        %v3370 = vsel %vm1349, %v3360, %v3369
        %v3372 = vshrl.u32 %v3271, 16
        %v3374 = vrot.slane %v3372, 3
        %v3375 = vshll.u32 %v3271, 16
        %v3377 = vrot.slane %v3375, 4
        %v3378 = vor.u32 %v3374, %v3377
        %v3379 = vsel %vm1349, %v3369, %v3378
        %v3381 = vshrl.u32 %v3272, 16
        %v3383 = vrot.slane %v3381, 3
        %v3384 = vshll.u32 %v3272, 16
        %v3386 = vrot.slane %v3384, 4
        %v3387 = vor.u32 %v3383, %v3386
        %v3388 = vsel %vm1349, %v3378, %v3387
        %v3417 = vunpack.c.l.b16 %v3194
        %v3418 = vunpack.c.l.b16 %v3195
        %v3419 = vunpack.c.l.b16 %v3196
        %v3420 = vunpack.c.l.b16 %v3197
        %v3421 = vunpack.c.l.b16 %v3198
        %v3422 = vunpack.c.l.b16 %v3199
        %v3423 = vunpack.c.l.b16 %v3200
        %v3424 = vunpack.c.l.b16 %v3201
        %v3425 = vunpack.c.l.b16 %v3202
        %v3426 = vunpack.c.l.b16 %v3203
        %v3427 = vunpack.c.l.b16 %v3204
        %v3428 = vunpack.c.l.b16 %v3205
        %v3429 = vunpack.c.l.b16 %v3206
        %v3430 = vunpack.c.l.b16 %v3207
        %v3431 = vunpack.c.l.b16 %v3208
        %v3432 = vunpack.c.l.b16 %v3209
        %v3433 = vpack.c.b16 %v3418, %v3417
        %v3434 = vpack.c.b16 %v3420, %v3419
        %v3435 = vpack.c.b16 %v3422, %v3421
        %v3436 = vpack.c.b16 %v3424, %v3423
        %v3437 = vpack.c.b16 %v3426, %v3425
        %v3438 = vpack.c.b16 %v3428, %v3427
        %v3439 = vpack.c.b16 %v3430, %v3429
        %v3440 = vpack.c.b16 %v3432, %v3431
        %3449 = vmatprep.subr.bf16.mxu0 0
        %3450 = vmatpush1.bf16.msra.mxu0 %v3440
        %3451 = vmatprep.subr.bf16.mxu0 0
        %3452 = vmatpush1.bf16.msra.mxu0 %v3439
        %3453 = vmatprep.subr.bf16.mxu0 0
        %3454 = vmatpush1.bf16.msra.mxu0 %v3438
        %3455 = vmatprep.subr.bf16.mxu0 0
        %3456 = vmatpush1.bf16.msra.mxu0 %v3437
        %3457 = vmatprep.subr.bf16.mxu0 0
        %3458 = vmatpush1.bf16.msra.mxu0 %v3436
        %3459 = vmatprep.subr.bf16.mxu0 0
        %3460 = vmatpush1.bf16.msra.mxu0 %v3435
        %3461 = vmatprep.subr.bf16.mxu0 0
        %3462 = vmatpush1.bf16.msra.mxu0 %v3434
        %3463 = vmatprep.subr.bf16.mxu0 0
        %3464 = vmatpush1.bf16.msra.mxu0 %v3433
        %3465 = vmatprep.subr.bf16.mxu0 0
        %3466 = vmatpush2.bf16.msra.mxu0 0
        %3467 = vmatprep.subr.bf16.mxu0 0
        %3468 = vmatpush2.bf16.msra.mxu0 0
        %3469 = vmatprep.subr.bf16.mxu0 0
        %3470 = vmatpush2.bf16.msra.mxu0 0
        %3471 = vmatprep.subr.bf16.mxu0 0
        %3472 = vmatpush2.bf16.msra.mxu0 0
        %3473 = vmatprep.subr.bf16.mxu0 0
        %3474 = vmatpush2.bf16.msra.mxu0 0
        %3475 = vmatprep.subr.bf16.mxu0 0
        %3476 = vmatpush2.bf16.msra.mxu0 0
        %3477 = vmatprep.subr.bf16.mxu0 0
        %3478 = vmatpush2.bf16.msra.mxu0 0
        %3479 = vmatprep.subr.bf16.mxu0 0
        %3480 = vmatpush2.bf16.msra.mxu0 0
        %3481 = vmatprep.mubr.bf16.mxu0 0
        %3482 = vmatmul.mubr.bf16.gmra.mxu0 %v3289
        %v3483 = vpop.f32.mrf.mxu0
        %v3484 = vadd.f32 0.0, %v3483
        %v3485 = vpop.f32.mrf.mxu0
        %v3486 = vpop.f32.mrf.mxu0
        %v3487 = vadd.f32 0.0, %v3486
        %v3488 = vpop.f32.mrf.mxu0
        %3489 = vmatprep.mubr.bf16.mxu0 0
        %3490 = vmatmul.mubr.bf16.gmra.mxu0 %v3298
        %v3491 = vpop.f32.mrf.mxu0
        %v3492 = vadd.f32 0.0, %v3491
        %v3493 = vpop.f32.mrf.mxu0
        %v3494 = vpop.f32.mrf.mxu0
        %v3495 = vadd.f32 0.0, %v3494
        %v3496 = vpop.f32.mrf.mxu0
        %3497 = vmatprep.mubr.bf16.mxu0 0
        %3498 = vmatmul.mubr.bf16.gmra.mxu0 %v3307
        %v3499 = vpop.f32.mrf.mxu0
        %v3500 = vadd.f32 0.0, %v3499
        %v3501 = vpop.f32.mrf.mxu0
        %v3502 = vpop.f32.mrf.mxu0
        %v3503 = vadd.f32 0.0, %v3502
        %v3504 = vpop.f32.mrf.mxu0
        %3505 = vmatprep.mubr.bf16.mxu0 0
        %3506 = vmatmul.mubr.bf16.gmra.mxu0 %v3316
        %v3507 = vpop.f32.mrf.mxu0
        %v3508 = vadd.f32 0.0, %v3507
        %v3509 = vpop.f32.mrf.mxu0
        %v3510 = vpop.f32.mrf.mxu0
        %v3511 = vadd.f32 0.0, %v3510
        %v3512 = vpop.f32.mrf.mxu0
        %3513 = vmatprep.mubr.bf16.mxu0 0
        %3514 = vmatmul.mubr.bf16.gmra.mxu0 %v3325
        %v3515 = vpop.f32.mrf.mxu0
        %v3516 = vadd.f32 0.0, %v3515
        %v3517 = vpop.f32.mrf.mxu0
        %v3518 = vpop.f32.mrf.mxu0
        %v3519 = vadd.f32 0.0, %v3518
        %v3520 = vpop.f32.mrf.mxu0
        %3521 = vmatprep.mubr.bf16.mxu0 0
        %3522 = vmatmul.mubr.bf16.gmra.mxu0 %v3334
        %v3523 = vpop.f32.mrf.mxu0
        %v3524 = vadd.f32 0.0, %v3523
        %v3525 = vpop.f32.mrf.mxu0
        %v3526 = vpop.f32.mrf.mxu0
        %v3527 = vadd.f32 0.0, %v3526
        %v3528 = vpop.f32.mrf.mxu0
        %3529 = vmatprep.mubr.bf16.mxu0 0
        %3530 = vmatmul.mubr.bf16.gmra.mxu0 %v3343
        %v3531 = vpop.f32.mrf.mxu0
        %v3532 = vadd.f32 0.0, %v3531
        %v3533 = vpop.f32.mrf.mxu0
        %v3534 = vpop.f32.mrf.mxu0
        %v3535 = vadd.f32 0.0, %v3534
        %v3536 = vpop.f32.mrf.mxu0
        %3537 = vmatprep.mubr.bf16.mxu0 0
        %3538 = vmatmul.mubr.bf16.gmra.mxu0 %v3352
        %v3539 = vpop.f32.mrf.mxu0
        %v3540 = vadd.f32 0.0, %v3539
        %v3541 = vpop.f32.mrf.mxu0
        %v3542 = vpop.f32.mrf.mxu0
        %v3543 = vadd.f32 0.0, %v3542
        %v3544 = vpop.f32.mrf.mxu0
        %3545 = vmatprep.mubr.bf16.mxu0 0
        %3546 = vmatmul.mubr.bf16.gmra.mxu0 %v3361
        %v3547 = vpop.f32.mrf.mxu0
        %v3548 = vadd.f32 0.0, %v3547
        %v3549 = vpop.f32.mrf.mxu0
        %v3550 = vpop.f32.mrf.mxu0
        %v3551 = vadd.f32 0.0, %v3550
        %v3552 = vpop.f32.mrf.mxu0
        %3553 = vmatprep.mubr.bf16.mxu0 0
        %3554 = vmatmul.mubr.bf16.gmra.mxu0 %v3370
        %v3555 = vpop.f32.mrf.mxu0
        %v3556 = vadd.f32 0.0, %v3555
        %v3557 = vpop.f32.mrf.mxu0
        %v3558 = vpop.f32.mrf.mxu0
        %v3559 = vadd.f32 0.0, %v3558
        %v3560 = vpop.f32.mrf.mxu0
        %3561 = vmatprep.mubr.bf16.mxu0 0
        %3562 = vmatmul.mubr.bf16.gmra.mxu0 %v3379
        %v3563 = vpop.f32.mrf.mxu0
        %v3564 = vadd.f32 0.0, %v3563
        %v3565 = vpop.f32.mrf.mxu0
        %v3566 = vpop.f32.mrf.mxu0
        %v3567 = vadd.f32 0.0, %v3566
        %v3568 = vpop.f32.mrf.mxu0
        %3569 = vmatprep.mubr.bf16.mxu0 0
        %3570 = vmatmul.mubr.bf16.gmra.mxu0 %v3388
        %v3571 = vpop.f32.mrf.mxu0
        %v3572 = vadd.f32 0.0, %v3571
        %v3573 = vpop.f32.mrf.mxu0
        %v3574 = vpop.f32.mrf.mxu0
        %v3575 = vadd.f32 0.0, %v3574
        %v3576 = vpop.f32.mrf.mxu0
        %3577 = vdwg.mxu0
        %v3578 = vadd.f32 %v3144, %v3484
        %v3579 = vadd.f32 %v3145, %v3487
        %v3580 = vadd.f32 %v3146, %v3492
        %v3581 = vadd.f32 %v3147, %v3495
        %v3582 = vadd.f32 %v3148, %v3500
        %v3583 = vadd.f32 %v3149, %v3503
        %v3584 = vadd.f32 %v3150, %v3508
        %v3585 = vadd.f32 %v3151, %v3511
        %v3586 = vadd.f32 %v3152, %v3516
        %v3587 = vadd.f32 %v3153, %v3519
        %v3588 = vadd.f32 %v3154, %v3524
        %v3589 = vadd.f32 %v3155, %v3527
        %v3590 = vadd.f32 %v3156, %v3532
        %v3591 = vadd.f32 %v3157, %v3535
        %v3592 = vadd.f32 %v3158, %v3540
        %v3593 = vadd.f32 %v3159, %v3543
        %v3594 = vadd.f32 %v3160, %v3548
        %v3595 = vadd.f32 %v3161, %v3551
        %v3596 = vadd.f32 %v3162, %v3556
        %v3597 = vadd.f32 %v3163, %v3559
        %v3598 = vadd.f32 %v3164, %v3564
        %v3599 = vadd.f32 %v3165, %v3567
        %v3600 = vadd.f32 %v3166, %v3572
        %v3601 = vadd.f32 %v3167, %v3575
        %s3602 = scalar_lea.vmem [#allocation8], 448
        %v3603 = vld [vmem:[%s3602] sm:$0xf]
        %v3604 = vld [vmem:[%s3602 + $0x4] sm:$0xf]
        %v3605 = vld [vmem:[%s3602 + $0x8] sm:$0xf]
        %v3606 = vld [vmem:[%s3602 + $0xc] sm:$0xf]
        %v3607 = vld [vmem:[%s3602 + $0x10] sm:$0xf]
        %v3608 = vld [vmem:[%s3602 + $0x14] sm:$0xf]
        %v3609 = vld [vmem:[%s3602 + $0x18] sm:$0xf]
        %v3610 = vld [vmem:[%s3602 + $0x1c] sm:$0xf]
        %v3611 = vld [vmem:[%s3602 + $0x20] sm:$0xf]
        %v3612 = vld [vmem:[%s3602 + $0x24] sm:$0xf]
        %v3613 = vld [vmem:[%s3602 + $0x28] sm:$0xf]
        %v3614 = vld [vmem:[%s3602 + $0x2c] sm:$0xf]
        %v3615 = vld [vmem:[%s3602 + $0x30] sm:$0xf]
        %v3616 = vld [vmem:[%s3602 + $0x34] sm:$0xf]
        %v3617 = vld [vmem:[%s3602 + $0x38] sm:$0xf]
        %v3618 = vld [vmem:[%s3602 + $0x3c] sm:$0xf]
        %v3619 = vpack.c.b16 %v3237, %v3236
        %v3620 = vpack.c.b16 %v3239, %v3238
        %v3621 = vpack.c.b16 %v3241, %v3240
        %v3622 = vpack.c.b16 %v3243, %v3242
        %v3623 = vpack.c.b16 %v3245, %v3244
        %v3624 = vpack.c.b16 %v3247, %v3246
        %v3625 = vpack.c.b16 %v3249, %v3248
        %v3626 = vpack.c.b16 %v3251, %v3250
        %v3627 = vpack.c.b16 %v3253, %v3252
        %v3628 = vpack.c.b16 %v3255, %v3254
        %v3629 = vpack.c.b16 %v3257, %v3256
        %v3630 = vpack.c.b16 %v3259, %v3258
        %v3659 = vunpack.c.l.b16 %v3603
        %v3660 = vunpack.c.l.b16 %v3604
        %v3661 = vunpack.c.l.b16 %v3605
        %v3662 = vunpack.c.l.b16 %v3606
        %v3663 = vunpack.c.l.b16 %v3607
        %v3664 = vunpack.c.l.b16 %v3608
        %v3665 = vunpack.c.l.b16 %v3609
        %v3666 = vunpack.c.l.b16 %v3610
        %v3667 = vunpack.c.l.b16 %v3611
        %v3668 = vunpack.c.l.b16 %v3612
        %v3669 = vunpack.c.l.b16 %v3613
        %v3670 = vunpack.c.l.b16 %v3614
        %v3671 = vunpack.c.l.b16 %v3615
        %v3672 = vunpack.c.l.b16 %v3616
        %v3673 = vunpack.c.l.b16 %v3617
        %v3674 = vunpack.c.l.b16 %v3618
        %v3675 = vpack.c.b16 %v3660, %v3659
        %v3676 = vpack.c.b16 %v3662, %v3661
        %v3677 = vpack.c.b16 %v3664, %v3663
        %v3678 = vpack.c.b16 %v3666, %v3665
        %v3679 = vpack.c.b16 %v3668, %v3667
        %v3680 = vpack.c.b16 %v3670, %v3669
        %v3681 = vpack.c.b16 %v3672, %v3671
        %v3682 = vpack.c.b16 %v3674, %v3673
        %3691 = vmatprep.subr.bf16.mxu0 0
        %3692 = vmatpush1.bf16.msra.mxu0 %v3682
        %3693 = vmatprep.subr.bf16.mxu0 0
        %3694 = vmatpush1.bf16.msra.mxu0 %v3681
        %3695 = vmatprep.subr.bf16.mxu0 0
        %3696 = vmatpush1.bf16.msra.mxu0 %v3680
        %3697 = vmatprep.subr.bf16.mxu0 0
        %3698 = vmatpush1.bf16.msra.mxu0 %v3679
        %3699 = vmatprep.subr.bf16.mxu0 0
        %3700 = vmatpush1.bf16.msra.mxu0 %v3678
        %3701 = vmatprep.subr.bf16.mxu0 0
        %3702 = vmatpush1.bf16.msra.mxu0 %v3677
        %3703 = vmatprep.subr.bf16.mxu0 0
        %3704 = vmatpush1.bf16.msra.mxu0 %v3676
        %3705 = vmatprep.subr.bf16.mxu0 0
        %3706 = vmatpush1.bf16.msra.mxu0 %v3675
        %3707 = vmatprep.subr.bf16.mxu0 0
        %3708 = vmatpush2.bf16.msra.mxu0 0
        %3709 = vmatprep.subr.bf16.mxu0 0
        %3710 = vmatpush2.bf16.msra.mxu0 0
        %3711 = vmatprep.subr.bf16.mxu0 0
        %3712 = vmatpush2.bf16.msra.mxu0 0
        %3713 = vmatprep.subr.bf16.mxu0 0
        %3714 = vmatpush2.bf16.msra.mxu0 0
        %3715 = vmatprep.subr.bf16.mxu0 0
        %3716 = vmatpush2.bf16.msra.mxu0 0
        %3717 = vmatprep.subr.bf16.mxu0 0
        %3718 = vmatpush2.bf16.msra.mxu0 0
        %3719 = vmatprep.subr.bf16.mxu0 0
        %3720 = vmatpush2.bf16.msra.mxu0 0
        %3721 = vmatprep.subr.bf16.mxu0 0
        %3722 = vmatpush2.bf16.msra.mxu0 0
        %3723 = vmatprep.mubr.bf16.mxu0 0
        %3724 = vmatmul.mubr.bf16.gmra.mxu0 %v3619
        %v3725 = vpop.f32.mrf.mxu0
        %v3726 = vadd.f32 0.0, %v3725
        %v3727 = vpop.f32.mrf.mxu0
        %v3728 = vpop.f32.mrf.mxu0
        %v3729 = vadd.f32 0.0, %v3728
        %v3730 = vpop.f32.mrf.mxu0
        %3731 = vmatprep.mubr.bf16.mxu0 0
        %3732 = vmatmul.mubr.bf16.gmra.mxu0 %v3620
        %v3733 = vpop.f32.mrf.mxu0
        %v3734 = vadd.f32 0.0, %v3733
        %v3735 = vpop.f32.mrf.mxu0
        %v3736 = vpop.f32.mrf.mxu0
        %v3737 = vadd.f32 0.0, %v3736
        %v3738 = vpop.f32.mrf.mxu0
        %3739 = vmatprep.mubr.bf16.mxu0 0
        %3740 = vmatmul.mubr.bf16.gmra.mxu0 %v3621
        %v3741 = vpop.f32.mrf.mxu0
        %v3742 = vadd.f32 0.0, %v3741
        %v3743 = vpop.f32.mrf.mxu0
        %v3744 = vpop.f32.mrf.mxu0
        %v3745 = vadd.f32 0.0, %v3744
        %v3746 = vpop.f32.mrf.mxu0
        %3747 = vmatprep.mubr.bf16.mxu0 0
        %3748 = vmatmul.mubr.bf16.gmra.mxu0 %v3622
        %v3749 = vpop.f32.mrf.mxu0
        %v3750 = vadd.f32 0.0, %v3749
        %v3751 = vpop.f32.mrf.mxu0
        %v3752 = vpop.f32.mrf.mxu0
        %v3753 = vadd.f32 0.0, %v3752
        %v3754 = vpop.f32.mrf.mxu0
        %3755 = vmatprep.mubr.bf16.mxu0 0
        %3756 = vmatmul.mubr.bf16.gmra.mxu0 %v3623
        %v3757 = vpop.f32.mrf.mxu0
        %v3758 = vadd.f32 0.0, %v3757
        %v3759 = vpop.f32.mrf.mxu0
        %v3760 = vpop.f32.mrf.mxu0
        %v3761 = vadd.f32 0.0, %v3760
        %v3762 = vpop.f32.mrf.mxu0
        %3763 = vmatprep.mubr.bf16.mxu0 0
        %3764 = vmatmul.mubr.bf16.gmra.mxu0 %v3624
        %v3765 = vpop.f32.mrf.mxu0
        %v3766 = vadd.f32 0.0, %v3765
        %v3767 = vpop.f32.mrf.mxu0
        %v3768 = vpop.f32.mrf.mxu0
        %v3769 = vadd.f32 0.0, %v3768
        %v3770 = vpop.f32.mrf.mxu0
        %3771 = vmatprep.mubr.bf16.mxu0 0
        %3772 = vmatmul.mubr.bf16.gmra.mxu0 %v3625
        %v3773 = vpop.f32.mrf.mxu0
        %v3774 = vadd.f32 0.0, %v3773
        %v3775 = vpop.f32.mrf.mxu0
        %v3776 = vpop.f32.mrf.mxu0
        %v3777 = vadd.f32 0.0, %v3776
        %v3778 = vpop.f32.mrf.mxu0
        %3779 = vmatprep.mubr.bf16.mxu0 0
        %3780 = vmatmul.mubr.bf16.gmra.mxu0 %v3626
        %v3781 = vpop.f32.mrf.mxu0
        %v3782 = vadd.f32 0.0, %v3781
        %v3783 = vpop.f32.mrf.mxu0
        %v3784 = vpop.f32.mrf.mxu0
        %v3785 = vadd.f32 0.0, %v3784
        %v3786 = vpop.f32.mrf.mxu0
        %3787 = vmatprep.mubr.bf16.mxu0 0
        %3788 = vmatmul.mubr.bf16.gmra.mxu0 %v3627
        %v3789 = vpop.f32.mrf.mxu0
        %v3790 = vadd.f32 0.0, %v3789
        %v3791 = vpop.f32.mrf.mxu0
        %v3792 = vpop.f32.mrf.mxu0
        %v3793 = vadd.f32 0.0, %v3792
        %v3794 = vpop.f32.mrf.mxu0
        %3795 = vmatprep.mubr.bf16.mxu0 0
        %3796 = vmatmul.mubr.bf16.gmra.mxu0 %v3628
        %v3797 = vpop.f32.mrf.mxu0
        %v3798 = vadd.f32 0.0, %v3797
        %v3799 = vpop.f32.mrf.mxu0
        %v3800 = vpop.f32.mrf.mxu0
        %v3801 = vadd.f32 0.0, %v3800
        %v3802 = vpop.f32.mrf.mxu0
        %3803 = vmatprep.mubr.bf16.mxu0 0
        %3804 = vmatmul.mubr.bf16.gmra.mxu0 %v3629
        %v3805 = vpop.f32.mrf.mxu0
        %v3806 = vadd.f32 0.0, %v3805
        %v3807 = vpop.f32.mrf.mxu0
        %v3808 = vpop.f32.mrf.mxu0
        %v3809 = vadd.f32 0.0, %v3808
        %v3810 = vpop.f32.mrf.mxu0
        %3811 = vmatprep.mubr.bf16.mxu0 0
        %3812 = vmatmul.mubr.bf16.gmra.mxu0 %v3630
        %v3813 = vpop.f32.mrf.mxu0
        %v3814 = vadd.f32 0.0, %v3813
        %v3815 = vpop.f32.mrf.mxu0
        %v3816 = vpop.f32.mrf.mxu0
        %v3817 = vadd.f32 0.0, %v3816
        %v3818 = vpop.f32.mrf.mxu0
        %3819 = vdwg.mxu0
        %v3820 = vadd.f32 %v3578, %v3726
        %v3821 = vadd.f32 %v3579, %v3729
        %v3822 = vadd.f32 %v3580, %v3734
        %v3823 = vadd.f32 %v3581, %v3737
        %v3824 = vadd.f32 %v3582, %v3742
        %v3825 = vadd.f32 %v3583, %v3745
        %v3826 = vadd.f32 %v3584, %v3750
        %v3827 = vadd.f32 %v3585, %v3753
        %v3828 = vadd.f32 %v3586, %v3758
        %v3829 = vadd.f32 %v3587, %v3761
        %v3830 = vadd.f32 %v3588, %v3766
        %v3831 = vadd.f32 %v3589, %v3769
        %v3832 = vadd.f32 %v3590, %v3774
        %v3833 = vadd.f32 %v3591, %v3777
        %v3834 = vadd.f32 %v3592, %v3782
        %v3835 = vadd.f32 %v3593, %v3785
        %v3836 = vadd.f32 %v3594, %v3790
        %v3837 = vadd.f32 %v3595, %v3793
        %v3838 = vadd.f32 %v3596, %v3798
        %v3839 = vadd.f32 %v3597, %v3801
        %v3840 = vadd.f32 %v3598, %v3806
        %v3841 = vadd.f32 %v3599, %v3809
        %v3842 = vadd.f32 %v3600, %v3814
        %v3843 = vadd.f32 %v3601, %v3817
        %v3844 = vld [vmem:[#allocation2 + $0x1c] sm:$0xf]
        %v3845 = vld [vmem:[#allocation2 + $0x20] sm:$0xf]
        %v3846 = vld [vmem:[#allocation2 + $0x24] sm:$0xf]
        %v3847 = vld [vmem:[#allocation2 + $0x28] sm:$0xf]
        %v3848 = vld [vmem:[#allocation2 + $0x2c] sm:$0xf]
        %v3849 = vld [vmem:[#allocation2 + $0x30] sm:$0xf]
        %v3850 = vld [vmem:[#allocation2 + $0x34] sm:$0xf]
        %v3851 = vld [vmem:[#allocation2 + $0x38] sm:$0xf]
        %v3852 = vld [vmem:[#allocation2 + $0x3c] sm:$0xf]
        %v3853 = vld [vmem:[#allocation2 + $0x40] sm:$0xf]
        %v3854 = vld [vmem:[#allocation2 + $0x44] sm:$0xf]
        %v3855 = vld [vmem:[#allocation2 + $0x48] sm:$0xf]
        %v3856 = vld [vmem:[#allocation2 + $0x4c] sm:$0xf]
        %v3857 = vld [vmem:[#allocation2 + $0x50] sm:$0xf]
        %v3858 = vld [vmem:[#allocation2 + $0x54] sm:$0xf]
        %v3859 = vld [vmem:[#allocation2 + $0x58] sm:$0xf]
        %v3860 = vld [vmem:[#allocation2 + $0x5c] sm:$0xf]
        %v3861 = vld [vmem:[#allocation2 + $0x60] sm:$0xf]
        %v3862 = vld [vmem:[#allocation2 + $0x64] sm:$0xf]
        %v3863 = vld [vmem:[#allocation2 + $0x68] sm:$0xf]
        %v3864 = vld [vmem:[#allocation2 + $0x6c] sm:$0xf]
        %v3865 = vld [vmem:[#allocation2 + $0x70] sm:$0xf]
        %v3866 = vld [vmem:[#allocation2 + $0x74] sm:$0xf]
        %v3867 = vld [vmem:[#allocation2 + $0x78] sm:$0xf]
        %v3868 = vld [vmem:[#allocation2 + $0x7c] sm:$0x1]
        %s3869 = scalar_lea.vmem [#allocation8], 512
        %v3870 = vld [vmem:[%s3869] sm:$0xf]
        %v3871 = vld [vmem:[%s3869 + $0x4] sm:$0xf]
        %v3872 = vld [vmem:[%s3869 + $0x8] sm:$0xf]
        %v3873 = vld [vmem:[%s3869 + $0xc] sm:$0xf]
        %v3874 = vld [vmem:[%s3869 + $0x10] sm:$0xf]
        %v3875 = vld [vmem:[%s3869 + $0x14] sm:$0xf]
        %v3876 = vld [vmem:[%s3869 + $0x18] sm:$0xf]
        %v3877 = vld [vmem:[%s3869 + $0x1c] sm:$0xf]
        %v3878 = vld [vmem:[%s3869 + $0x20] sm:$0xf]
        %v3879 = vld [vmem:[%s3869 + $0x24] sm:$0xf]
        %v3880 = vld [vmem:[%s3869 + $0x28] sm:$0xf]
        %v3881 = vld [vmem:[%s3869 + $0x2c] sm:$0xf]
        %v3882 = vld [vmem:[%s3869 + $0x30] sm:$0xf]
        %v3883 = vld [vmem:[%s3869 + $0x34] sm:$0xf]
        %v3884 = vld [vmem:[%s3869 + $0x38] sm:$0xf]
        %v3885 = vld [vmem:[%s3869 + $0x3c] sm:$0xf]
        %v3911 = vunpack.c.l.b16 %v3844
        %v3912 = vunpack.c.l.b16 %v3845
        %v3913 = vunpack.c.l.b16 %v3846
        %v3914 = vunpack.c.l.b16 %v3847
        %v3915 = vunpack.c.l.b16 %v3848
        %v3916 = vunpack.c.l.b16 %v3849
        %v3917 = vunpack.c.l.b16 %v3850
        %v3918 = vunpack.c.l.b16 %v3851
        %v3919 = vunpack.c.l.b16 %v3852
        %v3920 = vunpack.c.l.b16 %v3853
        %v3921 = vunpack.c.l.b16 %v3854
        %v3922 = vunpack.c.l.b16 %v3855
        %v3923 = vunpack.c.l.b16 %v3856
        %v3924 = vunpack.c.l.b16 %v3857
        %v3925 = vunpack.c.l.b16 %v3858
        %v3926 = vunpack.c.l.b16 %v3859
        %v3927 = vunpack.c.l.b16 %v3860
        %v3928 = vunpack.c.l.b16 %v3861
        %v3929 = vunpack.c.l.b16 %v3862
        %v3930 = vunpack.c.l.b16 %v3863
        %v3931 = vunpack.c.l.b16 %v3864
        %v3932 = vunpack.c.l.b16 %v3865
        %v3933 = vunpack.c.l.b16 %v3866
        %v3934 = vunpack.c.l.b16 %v3867
        %v3935 = vunpack.c.l.b16 %v3868
        %v3936 = vpack.c.b16 %v3912, %v3911
        %v3937 = vpack.c.b16 %v3914, %v3913
        %v3938 = vpack.c.b16 %v3916, %v3915
        %v3939 = vpack.c.b16 %v3918, %v3917
        %v3940 = vpack.c.b16 %v3920, %v3919
        %v3941 = vpack.c.b16 %v3922, %v3921
        %v3942 = vpack.c.b16 %v3924, %v3923
        %v3943 = vpack.c.b16 %v3926, %v3925
        %v3944 = vpack.c.b16 %v3928, %v3927
        %v3945 = vpack.c.b16 %v3930, %v3929
        %v3946 = vpack.c.b16 %v3932, %v3931
        %v3947 = vpack.c.b16 %v3934, %v3933
        %v3948 = vpack.c.b16 %v3935, %v3935
        %v3950 = vshrl.u32 %v3936, 16
        %v3952 = vshll.u32 %v3936, 16
        %v3954 = vrot.slane %v3952, 1
        %v3955 = vor.u32 %v3950, %v3954
        %v3957 = vshll.u32 %v3937, 16
        %v3959 = vrot.slane %v3957, 1
        %v3960 = vsel %vm1760, %v3955, %v3959
        %v3961 = vshrl.u32 %v3937, 16
        %v3963 = vor.u32 %v3961, %v3959
        %v3965 = vshll.u32 %v3938, 16
        %v3967 = vrot.slane %v3965, 1
        %v3968 = vsel %vm1760, %v3963, %v3967
        %v3969 = vshrl.u32 %v3938, 16
        %v3971 = vor.u32 %v3969, %v3967
        %v3973 = vshll.u32 %v3939, 16
        %v3975 = vrot.slane %v3973, 1
        %v3976 = vsel %vm1760, %v3971, %v3975
        %v3977 = vshrl.u32 %v3939, 16
        %v3979 = vor.u32 %v3977, %v3975
        %v3981 = vshll.u32 %v3940, 16
        %v3983 = vrot.slane %v3981, 1
        %v3984 = vsel %vm1760, %v3979, %v3983
        %v3985 = vshrl.u32 %v3940, 16
        %v3987 = vor.u32 %v3985, %v3983
        %v3989 = vshll.u32 %v3941, 16
        %v3991 = vrot.slane %v3989, 1
        %v3992 = vsel %vm1760, %v3987, %v3991
        %v3993 = vshrl.u32 %v3941, 16
        %v3995 = vor.u32 %v3993, %v3991
        %v3997 = vshll.u32 %v3942, 16
        %v3999 = vrot.slane %v3997, 1
        %v4000 = vsel %vm1760, %v3995, %v3999
        %v4001 = vshrl.u32 %v3942, 16
        %v4003 = vor.u32 %v4001, %v3999
        %v4005 = vshll.u32 %v3943, 16
        %v4007 = vrot.slane %v4005, 1
        %v4008 = vsel %vm1760, %v4003, %v4007
        %v4009 = vshrl.u32 %v3943, 16
        %v4011 = vor.u32 %v4009, %v4007
        %v4013 = vshll.u32 %v3944, 16
        %v4015 = vrot.slane %v4013, 1
        %v4016 = vsel %vm1760, %v4011, %v4015
        %v4017 = vshrl.u32 %v3944, 16
        %v4019 = vor.u32 %v4017, %v4015
        %v4021 = vshll.u32 %v3945, 16
        %v4023 = vrot.slane %v4021, 1
        %v4024 = vsel %vm1760, %v4019, %v4023
        %v4025 = vshrl.u32 %v3945, 16
        %v4027 = vor.u32 %v4025, %v4023
        %v4029 = vshll.u32 %v3946, 16
        %v4031 = vrot.slane %v4029, 1
        %v4032 = vsel %vm1760, %v4027, %v4031
        %v4033 = vshrl.u32 %v3946, 16
        %v4035 = vor.u32 %v4033, %v4031
        %v4037 = vshll.u32 %v3947, 16
        %v4039 = vrot.slane %v4037, 1
        %v4040 = vsel %vm1760, %v4035, %v4039
        %v4041 = vshrl.u32 %v3947, 16
        %v4043 = vor.u32 %v4041, %v4039
        %v4045 = vshll.u32 %v3948, 16
        %v4047 = vrot.slane %v4045, 1
        %v4048 = vsel %vm1760, %v4043, %v4047
        %v4077 = vunpack.c.l.b16 %v3870
        %v4078 = vunpack.c.l.b16 %v3871
        %v4079 = vunpack.c.l.b16 %v3872
        %v4080 = vunpack.c.l.b16 %v3873
        %v4081 = vunpack.c.l.b16 %v3874
        %v4082 = vunpack.c.l.b16 %v3875
        %v4083 = vunpack.c.l.b16 %v3876
        %v4084 = vunpack.c.l.b16 %v3877
        %v4085 = vunpack.c.l.b16 %v3878
        %v4086 = vunpack.c.l.b16 %v3879
        %v4087 = vunpack.c.l.b16 %v3880
        %v4088 = vunpack.c.l.b16 %v3881
        %v4089 = vunpack.c.l.b16 %v3882
        %v4090 = vunpack.c.l.b16 %v3883
        %v4091 = vunpack.c.l.b16 %v3884
        %v4092 = vunpack.c.l.b16 %v3885
        %v4093 = vpack.c.b16 %v4078, %v4077
        %v4094 = vpack.c.b16 %v4080, %v4079
        %v4095 = vpack.c.b16 %v4082, %v4081
        %v4096 = vpack.c.b16 %v4084, %v4083
        %v4097 = vpack.c.b16 %v4086, %v4085
        %v4098 = vpack.c.b16 %v4088, %v4087
        %v4099 = vpack.c.b16 %v4090, %v4089
        %v4100 = vpack.c.b16 %v4092, %v4091
        %4109 = vmatprep.subr.bf16.mxu0 0
        %4110 = vmatpush1.bf16.msra.mxu0 %v4100
        %4111 = vmatprep.subr.bf16.mxu0 0
        %4112 = vmatpush1.bf16.msra.mxu0 %v4099
        %4113 = vmatprep.subr.bf16.mxu0 0
        %4114 = vmatpush1.bf16.msra.mxu0 %v4098
        %4115 = vmatprep.subr.bf16.mxu0 0
        %4116 = vmatpush1.bf16.msra.mxu0 %v4097
        %4117 = vmatprep.subr.bf16.mxu0 0
        %4118 = vmatpush1.bf16.msra.mxu0 %v4096
        %4119 = vmatprep.subr.bf16.mxu0 0
        %4120 = vmatpush1.bf16.msra.mxu0 %v4095
        %4121 = vmatprep.subr.bf16.mxu0 0
        %4122 = vmatpush1.bf16.msra.mxu0 %v4094
        %4123 = vmatprep.subr.bf16.mxu0 0
        %4124 = vmatpush1.bf16.msra.mxu0 %v4093
        %4125 = vmatprep.subr.bf16.mxu0 0
        %4126 = vmatpush2.bf16.msra.mxu0 0
        %4127 = vmatprep.subr.bf16.mxu0 0
        %4128 = vmatpush2.bf16.msra.mxu0 0
        %4129 = vmatprep.subr.bf16.mxu0 0
        %4130 = vmatpush2.bf16.msra.mxu0 0
        %4131 = vmatprep.subr.bf16.mxu0 0
        %4132 = vmatpush2.bf16.msra.mxu0 0
        %4133 = vmatprep.subr.bf16.mxu0 0
        %4134 = vmatpush2.bf16.msra.mxu0 0
        %4135 = vmatprep.subr.bf16.mxu0 0
        %4136 = vmatpush2.bf16.msra.mxu0 0
        %4137 = vmatprep.subr.bf16.mxu0 0
        %4138 = vmatpush2.bf16.msra.mxu0 0
        %4139 = vmatprep.subr.bf16.mxu0 0
        %4140 = vmatpush2.bf16.msra.mxu0 0
        %4141 = vmatprep.mubr.bf16.mxu0 0
        %4142 = vmatmul.mubr.bf16.gmra.mxu0 %v3960
        %v4143 = vpop.f32.mrf.mxu0
        %v4144 = vadd.f32 0.0, %v4143
        %v4145 = vpop.f32.mrf.mxu0
        %v4146 = vpop.f32.mrf.mxu0
        %v4147 = vadd.f32 0.0, %v4146
        %v4148 = vpop.f32.mrf.mxu0
        %4149 = vmatprep.mubr.bf16.mxu0 0
        %4150 = vmatmul.mubr.bf16.gmra.mxu0 %v3968
        %v4151 = vpop.f32.mrf.mxu0
        %v4152 = vadd.f32 0.0, %v4151
        %v4153 = vpop.f32.mrf.mxu0
        %v4154 = vpop.f32.mrf.mxu0
        %v4155 = vadd.f32 0.0, %v4154
        %v4156 = vpop.f32.mrf.mxu0
        %4157 = vmatprep.mubr.bf16.mxu0 0
        %4158 = vmatmul.mubr.bf16.gmra.mxu0 %v3976
        %v4159 = vpop.f32.mrf.mxu0
        %v4160 = vadd.f32 0.0, %v4159
        %v4161 = vpop.f32.mrf.mxu0
        %v4162 = vpop.f32.mrf.mxu0
        %v4163 = vadd.f32 0.0, %v4162
        %v4164 = vpop.f32.mrf.mxu0
        %4165 = vmatprep.mubr.bf16.mxu0 0
        %4166 = vmatmul.mubr.bf16.gmra.mxu0 %v3984
        %v4167 = vpop.f32.mrf.mxu0
        %v4168 = vadd.f32 0.0, %v4167
        %v4169 = vpop.f32.mrf.mxu0
        %v4170 = vpop.f32.mrf.mxu0
        %v4171 = vadd.f32 0.0, %v4170
        %v4172 = vpop.f32.mrf.mxu0
        %4173 = vmatprep.mubr.bf16.mxu0 0
        %4174 = vmatmul.mubr.bf16.gmra.mxu0 %v3992
        %v4175 = vpop.f32.mrf.mxu0
        %v4176 = vadd.f32 0.0, %v4175
        %v4177 = vpop.f32.mrf.mxu0
        %v4178 = vpop.f32.mrf.mxu0
        %v4179 = vadd.f32 0.0, %v4178
        %v4180 = vpop.f32.mrf.mxu0
        %4181 = vmatprep.mubr.bf16.mxu0 0
        %4182 = vmatmul.mubr.bf16.gmra.mxu0 %v4000
        %v4183 = vpop.f32.mrf.mxu0
        %v4184 = vadd.f32 0.0, %v4183
        %v4185 = vpop.f32.mrf.mxu0
        %v4186 = vpop.f32.mrf.mxu0
        %v4187 = vadd.f32 0.0, %v4186
        %v4188 = vpop.f32.mrf.mxu0
        %4189 = vmatprep.mubr.bf16.mxu0 0
        %4190 = vmatmul.mubr.bf16.gmra.mxu0 %v4008
        %v4191 = vpop.f32.mrf.mxu0
        %v4192 = vadd.f32 0.0, %v4191
        %v4193 = vpop.f32.mrf.mxu0
        %v4194 = vpop.f32.mrf.mxu0
        %v4195 = vadd.f32 0.0, %v4194
        %v4196 = vpop.f32.mrf.mxu0
        %4197 = vmatprep.mubr.bf16.mxu0 0
        %4198 = vmatmul.mubr.bf16.gmra.mxu0 %v4016
        %v4199 = vpop.f32.mrf.mxu0
        %v4200 = vadd.f32 0.0, %v4199
        %v4201 = vpop.f32.mrf.mxu0
        %v4202 = vpop.f32.mrf.mxu0
        %v4203 = vadd.f32 0.0, %v4202
        %v4204 = vpop.f32.mrf.mxu0
        %4205 = vmatprep.mubr.bf16.mxu0 0
        %4206 = vmatmul.mubr.bf16.gmra.mxu0 %v4024
        %v4207 = vpop.f32.mrf.mxu0
        %v4208 = vadd.f32 0.0, %v4207
        %v4209 = vpop.f32.mrf.mxu0
        %v4210 = vpop.f32.mrf.mxu0
        %v4211 = vadd.f32 0.0, %v4210
        %v4212 = vpop.f32.mrf.mxu0
        %4213 = vmatprep.mubr.bf16.mxu0 0
        %4214 = vmatmul.mubr.bf16.gmra.mxu0 %v4032
        %v4215 = vpop.f32.mrf.mxu0
        %v4216 = vadd.f32 0.0, %v4215
        %v4217 = vpop.f32.mrf.mxu0
        %v4218 = vpop.f32.mrf.mxu0
        %v4219 = vadd.f32 0.0, %v4218
        %v4220 = vpop.f32.mrf.mxu0
        %4221 = vmatprep.mubr.bf16.mxu0 0
        %4222 = vmatmul.mubr.bf16.gmra.mxu0 %v4040
        %v4223 = vpop.f32.mrf.mxu0
        %v4224 = vadd.f32 0.0, %v4223
        %v4225 = vpop.f32.mrf.mxu0
        %v4226 = vpop.f32.mrf.mxu0
        %v4227 = vadd.f32 0.0, %v4226
        %v4228 = vpop.f32.mrf.mxu0
        %4229 = vmatprep.mubr.bf16.mxu0 0
        %4230 = vmatmul.mubr.bf16.gmra.mxu0 %v4048
        %v4231 = vpop.f32.mrf.mxu0
        %v4232 = vadd.f32 0.0, %v4231
        %v4233 = vpop.f32.mrf.mxu0
        %v4234 = vpop.f32.mrf.mxu0
        %v4235 = vadd.f32 0.0, %v4234
        %v4236 = vpop.f32.mrf.mxu0
        %4237 = vdwg.mxu0
        %v4238 = vadd.f32 %v3820, %v4144
        %v4239 = vadd.f32 %v3821, %v4147
        %v4240 = vadd.f32 %v3822, %v4152
        %v4241 = vadd.f32 %v3823, %v4155
        %v4242 = vadd.f32 %v3824, %v4160
        %v4243 = vadd.f32 %v3825, %v4163
        %v4244 = vadd.f32 %v3826, %v4168
        %v4245 = vadd.f32 %v3827, %v4171
        %v4246 = vadd.f32 %v3828, %v4176
        %v4247 = vadd.f32 %v3829, %v4179
        %v4248 = vadd.f32 %v3830, %v4184
        %v4249 = vadd.f32 %v3831, %v4187
        %v4250 = vadd.f32 %v3832, %v4192
        %v4251 = vadd.f32 %v3833, %v4195
        %v4252 = vadd.f32 %v3834, %v4200
        %v4253 = vadd.f32 %v3835, %v4203
        %v4254 = vadd.f32 %v3836, %v4208
        %v4255 = vadd.f32 %v3837, %v4211
        %v4256 = vadd.f32 %v3838, %v4216
        %v4257 = vadd.f32 %v3839, %v4219
        %v4258 = vadd.f32 %v3840, %v4224
        %v4259 = vadd.f32 %v3841, %v4227
        %v4260 = vadd.f32 %v3842, %v4232
        %v4261 = vadd.f32 %v3843, %v4235
        %v4262 = vld [vmem:[%s4] sm:$0x1]
        %v4264 = vlaneseq
        %v4265 = vshrl.u32 %v4264, 7
        %v4266 = vsub.s32 0, %v4265
        %v4267 = vrot.slane %v4262, %v4266
        %v4269 = vadd.f32 %v4238, %v4267
        %v4270 = vadd.f32 %v4239, %v4267
        %v4271 = vadd.f32 %v4240, %v4267
        %v4272 = vadd.f32 %v4241, %v4267
        %v4273 = vadd.f32 %v4242, %v4267
        %v4274 = vadd.f32 %v4243, %v4267
        %v4275 = vadd.f32 %v4244, %v4267
        %v4276 = vadd.f32 %v4245, %v4267
        %v4277 = vadd.f32 %v4246, %v4267
        %v4278 = vadd.f32 %v4247, %v4267
        %v4279 = vadd.f32 %v4248, %v4267
        %v4280 = vadd.f32 %v4249, %v4267
        %v4281 = vadd.f32 %v4250, %v4267
        %v4282 = vadd.f32 %v4251, %v4267
        %v4283 = vadd.f32 %v4252, %v4267
        %v4284 = vadd.f32 %v4253, %v4267
        %v4285 = vadd.f32 %v4254, %v4267
        %v4286 = vadd.f32 %v4255, %v4267
        %v4287 = vadd.f32 %v4256, %v4267
        %v4288 = vadd.f32 %v4257, %v4267
        %v4289 = vadd.f32 %v4258, %v4267
        %v4290 = vadd.f32 %v4259, %v4267
        %v4291 = vadd.f32 %v4260, %v4267
        %v4292 = vadd.f32 %v4261, %v4267
        %v4293 = vmax.f32 %v4269, 0.0
        %v4294 = vmax.f32 %v4270, 0.0
        %v4295 = vmax.f32 %v4271, 0.0
        %v4296 = vmax.f32 %v4272, 0.0
        %v4297 = vmax.f32 %v4273, 0.0
        %v4298 = vmax.f32 %v4274, 0.0
        %v4299 = vmax.f32 %v4275, 0.0
        %v4300 = vmax.f32 %v4276, 0.0
        %v4301 = vmax.f32 %v4277, 0.0
        %v4302 = vmax.f32 %v4278, 0.0
        %v4303 = vmax.f32 %v4279, 0.0
        %v4304 = vmax.f32 %v4280, 0.0
        %v4305 = vmax.f32 %v4281, 0.0
        %v4306 = vmax.f32 %v4282, 0.0
        %v4307 = vmax.f32 %v4283, 0.0
        %v4308 = vmax.f32 %v4284, 0.0
        %v4309 = vmax.f32 %v4285, 0.0
        %v4310 = vmax.f32 %v4286, 0.0
        %v4311 = vmax.f32 %v4287, 0.0
        %v4312 = vmax.f32 %v4288, 0.0
        %v4313 = vmax.f32 %v4289, 0.0
        %v4314 = vmax.f32 %v4290, 0.0
        %v4315 = vmax.f32 %v4291, 0.0
        %v4316 = vmax.f32 %v4292, 0.0
        %v4317 = vpack.c.bf16 %v4294, %v4293
        %v4318 = vpack.c.bf16 %v4296, %v4295
        %v4319 = vpack.c.bf16 %v4298, %v4297
        %v4320 = vpack.c.bf16 %v4300, %v4299
        %v4321 = vpack.c.bf16 %v4302, %v4301
        %v4322 = vpack.c.bf16 %v4304, %v4303
        %v4323 = vpack.c.bf16 %v4306, %v4305
        %v4324 = vpack.c.bf16 %v4308, %v4307
        %v4325 = vpack.c.bf16 %v4310, %v4309
        %v4326 = vpack.c.bf16 %v4312, %v4311
        %v4327 = vpack.c.bf16 %v4314, %v4313
        %v4328 = vpack.c.bf16 %v4316, %v4315
        %v4329 = vld [vmem:[#allocation9] sm:$0xf]
        %v4330 = vld [vmem:[#allocation9 + $0x4] sm:$0xf]
        %v4331 = vld [vmem:[#allocation9 + $0x8] sm:$0xf]
        %v4332 = vld [vmem:[#allocation9 + $0xc] sm:$0xf]
        %v4333 = vld [vmem:[#allocation9 + $0x10] sm:$0xf]
        %v4334 = vld [vmem:[#allocation9 + $0x14] sm:$0xf]
        %v4335 = vld [vmem:[#allocation9 + $0x18] sm:$0xf]
        %v4336 = vld [vmem:[#allocation9 + $0x1c] sm:$0xf]
        %v4337 = vld [vmem:[#allocation9 + $0x20] sm:$0xf]
        %v4338 = vld [vmem:[#allocation9 + $0x24] sm:$0xf]
        %v4339 = vld [vmem:[#allocation9 + $0x28] sm:$0xf]
        %v4340 = vld [vmem:[#allocation9 + $0x2c] sm:$0xf]
        %v4341 = vld [vmem:[#allocation9 + $0x30] sm:$0xf]
        %v4342 = vld [vmem:[#allocation9 + $0x34] sm:$0xf]
        %v4343 = vld [vmem:[#allocation9 + $0x38] sm:$0xf]
        %v4344 = vld [vmem:[#allocation9 + $0x3c] sm:$0xf]
        %v4345 = vld [vmem:[%s6] sm:$0x1]
        %v4347 = vlaneseq
        %v4348 = vshrl.u32 %v4347, 7
        %v4349 = vsub.s32 0, %v4348
        %v4350 = vrot.slane %v4345, %v4349
        %v4368 = vunpack.c.l.b16 %v4329
        %v4369 = vunpack.c.l.b16 %v4330
        %v4370 = vunpack.c.l.b16 %v4331
        %v4371 = vunpack.c.l.b16 %v4332
        %v4372 = vunpack.c.l.b16 %v4333
        %v4373 = vunpack.c.l.b16 %v4334
        %v4374 = vunpack.c.l.b16 %v4335
        %v4375 = vunpack.c.l.b16 %v4336
        %v4376 = vunpack.c.l.b16 %v4337
        %v4377 = vunpack.c.l.b16 %v4338
        %v4378 = vunpack.c.l.b16 %v4339
        %v4379 = vunpack.c.l.b16 %v4340
        %v4380 = vunpack.c.l.b16 %v4341
        %v4381 = vunpack.c.l.b16 %v4342
        %v4382 = vunpack.c.l.b16 %v4343
        %v4383 = vunpack.c.l.b16 %v4344
        %v4384 = vpack.c.b16 %v4369, %v4368
        %v4385 = vpack.c.b16 %v4371, %v4370
        %v4386 = vpack.c.b16 %v4373, %v4372
        %v4387 = vpack.c.b16 %v4375, %v4374
        %v4388 = vpack.c.b16 %v4377, %v4376
        %v4389 = vpack.c.b16 %v4379, %v4378
        %v4390 = vpack.c.b16 %v4381, %v4380
        %v4391 = vpack.c.b16 %v4383, %v4382
        %4400 = vmatprep.subr.bf16.mxu0 0
        %4401 = vmatpush1.bf16.msra.mxu0 %v4391
        %4402 = vmatprep.subr.bf16.mxu0 0
        %4403 = vmatpush1.bf16.msra.mxu0 %v4390
        %4404 = vmatprep.subr.bf16.mxu0 0
        %4405 = vmatpush1.bf16.msra.mxu0 %v4389
        %4406 = vmatprep.subr.bf16.mxu0 0
        %4407 = vmatpush1.bf16.msra.mxu0 %v4388
        %4408 = vmatprep.subr.bf16.mxu0 0
        %4409 = vmatpush1.bf16.msra.mxu0 %v4387
        %4410 = vmatprep.subr.bf16.mxu0 0
        %4411 = vmatpush1.bf16.msra.mxu0 %v4386
        %4412 = vmatprep.subr.bf16.mxu0 0
        %4413 = vmatpush1.bf16.msra.mxu0 %v4385
        %4414 = vmatprep.subr.bf16.mxu0 0
        %4415 = vmatpush1.bf16.msra.mxu0 %v4384
        %4416 = vmatprep.subr.bf16.mxu0 0
        %4417 = vmatpush2.bf16.msra.mxu0 0
        %4418 = vmatprep.subr.bf16.mxu0 0
        %4419 = vmatpush2.bf16.msra.mxu0 0
        %4420 = vmatprep.subr.bf16.mxu0 0
        %4421 = vmatpush2.bf16.msra.mxu0 0
        %4422 = vmatprep.subr.bf16.mxu0 0
        %4423 = vmatpush2.bf16.msra.mxu0 0
        %4424 = vmatprep.subr.bf16.mxu0 0
        %4425 = vmatpush2.bf16.msra.mxu0 0
        %4426 = vmatprep.subr.bf16.mxu0 0
        %4427 = vmatpush2.bf16.msra.mxu0 0
        %4428 = vmatprep.subr.bf16.mxu0 0
        %4429 = vmatpush2.bf16.msra.mxu0 0
        %4430 = vmatprep.subr.bf16.mxu0 0
        %4431 = vmatpush2.bf16.msra.mxu0 0
        %4432 = vmatprep.mubr.bf16.mxu0 0
        %4433 = vmatmul.mubr.bf16.gmra.mxu0 %v4317
        %v4434 = vpop.f32.mrf.mxu0
        %v4435 = vadd.f32 %v4350, %v4434
        %v4436 = vpop.f32.mrf.mxu0
        %v4437 = vpop.f32.mrf.mxu0
        %v4438 = vadd.f32 %v4350, %v4437
        %v4439 = vpop.f32.mrf.mxu0
        %4440 = vmatprep.mubr.bf16.mxu0 0
        %4441 = vmatmul.mubr.bf16.gmra.mxu0 %v4318
        %v4442 = vpop.f32.mrf.mxu0
        %v4443 = vadd.f32 %v4350, %v4442
        %v4444 = vpop.f32.mrf.mxu0
        %v4445 = vpop.f32.mrf.mxu0
        %v4446 = vadd.f32 %v4350, %v4445
        %v4447 = vpop.f32.mrf.mxu0
        %4448 = vmatprep.mubr.bf16.mxu0 0
        %4449 = vmatmul.mubr.bf16.gmra.mxu0 %v4319
        %v4450 = vpop.f32.mrf.mxu0
        %v4451 = vadd.f32 %v4350, %v4450
        %v4452 = vpop.f32.mrf.mxu0
        %v4453 = vpop.f32.mrf.mxu0
        %v4454 = vadd.f32 %v4350, %v4453
        %v4455 = vpop.f32.mrf.mxu0
        %4456 = vmatprep.mubr.bf16.mxu0 0
        %4457 = vmatmul.mubr.bf16.gmra.mxu0 %v4320
        %v4458 = vpop.f32.mrf.mxu0
        %v4459 = vadd.f32 %v4350, %v4458
        %v4460 = vpop.f32.mrf.mxu0
        %v4461 = vpop.f32.mrf.mxu0
        %v4462 = vadd.f32 %v4350, %v4461
        %v4463 = vpop.f32.mrf.mxu0
        %4464 = vmatprep.mubr.bf16.mxu0 0
        %4465 = vmatmul.mubr.bf16.gmra.mxu0 %v4321
        %v4466 = vpop.f32.mrf.mxu0
        %v4467 = vadd.f32 %v4350, %v4466
        %v4468 = vpop.f32.mrf.mxu0
        %v4469 = vpop.f32.mrf.mxu0
        %v4470 = vadd.f32 %v4350, %v4469
        %v4471 = vpop.f32.mrf.mxu0
        %4472 = vmatprep.mubr.bf16.mxu0 0
        %4473 = vmatmul.mubr.bf16.gmra.mxu0 %v4322
        %v4474 = vpop.f32.mrf.mxu0
        %v4475 = vadd.f32 %v4350, %v4474
        %v4476 = vpop.f32.mrf.mxu0
        %v4477 = vpop.f32.mrf.mxu0
        %v4478 = vadd.f32 %v4350, %v4477
        %v4479 = vpop.f32.mrf.mxu0
        %4480 = vmatprep.mubr.bf16.mxu0 0
        %4481 = vmatmul.mubr.bf16.gmra.mxu0 %v4323
        %v4482 = vpop.f32.mrf.mxu0
        %v4483 = vadd.f32 %v4350, %v4482
        %v4484 = vpop.f32.mrf.mxu0
        %v4485 = vpop.f32.mrf.mxu0
        %v4486 = vadd.f32 %v4350, %v4485
        %v4487 = vpop.f32.mrf.mxu0
        %4488 = vmatprep.mubr.bf16.mxu0 0
        %4489 = vmatmul.mubr.bf16.gmra.mxu0 %v4324
        %v4490 = vpop.f32.mrf.mxu0
        %v4491 = vadd.f32 %v4350, %v4490
        %v4492 = vpop.f32.mrf.mxu0
        %v4493 = vpop.f32.mrf.mxu0
        %v4494 = vadd.f32 %v4350, %v4493
        %v4495 = vpop.f32.mrf.mxu0
        %4496 = vmatprep.mubr.bf16.mxu0 0
        %4497 = vmatmul.mubr.bf16.gmra.mxu0 %v4325
        %v4498 = vpop.f32.mrf.mxu0
        %v4499 = vadd.f32 %v4350, %v4498
        %v4500 = vpop.f32.mrf.mxu0
        %v4501 = vpop.f32.mrf.mxu0
        %v4502 = vadd.f32 %v4350, %v4501
        %v4503 = vpop.f32.mrf.mxu0
        %4504 = vmatprep.mubr.bf16.mxu0 0
        %4505 = vmatmul.mubr.bf16.gmra.mxu0 %v4326
        %v4506 = vpop.f32.mrf.mxu0
        %v4507 = vadd.f32 %v4350, %v4506
        %v4508 = vpop.f32.mrf.mxu0
        %v4509 = vpop.f32.mrf.mxu0
        %v4510 = vadd.f32 %v4350, %v4509
        %v4511 = vpop.f32.mrf.mxu0
        %4512 = vmatprep.mubr.bf16.mxu0 0
        %4513 = vmatmul.mubr.bf16.gmra.mxu0 %v4327
        %v4514 = vpop.f32.mrf.mxu0
        %v4515 = vadd.f32 %v4350, %v4514
        %v4516 = vpop.f32.mrf.mxu0
        %v4517 = vpop.f32.mrf.mxu0
        %v4518 = vadd.f32 %v4350, %v4517
        %v4519 = vpop.f32.mrf.mxu0
        %4520 = vmatprep.mubr.bf16.mxu0 0
        %4521 = vmatmul.mubr.bf16.gmra.mxu0 %v4328
        %v4522 = vpop.f32.mrf.mxu0
        %v4523 = vadd.f32 %v4350, %v4522
        %v4524 = vpop.f32.mrf.mxu0
        %v4525 = vpop.f32.mrf.mxu0
        %v4526 = vadd.f32 %v4350, %v4525
        %v4527 = vpop.f32.mrf.mxu0
        %4528 = vdwg.mxu0
        %v4529 = vunpack.c.l.bf16 %v363
        %v4530 = vunpack.c.l.bf16 %v364
        %v4531 = vunpack.c.l.bf16 %v365
        %v4532 = vunpack.c.l.bf16 %v366
        %v4533 = vunpack.c.l.bf16 %v367
        %v4534 = vunpack.c.l.bf16 %v368
        %v4535 = vunpack.c.l.bf16 %v369
        %v4536 = vunpack.c.l.bf16 %v370
        %v4537 = vunpack.c.l.bf16 %v371
        %v4538 = vunpack.c.l.bf16 %v372
        %v4539 = vunpack.c.l.bf16 %v373
        %v4540 = vunpack.c.l.bf16 %v374
        %v4541 = vunpack.c.l.bf16 %v375
        %v4542 = vunpack.c.l.bf16 %v376
        %v4543 = vunpack.c.l.bf16 %v377
        %v4544 = vunpack.c.l.bf16 %v378
        %v4545 = vunpack.c.l.bf16 %v379
        %v4546 = vunpack.c.l.bf16 %v380
        %v4547 = vunpack.c.l.bf16 %v381
        %v4548 = vunpack.c.l.bf16 %v382
        %v4549 = vunpack.c.l.bf16 %v383
        %v4550 = vunpack.c.l.bf16 %v384
        %v4551 = vunpack.c.l.bf16 %v385
        %v4552 = vunpack.c.l.bf16 %v386
        %v4553 = vadd.f32 %v4435, %v4529
        %v4554 = vadd.f32 %v4438, %v4530
        %v4555 = vadd.f32 %v4443, %v4531
        %v4556 = vadd.f32 %v4446, %v4532
        %v4557 = vadd.f32 %v4451, %v4533
        %v4558 = vadd.f32 %v4454, %v4534
        %v4559 = vadd.f32 %v4459, %v4535
        %v4560 = vadd.f32 %v4462, %v4536
        %v4561 = vadd.f32 %v4467, %v4537
        %v4562 = vadd.f32 %v4470, %v4538
        %v4563 = vadd.f32 %v4475, %v4539
        %v4564 = vadd.f32 %v4478, %v4540
        %v4565 = vadd.f32 %v4483, %v4541
        %v4566 = vadd.f32 %v4486, %v4542
        %v4567 = vadd.f32 %v4491, %v4543
        %v4568 = vadd.f32 %v4494, %v4544
        %v4569 = vadd.f32 %v4499, %v4545
        %v4570 = vadd.f32 %v4502, %v4546
        %v4571 = vadd.f32 %v4507, %v4547
        %v4572 = vadd.f32 %v4510, %v4548
        %v4573 = vadd.f32 %v4515, %v4549
        %v4574 = vadd.f32 %v4518, %v4550
        %v4575 = vadd.f32 %v4523, %v4551
        %v4576 = vadd.f32 %v4526, %v4552
        %v4577 = vmax.f32 %v4553, 0.0
        %v4578 = vmax.f32 %v4554, 0.0
        %v4579 = vmax.f32 %v4555, 0.0
        %v4580 = vmax.f32 %v4556, 0.0
        %v4581 = vmax.f32 %v4557, 0.0
        %v4582 = vmax.f32 %v4558, 0.0
        %v4583 = vmax.f32 %v4559, 0.0
        %v4584 = vmax.f32 %v4560, 0.0
        %v4585 = vmax.f32 %v4561, 0.0
        %v4586 = vmax.f32 %v4562, 0.0
        %v4587 = vmax.f32 %v4563, 0.0
        %v4588 = vmax.f32 %v4564, 0.0
        %v4589 = vmax.f32 %v4565, 0.0
        %v4590 = vmax.f32 %v4566, 0.0
        %v4591 = vmax.f32 %v4567, 0.0
        %v4592 = vmax.f32 %v4568, 0.0
        %v4593 = vmax.f32 %v4569, 0.0
        %v4594 = vmax.f32 %v4570, 0.0
        %v4595 = vmax.f32 %v4571, 0.0
        %v4596 = vmax.f32 %v4572, 0.0
        %v4597 = vmax.f32 %v4573, 0.0
        %v4598 = vmax.f32 %v4574, 0.0
        %v4599 = vmax.f32 %v4575, 0.0
        %v4600 = vmax.f32 %v4576, 0.0
        %4601 = vst [vmem:[%s358] sm:$0xff] %v4577
        %4602 = vst [vmem:[%s358 + $0x8] sm:$0xff] %v4578
        %4603 = vst [vmem:[%s358 + $0x10] sm:$0xff] %v4579
        %4604 = vst [vmem:[%s358 + $0x18] sm:$0xff] %v4580
        %4605 = vst [vmem:[%s358 + $0x20] sm:$0xff] %v4581
        %4606 = vst [vmem:[%s358 + $0x28] sm:$0xff] %v4582
        %4607 = vst [vmem:[%s358 + $0x30] sm:$0xff] %v4583
        %4608 = vst [vmem:[%s358 + $0x38] sm:$0xff] %v4584
        %4609 = vst [vmem:[%s358 + $0x40] sm:$0xff] %v4585
        %4610 = vst [vmem:[%s358 + $0x48] sm:$0xff] %v4586
        %4611 = vst [vmem:[%s358 + $0x50] sm:$0xff] %v4587
        %4612 = vst [vmem:[%s358 + $0x58] sm:$0xff] %v4588
        %4613 = vst [vmem:[%s358 + $0x60] sm:$0xff] %v4589
        %4614 = vst [vmem:[%s358 + $0x68] sm:$0xff] %v4590
        %4615 = vst [vmem:[%s358 + $0x70] sm:$0xff] %v4591
        %4616 = vst [vmem:[%s358 + $0x78] sm:$0xff] %v4592
        %4617 = vst [vmem:[%s358 + $0x80] sm:$0xff] %v4593
        %4618 = vst [vmem:[%s358 + $0x88] sm:$0xff] %v4594
        %4619 = vst [vmem:[%s358 + $0x90] sm:$0xff] %v4595
        %4620 = vst [vmem:[%s358 + $0x98] sm:$0xff] %v4596
        %4621 = vst [vmem:[%s358 + $0xa0] sm:$0xff] %v4597
        %4622 = vst [vmem:[%s358 + $0xa8] sm:$0xff] %v4598
        %4623 = vst [vmem:[%s358 + $0xb0] sm:$0xff] %v4599
        %4624 = vst [vmem:[%s358 + $0xb8] sm:$0xff] %v4600
        %s4625 = sand.u32 %s202, 1
        %s4626 = scalar_lea.sflag [#allocation5], %s4625
        %s4627 = sand.u32 %s202, 1
        %s4628 = smul.addr %s4627, 192
        %s4629 = scalar_lea.vmem [#allocation11], %s4628
        // Predicated region
        $region65: #{tpu_custom_call.1} parent=47 // pred_check
          %p4630 = pneg %p212
        $region66: #{tpu_custom_call.1} parent=47 // pred_check_branch
          %4632 = sbr.rel (%p4630) target = $region68
        $region67: #{tpu_custom_call.1} parent=47 // pred_region
          %s4634 = ssub.s32 3072, 3072
          %4635 = vsyncadd %s4626, %s4634
          %s4636 = smul.addr %s31, 24
          %s4637 = smul.addr %s30, 48
          %s4638 = sadd.s32 %s4636, %s4637
          %s4639 = smul.addr %s4638, 128
          %s4640 = scalar_lea.hbm %s7, %s4639
          %s4641 = sshll.u32 %s4629, 4
          %s4642 = int_to_ptr.vmem [resolvable:$true] %s4641
          %4647 = dma.vmem_to_hbm [thread:$0]  %s4642, 3072, %s4640, %s4626, 128, 128, 8
        $region68: #{tpu_custom_call.1} parent=47 // pred_fallthru
          _
      $region48: #{tpu_custom_call.1} parent=5 // pred_fallthru
        _
      %p4648 = scmp.le.s32.totalorder 2, %s21
      // Predicated region
      $region69: #{tpu_custom_call.1} parent=5 // pred_check
        %p4649 = pneg %p4648
      $region70: #{tpu_custom_call.1} parent=5 // pred_check_branch
        %4651 = sbr.rel (%p4649) target = $region72
      $region71: #{tpu_custom_call.1} parent=5 // pred_region
        %s4652 = ssub.s32 %s21, 2
        // Predicated region
        $region73: #{tpu_custom_call.1} parent=71 // pred_check
          %p4653 = pneg %p218
        $region74: #{tpu_custom_call.1} parent=71 // pred_check_branch
          %4655 = sbr.rel (%p4653) target = $region76
        $region75: #{tpu_custom_call.1} parent=71 // pred_region
          %s4656 = sand.u32 %s203, 1
          %s4657 = scalar_lea.sflag [#allocation5], %s4656
          %s4658 = sand.u32 %s203, 1
          %s4659 = smul.addr %s4658, 192
          %s4660 = scalar_lea.vmem [#allocation11], %s4659
          %4661 = dma.done %s4657, 3072
        $region76: #{tpu_custom_call.1} parent=71 // pred_fallthru
          _
      $region72: #{tpu_custom_call.1} parent=5 // pred_fallthru
        _
    $region6: #{tpu_custom_call.1} parent=1 // loop_footer
      %s25 = sadd.s32 1, %s21
    $region7: #{tpu_custom_call.1} parent=1 // loop_footer_branch
      %20 = sbr.rel target = $region3
    $region8: #{tpu_custom_call.1} parent=1 // loop_exit
      _
    %4662 = vsyncpa [#allocation4], 1
    %s4663 = scalar_lea.sflag [#allocation4], 1
    %4664 = vsyncpa %s4663, 1
    %4665 = vsyncpa [#allocation7], 1
    %4666 = vsyncpa [#allocation10], 1
    %4667 = vsyncpa [#allocation5], 1
    %s4668 = scalar_lea.sflag [#allocation5], 1
    %4669 = vsyncpa %s4668, 1

</llo_original>
